<compile_context>
chip_gen: v7x
topology: tpu7x:2x2x1
jax: 0.10.0
libtpu: 0.0.40
codegen_flags: <defaults>
</compile_context>

<pallas_src>
import jax
import jax.numpy as jnp
from jax.experimental import pallas as pl
from jax.experimental.pallas import tpu as pltpu


def _round_up(n, m):
    return ((n + m - 1) // m) * m


_ONEHOT_GATHER_MAX_NODES = 256   # below this, gather rows with an MXU one-hot matmul


def _pick_tile_e(num_edges):
    """Generation-aware edge tile size (multiple of 16 for bf16 sublane packing)."""
    try:
        kind = jax.devices()[0].device_kind.lower()
    except Exception:
        kind = ""
    if "v5 lite" in kind or "v5e" in kind or "v5litepod" in kind:
        base = 512            # v5e: 16 MiB default scoped VMEM
    else:
        base = 1024           # v6e / v7x (scoped limit raised below only when needed)
    # TODO(synk): confirm the edge grid axis is sharded across both v7x TensorCores
    # (pltpu.CORE_PARALLEL / core_map) -- review #6.
    return min(base, _round_up(max(num_edges, 16), 16))


# ----------------------------------------------------------------------------
# Pallas kernels
# ----------------------------------------------------------------------------
def _make_edge_kernel(n_pad, use_onehot):
    """EdgeConv message MLP with the node-row gather fused in-kernel.

    msg = relu(cat([x_i, x_j - x_i]) @ W1 + b1) @ W2 + b2
        = relu([x_i | x_j] @ [[W1a - W1b]; [W1b]] + b1) @ W2 + b2
    """

    def kernel(dst_ref, src_ref, x_ref, w1_ref, b1_ref, w2_ref, b2_ref, o_ref):
        tbl = x_ref[...]                     # (n_pad, Dp) f32 node table, VMEM-resident
        di = dst_ref[...]                    # (tile_e, 1) int32
        si = src_ref[...]                    # (tile_e, 1) int32
        if use_onehot:
            # Tiny table: exact one-hot gather on the MXU (no gather op needed).
            tbl_b = tbl.astype(jnp.bfloat16)
            iota = jax.lax.broadcasted_iota(jnp.int32, (di.shape[0], n_pad), 1)
            oh_i = (di == iota).astype(jnp.bfloat16)
            oh_j = (si == iota).astype(jnp.bfloat16)
            xi = jnp.dot(oh_i, tbl_b, preferred_element_type=jnp.float32)
            xj = jnp.dot(oh_j, tbl_b, preferred_element_type=jnp.float32)
            xi = xi.astype(jnp.bfloat16)
            xj = xj.astype(jnp.bfloat16)
        else:
            # Hardware sublane gather on the 32-bit table (indices are always in range;
            # "clip" keeps the lowering simple for the padded tail edges).
            xi = jnp.take_along_axis(tbl, di, axis=0, mode="clip").astype(jnp.bfloat16)
            xj = jnp.take_along_axis(tbl, si, axis=0, mode="clip").astype(jnp.bfloat16)

        # Lane-axis concat at a 128-multiple boundary -> single K = 2*Dp contraction.
        xc = jnp.concatenate([xi, xj], axis=-1)                       # (tile_e, 2*Dp) bf16
        h = jnp.dot(xc, w1_ref[...], preferred_element_type=jnp.float32)
        h = jnp.maximum(h + b1_ref[...], 0.0)
        o = jnp.dot(h.astype(jnp.bfloat16), w2_ref[...],
                    preferred_element_type=jnp.float32)
        o_ref[...] = (o + b2_ref[...]).astype(o_ref.dtype)            # bf16 msg tile

    return kernel


def edge_mlp_fused(table, dst_g, src_g, lp, *, tile_e):
    """Run the EdgeConv MLP over every edge with the node gather fused in-kernel."""
    n_pad, dp = table.shape
    e_pad = dst_g.shape[0]
    hdim, dout_p = lp["hdim"], lp["dout_p"]
    use_onehot = n_pad <= _ONEHOT_GATHER_MAX_NODES
    kernel = _make_edge_kernel(n_pad, use_onehot)

    cp_kwargs = dict(dimension_semantics=("parallel",))
    # Rough VMEM working-set estimate; raise the scoped limit only when necessary.
    est = (n_pad * dp * 4
           + (2 * dp * hdim + hdim * dout_p) * 2
           + 4 * tile_e * (2 * dp * 2 + hdim * 4 + dout_p * 4)
           + (4 << 20))
    if est > 28 * (1 << 20):
        cp_kwargs["vmem_limit_bytes"] = int(min(2 * est, 128 * (1 << 20)))

    return pl.pallas_call(
        kernel,
        out_shape=jax.ShapeDtypeStruct((e_pad, dout_p), jnp.bfloat16),
        grid=(e_pad // tile_e,),
        in_specs=[
            pl.BlockSpec((tile_e, 1), lambda i: (i, 0)),        # dst indices
            pl.BlockSpec((tile_e, 1), lambda i: (i, 0)),        # src indices
            pl.BlockSpec((n_pad, dp), lambda i: (0, 0)),        # node table (resident)
            pl.BlockSpec((2 * dp, hdim), lambda i: (0, 0)),     # [[W1a-W1b];[W1b]] (resident)
            pl.BlockSpec((1, hdim), lambda i: (0, 0)),          # b1
            pl.BlockSpec((hdim, dout_p), lambda i: (0, 0)),     # W2 (resident)
            pl.BlockSpec((1, dout_p), lambda i: (0, 0)),        # b2
        ],
        out_specs=pl.BlockSpec((tile_e, dout_p), lambda i: (i, 0)),
        compiler_params=pltpu.CompilerParams(**cp_kwargs),
    )(dst_g, src_g, table, lp["w1s"], lp["b1"], lp["w2"], lp["b2"])


def _bn_relu_mean_kernel(s_ref, ic_ref, sc_ref, sh_ref, o_ref):
    """Fused mean-divide + BatchNorm affine-normalize + ReLU."""
    o_ref[...] = jnp.maximum(
        s_ref[...] * ic_ref[...] * sc_ref[...] + sh_ref[...], 0.0)


def bn_relu_mean(summed, inv_cnt, gamma, beta, n_real, *, eps=1e-5, tile_n=512):
    """relu(BatchNorm1d(summed * inv_cnt)) with training-mode (biased) batch stats.

    `summed` rows >= n_real are exactly zero (no edges point there), so the reductions can
    run over the padded rows while dividing by the true node count n_real.
    """
    n_pad, c = summed.shape
    hm = summed * inv_cnt                          # fused into the reductions by XLA
    nf = jnp.float32(n_real)
    mean = jnp.sum(hm, axis=0) / nf
    var = jnp.maximum(jnp.sum(hm * hm, axis=0) / nf - mean * mean, 0.0)
    scale = gamma * jax.lax.rsqrt(var + eps)
    shift = beta - mean * scale

    tile_n = min(tile_n, n_pad)
    return pl.pallas_call(
        _bn_relu_mean_kernel,
        out_shape=jax.ShapeDtypeStruct((n_pad, c), jnp.float32),
        grid=(pl.cdiv(n_pad, tile_n),),
        in_specs=[
            pl.BlockSpec((tile_n, c), lambda i: (i, 0)),
            pl.BlockSpec((tile_n, 1), lambda i: (i, 0)),
            pl.BlockSpec((1, c), lambda i: (0, 0)),
            pl.BlockSpec((1, c), lambda i: (0, 0)),
        ],
        out_specs=pl.BlockSpec((tile_n, c), lambda i: (i, 0)),
        compiler_params=pltpu.CompilerParams(dimension_semantics=("parallel",)),
    )(summed, inv_cnt, scale.reshape(1, c), shift.reshape(1, c))


# ----------------------------------------------------------------------------
# Plain-JAX glue (positional embedding, one-time edge sort, scatter-mean)
# ----------------------------------------------------------------------------
def positional_embed(p, num_freqs=10):
    """NeRF-style get_embedder(10): [x, sin(2^k x), cos(2^k x)] -> (N, 63)."""
    freqs = 2.0 ** jnp.arange(num_freqs, dtype=jnp.float32)
    xf = p[:, None, :] * freqs[None, :, None]              # (N, F, 3)
    sc = jnp.stack([jnp.sin(xf), jnp.cos(xf)], axis=2)     # (N, F, 2, 3)
    return jnp.concatenate([p, sc.reshape(p.shape[0], -1)], axis=-1)


def _prep_edge_params(p, d_in_padded):
    """Split/stack W1, zero-pad to the (lane-padded) node-table width, pad W2/b2 columns."""
    w1, b1, w2, b2 = p["w1"], p["b1"], p["w2"], p["b2"]
    din = w1.shape[0] // 2
    hdim = w1.shape[1]
    dout = w2.shape[1]
    dout_p = _round_up(dout, 128)
    pad_in = d_in_padded - din
    w1a, w1b = w1[:din], w1[din:]
    w1d = jnp.pad(w1a - w1b, ((0, pad_in), (0, 0)))
    w1bp = jnp.pad(w1b, ((0, pad_in), (0, 0)))
    w1s = jnp.concatenate([w1d, w1bp], axis=0).astype(jnp.bfloat16)     # (2*Dp, H)
    w2p = jnp.pad(w2, ((0, 0), (0, dout_p - dout))).astype(jnp.bfloat16)
    b2p = jnp.pad(b2, (0, dout_p - dout))
    return dict(w1s=w1s, b1=b1.reshape(1, hdim), w2=w2p, b2=b2p.reshape(1, dout_p),
                hdim=hdim, dout_p=dout_p)


def _pad_gamma_beta(gamma, beta, c):
    pad = c - gamma.shape[0]
    return (jnp.pad(gamma, (0, pad), constant_values=1.0), jnp.pad(beta, (0, pad)))


# ----------------------------------------------------------------------------
# Parameters (default GraphEncoder config)
# ----------------------------------------------------------------------------
EMBED_DIM = 63                            # get_embedder(10) -> 3 + 3*2*10
OUTPUT_DIM = 512
LAYER_DIMS = [(EMBED_DIM * 3 + 7, 64), (64, 128), (128, 256), (256, 256),
              (256, OUTPUT_DIM)]


def init_edge_conv_params(key, in_dim, out_dim):
    k1, k2 = jax.random.split(key)
    w1 = jax.random.normal(k1, (2 * in_dim, 2 * out_dim), jnp.float32)
    w1 = w1 * (1.0 / jnp.sqrt(2.0 * in_dim))
    w2 = jax.random.normal(k2, (2 * out_dim, out_dim), jnp.float32)
    w2 = w2 * (1.0 / jnp.sqrt(2.0 * out_dim))
    return {"w1": w1, "b1": jnp.zeros((2 * out_dim,), jnp.float32),
            "w2": w2, "b2": jnp.zeros((out_dim,), jnp.float32)}


def init_params(key):
    keys = jax.random.split(key, len(LAYER_DIMS))
    params = {}
    for i, ((din, dout), k) in enumerate(zip(LAYER_DIMS, keys), start=1):
        params[f"gc{i}"] = init_edge_conv_params(k, din, dout)
        if i <= 4:  # norm1..norm4 (gc5 has no norm)
            params[f"bn{i}_g"] = jnp.ones((dout,), jnp.float32)
            params[f"bn{i}_b"] = jnp.zeros((dout,), jnp.float32)
    return params


# ----------------------------------------------------------------------------
# Forward pass (mirrors GraphEncoder.forward with default flags:
# no_max_pool=True -> no scatter_max over `batch`; use_point_features=False)
# ----------------------------------------------------------------------------
@jax.jit
def forward(params, x, edge_index):
    n = x.shape[0]
    n_pad = _round_up(n, 8)
    src = edge_index[0].astype(jnp.int32)
    dst = edge_index[1].astype(jnp.int32)
    e = src.shape[0]

    # Sort edges by destination once (contiguous scatter segments) and hoist the in-degree.
    order = jnp.argsort(dst)
    dst = dst[order]
    src = src[order]
    cnt = jax.ops.segment_sum(jnp.ones((e,), jnp.float32), dst,
                              num_segments=n_pad, indices_are_sorted=True)
    inv_cnt = (1.0 / jnp.maximum(cnt, 1.0))[:, None]            # (n_pad, 1)

    tile_e = _pick_tile_e(e)
    e_pad = _round_up(e, tile_e)
    pad_e = e_pad - e
    dst_g = jnp.pad(dst, (0, pad_e))[:, None]                   # gather idx (pad -> node 0)
    src_g = jnp.pad(src, (0, pad_e))[:, None]
    dst_scatter = jnp.pad(dst, (0, pad_e), constant_values=n_pad)  # OOB -> dropped by segment_sum

    # Node features: 3x NeRF positional embedding + 7 extra scalar features, lane/row padded.
    x0 = positional_embed(x[:, :3])
    x1 = positional_embed(x[:, 3:6])
    x2 = positional_embed(x[:, 6:9])
    feats = jnp.concatenate([x0, x1, x2, x[:, 9:]], axis=-1)    # (N, 196)
    d0p = _round_up(feats.shape[1], 128)
    h = jnp.pad(feats, ((0, n_pad - n), (0, d0p - feats.shape[1])))   # (n_pad, 256) f32

    def layer(h_in, name, bn_name):
        lp = _prep_edge_params(params[name], h_in.shape[1])
        msg = edge_mlp_fused(h_in, dst_g, src_g, lp, tile_e=tile_e)    # (e_pad, Dout_p) bf16
        summed = jax.ops.segment_sum(msg.astype(jnp.float32), dst_scatter,
                                     num_segments=n_pad, indices_are_sorted=True)
        if bn_name is None:
            return summed * inv_cnt                                    # final layer: mean only
        gamma, beta = _pad_gamma_beta(params[bn_name + "_g"], params[bn_name + "_b"],
                                      lp["dout_p"])
        return bn_relu_mean(summed, inv_cnt, gamma, beta, n)

    h = layer(h, "gc1", "bn1")
    h = layer(h, "gc2", "bn2")     # point_features (pre-relu norm2 output) is unused downstream
    h = layer(h, "gc3", "bn3")
    h = layer(h, "gc4", "bn4")
    out = layer(h, "gc5", None)    # no norm / relu
    return out[:n]


# ----------------------------------------------------------------------------
if __name__ == "__main__":
    key = jax.random.PRNGKey(0)
    kx, ke, kp = jax.random.split(key, 3)

    n_nodes = 8
    n_edges = 24

    x = jax.random.normal(kx, (n_nodes, 16), jnp.float32)    # 9 coords + 7 extra feats
    edge_index = jax.random.randint(ke, (2, n_edges), 0, n_nodes, dtype=jnp.int32)
    params = init_params(kp)

    out = forward(params, x, edge_index)
    out = jax.block_until_ready(out)
    assert out.shape == (n_nodes, OUTPUT_DIM), out.shape
    assert bool(jnp.all(jnp.isfinite(out)))
    print("KERNEL_OK")
</pallas_src>

<mosaic_0001>
module attributes {stable_mosaic.version = 11 : i64} {
  func.func @kernel(%arg0: i32, %arg1: memref<32x1xi32, #tpu.memory_space<vmem>>, %arg2: memref<32x1xi32, #tpu.memory_space<vmem>>, %arg3: memref<8x256xf32, #tpu.memory_space<vmem>>, %arg4: memref<512x128xbf16, #tpu.memory_space<vmem>>, %arg5: memref<1x128xf32, #tpu.memory_space<vmem>>, %arg6: memref<128x128xbf16, #tpu.memory_space<vmem>>, %arg7: memref<1x128xf32, #tpu.memory_space<vmem>>, %arg8: memref<32x128xbf16, #tpu.memory_space<vmem>>) attributes {dimension_semantics = [#tpu.dimension_semantics<parallel>], iteration_bounds = array<i64: 1>, scalar_prefetch = 0 : i64, scratch_operands = 0 : i64, tpu.core_type = #tpu.core_type<tc>, window_params = [{transform_indices = @transform_0, window_bounds = array<i64: 32, 1>}, {transform_indices = @transform_1, window_bounds = array<i64: 32, 1>}, {pipeline_mode = #tpu.pipeline_mode<synchronous>, transform_indices = @transform_2, window_bounds = array<i64: 8, 256>}, {pipeline_mode = #tpu.pipeline_mode<synchronous>, transform_indices = @transform_3, window_bounds = array<i64: 512, 128>}, {pipeline_mode = #tpu.pipeline_mode<synchronous>, transform_indices = @transform_4, window_bounds = array<i64: 1, 128>}, {pipeline_mode = #tpu.pipeline_mode<synchronous>, transform_indices = @transform_5, window_bounds = array<i64: 128, 128>}, {pipeline_mode = #tpu.pipeline_mode<synchronous>, transform_indices = @transform_6, window_bounds = array<i64: 1, 128>}, {transform_indices = @transform_7, window_bounds = array<i64: 32, 128>}]} {
    %c0 = arith.constant 0 : index
    %c0_0 = arith.constant 0 : index
    %0 = vector.load %arg3[%c0, %c0_0] : memref<8x256xf32, #tpu.memory_space<vmem>>, vector<8x256xf32>
    %c0_1 = arith.constant 0 : index
    %c0_2 = arith.constant 0 : index
    %1 = vector.load %arg1[%c0_1, %c0_2] : memref<32x1xi32, #tpu.memory_space<vmem>>, vector<32x1xi32>
    %c0_3 = arith.constant 0 : index
    %c0_4 = arith.constant 0 : index
    %2 = vector.load %arg2[%c0_3, %c0_4] : memref<32x1xi32, #tpu.memory_space<vmem>>, vector<32x1xi32>
    %3 = arith.truncf %0 : vector<8x256xf32> to vector<8x256xbf16>
    %4 = tpu.iota {dimensions = array<i32: 1>} : vector<32x8xi32>
    %5 = vector.broadcast %1 : vector<32x1xi32> to vector<32x8xi32>
    %6 = arith.cmpi eq, %5, %4 : vector<32x8xi32>
    %7 = arith.extui %6 : vector<32x8xi1> to vector<32x8xi32>
    %8 = arith.sitofp %7 : vector<32x8xi32> to vector<32x8xf32>
    %9 = arith.truncf %8 : vector<32x8xf32> to vector<32x8xbf16>
    %10 = vector.broadcast %2 : vector<32x1xi32> to vector<32x8xi32>
    %11 = arith.cmpi eq, %10, %4 : vector<32x8xi32>
    %12 = arith.extui %11 : vector<32x8xi1> to vector<32x8xi32>
    %13 = arith.sitofp %12 : vector<32x8xi32> to vector<32x8xf32>
    %14 = arith.truncf %13 : vector<32x8xf32> to vector<32x8xbf16>
    %cst = arith.constant dense<0.000000e+00> : vector<32x256xf32>
    %15 = tpu.matmul %9, %3, %cst {dimension_numbers = #tpu.dot_dimension_numbers<[1], [0], [0], [1], [0, 0, 1, 1], [], []>} : vector<32x8xbf16>, vector<8x256xbf16>, vector<32x256xf32> -> vector<32x256xf32>
    %cst_5 = arith.constant dense<0.000000e+00> : vector<32x256xf32>
    %16 = tpu.matmul %14, %3, %cst_5 {dimension_numbers = #tpu.dot_dimension_numbers<[1], [0], [0], [1], [0, 0, 1, 1], [], []>} : vector<32x8xbf16>, vector<8x256xbf16>, vector<32x256xf32> -> vector<32x256xf32>
    %17 = arith.truncf %15 : vector<32x256xf32> to vector<32x256xbf16>
    %18 = arith.truncf %16 : vector<32x256xf32> to vector<32x256xbf16>
    %19 = tpu.concatenate %17, %18 in 1 : vector<32x256xbf16>, vector<32x256xbf16> -> vector<32x512xbf16>
    %c0_6 = arith.constant 0 : index
    %c0_7 = arith.constant 0 : index
    %20 = vector.load %arg4[%c0_6, %c0_7] : memref<512x128xbf16, #tpu.memory_space<vmem>>, vector<512x128xbf16>
    %cst_8 = arith.constant dense<0.000000e+00> : vector<32x128xf32>
    %21 = tpu.matmul %19, %20, %cst_8 {dimension_numbers = #tpu.dot_dimension_numbers<[1], [0], [0], [1], [0, 0, 1, 1], [], []>} : vector<32x512xbf16>, vector<512x128xbf16>, vector<32x128xf32> -> vector<32x128xf32>
    %c0_9 = arith.constant 0 : index
    %c0_10 = arith.constant 0 : index
    %22 = vector.load %arg5[%c0_9, %c0_10] : memref<1x128xf32, #tpu.memory_space<vmem>>, vector<1x128xf32>
    %23 = vector.broadcast %22 : vector<1x128xf32> to vector<32x128xf32>
    %24 = arith.addf %21, %23 : vector<32x128xf32>
    %cst_11 = arith.constant 0.000000e+00 : f32
    %25 = vector.broadcast %cst_11 : f32 to vector<32x128xf32>
    %26 = arith.maximumf %24, %25 : vector<32x128xf32>
    %27 = arith.truncf %26 : vector<32x128xf32> to vector<32x128xbf16>
    %c0_12 = arith.constant 0 : index
    %c0_13 = arith.constant 0 : index
    %28 = vector.load %arg6[%c0_12, %c0_13] : memref<128x128xbf16, #tpu.memory_space<vmem>>, vector<128x128xbf16>
    %cst_14 = arith.constant dense<0.000000e+00> : vector<32x128xf32>
    %29 = tpu.matmul %27, %28, %cst_14 {dimension_numbers = #tpu.dot_dimension_numbers<[1], [0], [0], [1], [0, 0, 1, 1], [], []>} : vector<32x128xbf16>, vector<128x128xbf16>, vector<32x128xf32> -> vector<32x128xf32>
    %c0_15 = arith.constant 0 : index
    %c0_16 = arith.constant 0 : index
    %30 = vector.load %arg7[%c0_15, %c0_16] : memref<1x128xf32, #tpu.memory_space<vmem>>, vector<1x128xf32>
    %31 = vector.broadcast %30 : vector<1x128xf32> to vector<32x128xf32>
    %32 = arith.addf %29, %31 : vector<32x128xf32>
    %33 = arith.truncf %32 : vector<32x128xf32> to vector<32x128xbf16>
    %c0_17 = arith.constant 0 : index
    %c0_18 = arith.constant 0 : index
    %34 = vector.load %arg8[%c0_17, %c0_18] : memref<32x128xbf16, #tpu.memory_space<vmem>>, vector<32x128xbf16>
    tpu.vector_store %arg8[%c0_17, %c0_18], %33 {strides = array<i32>} : memref<32x128xbf16, #tpu.memory_space<vmem>>, vector<32x128xbf16>,
    return
  }
  func.func @transform_0(%arg0: i32) -> (i32, i32) {
    %c0_i32 = arith.constant 0 : i32
    %c0_i32_0 = arith.constant 0 : i32
    return %arg0, %c0_i32 : i32, i32
  }
  func.func @transform_1(%arg0: i32) -> (i32, i32) {
    %c0_i32 = arith.constant 0 : i32
    %c0_i32_0 = arith.constant 0 : i32
    return %arg0, %c0_i32 : i32, i32
  }
  func.func @transform_2(%arg0: i32) -> (i32, i32) {
    %c0_i32 = arith.constant 0 : i32
    %c0_i32_0 = arith.constant 0 : i32
    %c0_i32_1 = arith.constant 0 : i32
    return %c0_i32, %c0_i32_0 : i32, i32
  }
  func.func @transform_3(%arg0: i32) -> (i32, i32) {
    %c0_i32 = arith.constant 0 : i32
    %c0_i32_0 = arith.constant 0 : i32
    %c0_i32_1 = arith.constant 0 : i32
    return %c0_i32, %c0_i32_0 : i32, i32
  }
  func.func @transform_4(%arg0: i32) -> (i32, i32) {
    %c0_i32 = arith.constant 0 : i32
    %c0_i32_0 = arith.constant 0 : i32
    %c0_i32_1 = arith.constant 0 : i32
    return %c0_i32, %c0_i32_0 : i32, i32
  }
  func.func @transform_5(%arg0: i32) -> (i32, i32) {
    %c0_i32 = arith.constant 0 : i32
    %c0_i32_0 = arith.constant 0 : i32
    %c0_i32_1 = arith.constant 0 : i32
    return %c0_i32, %c0_i32_0 : i32, i32
  }
  func.func @transform_6(%arg0: i32) -> (i32, i32) {
    %c0_i32 = arith.constant 0 : i32
    %c0_i32_0 = arith.constant 0 : i32
    %c0_i32_1 = arith.constant 0 : i32
    return %c0_i32, %c0_i32_0 : i32, i32
  }
  func.func @transform_7(%arg0: i32) -> (i32, i32) {
    %c0_i32 = arith.constant 0 : i32
    %c0_i32_0 = arith.constant 0 : i32
    return %arg0, %c0_i32 : i32, i32
  }
}

module attributes {stable_mosaic.version = 11 : i64} {
  func.func @_bn_relu_mean_kernel(%arg0: i32, %arg1: memref<8x128xf32, #tpu.memory_space<vmem>>, %arg2: memref<8x1xf32, #tpu.memory_space<vmem>>, %arg3: memref<1x128xf32, #tpu.memory_space<vmem>>, %arg4: memref<1x128xf32, #tpu.memory_space<vmem>>, %arg5: memref<8x128xf32, #tpu.memory_space<vmem>>) attributes {dimension_semantics = [#tpu.dimension_semantics<parallel>], iteration_bounds = array<i64: 1>, scalar_prefetch = 0 : i64, scratch_operands = 0 : i64, tpu.core_type = #tpu.core_type<tc>, window_params = [{transform_indices = @transform_0, window_bounds = array<i64: 8, 128>}, {transform_indices = @transform_1, window_bounds = array<i64: 8, 1>}, {pipeline_mode = #tpu.pipeline_mode<synchronous>, transform_indices = @transform_2, window_bounds = array<i64: 1, 128>}, {pipeline_mode = #tpu.pipeline_mode<synchronous>, transform_indices = @transform_3, window_bounds = array<i64: 1, 128>}, {transform_indices = @transform_4, window_bounds = array<i64: 8, 128>}]} {
    %c0 = arith.constant 0 : index
    %c0_0 = arith.constant 0 : index
    %0 = vector.load %arg1[%c0, %c0_0] : memref<8x128xf32, #tpu.memory_space<vmem>>, vector<8x128xf32>
    %c0_1 = arith.constant 0 : index
    %c0_2 = arith.constant 0 : index
    %1 = vector.load %arg2[%c0_1, %c0_2] : memref<8x1xf32, #tpu.memory_space<vmem>>, vector<8x1xf32>
    %2 = vector.broadcast %1 : vector<8x1xf32> to vector<8x128xf32>
    %3 = arith.mulf %0, %2 : vector<8x128xf32>
    %c0_3 = arith.constant 0 : index
    %c0_4 = arith.constant 0 : index
    %4 = vector.load %arg3[%c0_3, %c0_4] : memref<1x128xf32, #tpu.memory_space<vmem>>, vector<1x128xf32>
    %5 = vector.broadcast %4 : vector<1x128xf32> to vector<8x128xf32>
    %6 = arith.mulf %3, %5 : vector<8x128xf32>
    %c0_5 = arith.constant 0 : index
    %c0_6 = arith.constant 0 : index
    %7 = vector.load %arg4[%c0_5, %c0_6] : memref<1x128xf32, #tpu.memory_space<vmem>>, vector<1x128xf32>
    %8 = vector.broadcast %7 : vector<1x128xf32> to vector<8x128xf32>
    %9 = arith.addf %6, %8 : vector<8x128xf32>
    %cst = arith.constant 0.000000e+00 : f32
    %10 = vector.broadcast %cst : f32 to vector<8x128xf32>
    %11 = arith.maximumf %9, %10 : vector<8x128xf32>
    %c0_7 = arith.constant 0 : index
    %c0_8 = arith.constant 0 : index
    %12 = vector.load %arg5[%c0_7, %c0_8] : memref<8x128xf32, #tpu.memory_space<vmem>>, vector<8x128xf32>
    tpu.vector_store %arg5[%c0_7, %c0_8], %11 {strides = array<i32>} : memref<8x128xf32, #tpu.memory_space<vmem>>, vector<8x128xf32>,
    return
  }
  func.func @transform_0(%arg0: i32) -> (i32, i32) {
    %c0_i32 = arith.constant 0 : i32
    %c0_i32_0 = arith.constant 0 : i32
    return %arg0, %c0_i32 : i32, i32
  }
  func.func @transform_1(%arg0: i32) -> (i32, i32) {
    %c0_i32 = arith.constant 0 : i32
    %c0_i32_0 = arith.constant 0 : i32
    return %arg0, %c0_i32 : i32, i32
  }
  func.func @transform_2(%arg0: i32) -> (i32, i32) {
    %c0_i32 = arith.constant 0 : i32
    %c0_i32_0 = arith.constant 0 : i32
    %c0_i32_1 = arith.constant 0 : i32
    return %c0_i32, %c0_i32_0 : i32, i32
  }
  func.func @transform_3(%arg0: i32) -> (i32, i32) {
    %c0_i32 = arith.constant 0 : i32
    %c0_i32_0 = arith.constant 0 : i32
    %c0_i32_1 = arith.constant 0 : i32
    return %c0_i32, %c0_i32_0 : i32, i32
  }
  func.func @transform_4(%arg0: i32) -> (i32, i32) {
    %c0_i32 = arith.constant 0 : i32
    %c0_i32_0 = arith.constant 0 : i32
    return %arg0, %c0_i32 : i32, i32
  }
}

module attributes {stable_mosaic.version = 11 : i64} {
  func.func @kernel(%arg0: i32, %arg1: memref<32x1xi32, #tpu.memory_space<vmem>>, %arg2: memref<32x1xi32, #tpu.memory_space<vmem>>, %arg3: memref<8x128xf32, #tpu.memory_space<vmem>>, %arg4: memref<256x256xbf16, #tpu.memory_space<vmem>>, %arg5: memref<1x256xf32, #tpu.memory_space<vmem>>, %arg6: memref<256x128xbf16, #tpu.memory_space<vmem>>, %arg7: memref<1x128xf32, #tpu.memory_space<vmem>>, %arg8: memref<32x128xbf16, #tpu.memory_space<vmem>>) attributes {dimension_semantics = [#tpu.dimension_semantics<parallel>], iteration_bounds = array<i64: 1>, scalar_prefetch = 0 : i64, scratch_operands = 0 : i64, tpu.core_type = #tpu.core_type<tc>, window_params = [{transform_indices = @transform_0, window_bounds = array<i64: 32, 1>}, {transform_indices = @transform_1, window_bounds = array<i64: 32, 1>}, {pipeline_mode = #tpu.pipeline_mode<synchronous>, transform_indices = @transform_2, window_bounds = array<i64: 8, 128>}, {pipeline_mode = #tpu.pipeline_mode<synchronous>, transform_indices = @transform_3, window_bounds = array<i64: 256, 256>}, {pipeline_mode = #tpu.pipeline_mode<synchronous>, transform_indices = @transform_4, window_bounds = array<i64: 1, 256>}, {pipeline_mode = #tpu.pipeline_mode<synchronous>, transform_indices = @transform_5, window_bounds = array<i64: 256, 128>}, {pipeline_mode = #tpu.pipeline_mode<synchronous>, transform_indices = @transform_6, window_bounds = array<i64: 1, 128>}, {transform_indices = @transform_7, window_bounds = array<i64: 32, 128>}]} {
    %c0 = arith.constant 0 : index
    %c0_0 = arith.constant 0 : index
    %0 = vector.load %arg3[%c0, %c0_0] : memref<8x128xf32, #tpu.memory_space<vmem>>, vector<8x128xf32>
    %c0_1 = arith.constant 0 : index
    %c0_2 = arith.constant 0 : index
    %1 = vector.load %arg1[%c0_1, %c0_2] : memref<32x1xi32, #tpu.memory_space<vmem>>, vector<32x1xi32>
    %c0_3 = arith.constant 0 : index
    %c0_4 = arith.constant 0 : index
    %2 = vector.load %arg2[%c0_3, %c0_4] : memref<32x1xi32, #tpu.memory_space<vmem>>, vector<32x1xi32>
    %3 = arith.truncf %0 : vector<8x128xf32> to vector<8x128xbf16>
    %4 = tpu.iota {dimensions = array<i32: 1>} : vector<32x8xi32>
    %5 = vector.broadcast %1 : vector<32x1xi32> to vector<32x8xi32>
    %6 = arith.cmpi eq, %5, %4 : vector<32x8xi32>
    %7 = arith.extui %6 : vector<32x8xi1> to vector<32x8xi32>
    %8 = arith.sitofp %7 : vector<32x8xi32> to vector<32x8xf32>
    %9 = arith.truncf %8 : vector<32x8xf32> to vector<32x8xbf16>
    %10 = vector.broadcast %2 : vector<32x1xi32> to vector<32x8xi32>
    %11 = arith.cmpi eq, %10, %4 : vector<32x8xi32>
    %12 = arith.extui %11 : vector<32x8xi1> to vector<32x8xi32>
    %13 = arith.sitofp %12 : vector<32x8xi32> to vector<32x8xf32>
    %14 = arith.truncf %13 : vector<32x8xf32> to vector<32x8xbf16>
    %cst = arith.constant dense<0.000000e+00> : vector<32x128xf32>
    %15 = tpu.matmul %9, %3, %cst {dimension_numbers = #tpu.dot_dimension_numbers<[1], [0], [0], [1], [0, 0, 1, 1], [], []>} : vector<32x8xbf16>, vector<8x128xbf16>, vector<32x128xf32> -> vector<32x128xf32>
    %cst_5 = arith.constant dense<0.000000e+00> : vector<32x128xf32>
    %16 = tpu.matmul %14, %3, %cst_5 {dimension_numbers = #tpu.dot_dimension_numbers<[1], [0], [0], [1], [0, 0, 1, 1], [], []>} : vector<32x8xbf16>, vector<8x128xbf16>, vector<32x128xf32> -> vector<32x128xf32>
    %17 = arith.truncf %15 : vector<32x128xf32> to vector<32x128xbf16>
    %18 = arith.truncf %16 : vector<32x128xf32> to vector<32x128xbf16>
    %19 = tpu.concatenate %17, %18 in 1 : vector<32x128xbf16>, vector<32x128xbf16> -> vector<32x256xbf16>
    %c0_6 = arith.constant 0 : index
    %c0_7 = arith.constant 0 : index
    %20 = vector.load %arg4[%c0_6, %c0_7] : memref<256x256xbf16, #tpu.memory_space<vmem>>, vector<256x256xbf16>
    %cst_8 = arith.constant dense<0.000000e+00> : vector<32x256xf32>
    %21 = tpu.matmul %19, %20, %cst_8 {dimension_numbers = #tpu.dot_dimension_numbers<[1], [0], [0], [1], [0, 0, 1, 1], [], []>} : vector<32x256xbf16>, vector<256x256xbf16>, vector<32x256xf32> -> vector<32x256xf32>
    %c0_9 = arith.constant 0 : index
    %c0_10 = arith.constant 0 : index
    %22 = vector.load %arg5[%c0_9, %c0_10] : memref<1x256xf32, #tpu.memory_space<vmem>>, vector<1x256xf32>
    %23 = vector.broadcast %22 : vector<1x256xf32> to vector<32x256xf32>
    %24 = arith.addf %21, %23 : vector<32x256xf32>
    %cst_11 = arith.constant 0.000000e+00 : f32
    %25 = vector.broadcast %cst_11 : f32 to vector<32x256xf32>
    %26 = arith.maximumf %24, %25 : vector<32x256xf32>
    %27 = arith.truncf %26 : vector<32x256xf32> to vector<32x256xbf16>
    %c0_12 = arith.constant 0 : index
    %c0_13 = arith.constant 0 : index
    %28 = vector.load %arg6[%c0_12, %c0_13] : memref<256x128xbf16, #tpu.memory_space<vmem>>, vector<256x128xbf16>
    %cst_14 = arith.constant dense<0.000000e+00> : vector<32x128xf32>
    %29 = tpu.matmul %27, %28, %cst_14 {dimension_numbers = #tpu.dot_dimension_numbers<[1], [0], [0], [1], [0, 0, 1, 1], [], []>} : vector<32x256xbf16>, vector<256x128xbf16>, vector<32x128xf32> -> vector<32x128xf32>
    %c0_15 = arith.constant 0 : index
    %c0_16 = arith.constant 0 : index
    %30 = vector.load %arg7[%c0_15, %c0_16] : memref<1x128xf32, #tpu.memory_space<vmem>>, vector<1x128xf32>
    %31 = vector.broadcast %30 : vector<1x128xf32> to vector<32x128xf32>
    %32 = arith.addf %29, %31 : vector<32x128xf32>
    %33 = arith.truncf %32 : vector<32x128xf32> to vector<32x128xbf16>
    %c0_17 = arith.constant 0 : index
    %c0_18 = arith.constant 0 : index
    %34 = vector.load %arg8[%c0_17, %c0_18] : memref<32x128xbf16, #tpu.memory_space<vmem>>, vector<32x128xbf16>
    tpu.vector_store %arg8[%c0_17, %c0_18], %33 {strides = array<i32>} : memref<32x128xbf16, #tpu.memory_space<vmem>>, vector<32x128xbf16>,
    return
  }
  func.func @transform_0(%arg0: i32) -> (i32, i32) {
    %c0_i32 = arith.constant 0 : i32
    %c0_i32_0 = arith.constant 0 : i32
    return %arg0, %c0_i32 : i32, i32
  }
  func.func @transform_1(%arg0: i32) -> (i32, i32) {
    %c0_i32 = arith.constant 0 : i32
    %c0_i32_0 = arith.constant 0 : i32
    return %arg0, %c0_i32 : i32, i32
  }
  func.func @transform_2(%arg0: i32) -> (i32, i32) {
    %c0_i32 = arith.constant 0 : i32
    %c0_i32_0 = arith.constant 0 : i32
    %c0_i32_1 = arith.constant 0 : i32
    return %c0_i32, %c0_i32_0 : i32, i32
  }
  func.func @transform_3(%arg0: i32) -> (i32, i32) {
    %c0_i32 = arith.constant 0 : i32
    %c0_i32_0 = arith.constant 0 : i32
    %c0_i32_1 = arith.constant 0 : i32
    return %c0_i32, %c0_i32_0 : i32, i32
  }
  func.func @transform_4(%arg0: i32) -> (i32, i32) {
    %c0_i32 = arith.constant 0 : i32
    %c0_i32_0 = arith.constant 0 : i32
    %c0_i32_1 = arith.constant 0 : i32
    return %c0_i32, %c0_i32_0 : i32, i32
  }
  func.func @transform_5(%arg0: i32) -> (i32, i32) {
    %c0_i32 = arith.constant 0 : i32
    %c0_i32_0 = arith.constant 0 : i32
    %c0_i32_1 = arith.constant 0 : i32
    return %c0_i32, %c0_i32_0 : i32, i32
  }
  func.func @transform_6(%arg0: i32) -> (i32, i32) {
    %c0_i32 = arith.constant 0 : i32
    %c0_i32_0 = arith.constant 0 : i32
    %c0_i32_1 = arith.constant 0 : i32
    return %c0_i32, %c0_i32_0 : i32, i32
  }
  func.func @transform_7(%arg0: i32) -> (i32, i32) {
    %c0_i32 = arith.constant 0 : i32
    %c0_i32_0 = arith.constant 0 : i32
    return %arg0, %c0_i32 : i32, i32
  }
}

module attributes {stable_mosaic.version = 11 : i64} {
  func.func @kernel(%arg0: i32, %arg1: memref<32x1xi32, #tpu.memory_space<vmem>>, %arg2: memref<32x1xi32, #tpu.memory_space<vmem>>, %arg3: memref<8x128xf32, #tpu.memory_space<vmem>>, %arg4: memref<256x512xbf16, #tpu.memory_space<vmem>>, %arg5: memref<1x512xf32, #tpu.memory_space<vmem>>, %arg6: memref<512x256xbf16, #tpu.memory_space<vmem>>, %arg7: memref<1x256xf32, #tpu.memory_space<vmem>>, %arg8: memref<32x256xbf16, #tpu.memory_space<vmem>>) attributes {dimension_semantics = [#tpu.dimension_semantics<parallel>], iteration_bounds = array<i64: 1>, scalar_prefetch = 0 : i64, scratch_operands = 0 : i64, tpu.core_type = #tpu.core_type<tc>, window_params = [{transform_indices = @transform_0, window_bounds = array<i64: 32, 1>}, {transform_indices = @transform_1, window_bounds = array<i64: 32, 1>}, {pipeline_mode = #tpu.pipeline_mode<synchronous>, transform_indices = @transform_2, window_bounds = array<i64: 8, 128>}, {pipeline_mode = #tpu.pipeline_mode<synchronous>, transform_indices = @transform_3, window_bounds = array<i64: 256, 512>}, {pipeline_mode = #tpu.pipeline_mode<synchronous>, transform_indices = @transform_4, window_bounds = array<i64: 1, 512>}, {pipeline_mode = #tpu.pipeline_mode<synchronous>, transform_indices = @transform_5, window_bounds = array<i64: 512, 256>}, {pipeline_mode = #tpu.pipeline_mode<synchronous>, transform_indices = @transform_6, window_bounds = array<i64: 1, 256>}, {transform_indices = @transform_7, window_bounds = array<i64: 32, 256>}]} {
    %c0 = arith.constant 0 : index
    %c0_0 = arith.constant 0 : index
    %0 = vector.load %arg3[%c0, %c0_0] : memref<8x128xf32, #tpu.memory_space<vmem>>, vector<8x128xf32>
    %c0_1 = arith.constant 0 : index
    %c0_2 = arith.constant 0 : index
    %1 = vector.load %arg1[%c0_1, %c0_2] : memref<32x1xi32, #tpu.memory_space<vmem>>, vector<32x1xi32>
    %c0_3 = arith.constant 0 : index
    %c0_4 = arith.constant 0 : index
    %2 = vector.load %arg2[%c0_3, %c0_4] : memref<32x1xi32, #tpu.memory_space<vmem>>, vector<32x1xi32>
    %3 = arith.truncf %0 : vector<8x128xf32> to vector<8x128xbf16>
    %4 = tpu.iota {dimensions = array<i32: 1>} : vector<32x8xi32>
    %5 = vector.broadcast %1 : vector<32x1xi32> to vector<32x8xi32>
    %6 = arith.cmpi eq, %5, %4 : vector<32x8xi32>
    %7 = arith.extui %6 : vector<32x8xi1> to vector<32x8xi32>
    %8 = arith.sitofp %7 : vector<32x8xi32> to vector<32x8xf32>
    %9 = arith.truncf %8 : vector<32x8xf32> to vector<32x8xbf16>
    %10 = vector.broadcast %2 : vector<32x1xi32> to vector<32x8xi32>
    %11 = arith.cmpi eq, %10, %4 : vector<32x8xi32>
    %12 = arith.extui %11 : vector<32x8xi1> to vector<32x8xi32>
    %13 = arith.sitofp %12 : vector<32x8xi32> to vector<32x8xf32>
    %14 = arith.truncf %13 : vector<32x8xf32> to vector<32x8xbf16>
    %cst = arith.constant dense<0.000000e+00> : vector<32x128xf32>
    %15 = tpu.matmul %9, %3, %cst {dimension_numbers = #tpu.dot_dimension_numbers<[1], [0], [0], [1], [0, 0, 1, 1], [], []>} : vector<32x8xbf16>, vector<8x128xbf16>, vector<32x128xf32> -> vector<32x128xf32>
    %cst_5 = arith.constant dense<0.000000e+00> : vector<32x128xf32>
    %16 = tpu.matmul %14, %3, %cst_5 {dimension_numbers = #tpu.dot_dimension_numbers<[1], [0], [0], [1], [0, 0, 1, 1], [], []>} : vector<32x8xbf16>, vector<8x128xbf16>, vector<32x128xf32> -> vector<32x128xf32>
    %17 = arith.truncf %15 : vector<32x128xf32> to vector<32x128xbf16>
    %18 = arith.truncf %16 : vector<32x128xf32> to vector<32x128xbf16>
    %19 = tpu.concatenate %17, %18 in 1 : vector<32x128xbf16>, vector<32x128xbf16> -> vector<32x256xbf16>
    %c0_6 = arith.constant 0 : index
    %c0_7 = arith.constant 0 : index
    %20 = vector.load %arg4[%c0_6, %c0_7] : memref<256x512xbf16, #tpu.memory_space<vmem>>, vector<256x512xbf16>
    %cst_8 = arith.constant dense<0.000000e+00> : vector<32x512xf32>
    %21 = tpu.matmul %19, %20, %cst_8 {dimension_numbers = #tpu.dot_dimension_numbers<[1], [0], [0], [1], [0, 0, 1, 1], [], []>} : vector<32x256xbf16>, vector<256x512xbf16>, vector<32x512xf32> -> vector<32x512xf32>
    %c0_9 = arith.constant 0 : index
    %c0_10 = arith.constant 0 : index
    %22 = vector.load %arg5[%c0_9, %c0_10] : memref<1x512xf32, #tpu.memory_space<vmem>>, vector<1x512xf32>
    %23 = vector.broadcast %22 : vector<1x512xf32> to vector<32x512xf32>
    %24 = arith.addf %21, %23 : vector<32x512xf32>
    %cst_11 = arith.constant 0.000000e+00 : f32
    %25 = vector.broadcast %cst_11 : f32 to vector<32x512xf32>
    %26 = arith.maximumf %24, %25 : vector<32x512xf32>
    %27 = arith.truncf %26 : vector<32x512xf32> to vector<32x512xbf16>
    %c0_12 = arith.constant 0 : index
    %c0_13 = arith.constant 0 : index
    %28 = vector.load %arg6[%c0_12, %c0_13] : memref<512x256xbf16, #tpu.memory_space<vmem>>, vector<512x256xbf16>
    %cst_14 = arith.constant dense<0.000000e+00> : vector<32x256xf32>
    %29 = tpu.matmul %27, %28, %cst_14 {dimension_numbers = #tpu.dot_dimension_numbers<[1], [0], [0], [1], [0, 0, 1, 1], [], []>} : vector<32x512xbf16>, vector<512x256xbf16>, vector<32x256xf32> -> vector<32x256xf32>
    %c0_15 = arith.constant 0 : index
    %c0_16 = arith.constant 0 : index
    %30 = vector.load %arg7[%c0_15, %c0_16] : memref<1x256xf32, #tpu.memory_space<vmem>>, vector<1x256xf32>
    %31 = vector.broadcast %30 : vector<1x256xf32> to vector<32x256xf32>
    %32 = arith.addf %29, %31 : vector<32x256xf32>
    %33 = arith.truncf %32 : vector<32x256xf32> to vector<32x256xbf16>
    %c0_17 = arith.constant 0 : index
    %c0_18 = arith.constant 0 : index
    %34 = vector.load %arg8[%c0_17, %c0_18] : memref<32x256xbf16, #tpu.memory_space<vmem>>, vector<32x256xbf16>
    tpu.vector_store %arg8[%c0_17, %c0_18], %33 {strides = array<i32>} : memref<32x256xbf16, #tpu.memory_space<vmem>>, vector<32x256xbf16>,
    return
  }
  func.func @transform_0(%arg0: i32) -> (i32, i32) {
    %c0_i32 = arith.constant 0 : i32
    %c0_i32_0 = arith.constant 0 : i32
    return %arg0, %c0_i32 : i32, i32
  }
  func.func @transform_1(%arg0: i32) -> (i32, i32) {
    %c0_i32 = arith.constant 0 : i32
    %c0_i32_0 = arith.constant 0 : i32
    return %arg0, %c0_i32 : i32, i32
  }
  func.func @transform_2(%arg0: i32) -> (i32, i32) {
    %c0_i32 = arith.constant 0 : i32
    %c0_i32_0 = arith.constant 0 : i32
    %c0_i32_1 = arith.constant 0 : i32
    return %c0_i32, %c0_i32_0 : i32, i32
  }
  func.func @transform_3(%arg0: i32) -> (i32, i32) {
    %c0_i32 = arith.constant 0 : i32
    %c0_i32_0 = arith.constant 0 : i32
    %c0_i32_1 = arith.constant 0 : i32
    return %c0_i32, %c0_i32_0 : i32, i32
  }
  func.func @transform_4(%arg0: i32) -> (i32, i32) {
    %c0_i32 = arith.constant 0 : i32
    %c0_i32_0 = arith.constant 0 : i32
    %c0_i32_1 = arith.constant 0 : i32
    return %c0_i32, %c0_i32_0 : i32, i32
  }
  func.func @transform_5(%arg0: i32) -> (i32, i32) {
    %c0_i32 = arith.constant 0 : i32
    %c0_i32_0 = arith.constant 0 : i32
    %c0_i32_1 = arith.constant 0 : i32
    return %c0_i32, %c0_i32_0 : i32, i32
  }
  func.func @transform_6(%arg0: i32) -> (i32, i32) {
    %c0_i32 = arith.constant 0 : i32
    %c0_i32_0 = arith.constant 0 : i32
    %c0_i32_1 = arith.constant 0 : i32
    return %c0_i32, %c0_i32_0 : i32, i32
  }
  func.func @transform_7(%arg0: i32) -> (i32, i32) {
    %c0_i32 = arith.constant 0 : i32
    %c0_i32_0 = arith.constant 0 : i32
    return %arg0, %c0_i32 : i32, i32
  }
}

module attributes {stable_mosaic.version = 11 : i64} {
  func.func @_bn_relu_mean_kernel(%arg0: i32, %arg1: memref<8x256xf32, #tpu.memory_space<vmem>>, %arg2: memref<8x1xf32, #tpu.memory_space<vmem>>, %arg3: memref<1x256xf32, #tpu.memory_space<vmem>>, %arg4: memref<1x256xf32, #tpu.memory_space<vmem>>, %arg5: memref<8x256xf32, #tpu.memory_space<vmem>>) attributes {dimension_semantics = [#tpu.dimension_semantics<parallel>], iteration_bounds = array<i64: 1>, scalar_prefetch = 0 : i64, scratch_operands = 0 : i64, tpu.core_type = #tpu.core_type<tc>, window_params = [{transform_indices = @transform_0, window_bounds = array<i64: 8, 256>}, {transform_indices = @transform_1, window_bounds = array<i64: 8, 1>}, {pipeline_mode = #tpu.pipeline_mode<synchronous>, transform_indices = @transform_2, window_bounds = array<i64: 1, 256>}, {pipeline_mode = #tpu.pipeline_mode<synchronous>, transform_indices = @transform_3, window_bounds = array<i64: 1, 256>}, {transform_indices = @transform_4, window_bounds = array<i64: 8, 256>}]} {
    %c0 = arith.constant 0 : index
    %c0_0 = arith.constant 0 : index
    %0 = vector.load %arg1[%c0, %c0_0] : memref<8x256xf32, #tpu.memory_space<vmem>>, vector<8x256xf32>
    %c0_1 = arith.constant 0 : index
    %c0_2 = arith.constant 0 : index
    %1 = vector.load %arg2[%c0_1, %c0_2] : memref<8x1xf32, #tpu.memory_space<vmem>>, vector<8x1xf32>
    %2 = vector.broadcast %1 : vector<8x1xf32> to vector<8x256xf32>
    %3 = arith.mulf %0, %2 : vector<8x256xf32>
    %c0_3 = arith.constant 0 : index
    %c0_4 = arith.constant 0 : index
    %4 = vector.load %arg3[%c0_3, %c0_4] : memref<1x256xf32, #tpu.memory_space<vmem>>, vector<1x256xf32>
    %5 = vector.broadcast %4 : vector<1x256xf32> to vector<8x256xf32>
    %6 = arith.mulf %3, %5 : vector<8x256xf32>
    %c0_5 = arith.constant 0 : index
    %c0_6 = arith.constant 0 : index
    %7 = vector.load %arg4[%c0_5, %c0_6] : memref<1x256xf32, #tpu.memory_space<vmem>>, vector<1x256xf32>
    %8 = vector.broadcast %7 : vector<1x256xf32> to vector<8x256xf32>
    %9 = arith.addf %6, %8 : vector<8x256xf32>
    %cst = arith.constant 0.000000e+00 : f32
    %10 = vector.broadcast %cst : f32 to vector<8x256xf32>
    %11 = arith.maximumf %9, %10 : vector<8x256xf32>
    %c0_7 = arith.constant 0 : index
    %c0_8 = arith.constant 0 : index
    %12 = vector.load %arg5[%c0_7, %c0_8] : memref<8x256xf32, #tpu.memory_space<vmem>>, vector<8x256xf32>
    tpu.vector_store %arg5[%c0_7, %c0_8], %11 {strides = array<i32>} : memref<8x256xf32, #tpu.memory_space<vmem>>, vector<8x256xf32>,
    return
  }
  func.func @transform_0(%arg0: i32) -> (i32, i32) {
    %c0_i32 = arith.constant 0 : i32
    %c0_i32_0 = arith.constant 0 : i32
    return %arg0, %c0_i32 : i32, i32
  }
  func.func @transform_1(%arg0: i32) -> (i32, i32) {
    %c0_i32 = arith.constant 0 : i32
    %c0_i32_0 = arith.constant 0 : i32
    return %arg0, %c0_i32 : i32, i32
  }
  func.func @transform_2(%arg0: i32) -> (i32, i32) {
    %c0_i32 = arith.constant 0 : i32
    %c0_i32_0 = arith.constant 0 : i32
    %c0_i32_1 = arith.constant 0 : i32
    return %c0_i32, %c0_i32_0 : i32, i32
  }
  func.func @transform_3(%arg0: i32) -> (i32, i32) {
    %c0_i32 = arith.constant 0 : i32
    %c0_i32_0 = arith.constant 0 : i32
    %c0_i32_1 = arith.constant 0 : i32
    return %c0_i32, %c0_i32_0 : i32, i32
  }
  func.func @transform_4(%arg0: i32) -> (i32, i32) {
    %c0_i32 = arith.constant 0 : i32
    %c0_i32_0 = arith.constant 0 : i32
    return %arg0, %c0_i32 : i32, i32
  }
}

module attributes {stable_mosaic.version = 11 : i64} {
  func.func @kernel(%arg0: i32, %arg1: memref<32x1xi32, #tpu.memory_space<vmem>>, %arg2: memref<32x1xi32, #tpu.memory_space<vmem>>, %arg3: memref<8x256xf32, #tpu.memory_space<vmem>>, %arg4: memref<512x512xbf16, #tpu.memory_space<vmem>>, %arg5: memref<1x512xf32, #tpu.memory_space<vmem>>, %arg6: memref<512x256xbf16, #tpu.memory_space<vmem>>, %arg7: memref<1x256xf32, #tpu.memory_space<vmem>>, %arg8: memref<32x256xbf16, #tpu.memory_space<vmem>>) attributes {dimension_semantics = [#tpu.dimension_semantics<parallel>], iteration_bounds = array<i64: 1>, scalar_prefetch = 0 : i64, scratch_operands = 0 : i64, tpu.core_type = #tpu.core_type<tc>, window_params = [{transform_indices = @transform_0, window_bounds = array<i64: 32, 1>}, {transform_indices = @transform_1, window_bounds = array<i64: 32, 1>}, {pipeline_mode = #tpu.pipeline_mode<synchronous>, transform_indices = @transform_2, window_bounds = array<i64: 8, 256>}, {pipeline_mode = #tpu.pipeline_mode<synchronous>, transform_indices = @transform_3, window_bounds = array<i64: 512, 512>}, {pipeline_mode = #tpu.pipeline_mode<synchronous>, transform_indices = @transform_4, window_bounds = array<i64: 1, 512>}, {pipeline_mode = #tpu.pipeline_mode<synchronous>, transform_indices = @transform_5, window_bounds = array<i64: 512, 256>}, {pipeline_mode = #tpu.pipeline_mode<synchronous>, transform_indices = @transform_6, window_bounds = array<i64: 1, 256>}, {transform_indices = @transform_7, window_bounds = array<i64: 32, 256>}]} {
    %c0 = arith.constant 0 : index
    %c0_0 = arith.constant 0 : index
    %0 = vector.load %arg3[%c0, %c0_0] : memref<8x256xf32, #tpu.memory_space<vmem>>, vector<8x256xf32>
    %c0_1 = arith.constant 0 : index
    %c0_2 = arith.constant 0 : index
    %1 = vector.load %arg1[%c0_1, %c0_2] : memref<32x1xi32, #tpu.memory_space<vmem>>, vector<32x1xi32>
    %c0_3 = arith.constant 0 : index
    %c0_4 = arith.constant 0 : index
    %2 = vector.load %arg2[%c0_3, %c0_4] : memref<32x1xi32, #tpu.memory_space<vmem>>, vector<32x1xi32>
    %3 = arith.truncf %0 : vector<8x256xf32> to vector<8x256xbf16>
    %4 = tpu.iota {dimensions = array<i32: 1>} : vector<32x8xi32>
    %5 = vector.broadcast %1 : vector<32x1xi32> to vector<32x8xi32>
    %6 = arith.cmpi eq, %5, %4 : vector<32x8xi32>
    %7 = arith.extui %6 : vector<32x8xi1> to vector<32x8xi32>
    %8 = arith.sitofp %7 : vector<32x8xi32> to vector<32x8xf32>
    %9 = arith.truncf %8 : vector<32x8xf32> to vector<32x8xbf16>
    %10 = vector.broadcast %2 : vector<32x1xi32> to vector<32x8xi32>
    %11 = arith.cmpi eq, %10, %4 : vector<32x8xi32>
    %12 = arith.extui %11 : vector<32x8xi1> to vector<32x8xi32>
    %13 = arith.sitofp %12 : vector<32x8xi32> to vector<32x8xf32>
    %14 = arith.truncf %13 : vector<32x8xf32> to vector<32x8xbf16>
    %cst = arith.constant dense<0.000000e+00> : vector<32x256xf32>
    %15 = tpu.matmul %9, %3, %cst {dimension_numbers = #tpu.dot_dimension_numbers<[1], [0], [0], [1], [0, 0, 1, 1], [], []>} : vector<32x8xbf16>, vector<8x256xbf16>, vector<32x256xf32> -> vector<32x256xf32>
    %cst_5 = arith.constant dense<0.000000e+00> : vector<32x256xf32>
    %16 = tpu.matmul %14, %3, %cst_5 {dimension_numbers = #tpu.dot_dimension_numbers<[1], [0], [0], [1], [0, 0, 1, 1], [], []>} : vector<32x8xbf16>, vector<8x256xbf16>, vector<32x256xf32> -> vector<32x256xf32>
    %17 = arith.truncf %15 : vector<32x256xf32> to vector<32x256xbf16>
    %18 = arith.truncf %16 : vector<32x256xf32> to vector<32x256xbf16>
    %19 = tpu.concatenate %17, %18 in 1 : vector<32x256xbf16>, vector<32x256xbf16> -> vector<32x512xbf16>
    %c0_6 = arith.constant 0 : index
    %c0_7 = arith.constant 0 : index
    %20 = vector.load %arg4[%c0_6, %c0_7] : memref<512x512xbf16, #tpu.memory_space<vmem>>, vector<512x512xbf16>
    %cst_8 = arith.constant dense<0.000000e+00> : vector<32x512xf32>
    %21 = tpu.matmul %19, %20, %cst_8 {dimension_numbers = #tpu.dot_dimension_numbers<[1], [0], [0], [1], [0, 0, 1, 1], [], []>} : vector<32x512xbf16>, vector<512x512xbf16>, vector<32x512xf32> -> vector<32x512xf32>
    %c0_9 = arith.constant 0 : index
    %c0_10 = arith.constant 0 : index
    %22 = vector.load %arg5[%c0_9, %c0_10] : memref<1x512xf32, #tpu.memory_space<vmem>>, vector<1x512xf32>
    %23 = vector.broadcast %22 : vector<1x512xf32> to vector<32x512xf32>
    %24 = arith.addf %21, %23 : vector<32x512xf32>
    %cst_11 = arith.constant 0.000000e+00 : f32
    %25 = vector.broadcast %cst_11 : f32 to vector<32x512xf32>
    %26 = arith.maximumf %24, %25 : vector<32x512xf32>
    %27 = arith.truncf %26 : vector<32x512xf32> to vector<32x512xbf16>
    %c0_12 = arith.constant 0 : index
    %c0_13 = arith.constant 0 : index
    %28 = vector.load %arg6[%c0_12, %c0_13] : memref<512x256xbf16, #tpu.memory_space<vmem>>, vector<512x256xbf16>
    %cst_14 = arith.constant dense<0.000000e+00> : vector<32x256xf32>
    %29 = tpu.matmul %27, %28, %cst_14 {dimension_numbers = #tpu.dot_dimension_numbers<[1], [0], [0], [1], [0, 0, 1, 1], [], []>} : vector<32x512xbf16>, vector<512x256xbf16>, vector<32x256xf32> -> vector<32x256xf32>
    %c0_15 = arith.constant 0 : index
    %c0_16 = arith.constant 0 : index
    %30 = vector.load %arg7[%c0_15, %c0_16] : memref<1x256xf32, #tpu.memory_space<vmem>>, vector<1x256xf32>
    %31 = vector.broadcast %30 : vector<1x256xf32> to vector<32x256xf32>
    %32 = arith.addf %29, %31 : vector<32x256xf32>
    %33 = arith.truncf %32 : vector<32x256xf32> to vector<32x256xbf16>
    %c0_17 = arith.constant 0 : index
    %c0_18 = arith.constant 0 : index
    %34 = vector.load %arg8[%c0_17, %c0_18] : memref<32x256xbf16, #tpu.memory_space<vmem>>, vector<32x256xbf16>
    tpu.vector_store %arg8[%c0_17, %c0_18], %33 {strides = array<i32>} : memref<32x256xbf16, #tpu.memory_space<vmem>>, vector<32x256xbf16>,
    return
  }
  func.func @transform_0(%arg0: i32) -> (i32, i32) {
    %c0_i32 = arith.constant 0 : i32
    %c0_i32_0 = arith.constant 0 : i32
    return %arg0, %c0_i32 : i32, i32
  }
  func.func @transform_1(%arg0: i32) -> (i32, i32) {
    %c0_i32 = arith.constant 0 : i32
    %c0_i32_0 = arith.constant 0 : i32
    return %arg0, %c0_i32 : i32, i32
  }
  func.func @transform_2(%arg0: i32) -> (i32, i32) {
    %c0_i32 = arith.constant 0 : i32
    %c0_i32_0 = arith.constant 0 : i32
    %c0_i32_1 = arith.constant 0 : i32
    return %c0_i32, %c0_i32_0 : i32, i32
  }
  func.func @transform_3(%arg0: i32) -> (i32, i32) {
    %c0_i32 = arith.constant 0 : i32
    %c0_i32_0 = arith.constant 0 : i32
    %c0_i32_1 = arith.constant 0 : i32
    return %c0_i32, %c0_i32_0 : i32, i32
  }
  func.func @transform_4(%arg0: i32) -> (i32, i32) {
    %c0_i32 = arith.constant 0 : i32
    %c0_i32_0 = arith.constant 0 : i32
    %c0_i32_1 = arith.constant 0 : i32
    return %c0_i32, %c0_i32_0 : i32, i32
  }
  func.func @transform_5(%arg0: i32) -> (i32, i32) {
    %c0_i32 = arith.constant 0 : i32
    %c0_i32_0 = arith.constant 0 : i32
    %c0_i32_1 = arith.constant 0 : i32
    return %c0_i32, %c0_i32_0 : i32, i32
  }
  func.func @transform_6(%arg0: i32) -> (i32, i32) {
    %c0_i32 = arith.constant 0 : i32
    %c0_i32_0 = arith.constant 0 : i32
    %c0_i32_1 = arith.constant 0 : i32
    return %c0_i32, %c0_i32_0 : i32, i32
  }
  func.func @transform_7(%arg0: i32) -> (i32, i32) {
    %c0_i32 = arith.constant 0 : i32
    %c0_i32_0 = arith.constant 0 : i32
    return %arg0, %c0_i32 : i32, i32
  }
}

module attributes {stable_mosaic.version = 11 : i64} {
  func.func @kernel(%arg0: i32, %arg1: memref<32x1xi32, #tpu.memory_space<vmem>>, %arg2: memref<32x1xi32, #tpu.memory_space<vmem>>, %arg3: memref<8x256xf32, #tpu.memory_space<vmem>>, %arg4: memref<512x1024xbf16, #tpu.memory_space<vmem>>, %arg5: memref<1x1024xf32, #tpu.memory_space<vmem>>, %arg6: memref<1024x512xbf16, #tpu.memory_space<vmem>>, %arg7: memref<1x512xf32, #tpu.memory_space<vmem>>, %arg8: memref<32x512xbf16, #tpu.memory_space<vmem>>) attributes {dimension_semantics = [#tpu.dimension_semantics<parallel>], iteration_bounds = array<i64: 1>, scalar_prefetch = 0 : i64, scratch_operands = 0 : i64, tpu.core_type = #tpu.core_type<tc>, window_params = [{transform_indices = @transform_0, window_bounds = array<i64: 32, 1>}, {transform_indices = @transform_1, window_bounds = array<i64: 32, 1>}, {pipeline_mode = #tpu.pipeline_mode<synchronous>, transform_indices = @transform_2, window_bounds = array<i64: 8, 256>}, {pipeline_mode = #tpu.pipeline_mode<synchronous>, transform_indices = @transform_3, window_bounds = array<i64: 512, 1024>}, {pipeline_mode = #tpu.pipeline_mode<synchronous>, transform_indices = @transform_4, window_bounds = array<i64: 1, 1024>}, {pipeline_mode = #tpu.pipeline_mode<synchronous>, transform_indices = @transform_5, window_bounds = array<i64: 1024, 512>}, {pipeline_mode = #tpu.pipeline_mode<synchronous>, transform_indices = @transform_6, window_bounds = array<i64: 1, 512>}, {transform_indices = @transform_7, window_bounds = array<i64: 32, 512>}]} {
    %c0 = arith.constant 0 : index
    %c0_0 = arith.constant 0 : index
    %0 = vector.load %arg3[%c0, %c0_0] : memref<8x256xf32, #tpu.memory_space<vmem>>, vector<8x256xf32>
    %c0_1 = arith.constant 0 : index
    %c0_2 = arith.constant 0 : index
    %1 = vector.load %arg1[%c0_1, %c0_2] : memref<32x1xi32, #tpu.memory_space<vmem>>, vector<32x1xi32>
    %c0_3 = arith.constant 0 : index
    %c0_4 = arith.constant 0 : index
    %2 = vector.load %arg2[%c0_3, %c0_4] : memref<32x1xi32, #tpu.memory_space<vmem>>, vector<32x1xi32>
    %3 = arith.truncf %0 : vector<8x256xf32> to vector<8x256xbf16>
    %4 = tpu.iota {dimensions = array<i32: 1>} : vector<32x8xi32>
    %5 = vector.broadcast %1 : vector<32x1xi32> to vector<32x8xi32>
    %6 = arith.cmpi eq, %5, %4 : vector<32x8xi32>
    %7 = arith.extui %6 : vector<32x8xi1> to vector<32x8xi32>
    %8 = arith.sitofp %7 : vector<32x8xi32> to vector<32x8xf32>
    %9 = arith.truncf %8 : vector<32x8xf32> to vector<32x8xbf16>
    %10 = vector.broadcast %2 : vector<32x1xi32> to vector<32x8xi32>
    %11 = arith.cmpi eq, %10, %4 : vector<32x8xi32>
    %12 = arith.extui %11 : vector<32x8xi1> to vector<32x8xi32>
    %13 = arith.sitofp %12 : vector<32x8xi32> to vector<32x8xf32>
    %14 = arith.truncf %13 : vector<32x8xf32> to vector<32x8xbf16>
    %cst = arith.constant dense<0.000000e+00> : vector<32x256xf32>
    %15 = tpu.matmul %9, %3, %cst {dimension_numbers = #tpu.dot_dimension_numbers<[1], [0], [0], [1], [0, 0, 1, 1], [], []>} : vector<32x8xbf16>, vector<8x256xbf16>, vector<32x256xf32> -> vector<32x256xf32>
    %cst_5 = arith.constant dense<0.000000e+00> : vector<32x256xf32>
    %16 = tpu.matmul %14, %3, %cst_5 {dimension_numbers = #tpu.dot_dimension_numbers<[1], [0], [0], [1], [0, 0, 1, 1], [], []>} : vector<32x8xbf16>, vector<8x256xbf16>, vector<32x256xf32> -> vector<32x256xf32>
    %17 = arith.truncf %15 : vector<32x256xf32> to vector<32x256xbf16>
    %18 = arith.truncf %16 : vector<32x256xf32> to vector<32x256xbf16>
    %19 = tpu.concatenate %17, %18 in 1 : vector<32x256xbf16>, vector<32x256xbf16> -> vector<32x512xbf16>
    %c0_6 = arith.constant 0 : index
    %c0_7 = arith.constant 0 : index
    %20 = vector.load %arg4[%c0_6, %c0_7] : memref<512x1024xbf16, #tpu.memory_space<vmem>>, vector<512x1024xbf16>
    %cst_8 = arith.constant dense<0.000000e+00> : vector<32x1024xf32>
    %21 = tpu.matmul %19, %20, %cst_8 {dimension_numbers = #tpu.dot_dimension_numbers<[1], [0], [0], [1], [0, 0, 1, 1], [], []>} : vector<32x512xbf16>, vector<512x1024xbf16>, vector<32x1024xf32> -> vector<32x1024xf32>
    %c0_9 = arith.constant 0 : index
    %c0_10 = arith.constant 0 : index
    %22 = vector.load %arg5[%c0_9, %c0_10] : memref<1x1024xf32, #tpu.memory_space<vmem>>, vector<1x1024xf32>
    %23 = vector.broadcast %22 : vector<1x1024xf32> to vector<32x1024xf32>
    %24 = arith.addf %21, %23 : vector<32x1024xf32>
    %cst_11 = arith.constant 0.000000e+00 : f32
    %25 = vector.broadcast %cst_11 : f32 to vector<32x1024xf32>
    %26 = arith.maximumf %24, %25 : vector<32x1024xf32>
    %27 = arith.truncf %26 : vector<32x1024xf32> to vector<32x1024xbf16>
    %c0_12 = arith.constant 0 : index
    %c0_13 = arith.constant 0 : index
    %28 = vector.load %arg6[%c0_12, %c0_13] : memref<1024x512xbf16, #tpu.memory_space<vmem>>, vector<1024x512xbf16>
    %cst_14 = arith.constant dense<0.000000e+00> : vector<32x512xf32>
    %29 = tpu.matmul %27, %28, %cst_14 {dimension_numbers = #tpu.dot_dimension_numbers<[1], [0], [0], [1], [0, 0, 1, 1], [], []>} : vector<32x1024xbf16>, vector<1024x512xbf16>, vector<32x512xf32> -> vector<32x512xf32>
    %c0_15 = arith.constant 0 : index
    %c0_16 = arith.constant 0 : index
    %30 = vector.load %arg7[%c0_15, %c0_16] : memref<1x512xf32, #tpu.memory_space<vmem>>, vector<1x512xf32>
    %31 = vector.broadcast %30 : vector<1x512xf32> to vector<32x512xf32>
    %32 = arith.addf %29, %31 : vector<32x512xf32>
    %33 = arith.truncf %32 : vector<32x512xf32> to vector<32x512xbf16>
    %c0_17 = arith.constant 0 : index
    %c0_18 = arith.constant 0 : index
    %34 = vector.load %arg8[%c0_17, %c0_18] : memref<32x512xbf16, #tpu.memory_space<vmem>>, vector<32x512xbf16>
    tpu.vector_store %arg8[%c0_17, %c0_18], %33 {strides = array<i32>} : memref<32x512xbf16, #tpu.memory_space<vmem>>, vector<32x512xbf16>,
    return
  }
  func.func @transform_0(%arg0: i32) -> (i32, i32) {
    %c0_i32 = arith.constant 0 : i32
    %c0_i32_0 = arith.constant 0 : i32
    return %arg0, %c0_i32 : i32, i32
  }
  func.func @transform_1(%arg0: i32) -> (i32, i32) {
    %c0_i32 = arith.constant 0 : i32
    %c0_i32_0 = arith.constant 0 : i32
    return %arg0, %c0_i32 : i32, i32
  }
  func.func @transform_2(%arg0: i32) -> (i32, i32) {
    %c0_i32 = arith.constant 0 : i32
    %c0_i32_0 = arith.constant 0 : i32
    %c0_i32_1 = arith.constant 0 : i32
    return %c0_i32, %c0_i32_0 : i32, i32
  }
  func.func @transform_3(%arg0: i32) -> (i32, i32) {
    %c0_i32 = arith.constant 0 : i32
    %c0_i32_0 = arith.constant 0 : i32
    %c0_i32_1 = arith.constant 0 : i32
    return %c0_i32, %c0_i32_0 : i32, i32
  }
  func.func @transform_4(%arg0: i32) -> (i32, i32) {
    %c0_i32 = arith.constant 0 : i32
    %c0_i32_0 = arith.constant 0 : i32
    %c0_i32_1 = arith.constant 0 : i32
    return %c0_i32, %c0_i32_0 : i32, i32
  }
  func.func @transform_5(%arg0: i32) -> (i32, i32) {
    %c0_i32 = arith.constant 0 : i32
    %c0_i32_0 = arith.constant 0 : i32
    %c0_i32_1 = arith.constant 0 : i32
    return %c0_i32, %c0_i32_0 : i32, i32
  }
  func.func @transform_6(%arg0: i32) -> (i32, i32) {
    %c0_i32 = arith.constant 0 : i32
    %c0_i32_0 = arith.constant 0 : i32
    %c0_i32_1 = arith.constant 0 : i32
    return %c0_i32, %c0_i32_0 : i32, i32
  }
  func.func @transform_7(%arg0: i32) -> (i32, i32) {
    %c0_i32 = arith.constant 0 : i32
    %c0_i32_0 = arith.constant 0 : i32
    return %arg0, %c0_i32 : i32, i32
  }
}

</mosaic_0001>

<llo_original>
// kernel: forward.10
$region0: #{forward.10}
  #allocation0 [shape = 'u32[]', space=smem, size = 0x4, offset = 0x4, fixed_abs, tag = 'smem constant byte address 0x4 - core index']
  #allocation1 [shape = 'u32[144,128]{1,0:T(1,128)}', space=vmem, size = 0x12000, scoped, tag = 'internal scratch']
  %s0 = inlined_call_operand.vmem [shape: f32[8,128], index: 0, kind: input, shape index: {}]
  %s1 = inlined_call_operand.vmem [shape: f32[8,1], index: 1, kind: input, shape index: {}]
  %s2 = inlined_call_operand.vmem [shape: f32[1,128], index: 2, kind: input, shape index: {}]
  %s3 = inlined_call_operand.vmem [shape: f32[1,128], index: 3, kind: input, shape index: {}]
  %s4 = inlined_call_operand.vmem [shape: f32[8,128], index: 4, kind: output, shape index: {}]
  %s5 = sld [smem:[#allocation0]]
  $region26: #{forward.10} parent=0
    _
  %s7 = ssub.s32 1, %s5
  %s8 = scalar_select 0, %s7, %s5
  // Predicated region
  $region2: #{forward.10} parent=0 // pred_check
    _
  $region3: #{forward.10} parent=0 // pred_check_branch
    %10 = sbr.rel (0) target = $region5
  $region4: #{forward.10} parent=0 // pred_region
    _
  $region5: #{forward.10} parent=0 // pred_fallthru
    _
  // Predicated region
  $region6: #{forward.10} parent=0 // pred_check
    _
  $region7: #{forward.10} parent=0 // pred_check_branch
    %12 = sbr.rel (0) target = $region9
  $region8: #{forward.10} parent=0 // pred_region
    _
  $region9: #{forward.10} parent=0 // pred_fallthru
    _
  // Predicated region
  $region10: #{forward.10} parent=0 // pred_check
    _
  $region11: #{forward.10} parent=0 // pred_check_branch
    %14 = sbr.rel (0) target = $region13
  $region12: #{forward.10} parent=0 // pred_region
    _
  $region13: #{forward.10} parent=0 // pred_fallthru
    _
  // Predicated region
  $region14: #{forward.10} parent=0 // pred_check
    _
  $region15: #{forward.10} parent=0 // pred_check_branch
    %16 = sbr.rel (0) target = $region17
  $region16: #{forward.10} parent=0 // pred_region
    _
  $region17: #{forward.10} parent=0 // pred_fallthru
    _
  %v17 = vld [vmem:[%s0] sm:$0xff]
  %v18 = vld [vmem:[%s1] sm:$0xff]
  %20 = vset.pattern.permute.xlu0 0
  %21 = vperm.xlu0 %20, %v18
  %v22 = vpop.permute.xlu0 %21
  %v24 = vmul.f32 %v17, %v22
  %v25 = vld [vmem:[%s2] sm:$0x1]
  %v27 = vlaneseq
  %v28 = vshrl.u32 %v27, 7
  %v29 = vsub.s32 0, %v28
  %v30 = vrot.slane %v25, %v29
  %v32 = vmul.f32 %v24, %v30
  %v33 = vld [vmem:[%s3] sm:$0x1]
  %v35 = vlaneseq
  %v36 = vshrl.u32 %v35, 7
  %v37 = vsub.s32 0, %v36
  %v38 = vrot.slane %v33, %v37
  %v40 = vadd.f32 %v32, %v38
  %v41 = vmax.f32 %v40, 0.0
  %42 = vst [vmem:[%s4] sm:$0xff] %v41
  // Predicated region
  $region18: #{forward.10} parent=0 // pred_check
    _
  $region19: #{forward.10} parent=0 // pred_check_branch
    %44 = sbr.rel (0) target = $region21
  $region20: #{forward.10} parent=0 // pred_region
    _
  $region21: #{forward.10} parent=0 // pred_fallthru
    _
  // Predicated region
  $region22: #{forward.10} parent=0 // pred_check
    _
  $region23: #{forward.10} parent=0 // pred_check_branch
    %46 = sbr.rel (0) target = $region25
  $region24: #{forward.10} parent=0 // pred_region
    _
  $region25: #{forward.10} parent=0 // pred_fallthru
    _

// kernel: forward.9
$region0: #{forward.9}
  #allocation0 [shape = 'u32[]', space=smem, size = 0x4, offset = 0x4, fixed_abs, tag = 'smem constant byte address 0x4 - core index']
  #allocation1 [shape = 'u32[144,128]{1,0:T(1,128)}', space=vmem, size = 0x12000, scoped, tag = 'internal scratch']
  %s0 = inlined_call_operand.vmem [shape: s32[32,1], index: 0, kind: input, shape index: {}]
  %s1 = inlined_call_operand.vmem [shape: s32[32,1], index: 1, kind: input, shape index: {}]
  %s2 = inlined_call_operand.vmem [shape: f32[8,256], index: 2, kind: input, shape index: {}]
  %s3 = inlined_call_operand.vmem [shape: bf16[512,128], index: 3, kind: input, shape index: {}]
  %s4 = inlined_call_operand.vmem [shape: f32[1,128], index: 4, kind: input, shape index: {}]
  %s5 = inlined_call_operand.vmem [shape: bf16[128,128], index: 5, kind: input, shape index: {}]
  %s6 = inlined_call_operand.vmem [shape: f32[1,128], index: 6, kind: input, shape index: {}]
  %s7 = inlined_call_operand.vmem [shape: bf16[32,128], index: 7, kind: output, shape index: {}]
  %s8 = sld [smem:[#allocation0]]
  $region38: #{forward.9} parent=0
    _
  %s10 = ssub.s32 1, %s8
  %s11 = scalar_select 0, %s10, %s8
  // Predicated region
  $region2: #{forward.9} parent=0 // pred_check
    _
  $region3: #{forward.9} parent=0 // pred_check_branch
    %13 = sbr.rel (0) target = $region5
  $region4: #{forward.9} parent=0 // pred_region
    _
  $region5: #{forward.9} parent=0 // pred_fallthru
    _
  // Predicated region
  $region6: #{forward.9} parent=0 // pred_check
    _
  $region7: #{forward.9} parent=0 // pred_check_branch
    %15 = sbr.rel (0) target = $region9
  $region8: #{forward.9} parent=0 // pred_region
    _
  $region9: #{forward.9} parent=0 // pred_fallthru
    _
  // Predicated region
  $region10: #{forward.9} parent=0 // pred_check
    _
  $region11: #{forward.9} parent=0 // pred_check_branch
    %17 = sbr.rel (0) target = $region13
  $region12: #{forward.9} parent=0 // pred_region
    _
  $region13: #{forward.9} parent=0 // pred_fallthru
    _
  // Predicated region
  $region14: #{forward.9} parent=0 // pred_check
    _
  $region15: #{forward.9} parent=0 // pred_check_branch
    %19 = sbr.rel (0) target = $region17
  $region16: #{forward.9} parent=0 // pred_region
    _
  $region17: #{forward.9} parent=0 // pred_fallthru
    _
  // Predicated region
  $region18: #{forward.9} parent=0 // pred_check
    _
  $region19: #{forward.9} parent=0 // pred_check_branch
    %21 = sbr.rel (0) target = $region21
  $region20: #{forward.9} parent=0 // pred_region
    _
  $region21: #{forward.9} parent=0 // pred_fallthru
    _
  // Predicated region
  $region22: #{forward.9} parent=0 // pred_check
    _
  $region23: #{forward.9} parent=0 // pred_check_branch
    %23 = sbr.rel (0) target = $region25
  $region24: #{forward.9} parent=0 // pred_region
    _
  $region25: #{forward.9} parent=0 // pred_fallthru
    _
  // Predicated region
  $region26: #{forward.9} parent=0 // pred_check
    _
  $region27: #{forward.9} parent=0 // pred_check_branch
    %25 = sbr.rel (0) target = $region29
  $region28: #{forward.9} parent=0 // pred_region
    _
  $region29: #{forward.9} parent=0 // pred_fallthru
    _
  %v27 = vld [vmem:[%s2] sm:$0xff]
  %v28 = vld [vmem:[%s2 + $0x8] sm:$0xff]
  %v29 = vld [vmem:[%s0] sm:$0xff]
  %v30 = vld [vmem:[%s0 + $0x8] sm:$0xff]
  %v31 = vld [vmem:[%s0 + $0x10] sm:$0xff]
  %v32 = vld [vmem:[%s0 + $0x18] sm:$0xff]
  %v33 = vld [vmem:[%s1] sm:$0xff]
  %v34 = vld [vmem:[%s1 + $0x8] sm:$0xff]
  %v35 = vld [vmem:[%s1 + $0x10] sm:$0xff]
  %v36 = vld [vmem:[%s1 + $0x18] sm:$0xff]
  %v37 = vpack.c.bf16 %v27, %v27
  %v38 = vpack.c.bf16 %v28, %v28
  %v39 = vlaneseq
  %v40 = vand.u32 %v39, 127
  %41 = vset.pattern.permute.xlu0 0
  %42 = vperm.xlu0 %41, %v29
  %v43 = vpop.permute.xlu0 %42
  %44 = vset.pattern.permute.xlu0 0
  %45 = vperm.xlu0 %44, %v30
  %v46 = vpop.permute.xlu0 %45
  %47 = vset.pattern.permute.xlu0 0
  %48 = vperm.xlu0 %47, %v31
  %v49 = vpop.permute.xlu0 %48
  %50 = vset.pattern.permute.xlu0 0
  %51 = vperm.xlu0 %50, %v32
  %v52 = vpop.permute.xlu0 %51
  %vm53 = vcmp.eq.s32.totalorder %v43, %v40
  %vm54 = vcmp.eq.s32.totalorder %v46, %v40
  %vm55 = vcmp.eq.s32.totalorder %v49, %v40
  %vm56 = vcmp.eq.s32.totalorder %v52, %v40
  %v57 = vsel %vm53, 1, 0
  %v58 = vsel %vm54, 1, 0
  %v59 = vsel %vm55, 1, 0
  %v60 = vsel %vm56, 1, 0
  %v61 = vcvt.s32.f32 %v57
  %v62 = vcvt.s32.f32 %v58
  %v63 = vcvt.s32.f32 %v59
  %v64 = vcvt.s32.f32 %v60
  %v65 = vpack.c.bf16 %v62, %v61
  %v66 = vpack.c.bf16 %v64, %v63
  %67 = vset.pattern.permute.xlu0 0
  %68 = vperm.xlu0 %67, %v33
  %v69 = vpop.permute.xlu0 %68
  %70 = vset.pattern.permute.xlu0 0
  %71 = vperm.xlu0 %70, %v34
  %v72 = vpop.permute.xlu0 %71
  %73 = vset.pattern.permute.xlu0 0
  %74 = vperm.xlu0 %73, %v35
  %v75 = vpop.permute.xlu0 %74
  %76 = vset.pattern.permute.xlu0 0
  %77 = vperm.xlu0 %76, %v36
  %v78 = vpop.permute.xlu0 %77
  %vm79 = vcmp.eq.s32.totalorder %v69, %v40
  %vm80 = vcmp.eq.s32.totalorder %v72, %v40
  %vm81 = vcmp.eq.s32.totalorder %v75, %v40
  %vm82 = vcmp.eq.s32.totalorder %v78, %v40
  %v83 = vsel %vm79, 1, 0
  %v84 = vsel %vm80, 1, 0
  %v85 = vsel %vm81, 1, 0
  %v86 = vsel %vm82, 1, 0
  %v87 = vcvt.s32.f32 %v83
  %v88 = vcvt.s32.f32 %v84
  %v89 = vcvt.s32.f32 %v85
  %v90 = vcvt.s32.f32 %v86
  %v91 = vpack.c.bf16 %v88, %v87
  %v92 = vpack.c.bf16 %v90, %v89
  %vm93 = vcmask 64512
  %v95 = vsel %vm93, %v65, 0
  %v98 = vsel %vm93, %v66, 0
  %vm100 = vcmask 1043456
  %v102 = vsel %vm100, %v37, 0
  %v105 = vsel %vm100, %v38, 0
  %107 = vmatprep.subr.bf16.mxu0 %v105
  %108 = vmatpush1.bf16.msra.mxu0 %v102
  %109 = vmatprep.subr.bf16.mxu0 0
  %110 = vmatpush1.bf16.msra.mxu0 0
  %111 = vmatprep.subr.bf16.mxu0 0
  %112 = vmatpush1.bf16.msra.mxu0 0
  %113 = vmatprep.subr.bf16.mxu0 0
  %114 = vmatpush1.bf16.msra.mxu0 0
  %115 = vmatprep.subr.bf16.mxu0 0
  %116 = vmatpush1.bf16.msra.mxu0 0
  %117 = vmatprep.subr.bf16.mxu0 0
  %118 = vmatpush1.bf16.msra.mxu0 0
  %119 = vmatprep.subr.bf16.mxu0 0
  %120 = vmatpush1.bf16.msra.mxu0 0
  %121 = vmatprep.subr.bf16.mxu0 0
  %122 = vmatpush1.bf16.msra.mxu0 0
  %123 = vmatprep.subr.bf16.mxu0 0
  %124 = vmatpush1.bf16.msra.mxu0 0
  %125 = vmatprep.subr.bf16.mxu0 0
  %126 = vmatpush1.bf16.msra.mxu0 0
  %127 = vmatprep.subr.bf16.mxu0 0
  %128 = vmatpush1.bf16.msra.mxu0 0
  %129 = vmatprep.subr.bf16.mxu0 0
  %130 = vmatpush1.bf16.msra.mxu0 0
  %131 = vmatprep.subr.bf16.mxu0 0
  %132 = vmatpush1.bf16.msra.mxu0 0
  %133 = vmatprep.subr.bf16.mxu0 0
  %134 = vmatpush1.bf16.msra.mxu0 0
  %135 = vmatprep.subr.bf16.mxu0 0
  %136 = vmatpush1.bf16.msra.mxu0 0
  %137 = vmatprep.subr.bf16.mxu0 0
  %138 = vmatpush1.bf16.msra.mxu0 0
  %139 = vmatprep.mubr.bf16.mxu0 0
  %140 = vmatmul.mubr.bf16.gmra.mrb[0].mxu0 %v95
  %v141 = vpop.f32.mrb[0].mxu0
  %v142 = vadd.f32 0.0, %v141
  %v143 = vpop.f32.mrb[0].mxu0
  %v144 = vadd.f32 0.0, %v143
  %v145 = vpop.f32.mrb[0].mxu0
  %v146 = vadd.f32 0.0, %v145
  %v147 = vpop.f32.mrb[0].mxu0
  %v148 = vadd.f32 0.0, %v147
  %149 = vmatprep.mubr.bf16.mxu0 0
  %150 = vmatmul.mubr.bf16.gmra.mrb[0].mxu0 %v98
  %v151 = vpop.f32.mrb[0].mxu0
  %v152 = vadd.f32 0.0, %v151
  %v153 = vpop.f32.mrb[0].mxu0
  %v154 = vadd.f32 0.0, %v153
  %v155 = vpop.f32.mrb[0].mxu0
  %v156 = vadd.f32 0.0, %v155
  %v157 = vpop.f32.mrb[0].mxu0
  %v158 = vadd.f32 0.0, %v157
  %159 = vdwg.mxu0
  %v161 = vsel %vm93, %v91, 0
  %v164 = vsel %vm93, %v92, 0
  %166 = vmatprep.subr.bf16.mxu0 %v105
  %167 = vmatpush1.bf16.msra.mxu0 %v102
  %168 = vmatprep.subr.bf16.mxu0 0
  %169 = vmatpush1.bf16.msra.mxu0 0
  %170 = vmatprep.subr.bf16.mxu0 0
  %171 = vmatpush1.bf16.msra.mxu0 0
  %172 = vmatprep.subr.bf16.mxu0 0
  %173 = vmatpush1.bf16.msra.mxu0 0
  %174 = vmatprep.subr.bf16.mxu0 0
  %175 = vmatpush1.bf16.msra.mxu0 0
  %176 = vmatprep.subr.bf16.mxu0 0
  %177 = vmatpush1.bf16.msra.mxu0 0
  %178 = vmatprep.subr.bf16.mxu0 0
  %179 = vmatpush1.bf16.msra.mxu0 0
  %180 = vmatprep.subr.bf16.mxu0 0
  %181 = vmatpush1.bf16.msra.mxu0 0
  %182 = vmatprep.subr.bf16.mxu0 0
  %183 = vmatpush1.bf16.msra.mxu0 0
  %184 = vmatprep.subr.bf16.mxu0 0
  %185 = vmatpush1.bf16.msra.mxu0 0
  %186 = vmatprep.subr.bf16.mxu0 0
  %187 = vmatpush1.bf16.msra.mxu0 0
  %188 = vmatprep.subr.bf16.mxu0 0
  %189 = vmatpush1.bf16.msra.mxu0 0
  %190 = vmatprep.subr.bf16.mxu0 0
  %191 = vmatpush1.bf16.msra.mxu0 0
  %192 = vmatprep.subr.bf16.mxu0 0
  %193 = vmatpush1.bf16.msra.mxu0 0
  %194 = vmatprep.subr.bf16.mxu0 0
  %195 = vmatpush1.bf16.msra.mxu0 0
  %196 = vmatprep.subr.bf16.mxu0 0
  %197 = vmatpush1.bf16.msra.mxu0 0
  %198 = vmatprep.mubr.bf16.mxu0 0
  %199 = vmatmul.mubr.bf16.gmra.mrb[0].mxu0 %v161
  %v200 = vpop.f32.mrb[0].mxu0
  %v201 = vadd.f32 0.0, %v200
  %v202 = vpop.f32.mrb[0].mxu0
  %v203 = vadd.f32 0.0, %v202
  %v204 = vpop.f32.mrb[0].mxu0
  %v205 = vadd.f32 0.0, %v204
  %v206 = vpop.f32.mrb[0].mxu0
  %v207 = vadd.f32 0.0, %v206
  %208 = vmatprep.mubr.bf16.mxu0 0
  %209 = vmatmul.mubr.bf16.gmra.mrb[0].mxu0 %v164
  %v210 = vpop.f32.mrb[0].mxu0
  %v211 = vadd.f32 0.0, %v210
  %v212 = vpop.f32.mrb[0].mxu0
  %v213 = vadd.f32 0.0, %v212
  %v214 = vpop.f32.mrb[0].mxu0
  %v215 = vadd.f32 0.0, %v214
  %v216 = vpop.f32.mrb[0].mxu0
  %v217 = vadd.f32 0.0, %v216
  %218 = vdwg.mxu0
  %v219 = vpack.c.bf16 %v146, %v142
  %v220 = vpack.c.bf16 %v148, %v144
  %v221 = vpack.c.bf16 %v156, %v152
  %v222 = vpack.c.bf16 %v158, %v154
  %v223 = vpack.c.bf16 %v205, %v201
  %v224 = vpack.c.bf16 %v207, %v203
  %v225 = vpack.c.bf16 %v215, %v211
  %v226 = vpack.c.bf16 %v217, %v213
  %v227 = vld [vmem:[%s3] sm:$0xf]
  %v228 = vld [vmem:[%s3 + $0x4] sm:$0xf]
  %v229 = vld [vmem:[%s3 + $0x8] sm:$0xf]
  %v230 = vld [vmem:[%s3 + $0xc] sm:$0xf]
  %v231 = vld [vmem:[%s3 + $0x10] sm:$0xf]
  %v232 = vld [vmem:[%s3 + $0x14] sm:$0xf]
  %v233 = vld [vmem:[%s3 + $0x18] sm:$0xf]
  %v234 = vld [vmem:[%s3 + $0x1c] sm:$0xf]
  %v235 = vld [vmem:[%s3 + $0x20] sm:$0xf]
  %v236 = vld [vmem:[%s3 + $0x24] sm:$0xf]
  %v237 = vld [vmem:[%s3 + $0x28] sm:$0xf]
  %v238 = vld [vmem:[%s3 + $0x2c] sm:$0xf]
  %v239 = vld [vmem:[%s3 + $0x30] sm:$0xf]
  %v240 = vld [vmem:[%s3 + $0x34] sm:$0xf]
  %v241 = vld [vmem:[%s3 + $0x38] sm:$0xf]
  %v242 = vld [vmem:[%s3 + $0x3c] sm:$0xf]
  %v243 = vld [vmem:[%s3 + $0x40] sm:$0xf]
  %v244 = vld [vmem:[%s3 + $0x44] sm:$0xf]
  %v245 = vld [vmem:[%s3 + $0x48] sm:$0xf]
  %v246 = vld [vmem:[%s3 + $0x4c] sm:$0xf]
  %v247 = vld [vmem:[%s3 + $0x50] sm:$0xf]
  %v248 = vld [vmem:[%s3 + $0x54] sm:$0xf]
  %v249 = vld [vmem:[%s3 + $0x58] sm:$0xf]
  %v250 = vld [vmem:[%s3 + $0x5c] sm:$0xf]
  %v251 = vld [vmem:[%s3 + $0x60] sm:$0xf]
  %v252 = vld [vmem:[%s3 + $0x64] sm:$0xf]
  %v253 = vld [vmem:[%s3 + $0x68] sm:$0xf]
  %v254 = vld [vmem:[%s3 + $0x6c] sm:$0xf]
  %v255 = vld [vmem:[%s3 + $0x70] sm:$0xf]
  %v256 = vld [vmem:[%s3 + $0x74] sm:$0xf]
  %v257 = vld [vmem:[%s3 + $0x78] sm:$0xf]
  %v258 = vld [vmem:[%s3 + $0x7c] sm:$0xf]
  %v259 = vld [vmem:[%s3 + $0x80] sm:$0xf]
  %v260 = vld [vmem:[%s3 + $0x84] sm:$0xf]
  %v261 = vld [vmem:[%s3 + $0x88] sm:$0xf]
  %v262 = vld [vmem:[%s3 + $0x8c] sm:$0xf]
  %v263 = vld [vmem:[%s3 + $0x90] sm:$0xf]
  %v264 = vld [vmem:[%s3 + $0x94] sm:$0xf]
  %v265 = vld [vmem:[%s3 + $0x98] sm:$0xf]
  %v266 = vld [vmem:[%s3 + $0x9c] sm:$0xf]
  %v267 = vld [vmem:[%s3 + $0xa0] sm:$0xf]
  %v268 = vld [vmem:[%s3 + $0xa4] sm:$0xf]
  %v269 = vld [vmem:[%s3 + $0xa8] sm:$0xf]
  %v270 = vld [vmem:[%s3 + $0xac] sm:$0xf]
  %v271 = vld [vmem:[%s3 + $0xb0] sm:$0xf]
  %v272 = vld [vmem:[%s3 + $0xb4] sm:$0xf]
  %v273 = vld [vmem:[%s3 + $0xb8] sm:$0xf]
  %v274 = vld [vmem:[%s3 + $0xbc] sm:$0xf]
  %v275 = vld [vmem:[%s3 + $0xc0] sm:$0xf]
  %v276 = vld [vmem:[%s3 + $0xc4] sm:$0xf]
  %v277 = vld [vmem:[%s3 + $0xc8] sm:$0xf]
  %v278 = vld [vmem:[%s3 + $0xcc] sm:$0xf]
  %v279 = vld [vmem:[%s3 + $0xd0] sm:$0xf]
  %v280 = vld [vmem:[%s3 + $0xd4] sm:$0xf]
  %v281 = vld [vmem:[%s3 + $0xd8] sm:$0xf]
  %v282 = vld [vmem:[%s3 + $0xdc] sm:$0xf]
  %v283 = vld [vmem:[%s3 + $0xe0] sm:$0xf]
  %v284 = vld [vmem:[%s3 + $0xe4] sm:$0xf]
  %v285 = vld [vmem:[%s3 + $0xe8] sm:$0xf]
  %v286 = vld [vmem:[%s3 + $0xec] sm:$0xf]
  %v287 = vld [vmem:[%s3 + $0xf0] sm:$0xf]
  %v288 = vld [vmem:[%s3 + $0xf4] sm:$0xf]
  %v289 = vld [vmem:[%s3 + $0xf8] sm:$0xf]
  %v290 = vld [vmem:[%s3 + $0xfc] sm:$0xf]
  %v291 = vld [vmem:[%s4] sm:$0x1]
  %v293 = vlaneseq
  %v294 = vshrl.u32 %v293, 7
  %v295 = vsub.s32 0, %v294
  %v296 = vrot.slane %v291, %v295
  %v362 = vunpack.c.l.b16 %v227
  %v363 = vunpack.c.l.b16 %v228
  %v364 = vunpack.c.l.b16 %v229
  %v365 = vunpack.c.l.b16 %v230
  %v366 = vunpack.c.l.b16 %v231
  %v367 = vunpack.c.l.b16 %v232
  %v368 = vunpack.c.l.b16 %v233
  %v369 = vunpack.c.l.b16 %v234
  %v370 = vunpack.c.l.b16 %v235
  %v371 = vunpack.c.l.b16 %v236
  %v372 = vunpack.c.l.b16 %v237
  %v373 = vunpack.c.l.b16 %v238
  %v374 = vunpack.c.l.b16 %v239
  %v375 = vunpack.c.l.b16 %v240
  %v376 = vunpack.c.l.b16 %v241
  %v377 = vunpack.c.l.b16 %v242
  %v378 = vunpack.c.l.b16 %v243
  %v379 = vunpack.c.l.b16 %v244
  %v380 = vunpack.c.l.b16 %v245
  %v381 = vunpack.c.l.b16 %v246
  %v382 = vunpack.c.l.b16 %v247
  %v383 = vunpack.c.l.b16 %v248
  %v384 = vunpack.c.l.b16 %v249
  %v385 = vunpack.c.l.b16 %v250
  %v386 = vunpack.c.l.b16 %v251
  %v387 = vunpack.c.l.b16 %v252
  %v388 = vunpack.c.l.b16 %v253
  %v389 = vunpack.c.l.b16 %v254
  %v390 = vunpack.c.l.b16 %v255
  %v391 = vunpack.c.l.b16 %v256
  %v392 = vunpack.c.l.b16 %v257
  %v393 = vunpack.c.l.b16 %v258
  %v394 = vunpack.c.l.b16 %v259
  %v395 = vunpack.c.l.b16 %v260
  %v396 = vunpack.c.l.b16 %v261
  %v397 = vunpack.c.l.b16 %v262
  %v398 = vunpack.c.l.b16 %v263
  %v399 = vunpack.c.l.b16 %v264
  %v400 = vunpack.c.l.b16 %v265
  %v401 = vunpack.c.l.b16 %v266
  %v402 = vunpack.c.l.b16 %v267
  %v403 = vunpack.c.l.b16 %v268
  %v404 = vunpack.c.l.b16 %v269
  %v405 = vunpack.c.l.b16 %v270
  %v406 = vunpack.c.l.b16 %v271
  %v407 = vunpack.c.l.b16 %v272
  %v408 = vunpack.c.l.b16 %v273
  %v409 = vunpack.c.l.b16 %v274
  %v410 = vunpack.c.l.b16 %v275
  %v411 = vunpack.c.l.b16 %v276
  %v412 = vunpack.c.l.b16 %v277
  %v413 = vunpack.c.l.b16 %v278
  %v414 = vunpack.c.l.b16 %v279
  %v415 = vunpack.c.l.b16 %v280
  %v416 = vunpack.c.l.b16 %v281
  %v417 = vunpack.c.l.b16 %v282
  %v418 = vunpack.c.l.b16 %v283
  %v419 = vunpack.c.l.b16 %v284
  %v420 = vunpack.c.l.b16 %v285
  %v421 = vunpack.c.l.b16 %v286
  %v422 = vunpack.c.l.b16 %v287
  %v423 = vunpack.c.l.b16 %v288
  %v424 = vunpack.c.l.b16 %v289
  %v425 = vunpack.c.l.b16 %v290
  %v426 = vpack.c.b16 %v363, %v362
  %v427 = vpack.c.b16 %v365, %v364
  %v428 = vpack.c.b16 %v367, %v366
  %v429 = vpack.c.b16 %v369, %v368
  %v430 = vpack.c.b16 %v371, %v370
  %v431 = vpack.c.b16 %v373, %v372
  %v432 = vpack.c.b16 %v375, %v374
  %v433 = vpack.c.b16 %v377, %v376
  %v434 = vpack.c.b16 %v379, %v378
  %v435 = vpack.c.b16 %v381, %v380
  %v436 = vpack.c.b16 %v383, %v382
  %v437 = vpack.c.b16 %v385, %v384
  %v438 = vpack.c.b16 %v387, %v386
  %v439 = vpack.c.b16 %v389, %v388
  %v440 = vpack.c.b16 %v391, %v390
  %v441 = vpack.c.b16 %v393, %v392
  %v442 = vpack.c.b16 %v395, %v394
  %v443 = vpack.c.b16 %v397, %v396
  %v444 = vpack.c.b16 %v399, %v398
  %v445 = vpack.c.b16 %v401, %v400
  %v446 = vpack.c.b16 %v403, %v402
  %v447 = vpack.c.b16 %v405, %v404
  %v448 = vpack.c.b16 %v407, %v406
  %v449 = vpack.c.b16 %v409, %v408
  %v450 = vpack.c.b16 %v411, %v410
  %v451 = vpack.c.b16 %v413, %v412
  %v452 = vpack.c.b16 %v415, %v414
  %v453 = vpack.c.b16 %v417, %v416
  %v454 = vpack.c.b16 %v419, %v418
  %v455 = vpack.c.b16 %v421, %v420
  %v456 = vpack.c.b16 %v423, %v422
  %v457 = vpack.c.b16 %v425, %v424
  %490 = vmatprep.subr.bf16.mxu0 0
  %491 = vmatpush1.bf16.msra.mxu0 %v426
  %492 = vmatprep.subr.bf16.mxu0 0
  %493 = vmatpush1.bf16.msra.mxu0 %v427
  %494 = vmatprep.subr.bf16.mxu0 0
  %495 = vmatpush1.bf16.msra.mxu0 %v428
  %496 = vmatprep.subr.bf16.mxu0 0
  %497 = vmatpush1.bf16.msra.mxu0 %v429
  %498 = vmatprep.subr.bf16.mxu0 0
  %499 = vmatpush1.bf16.msra.mxu0 %v430
  %500 = vmatprep.subr.bf16.mxu0 0
  %501 = vmatpush1.bf16.msra.mxu0 %v431
  %502 = vmatprep.subr.bf16.mxu0 0
  %503 = vmatpush1.bf16.msra.mxu0 %v432
  %504 = vmatprep.subr.bf16.mxu0 0
  %505 = vmatpush1.bf16.msra.mxu0 %v433
  %506 = vmatprep.subr.bf16.mxu0 0
  %507 = vmatpush1.bf16.msra.mxu0 %v434
  %508 = vmatprep.subr.bf16.mxu0 0
  %509 = vmatpush1.bf16.msra.mxu0 %v435
  %510 = vmatprep.subr.bf16.mxu0 0
  %511 = vmatpush1.bf16.msra.mxu0 %v436
  %512 = vmatprep.subr.bf16.mxu0 0
  %513 = vmatpush1.bf16.msra.mxu0 %v437
  %514 = vmatprep.subr.bf16.mxu0 0
  %515 = vmatpush1.bf16.msra.mxu0 %v438
  %516 = vmatprep.subr.bf16.mxu0 0
  %517 = vmatpush1.bf16.msra.mxu0 %v439
  %518 = vmatprep.subr.bf16.mxu0 0
  %519 = vmatpush1.bf16.msra.mxu0 %v440
  %520 = vmatprep.subr.bf16.mxu0 0
  %521 = vmatpush1.bf16.msra.mxu0 %v441
  %522 = vmatprep.mubr.bf16.mxu0 %v220
  %523 = vmatmul.mubr.bf16.gmra.mrb[0].mxu0 %v219
  %v524 = vpop.f32.mrb[0].mxu0
  %v525 = vadd.f32 %v296, %v524
  %v526 = vpop.f32.mrb[0].mxu0
  %v527 = vpop.f32.mrb[0].mxu0
  %v528 = vadd.f32 %v296, %v527
  %v529 = vpop.f32.mrb[0].mxu0
  %530 = vmatprep.mubr.bf16.mxu0 %v222
  %531 = vmatmul.mubr.bf16.gmra.mrb[0].mxu0 %v221
  %v532 = vpop.f32.mrb[0].mxu0
  %v533 = vadd.f32 %v296, %v532
  %v534 = vpop.f32.mrb[0].mxu0
  %v535 = vpop.f32.mrb[0].mxu0
  %v536 = vadd.f32 %v296, %v535
  %v537 = vpop.f32.mrb[0].mxu0
  %538 = vdwg.mxu0
  %539 = vmatprep.subr.bf16.mxu0 0
  %540 = vmatpush1.bf16.msra.mxu0 %v442
  %541 = vmatprep.subr.bf16.mxu0 0
  %542 = vmatpush1.bf16.msra.mxu0 %v443
  %543 = vmatprep.subr.bf16.mxu0 0
  %544 = vmatpush1.bf16.msra.mxu0 %v444
  %545 = vmatprep.subr.bf16.mxu0 0
  %546 = vmatpush1.bf16.msra.mxu0 %v445
  %547 = vmatprep.subr.bf16.mxu0 0
  %548 = vmatpush1.bf16.msra.mxu0 %v446
  %549 = vmatprep.subr.bf16.mxu0 0
  %550 = vmatpush1.bf16.msra.mxu0 %v447
  %551 = vmatprep.subr.bf16.mxu0 0
  %552 = vmatpush1.bf16.msra.mxu0 %v448
  %553 = vmatprep.subr.bf16.mxu0 0
  %554 = vmatpush1.bf16.msra.mxu0 %v449
  %555 = vmatprep.subr.bf16.mxu0 0
  %556 = vmatpush1.bf16.msra.mxu0 %v450
  %557 = vmatprep.subr.bf16.mxu0 0
  %558 = vmatpush1.bf16.msra.mxu0 %v451
  %559 = vmatprep.subr.bf16.mxu0 0
  %560 = vmatpush1.bf16.msra.mxu0 %v452
  %561 = vmatprep.subr.bf16.mxu0 0
  %562 = vmatpush1.bf16.msra.mxu0 %v453
  %563 = vmatprep.subr.bf16.mxu0 0
  %564 = vmatpush1.bf16.msra.mxu0 %v454
  %565 = vmatprep.subr.bf16.mxu0 0
  %566 = vmatpush1.bf16.msra.mxu0 %v455
  %567 = vmatprep.subr.bf16.mxu0 0
  %568 = vmatpush1.bf16.msra.mxu0 %v456
  %569 = vmatprep.subr.bf16.mxu0 0
  %570 = vmatpush1.bf16.msra.mxu0 %v457
  %571 = vmatprep.mubr.bf16.mxu0 %v224
  %572 = vmatmul.mubr.bf16.gmra.mrb[0].mxu0 %v223
  %v573 = vpop.f32.mrb[0].mxu0
  %v574 = vadd.f32 %v525, %v573
  %v575 = vpop.f32.mrb[0].mxu0
  %v576 = vpop.f32.mrb[0].mxu0
  %v577 = vadd.f32 %v528, %v576
  %v578 = vpop.f32.mrb[0].mxu0
  %579 = vmatprep.mubr.bf16.mxu0 %v226
  %580 = vmatmul.mubr.bf16.gmra.mrb[0].mxu0 %v225
  %v581 = vpop.f32.mrb[0].mxu0
  %v582 = vadd.f32 %v533, %v581
  %v583 = vpop.f32.mrb[0].mxu0
  %v584 = vpop.f32.mrb[0].mxu0
  %v585 = vadd.f32 %v536, %v584
  %v586 = vpop.f32.mrb[0].mxu0
  %587 = vdwg.mxu0
  %v588 = vmax.f32 %v574, 0.0
  %v589 = vmax.f32 %v577, 0.0
  %v590 = vmax.f32 %v582, 0.0
  %v591 = vmax.f32 %v585, 0.0
  %v592 = vpack.c.bf16 %v589, %v588
  %v593 = vpack.c.bf16 %v591, %v590
  %v594 = vld [vmem:[%s5] sm:$0xf]
  %v595 = vld [vmem:[%s5 + $0x4] sm:$0xf]
  %v596 = vld [vmem:[%s5 + $0x8] sm:$0xf]
  %v597 = vld [vmem:[%s5 + $0xc] sm:$0xf]
  %v598 = vld [vmem:[%s5 + $0x10] sm:$0xf]
  %v599 = vld [vmem:[%s5 + $0x14] sm:$0xf]
  %v600 = vld [vmem:[%s5 + $0x18] sm:$0xf]
  %v601 = vld [vmem:[%s5 + $0x1c] sm:$0xf]
  %v602 = vld [vmem:[%s5 + $0x20] sm:$0xf]
  %v603 = vld [vmem:[%s5 + $0x24] sm:$0xf]
  %v604 = vld [vmem:[%s5 + $0x28] sm:$0xf]
  %v605 = vld [vmem:[%s5 + $0x2c] sm:$0xf]
  %v606 = vld [vmem:[%s5 + $0x30] sm:$0xf]
  %v607 = vld [vmem:[%s5 + $0x34] sm:$0xf]
  %v608 = vld [vmem:[%s5 + $0x38] sm:$0xf]
  %v609 = vld [vmem:[%s5 + $0x3c] sm:$0xf]
  %v610 = vld [vmem:[%s6] sm:$0x1]
  %v612 = vlaneseq
  %v613 = vshrl.u32 %v612, 7
  %v614 = vsub.s32 0, %v613
  %v615 = vrot.slane %v610, %v614
  %v633 = vunpack.c.l.b16 %v594
  %v634 = vunpack.c.l.b16 %v595
  %v635 = vunpack.c.l.b16 %v596
  %v636 = vunpack.c.l.b16 %v597
  %v637 = vunpack.c.l.b16 %v598
  %v638 = vunpack.c.l.b16 %v599
  %v639 = vunpack.c.l.b16 %v600
  %v640 = vunpack.c.l.b16 %v601
  %v641 = vunpack.c.l.b16 %v602
  %v642 = vunpack.c.l.b16 %v603
  %v643 = vunpack.c.l.b16 %v604
  %v644 = vunpack.c.l.b16 %v605
  %v645 = vunpack.c.l.b16 %v606
  %v646 = vunpack.c.l.b16 %v607
  %v647 = vunpack.c.l.b16 %v608
  %v648 = vunpack.c.l.b16 %v609
  %v649 = vpack.c.b16 %v634, %v633
  %v650 = vpack.c.b16 %v636, %v635
  %v651 = vpack.c.b16 %v638, %v637
  %v652 = vpack.c.b16 %v640, %v639
  %v653 = vpack.c.b16 %v642, %v641
  %v654 = vpack.c.b16 %v644, %v643
  %v655 = vpack.c.b16 %v646, %v645
  %v656 = vpack.c.b16 %v648, %v647
  %665 = vmatprep.subr.bf16.mxu0 0
  %666 = vmatpush1.bf16.msra.mxu0 %v649
  %667 = vmatprep.subr.bf16.mxu0 0
  %668 = vmatpush1.bf16.msra.mxu0 %v650
  %669 = vmatprep.subr.bf16.mxu0 0
  %670 = vmatpush1.bf16.msra.mxu0 %v651
  %671 = vmatprep.subr.bf16.mxu0 0
  %672 = vmatpush1.bf16.msra.mxu0 %v652
  %673 = vmatprep.subr.bf16.mxu0 0
  %674 = vmatpush1.bf16.msra.mxu0 %v653
  %675 = vmatprep.subr.bf16.mxu0 0
  %676 = vmatpush1.bf16.msra.mxu0 %v654
  %677 = vmatprep.subr.bf16.mxu0 0
  %678 = vmatpush1.bf16.msra.mxu0 %v655
  %679 = vmatprep.subr.bf16.mxu0 0
  %680 = vmatpush1.bf16.msra.mxu0 %v656
  %681 = vmatprep.subr.bf16.mxu0 0
  %682 = vmatpush1.bf16.msra.mxu0 0
  %683 = vmatprep.subr.bf16.mxu0 0
  %684 = vmatpush1.bf16.msra.mxu0 0
  %685 = vmatprep.subr.bf16.mxu0 0
  %686 = vmatpush1.bf16.msra.mxu0 0
  %687 = vmatprep.subr.bf16.mxu0 0
  %688 = vmatpush1.bf16.msra.mxu0 0
  %689 = vmatprep.subr.bf16.mxu0 0
  %690 = vmatpush1.bf16.msra.mxu0 0
  %691 = vmatprep.subr.bf16.mxu0 0
  %692 = vmatpush1.bf16.msra.mxu0 0
  %693 = vmatprep.subr.bf16.mxu0 0
  %694 = vmatpush1.bf16.msra.mxu0 0
  %695 = vmatprep.subr.bf16.mxu0 0
  %696 = vmatpush1.bf16.msra.mxu0 0
  %697 = vmatprep.mubr.bf16.mxu0 0
  %698 = vmatmul.mubr.bf16.gmra.mrb[0].mxu0 %v592
  %v699 = vpop.f32.mrb[0].mxu0
  %v700 = vadd.f32 %v615, %v699
  %v701 = vpop.f32.mrb[0].mxu0
  %v702 = vpop.f32.mrb[0].mxu0
  %v703 = vadd.f32 %v615, %v702
  %v704 = vpop.f32.mrb[0].mxu0
  %705 = vmatprep.mubr.bf16.mxu0 0
  %706 = vmatmul.mubr.bf16.gmra.mrb[0].mxu0 %v593
  %v707 = vpop.f32.mrb[0].mxu0
  %v708 = vadd.f32 %v615, %v707
  %v709 = vpop.f32.mrb[0].mxu0
  %v710 = vpop.f32.mrb[0].mxu0
  %v711 = vadd.f32 %v615, %v710
  %v712 = vpop.f32.mrb[0].mxu0
  %713 = vdwg.mxu0
  %v714 = vpack.c.bf16 %v703, %v700
  %v715 = vpack.c.bf16 %v711, %v708
  %v718 = vunpack.c.l.b16 %v714
  %v719 = vunpack.c.h.b16 %v714
  %v720 = vunpack.c.l.b16 %v715
  %v721 = vunpack.c.h.b16 %v715
  %v722 = vpack.c.b16 %v718, %v718
  %v723 = vpack.c.b16 %v719, %v719
  %v724 = vpack.c.b16 %v720, %v720
  %v725 = vpack.c.b16 %v721, %v721
  %730 = vst [vmem:[%s7] sm:$0xf] %v722
  %731 = vst [vmem:[%s7 + $0x4] sm:$0xf] %v723
  %732 = vst [vmem:[%s7 + $0x8] sm:$0xf] %v724
  %733 = vst [vmem:[%s7 + $0xc] sm:$0xf] %v725
  // Predicated region
  $region30: #{forward.9} parent=0 // pred_check
    _
  $region31: #{forward.9} parent=0 // pred_check_branch
    %735 = sbr.rel (0) target = $region33
  $region32: #{forward.9} parent=0 // pred_region
    _
  $region33: #{forward.9} parent=0 // pred_fallthru
    _
  // Predicated region
  $region34: #{forward.9} parent=0 // pred_check
    _
  $region35: #{forward.9} parent=0 // pred_check_branch
    %737 = sbr.rel (0) target = $region37
  $region36: #{forward.9} parent=0 // pred_region
    _
  $region37: #{forward.9} parent=0 // pred_fallthru
    _

// kernel: forward.11
$region0: #{forward.11}
  #allocation0 [shape = 'u32[]', space=smem, size = 0x4, offset = 0x4, fixed_abs, tag = 'smem constant byte address 0x4 - core index']
  #allocation1 [shape = 'u32[144,128]{1,0:T(1,128)}', space=vmem, size = 0x12000, scoped, tag = 'internal scratch']
  %s0 = inlined_call_operand.vmem [shape: s32[32,1], index: 0, kind: input, shape index: {}]
  %s1 = inlined_call_operand.vmem [shape: s32[32,1], index: 1, kind: input, shape index: {}]
  %s2 = inlined_call_operand.vmem [shape: f32[8,128], index: 2, kind: input, shape index: {}]
  %s3 = inlined_call_operand.vmem [shape: bf16[256,256], index: 3, kind: input, shape index: {}]
  %s4 = inlined_call_operand.vmem [shape: f32[1,256], index: 4, kind: input, shape index: {}]
  %s5 = inlined_call_operand.vmem [shape: bf16[256,128], index: 5, kind: input, shape index: {}]
  %s6 = inlined_call_operand.vmem [shape: f32[1,128], index: 6, kind: input, shape index: {}]
  %s7 = inlined_call_operand.vmem [shape: bf16[32,128], index: 7, kind: output, shape index: {}]
  %s8 = sld [smem:[#allocation0]]
  $region38: #{forward.11} parent=0
    _
  %s10 = ssub.s32 1, %s8
  %s11 = scalar_select 0, %s10, %s8
  // Predicated region
  $region2: #{forward.11} parent=0 // pred_check
    _
  $region3: #{forward.11} parent=0 // pred_check_branch
    %13 = sbr.rel (0) target = $region5
  $region4: #{forward.11} parent=0 // pred_region
    _
  $region5: #{forward.11} parent=0 // pred_fallthru
    _
  // Predicated region
  $region6: #{forward.11} parent=0 // pred_check
    _
  $region7: #{forward.11} parent=0 // pred_check_branch
    %15 = sbr.rel (0) target = $region9
  $region8: #{forward.11} parent=0 // pred_region
    _
  $region9: #{forward.11} parent=0 // pred_fallthru
    _
  // Predicated region
  $region10: #{forward.11} parent=0 // pred_check
    _
  $region11: #{forward.11} parent=0 // pred_check_branch
    %17 = sbr.rel (0) target = $region13
  $region12: #{forward.11} parent=0 // pred_region
    _
  $region13: #{forward.11} parent=0 // pred_fallthru
    _
  // Predicated region
  $region14: #{forward.11} parent=0 // pred_check
    _
  $region15: #{forward.11} parent=0 // pred_check_branch
    %19 = sbr.rel (0) target = $region17
  $region16: #{forward.11} parent=0 // pred_region
    _
  $region17: #{forward.11} parent=0 // pred_fallthru
    _
  // Predicated region
  $region18: #{forward.11} parent=0 // pred_check
    _
  $region19: #{forward.11} parent=0 // pred_check_branch
    %21 = sbr.rel (0) target = $region21
  $region20: #{forward.11} parent=0 // pred_region
    _
  $region21: #{forward.11} parent=0 // pred_fallthru
    _
  // Predicated region
  $region22: #{forward.11} parent=0 // pred_check
    _
  $region23: #{forward.11} parent=0 // pred_check_branch
    %23 = sbr.rel (0) target = $region25
  $region24: #{forward.11} parent=0 // pred_region
    _
  $region25: #{forward.11} parent=0 // pred_fallthru
    _
  // Predicated region
  $region26: #{forward.11} parent=0 // pred_check
    _
  $region27: #{forward.11} parent=0 // pred_check_branch
    %25 = sbr.rel (0) target = $region29
  $region28: #{forward.11} parent=0 // pred_region
    _
  $region29: #{forward.11} parent=0 // pred_fallthru
    _
  %v27 = vld [vmem:[%s2] sm:$0xff]
  %v28 = vld [vmem:[%s0] sm:$0xff]
  %v29 = vld [vmem:[%s0 + $0x8] sm:$0xff]
  %v30 = vld [vmem:[%s0 + $0x10] sm:$0xff]
  %v31 = vld [vmem:[%s0 + $0x18] sm:$0xff]
  %v32 = vld [vmem:[%s1] sm:$0xff]
  %v33 = vld [vmem:[%s1 + $0x8] sm:$0xff]
  %v34 = vld [vmem:[%s1 + $0x10] sm:$0xff]
  %v35 = vld [vmem:[%s1 + $0x18] sm:$0xff]
  %v36 = vpack.c.bf16 %v27, %v27
  %v37 = vlaneseq
  %v38 = vand.u32 %v37, 127
  %39 = vset.pattern.permute.xlu0 0
  %40 = vperm.xlu0 %39, %v28
  %v41 = vpop.permute.xlu0 %40
  %42 = vset.pattern.permute.xlu0 0
  %43 = vperm.xlu0 %42, %v29
  %v44 = vpop.permute.xlu0 %43
  %45 = vset.pattern.permute.xlu0 0
  %46 = vperm.xlu0 %45, %v30
  %v47 = vpop.permute.xlu0 %46
  %48 = vset.pattern.permute.xlu0 0
  %49 = vperm.xlu0 %48, %v31
  %v50 = vpop.permute.xlu0 %49
  %vm51 = vcmp.eq.s32.totalorder %v41, %v38
  %vm52 = vcmp.eq.s32.totalorder %v44, %v38
  %vm53 = vcmp.eq.s32.totalorder %v47, %v38
  %vm54 = vcmp.eq.s32.totalorder %v50, %v38
  %v55 = vsel %vm51, 1, 0
  %v56 = vsel %vm52, 1, 0
  %v57 = vsel %vm53, 1, 0
  %v58 = vsel %vm54, 1, 0
  %v59 = vcvt.s32.f32 %v55
  %v60 = vcvt.s32.f32 %v56
  %v61 = vcvt.s32.f32 %v57
  %v62 = vcvt.s32.f32 %v58
  %v63 = vpack.c.bf16 %v60, %v59
  %v64 = vpack.c.bf16 %v62, %v61
  %65 = vset.pattern.permute.xlu0 0
  %66 = vperm.xlu0 %65, %v32
  %v67 = vpop.permute.xlu0 %66
  %68 = vset.pattern.permute.xlu0 0
  %69 = vperm.xlu0 %68, %v33
  %v70 = vpop.permute.xlu0 %69
  %71 = vset.pattern.permute.xlu0 0
  %72 = vperm.xlu0 %71, %v34
  %v73 = vpop.permute.xlu0 %72
  %74 = vset.pattern.permute.xlu0 0
  %75 = vperm.xlu0 %74, %v35
  %v76 = vpop.permute.xlu0 %75
  %vm77 = vcmp.eq.s32.totalorder %v67, %v38
  %vm78 = vcmp.eq.s32.totalorder %v70, %v38
  %vm79 = vcmp.eq.s32.totalorder %v73, %v38
  %vm80 = vcmp.eq.s32.totalorder %v76, %v38
  %v81 = vsel %vm77, 1, 0
  %v82 = vsel %vm78, 1, 0
  %v83 = vsel %vm79, 1, 0
  %v84 = vsel %vm80, 1, 0
  %v85 = vcvt.s32.f32 %v81
  %v86 = vcvt.s32.f32 %v82
  %v87 = vcvt.s32.f32 %v83
  %v88 = vcvt.s32.f32 %v84
  %v89 = vpack.c.bf16 %v86, %v85
  %v90 = vpack.c.bf16 %v88, %v87
  %vm91 = vcmask 64512
  %v93 = vsel %vm91, %v63, 0
  %v96 = vsel %vm91, %v64, 0
  %vm98 = vcmask 1043456
  %v100 = vsel %vm98, %v36, 0
  %102 = vmatprep.subr.bf16.mxu0 0
  %103 = vmatpush1.bf16.msra.mxu0 %v100
  %104 = vmatprep.subr.bf16.mxu0 0
  %105 = vmatpush1.bf16.msra.mxu0 0
  %106 = vmatprep.subr.bf16.mxu0 0
  %107 = vmatpush1.bf16.msra.mxu0 0
  %108 = vmatprep.subr.bf16.mxu0 0
  %109 = vmatpush1.bf16.msra.mxu0 0
  %110 = vmatprep.subr.bf16.mxu0 0
  %111 = vmatpush1.bf16.msra.mxu0 0
  %112 = vmatprep.subr.bf16.mxu0 0
  %113 = vmatpush1.bf16.msra.mxu0 0
  %114 = vmatprep.subr.bf16.mxu0 0
  %115 = vmatpush1.bf16.msra.mxu0 0
  %116 = vmatprep.subr.bf16.mxu0 0
  %117 = vmatpush1.bf16.msra.mxu0 0
  %118 = vmatprep.subr.bf16.mxu0 0
  %119 = vmatpush1.bf16.msra.mxu0 0
  %120 = vmatprep.subr.bf16.mxu0 0
  %121 = vmatpush1.bf16.msra.mxu0 0
  %122 = vmatprep.subr.bf16.mxu0 0
  %123 = vmatpush1.bf16.msra.mxu0 0
  %124 = vmatprep.subr.bf16.mxu0 0
  %125 = vmatpush1.bf16.msra.mxu0 0
  %126 = vmatprep.subr.bf16.mxu0 0
  %127 = vmatpush1.bf16.msra.mxu0 0
  %128 = vmatprep.subr.bf16.mxu0 0
  %129 = vmatpush1.bf16.msra.mxu0 0
  %130 = vmatprep.subr.bf16.mxu0 0
  %131 = vmatpush1.bf16.msra.mxu0 0
  %132 = vmatprep.subr.bf16.mxu0 0
  %133 = vmatpush1.bf16.msra.mxu0 0
  %134 = vmatprep.mubr.bf16.mxu0 0
  %135 = vmatmul.mubr.bf16.gmra.mrb[0].mxu0 %v93
  %v136 = vpop.f32.mrb[0].mxu0
  %v137 = vadd.f32 0.0, %v136
  %v138 = vpop.f32.mrb[0].mxu0
  %v139 = vpop.f32.mrb[0].mxu0
  %v140 = vadd.f32 0.0, %v139
  %v141 = vpop.f32.mrb[0].mxu0
  %142 = vmatprep.mubr.bf16.mxu0 0
  %143 = vmatmul.mubr.bf16.gmra.mrb[0].mxu0 %v96
  %v144 = vpop.f32.mrb[0].mxu0
  %v145 = vadd.f32 0.0, %v144
  %v146 = vpop.f32.mrb[0].mxu0
  %v147 = vpop.f32.mrb[0].mxu0
  %v148 = vadd.f32 0.0, %v147
  %v149 = vpop.f32.mrb[0].mxu0
  %150 = vdwg.mxu0
  %v152 = vsel %vm91, %v89, 0
  %v155 = vsel %vm91, %v90, 0
  %157 = vmatprep.subr.bf16.mxu0 0
  %158 = vmatpush1.bf16.msra.mxu0 %v100
  %159 = vmatprep.subr.bf16.mxu0 0
  %160 = vmatpush1.bf16.msra.mxu0 0
  %161 = vmatprep.subr.bf16.mxu0 0
  %162 = vmatpush1.bf16.msra.mxu0 0
  %163 = vmatprep.subr.bf16.mxu0 0
  %164 = vmatpush1.bf16.msra.mxu0 0
  %165 = vmatprep.subr.bf16.mxu0 0
  %166 = vmatpush1.bf16.msra.mxu0 0
  %167 = vmatprep.subr.bf16.mxu0 0
  %168 = vmatpush1.bf16.msra.mxu0 0
  %169 = vmatprep.subr.bf16.mxu0 0
  %170 = vmatpush1.bf16.msra.mxu0 0
  %171 = vmatprep.subr.bf16.mxu0 0
  %172 = vmatpush1.bf16.msra.mxu0 0
  %173 = vmatprep.subr.bf16.mxu0 0
  %174 = vmatpush1.bf16.msra.mxu0 0
  %175 = vmatprep.subr.bf16.mxu0 0
  %176 = vmatpush1.bf16.msra.mxu0 0
  %177 = vmatprep.subr.bf16.mxu0 0
  %178 = vmatpush1.bf16.msra.mxu0 0
  %179 = vmatprep.subr.bf16.mxu0 0
  %180 = vmatpush1.bf16.msra.mxu0 0
  %181 = vmatprep.subr.bf16.mxu0 0
  %182 = vmatpush1.bf16.msra.mxu0 0
  %183 = vmatprep.subr.bf16.mxu0 0
  %184 = vmatpush1.bf16.msra.mxu0 0
  %185 = vmatprep.subr.bf16.mxu0 0
  %186 = vmatpush1.bf16.msra.mxu0 0
  %187 = vmatprep.subr.bf16.mxu0 0
  %188 = vmatpush1.bf16.msra.mxu0 0
  %189 = vmatprep.mubr.bf16.mxu0 0
  %190 = vmatmul.mubr.bf16.gmra.mrb[0].mxu0 %v152
  %v191 = vpop.f32.mrb[0].mxu0
  %v192 = vadd.f32 0.0, %v191
  %v193 = vpop.f32.mrb[0].mxu0
  %v194 = vpop.f32.mrb[0].mxu0
  %v195 = vadd.f32 0.0, %v194
  %v196 = vpop.f32.mrb[0].mxu0
  %197 = vmatprep.mubr.bf16.mxu0 0
  %198 = vmatmul.mubr.bf16.gmra.mrb[0].mxu0 %v155
  %v199 = vpop.f32.mrb[0].mxu0
  %v200 = vadd.f32 0.0, %v199
  %v201 = vpop.f32.mrb[0].mxu0
  %v202 = vpop.f32.mrb[0].mxu0
  %v203 = vadd.f32 0.0, %v202
  %v204 = vpop.f32.mrb[0].mxu0
  %205 = vdwg.mxu0
  %v206 = vpack.c.bf16 %v140, %v137
  %v207 = vpack.c.bf16 %v148, %v145
  %v208 = vpack.c.bf16 %v195, %v192
  %v209 = vpack.c.bf16 %v203, %v200
  %v210 = vld [vmem:[%s3] sm:$0xff]
  %v211 = vld [vmem:[%s3 + $0x8] sm:$0xff]
  %v212 = vld [vmem:[%s3 + $0x10] sm:$0xff]
  %v213 = vld [vmem:[%s3 + $0x18] sm:$0xff]
  %v214 = vld [vmem:[%s3 + $0x20] sm:$0xff]
  %v215 = vld [vmem:[%s3 + $0x28] sm:$0xff]
  %v216 = vld [vmem:[%s3 + $0x30] sm:$0xff]
  %v217 = vld [vmem:[%s3 + $0x38] sm:$0xff]
  %v218 = vld [vmem:[%s3 + $0x40] sm:$0xff]
  %v219 = vld [vmem:[%s3 + $0x48] sm:$0xff]
  %v220 = vld [vmem:[%s3 + $0x50] sm:$0xff]
  %v221 = vld [vmem:[%s3 + $0x58] sm:$0xff]
  %v222 = vld [vmem:[%s3 + $0x60] sm:$0xff]
  %v223 = vld [vmem:[%s3 + $0x68] sm:$0xff]
  %v224 = vld [vmem:[%s3 + $0x70] sm:$0xff]
  %v225 = vld [vmem:[%s3 + $0x78] sm:$0xff]
  %v226 = vld [vmem:[%s3 + $0x80] sm:$0xff]
  %v227 = vld [vmem:[%s3 + $0x88] sm:$0xff]
  %v228 = vld [vmem:[%s3 + $0x90] sm:$0xff]
  %v229 = vld [vmem:[%s3 + $0x98] sm:$0xff]
  %v230 = vld [vmem:[%s3 + $0xa0] sm:$0xff]
  %v231 = vld [vmem:[%s3 + $0xa8] sm:$0xff]
  %v232 = vld [vmem:[%s3 + $0xb0] sm:$0xff]
  %v233 = vld [vmem:[%s3 + $0xb8] sm:$0xff]
  %v234 = vld [vmem:[%s3 + $0xc0] sm:$0xff]
  %v235 = vld [vmem:[%s3 + $0xc8] sm:$0xff]
  %v236 = vld [vmem:[%s3 + $0xd0] sm:$0xff]
  %v237 = vld [vmem:[%s3 + $0xd8] sm:$0xff]
  %v238 = vld [vmem:[%s3 + $0xe0] sm:$0xff]
  %v239 = vld [vmem:[%s3 + $0xe8] sm:$0xff]
  %v240 = vld [vmem:[%s3 + $0xf0] sm:$0xff]
  %v241 = vld [vmem:[%s3 + $0xf8] sm:$0xff]
  %v242 = vld [vmem:[%s4] sm:$0x3]
  %v244 = vlaneseq
  %v245 = vshrl.u32 %v244, 7
  %v246 = vsub.s32 0, %v245
  %v247 = vrot.slane %v242, %v246
  %v248 = vlaneseq
  %v249 = vshrl.u32 %v248, 7
  %v250 = vsub.s32 1, %v249
  %v251 = vrot.slane %v242, %v250
  %v286 = vunpack.c.l.b16 %v210
  %v287 = vunpack.c.h.b16 %v210
  %v288 = vunpack.c.l.b16 %v211
  %v289 = vunpack.c.h.b16 %v211
  %v290 = vunpack.c.l.b16 %v212
  %v291 = vunpack.c.h.b16 %v212
  %v292 = vunpack.c.l.b16 %v213
  %v293 = vunpack.c.h.b16 %v213
  %v294 = vunpack.c.l.b16 %v214
  %v295 = vunpack.c.h.b16 %v214
  %v296 = vunpack.c.l.b16 %v215
  %v297 = vunpack.c.h.b16 %v215
  %v298 = vunpack.c.l.b16 %v216
  %v299 = vunpack.c.h.b16 %v216
  %v300 = vunpack.c.l.b16 %v217
  %v301 = vunpack.c.h.b16 %v217
  %v302 = vunpack.c.l.b16 %v218
  %v303 = vunpack.c.h.b16 %v218
  %v304 = vunpack.c.l.b16 %v219
  %v305 = vunpack.c.h.b16 %v219
  %v306 = vunpack.c.l.b16 %v220
  %v307 = vunpack.c.h.b16 %v220
  %v308 = vunpack.c.l.b16 %v221
  %v309 = vunpack.c.h.b16 %v221
  %v310 = vunpack.c.l.b16 %v222
  %v311 = vunpack.c.h.b16 %v222
  %v312 = vunpack.c.l.b16 %v223
  %v313 = vunpack.c.h.b16 %v223
  %v314 = vunpack.c.l.b16 %v224
  %v315 = vunpack.c.h.b16 %v224
  %v316 = vunpack.c.l.b16 %v225
  %v317 = vunpack.c.h.b16 %v225
  %v318 = vunpack.c.l.b16 %v226
  %v319 = vunpack.c.h.b16 %v226
  %v320 = vunpack.c.l.b16 %v227
  %v321 = vunpack.c.h.b16 %v227
  %v322 = vunpack.c.l.b16 %v228
  %v323 = vunpack.c.h.b16 %v228
  %v324 = vunpack.c.l.b16 %v229
  %v325 = vunpack.c.h.b16 %v229
  %v326 = vunpack.c.l.b16 %v230
  %v327 = vunpack.c.h.b16 %v230
  %v328 = vunpack.c.l.b16 %v231
  %v329 = vunpack.c.h.b16 %v231
  %v330 = vunpack.c.l.b16 %v232
  %v331 = vunpack.c.h.b16 %v232
  %v332 = vunpack.c.l.b16 %v233
  %v333 = vunpack.c.h.b16 %v233
  %v334 = vunpack.c.l.b16 %v234
  %v335 = vunpack.c.h.b16 %v234
  %v336 = vunpack.c.l.b16 %v235
  %v337 = vunpack.c.h.b16 %v235
  %v338 = vunpack.c.l.b16 %v236
  %v339 = vunpack.c.h.b16 %v236
  %v340 = vunpack.c.l.b16 %v237
  %v341 = vunpack.c.h.b16 %v237
  %v342 = vunpack.c.l.b16 %v238
  %v343 = vunpack.c.h.b16 %v238
  %v344 = vunpack.c.l.b16 %v239
  %v345 = vunpack.c.h.b16 %v239
  %v346 = vunpack.c.l.b16 %v240
  %v347 = vunpack.c.h.b16 %v240
  %v348 = vunpack.c.l.b16 %v241
  %v349 = vunpack.c.h.b16 %v241
  %v350 = vpack.c.b16 %v288, %v286
  %v351 = vpack.c.b16 %v289, %v287
  %v352 = vpack.c.b16 %v292, %v290
  %v353 = vpack.c.b16 %v293, %v291
  %v354 = vpack.c.b16 %v296, %v294
  %v355 = vpack.c.b16 %v297, %v295
  %v356 = vpack.c.b16 %v300, %v298
  %v357 = vpack.c.b16 %v301, %v299
  %v358 = vpack.c.b16 %v304, %v302
  %v359 = vpack.c.b16 %v305, %v303
  %v360 = vpack.c.b16 %v308, %v306
  %v361 = vpack.c.b16 %v309, %v307
  %v362 = vpack.c.b16 %v312, %v310
  %v363 = vpack.c.b16 %v313, %v311
  %v364 = vpack.c.b16 %v316, %v314
  %v365 = vpack.c.b16 %v317, %v315
  %v366 = vpack.c.b16 %v320, %v318
  %v367 = vpack.c.b16 %v321, %v319
  %v368 = vpack.c.b16 %v324, %v322
  %v369 = vpack.c.b16 %v325, %v323
  %v370 = vpack.c.b16 %v328, %v326
  %v371 = vpack.c.b16 %v329, %v327
  %v372 = vpack.c.b16 %v332, %v330
  %v373 = vpack.c.b16 %v333, %v331
  %v374 = vpack.c.b16 %v336, %v334
  %v375 = vpack.c.b16 %v337, %v335
  %v376 = vpack.c.b16 %v340, %v338
  %v377 = vpack.c.b16 %v341, %v339
  %v378 = vpack.c.b16 %v344, %v342
  %v379 = vpack.c.b16 %v345, %v343
  %v380 = vpack.c.b16 %v348, %v346
  %v381 = vpack.c.b16 %v349, %v347
  %414 = vmatprep.subr.bf16.mxu0 %v351
  %415 = vmatpush1.bf16.msra.mxu0 %v350
  %416 = vmatprep.subr.bf16.mxu0 %v353
  %417 = vmatpush1.bf16.msra.mxu0 %v352
  %418 = vmatprep.subr.bf16.mxu0 %v355
  %419 = vmatpush1.bf16.msra.mxu0 %v354
  %420 = vmatprep.subr.bf16.mxu0 %v357
  %421 = vmatpush1.bf16.msra.mxu0 %v356
  %422 = vmatprep.subr.bf16.mxu0 %v359
  %423 = vmatpush1.bf16.msra.mxu0 %v358
  %424 = vmatprep.subr.bf16.mxu0 %v361
  %425 = vmatpush1.bf16.msra.mxu0 %v360
  %426 = vmatprep.subr.bf16.mxu0 %v363
  %427 = vmatpush1.bf16.msra.mxu0 %v362
  %428 = vmatprep.subr.bf16.mxu0 %v365
  %429 = vmatpush1.bf16.msra.mxu0 %v364
  %430 = vmatprep.subr.bf16.mxu0 %v367
  %431 = vmatpush1.bf16.msra.mxu0 %v366
  %432 = vmatprep.subr.bf16.mxu0 %v369
  %433 = vmatpush1.bf16.msra.mxu0 %v368
  %434 = vmatprep.subr.bf16.mxu0 %v371
  %435 = vmatpush1.bf16.msra.mxu0 %v370
  %436 = vmatprep.subr.bf16.mxu0 %v373
  %437 = vmatpush1.bf16.msra.mxu0 %v372
  %438 = vmatprep.subr.bf16.mxu0 %v375
  %439 = vmatpush1.bf16.msra.mxu0 %v374
  %440 = vmatprep.subr.bf16.mxu0 %v377
  %441 = vmatpush1.bf16.msra.mxu0 %v376
  %442 = vmatprep.subr.bf16.mxu0 %v379
  %443 = vmatpush1.bf16.msra.mxu0 %v378
  %444 = vmatprep.subr.bf16.mxu0 %v381
  %445 = vmatpush1.bf16.msra.mxu0 %v380
  %446 = vmatprep.mubr.bf16.mxu0 %v208
  %447 = vmatmul.mubr.bf16.gmra.mrb[0].mxu0 %v206
  %v448 = vpop.f32.mrb[0].mxu0
  %v449 = vadd.f32 %v247, %v448
  %v450 = vpop.f32.mrb[0].mxu0
  %v451 = vadd.f32 %v251, %v450
  %v452 = vpop.f32.mrb[0].mxu0
  %v453 = vadd.f32 %v247, %v452
  %v454 = vpop.f32.mrb[0].mxu0
  %v455 = vadd.f32 %v251, %v454
  %456 = vmatprep.mubr.bf16.mxu0 %v209
  %457 = vmatmul.mubr.bf16.gmra.mrb[0].mxu0 %v207
  %v458 = vpop.f32.mrb[0].mxu0
  %v459 = vadd.f32 %v247, %v458
  %v460 = vpop.f32.mrb[0].mxu0
  %v461 = vadd.f32 %v251, %v460
  %v462 = vpop.f32.mrb[0].mxu0
  %v463 = vadd.f32 %v247, %v462
  %v464 = vpop.f32.mrb[0].mxu0
  %v465 = vadd.f32 %v251, %v464
  %466 = vdwg.mxu0
  %v467 = vmax.f32 %v449, 0.0
  %v468 = vmax.f32 %v451, 0.0
  %v469 = vmax.f32 %v453, 0.0
  %v470 = vmax.f32 %v455, 0.0
  %v471 = vmax.f32 %v459, 0.0
  %v472 = vmax.f32 %v461, 0.0
  %v473 = vmax.f32 %v463, 0.0
  %v474 = vmax.f32 %v465, 0.0
  %v475 = vpack.c.bf16 %v469, %v467
  %v476 = vpack.c.bf16 %v470, %v468
  %v477 = vpack.c.bf16 %v473, %v471
  %v478 = vpack.c.bf16 %v474, %v472
  %v479 = vld [vmem:[%s5] sm:$0xf]
  %v480 = vld [vmem:[%s5 + $0x4] sm:$0xf]
  %v481 = vld [vmem:[%s5 + $0x8] sm:$0xf]
  %v482 = vld [vmem:[%s5 + $0xc] sm:$0xf]
  %v483 = vld [vmem:[%s5 + $0x10] sm:$0xf]
  %v484 = vld [vmem:[%s5 + $0x14] sm:$0xf]
  %v485 = vld [vmem:[%s5 + $0x18] sm:$0xf]
  %v486 = vld [vmem:[%s5 + $0x1c] sm:$0xf]
  %v487 = vld [vmem:[%s5 + $0x20] sm:$0xf]
  %v488 = vld [vmem:[%s5 + $0x24] sm:$0xf]
  %v489 = vld [vmem:[%s5 + $0x28] sm:$0xf]
  %v490 = vld [vmem:[%s5 + $0x2c] sm:$0xf]
  %v491 = vld [vmem:[%s5 + $0x30] sm:$0xf]
  %v492 = vld [vmem:[%s5 + $0x34] sm:$0xf]
  %v493 = vld [vmem:[%s5 + $0x38] sm:$0xf]
  %v494 = vld [vmem:[%s5 + $0x3c] sm:$0xf]
  %v495 = vld [vmem:[%s5 + $0x40] sm:$0xf]
  %v496 = vld [vmem:[%s5 + $0x44] sm:$0xf]
  %v497 = vld [vmem:[%s5 + $0x48] sm:$0xf]
  %v498 = vld [vmem:[%s5 + $0x4c] sm:$0xf]
  %v499 = vld [vmem:[%s5 + $0x50] sm:$0xf]
  %v500 = vld [vmem:[%s5 + $0x54] sm:$0xf]
  %v501 = vld [vmem:[%s5 + $0x58] sm:$0xf]
  %v502 = vld [vmem:[%s5 + $0x5c] sm:$0xf]
  %v503 = vld [vmem:[%s5 + $0x60] sm:$0xf]
  %v504 = vld [vmem:[%s5 + $0x64] sm:$0xf]
  %v505 = vld [vmem:[%s5 + $0x68] sm:$0xf]
  %v506 = vld [vmem:[%s5 + $0x6c] sm:$0xf]
  %v507 = vld [vmem:[%s5 + $0x70] sm:$0xf]
  %v508 = vld [vmem:[%s5 + $0x74] sm:$0xf]
  %v509 = vld [vmem:[%s5 + $0x78] sm:$0xf]
  %v510 = vld [vmem:[%s5 + $0x7c] sm:$0xf]
  %v511 = vld [vmem:[%s6] sm:$0x1]
  %v513 = vlaneseq
  %v514 = vshrl.u32 %v513, 7
  %v515 = vsub.s32 0, %v514
  %v516 = vrot.slane %v511, %v515
  %v550 = vunpack.c.l.b16 %v479
  %v551 = vunpack.c.l.b16 %v480
  %v552 = vunpack.c.l.b16 %v481
  %v553 = vunpack.c.l.b16 %v482
  %v554 = vunpack.c.l.b16 %v483
  %v555 = vunpack.c.l.b16 %v484
  %v556 = vunpack.c.l.b16 %v485
  %v557 = vunpack.c.l.b16 %v486
  %v558 = vunpack.c.l.b16 %v487
  %v559 = vunpack.c.l.b16 %v488
  %v560 = vunpack.c.l.b16 %v489
  %v561 = vunpack.c.l.b16 %v490
  %v562 = vunpack.c.l.b16 %v491
  %v563 = vunpack.c.l.b16 %v492
  %v564 = vunpack.c.l.b16 %v493
  %v565 = vunpack.c.l.b16 %v494
  %v566 = vunpack.c.l.b16 %v495
  %v567 = vunpack.c.l.b16 %v496
  %v568 = vunpack.c.l.b16 %v497
  %v569 = vunpack.c.l.b16 %v498
  %v570 = vunpack.c.l.b16 %v499
  %v571 = vunpack.c.l.b16 %v500
  %v572 = vunpack.c.l.b16 %v501
  %v573 = vunpack.c.l.b16 %v502
  %v574 = vunpack.c.l.b16 %v503
  %v575 = vunpack.c.l.b16 %v504
  %v576 = vunpack.c.l.b16 %v505
  %v577 = vunpack.c.l.b16 %v506
  %v578 = vunpack.c.l.b16 %v507
  %v579 = vunpack.c.l.b16 %v508
  %v580 = vunpack.c.l.b16 %v509
  %v581 = vunpack.c.l.b16 %v510
  %v582 = vpack.c.b16 %v551, %v550
  %v583 = vpack.c.b16 %v553, %v552
  %v584 = vpack.c.b16 %v555, %v554
  %v585 = vpack.c.b16 %v557, %v556
  %v586 = vpack.c.b16 %v559, %v558
  %v587 = vpack.c.b16 %v561, %v560
  %v588 = vpack.c.b16 %v563, %v562
  %v589 = vpack.c.b16 %v565, %v564
  %v590 = vpack.c.b16 %v567, %v566
  %v591 = vpack.c.b16 %v569, %v568
  %v592 = vpack.c.b16 %v571, %v570
  %v593 = vpack.c.b16 %v573, %v572
  %v594 = vpack.c.b16 %v575, %v574
  %v595 = vpack.c.b16 %v577, %v576
  %v596 = vpack.c.b16 %v579, %v578
  %v597 = vpack.c.b16 %v581, %v580
  %614 = vmatprep.subr.bf16.mxu0 0
  %615 = vmatpush1.bf16.msra.mxu0 %v582
  %616 = vmatprep.subr.bf16.mxu0 0
  %617 = vmatpush1.bf16.msra.mxu0 %v583
  %618 = vmatprep.subr.bf16.mxu0 0
  %619 = vmatpush1.bf16.msra.mxu0 %v584
  %620 = vmatprep.subr.bf16.mxu0 0
  %621 = vmatpush1.bf16.msra.mxu0 %v585
  %622 = vmatprep.subr.bf16.mxu0 0
  %623 = vmatpush1.bf16.msra.mxu0 %v586
  %624 = vmatprep.subr.bf16.mxu0 0
  %625 = vmatpush1.bf16.msra.mxu0 %v587
  %626 = vmatprep.subr.bf16.mxu0 0
  %627 = vmatpush1.bf16.msra.mxu0 %v588
  %628 = vmatprep.subr.bf16.mxu0 0
  %629 = vmatpush1.bf16.msra.mxu0 %v589
  %630 = vmatprep.subr.bf16.mxu0 0
  %631 = vmatpush1.bf16.msra.mxu0 %v590
  %632 = vmatprep.subr.bf16.mxu0 0
  %633 = vmatpush1.bf16.msra.mxu0 %v591
  %634 = vmatprep.subr.bf16.mxu0 0
  %635 = vmatpush1.bf16.msra.mxu0 %v592
  %636 = vmatprep.subr.bf16.mxu0 0
  %637 = vmatpush1.bf16.msra.mxu0 %v593
  %638 = vmatprep.subr.bf16.mxu0 0
  %639 = vmatpush1.bf16.msra.mxu0 %v594
  %640 = vmatprep.subr.bf16.mxu0 0
  %641 = vmatpush1.bf16.msra.mxu0 %v595
  %642 = vmatprep.subr.bf16.mxu0 0
  %643 = vmatpush1.bf16.msra.mxu0 %v596
  %644 = vmatprep.subr.bf16.mxu0 0
  %645 = vmatpush1.bf16.msra.mxu0 %v597
  %646 = vmatprep.mubr.bf16.mxu0 %v476
  %647 = vmatmul.mubr.bf16.gmra.mrb[0].mxu0 %v475
  %v648 = vpop.f32.mrb[0].mxu0
  %v649 = vadd.f32 %v516, %v648
  %v650 = vpop.f32.mrb[0].mxu0
  %v651 = vpop.f32.mrb[0].mxu0
  %v652 = vadd.f32 %v516, %v651
  %v653 = vpop.f32.mrb[0].mxu0
  %654 = vmatprep.mubr.bf16.mxu0 %v478
  %655 = vmatmul.mubr.bf16.gmra.mrb[0].mxu0 %v477
  %v656 = vpop.f32.mrb[0].mxu0
  %v657 = vadd.f32 %v516, %v656
  %v658 = vpop.f32.mrb[0].mxu0
  %v659 = vpop.f32.mrb[0].mxu0
  %v660 = vadd.f32 %v516, %v659
  %v661 = vpop.f32.mrb[0].mxu0
  %662 = vdwg.mxu0
  %v663 = vpack.c.bf16 %v652, %v649
  %v664 = vpack.c.bf16 %v660, %v657
  %v667 = vunpack.c.l.b16 %v663
  %v668 = vunpack.c.h.b16 %v663
  %v669 = vunpack.c.l.b16 %v664
  %v670 = vunpack.c.h.b16 %v664
  %v671 = vpack.c.b16 %v667, %v667
  %v672 = vpack.c.b16 %v668, %v668
  %v673 = vpack.c.b16 %v669, %v669
  %v674 = vpack.c.b16 %v670, %v670
  %679 = vst [vmem:[%s7] sm:$0xf] %v671
  %680 = vst [vmem:[%s7 + $0x4] sm:$0xf] %v672
  %681 = vst [vmem:[%s7 + $0x8] sm:$0xf] %v673
  %682 = vst [vmem:[%s7 + $0xc] sm:$0xf] %v674
  // Predicated region
  $region30: #{forward.11} parent=0 // pred_check
    _
  $region31: #{forward.11} parent=0 // pred_check_branch
    %684 = sbr.rel (0) target = $region33
  $region32: #{forward.11} parent=0 // pred_region
    _
  $region33: #{forward.11} parent=0 // pred_fallthru
    _
  // Predicated region
  $region34: #{forward.11} parent=0 // pred_check
    _
  $region35: #{forward.11} parent=0 // pred_check_branch
    %686 = sbr.rel (0) target = $region37
  $region36: #{forward.11} parent=0 // pred_region
    _
  $region37: #{forward.11} parent=0 // pred_fallthru
    _

// kernel: forward.13
$region0: #{forward.13}
  #allocation0 [shape = 'u32[]', space=smem, size = 0x4, offset = 0x4, fixed_abs, tag = 'smem constant byte address 0x4 - core index']
  #allocation1 [shape = 'u32[144,128]{1,0:T(1,128)}', space=vmem, size = 0x12000, scoped, tag = 'internal scratch']
  %s0 = inlined_call_operand.vmem [shape: s32[32,1], index: 0, kind: input, shape index: {}]
  %s1 = inlined_call_operand.vmem [shape: s32[32,1], index: 1, kind: input, shape index: {}]
  %s2 = inlined_call_operand.vmem [shape: f32[8,128], index: 2, kind: input, shape index: {}]
  %s3 = inlined_call_operand.vmem [shape: bf16[256,512], index: 3, kind: input, shape index: {}]
  %s4 = inlined_call_operand.vmem [shape: f32[1,512], index: 4, kind: input, shape index: {}]
  %s5 = inlined_call_operand.vmem [shape: bf16[512,256], index: 5, kind: input, shape index: {}]
  %s6 = inlined_call_operand.vmem [shape: f32[1,256], index: 6, kind: input, shape index: {}]
  %s7 = inlined_call_operand.vmem [shape: bf16[32,256], index: 7, kind: output, shape index: {}]
  %s8 = sld [smem:[#allocation0]]
  $region38: #{forward.13} parent=0
    _
  %s10 = ssub.s32 1, %s8
  %s11 = scalar_select 0, %s10, %s8
  // Predicated region
  $region2: #{forward.13} parent=0 // pred_check
    _
  $region3: #{forward.13} parent=0 // pred_check_branch
    %13 = sbr.rel (0) target = $region5
  $region4: #{forward.13} parent=0 // pred_region
    _
  $region5: #{forward.13} parent=0 // pred_fallthru
    _
  // Predicated region
  $region6: #{forward.13} parent=0 // pred_check
    _
  $region7: #{forward.13} parent=0 // pred_check_branch
    %15 = sbr.rel (0) target = $region9
  $region8: #{forward.13} parent=0 // pred_region
    _
  $region9: #{forward.13} parent=0 // pred_fallthru
    _
  // Predicated region
  $region10: #{forward.13} parent=0 // pred_check
    _
  $region11: #{forward.13} parent=0 // pred_check_branch
    %17 = sbr.rel (0) target = $region13
  $region12: #{forward.13} parent=0 // pred_region
    _
  $region13: #{forward.13} parent=0 // pred_fallthru
    _
  // Predicated region
  $region14: #{forward.13} parent=0 // pred_check
    _
  $region15: #{forward.13} parent=0 // pred_check_branch
    %19 = sbr.rel (0) target = $region17
  $region16: #{forward.13} parent=0 // pred_region
    _
  $region17: #{forward.13} parent=0 // pred_fallthru
    _
  // Predicated region
  $region18: #{forward.13} parent=0 // pred_check
    _
  $region19: #{forward.13} parent=0 // pred_check_branch
    %21 = sbr.rel (0) target = $region21
  $region20: #{forward.13} parent=0 // pred_region
    _
  $region21: #{forward.13} parent=0 // pred_fallthru
    _
  // Predicated region
  $region22: #{forward.13} parent=0 // pred_check
    _
  $region23: #{forward.13} parent=0 // pred_check_branch
    %23 = sbr.rel (0) target = $region25
  $region24: #{forward.13} parent=0 // pred_region
    _
  $region25: #{forward.13} parent=0 // pred_fallthru
    _
  // Predicated region
  $region26: #{forward.13} parent=0 // pred_check
    _
  $region27: #{forward.13} parent=0 // pred_check_branch
    %25 = sbr.rel (0) target = $region29
  $region28: #{forward.13} parent=0 // pred_region
    _
  $region29: #{forward.13} parent=0 // pred_fallthru
    _
  %v27 = vld [vmem:[%s2] sm:$0xff]
  %v28 = vld [vmem:[%s0] sm:$0xff]
  %v29 = vld [vmem:[%s0 + $0x8] sm:$0xff]
  %v30 = vld [vmem:[%s0 + $0x10] sm:$0xff]
  %v31 = vld [vmem:[%s0 + $0x18] sm:$0xff]
  %v32 = vld [vmem:[%s1] sm:$0xff]
  %v33 = vld [vmem:[%s1 + $0x8] sm:$0xff]
  %v34 = vld [vmem:[%s1 + $0x10] sm:$0xff]
  %v35 = vld [vmem:[%s1 + $0x18] sm:$0xff]
  %v36 = vpack.c.bf16 %v27, %v27
  %v37 = vlaneseq
  %v38 = vand.u32 %v37, 127
  %39 = vset.pattern.permute.xlu0 0
  %40 = vperm.xlu0 %39, %v28
  %v41 = vpop.permute.xlu0 %40
  %42 = vset.pattern.permute.xlu0 0
  %43 = vperm.xlu0 %42, %v29
  %v44 = vpop.permute.xlu0 %43
  %45 = vset.pattern.permute.xlu0 0
  %46 = vperm.xlu0 %45, %v30
  %v47 = vpop.permute.xlu0 %46
  %48 = vset.pattern.permute.xlu0 0
  %49 = vperm.xlu0 %48, %v31
  %v50 = vpop.permute.xlu0 %49
  %vm51 = vcmp.eq.s32.totalorder %v41, %v38
  %vm52 = vcmp.eq.s32.totalorder %v44, %v38
  %vm53 = vcmp.eq.s32.totalorder %v47, %v38
  %vm54 = vcmp.eq.s32.totalorder %v50, %v38
  %v55 = vsel %vm51, 1, 0
  %v56 = vsel %vm52, 1, 0
  %v57 = vsel %vm53, 1, 0
  %v58 = vsel %vm54, 1, 0
  %v59 = vcvt.s32.f32 %v55
  %v60 = vcvt.s32.f32 %v56
  %v61 = vcvt.s32.f32 %v57
  %v62 = vcvt.s32.f32 %v58
  %v63 = vpack.c.bf16 %v60, %v59
  %v64 = vpack.c.bf16 %v62, %v61
  %65 = vset.pattern.permute.xlu0 0
  %66 = vperm.xlu0 %65, %v32
  %v67 = vpop.permute.xlu0 %66
  %68 = vset.pattern.permute.xlu0 0
  %69 = vperm.xlu0 %68, %v33
  %v70 = vpop.permute.xlu0 %69
  %71 = vset.pattern.permute.xlu0 0
  %72 = vperm.xlu0 %71, %v34
  %v73 = vpop.permute.xlu0 %72
  %74 = vset.pattern.permute.xlu0 0
  %75 = vperm.xlu0 %74, %v35
  %v76 = vpop.permute.xlu0 %75
  %vm77 = vcmp.eq.s32.totalorder %v67, %v38
  %vm78 = vcmp.eq.s32.totalorder %v70, %v38
  %vm79 = vcmp.eq.s32.totalorder %v73, %v38
  %vm80 = vcmp.eq.s32.totalorder %v76, %v38
  %v81 = vsel %vm77, 1, 0
  %v82 = vsel %vm78, 1, 0
  %v83 = vsel %vm79, 1, 0
  %v84 = vsel %vm80, 1, 0
  %v85 = vcvt.s32.f32 %v81
  %v86 = vcvt.s32.f32 %v82
  %v87 = vcvt.s32.f32 %v83
  %v88 = vcvt.s32.f32 %v84
  %v89 = vpack.c.bf16 %v86, %v85
  %v90 = vpack.c.bf16 %v88, %v87
  %vm91 = vcmask 64512
  %v93 = vsel %vm91, %v63, 0
  %v96 = vsel %vm91, %v64, 0
  %vm98 = vcmask 1043456
  %v100 = vsel %vm98, %v36, 0
  %102 = vmatprep.subr.bf16.mxu0 0
  %103 = vmatpush1.bf16.msra.mxu0 %v100
  %104 = vmatprep.subr.bf16.mxu0 0
  %105 = vmatpush1.bf16.msra.mxu0 0
  %106 = vmatprep.subr.bf16.mxu0 0
  %107 = vmatpush1.bf16.msra.mxu0 0
  %108 = vmatprep.subr.bf16.mxu0 0
  %109 = vmatpush1.bf16.msra.mxu0 0
  %110 = vmatprep.subr.bf16.mxu0 0
  %111 = vmatpush1.bf16.msra.mxu0 0
  %112 = vmatprep.subr.bf16.mxu0 0
  %113 = vmatpush1.bf16.msra.mxu0 0
  %114 = vmatprep.subr.bf16.mxu0 0
  %115 = vmatpush1.bf16.msra.mxu0 0
  %116 = vmatprep.subr.bf16.mxu0 0
  %117 = vmatpush1.bf16.msra.mxu0 0
  %118 = vmatprep.subr.bf16.mxu0 0
  %119 = vmatpush1.bf16.msra.mxu0 0
  %120 = vmatprep.subr.bf16.mxu0 0
  %121 = vmatpush1.bf16.msra.mxu0 0
  %122 = vmatprep.subr.bf16.mxu0 0
  %123 = vmatpush1.bf16.msra.mxu0 0
  %124 = vmatprep.subr.bf16.mxu0 0
  %125 = vmatpush1.bf16.msra.mxu0 0
  %126 = vmatprep.subr.bf16.mxu0 0
  %127 = vmatpush1.bf16.msra.mxu0 0
  %128 = vmatprep.subr.bf16.mxu0 0
  %129 = vmatpush1.bf16.msra.mxu0 0
  %130 = vmatprep.subr.bf16.mxu0 0
  %131 = vmatpush1.bf16.msra.mxu0 0
  %132 = vmatprep.subr.bf16.mxu0 0
  %133 = vmatpush1.bf16.msra.mxu0 0
  %134 = vmatprep.mubr.bf16.mxu0 0
  %135 = vmatmul.mubr.bf16.gmra.mrb[0].mxu0 %v93
  %v136 = vpop.f32.mrb[0].mxu0
  %v137 = vadd.f32 0.0, %v136
  %v138 = vpop.f32.mrb[0].mxu0
  %v139 = vpop.f32.mrb[0].mxu0
  %v140 = vadd.f32 0.0, %v139
  %v141 = vpop.f32.mrb[0].mxu0
  %142 = vmatprep.mubr.bf16.mxu0 0
  %143 = vmatmul.mubr.bf16.gmra.mrb[0].mxu0 %v96
  %v144 = vpop.f32.mrb[0].mxu0
  %v145 = vadd.f32 0.0, %v144
  %v146 = vpop.f32.mrb[0].mxu0
  %v147 = vpop.f32.mrb[0].mxu0
  %v148 = vadd.f32 0.0, %v147
  %v149 = vpop.f32.mrb[0].mxu0
  %150 = vdwg.mxu0
  %v152 = vsel %vm91, %v89, 0
  %v155 = vsel %vm91, %v90, 0
  %157 = vmatprep.subr.bf16.mxu0 0
  %158 = vmatpush1.bf16.msra.mxu0 %v100
  %159 = vmatprep.subr.bf16.mxu0 0
  %160 = vmatpush1.bf16.msra.mxu0 0
  %161 = vmatprep.subr.bf16.mxu0 0
  %162 = vmatpush1.bf16.msra.mxu0 0
  %163 = vmatprep.subr.bf16.mxu0 0
  %164 = vmatpush1.bf16.msra.mxu0 0
  %165 = vmatprep.subr.bf16.mxu0 0
  %166 = vmatpush1.bf16.msra.mxu0 0
  %167 = vmatprep.subr.bf16.mxu0 0
  %168 = vmatpush1.bf16.msra.mxu0 0
  %169 = vmatprep.subr.bf16.mxu0 0
  %170 = vmatpush1.bf16.msra.mxu0 0
  %171 = vmatprep.subr.bf16.mxu0 0
  %172 = vmatpush1.bf16.msra.mxu0 0
  %173 = vmatprep.subr.bf16.mxu0 0
  %174 = vmatpush1.bf16.msra.mxu0 0
  %175 = vmatprep.subr.bf16.mxu0 0
  %176 = vmatpush1.bf16.msra.mxu0 0
  %177 = vmatprep.subr.bf16.mxu0 0
  %178 = vmatpush1.bf16.msra.mxu0 0
  %179 = vmatprep.subr.bf16.mxu0 0
  %180 = vmatpush1.bf16.msra.mxu0 0
  %181 = vmatprep.subr.bf16.mxu0 0
  %182 = vmatpush1.bf16.msra.mxu0 0
  %183 = vmatprep.subr.bf16.mxu0 0
  %184 = vmatpush1.bf16.msra.mxu0 0
  %185 = vmatprep.subr.bf16.mxu0 0
  %186 = vmatpush1.bf16.msra.mxu0 0
  %187 = vmatprep.subr.bf16.mxu0 0
  %188 = vmatpush1.bf16.msra.mxu0 0
  %189 = vmatprep.mubr.bf16.mxu0 0
  %190 = vmatmul.mubr.bf16.gmra.mrb[0].mxu0 %v152
  %v191 = vpop.f32.mrb[0].mxu0
  %v192 = vadd.f32 0.0, %v191
  %v193 = vpop.f32.mrb[0].mxu0
  %v194 = vpop.f32.mrb[0].mxu0
  %v195 = vadd.f32 0.0, %v194
  %v196 = vpop.f32.mrb[0].mxu0
  %197 = vmatprep.mubr.bf16.mxu0 0
  %198 = vmatmul.mubr.bf16.gmra.mrb[0].mxu0 %v155
  %v199 = vpop.f32.mrb[0].mxu0
  %v200 = vadd.f32 0.0, %v199
  %v201 = vpop.f32.mrb[0].mxu0
  %v202 = vpop.f32.mrb[0].mxu0
  %v203 = vadd.f32 0.0, %v202
  %v204 = vpop.f32.mrb[0].mxu0
  %205 = vdwg.mxu0
  %v206 = vpack.c.bf16 %v140, %v137
  %v207 = vpack.c.bf16 %v148, %v145
  %v208 = vpack.c.bf16 %v195, %v192
  %v209 = vpack.c.bf16 %v203, %v200
  %v210 = vld [vmem:[%s3] sm:$0xff]
  %v211 = vld [vmem:[%s3 + $0x8] sm:$0xff]
  %v212 = vld [vmem:[%s3 + $0x10] sm:$0xff]
  %v213 = vld [vmem:[%s3 + $0x18] sm:$0xff]
  %v214 = vld [vmem:[%s3 + $0x20] sm:$0xff]
  %v215 = vld [vmem:[%s3 + $0x28] sm:$0xff]
  %v216 = vld [vmem:[%s3 + $0x30] sm:$0xff]
  %v217 = vld [vmem:[%s3 + $0x38] sm:$0xff]
  %v218 = vld [vmem:[%s3 + $0x40] sm:$0xff]
  %v219 = vld [vmem:[%s3 + $0x48] sm:$0xff]
  %v220 = vld [vmem:[%s3 + $0x50] sm:$0xff]
  %v221 = vld [vmem:[%s3 + $0x58] sm:$0xff]
  %v222 = vld [vmem:[%s3 + $0x60] sm:$0xff]
  %v223 = vld [vmem:[%s3 + $0x68] sm:$0xff]
  %v224 = vld [vmem:[%s3 + $0x70] sm:$0xff]
  %v225 = vld [vmem:[%s3 + $0x78] sm:$0xff]
  %v226 = vld [vmem:[%s3 + $0x80] sm:$0xff]
  %v227 = vld [vmem:[%s3 + $0x88] sm:$0xff]
  %v228 = vld [vmem:[%s3 + $0x90] sm:$0xff]
  %v229 = vld [vmem:[%s3 + $0x98] sm:$0xff]
  %v230 = vld [vmem:[%s3 + $0xa0] sm:$0xff]
  %v231 = vld [vmem:[%s3 + $0xa8] sm:$0xff]
  %v232 = vld [vmem:[%s3 + $0xb0] sm:$0xff]
  %v233 = vld [vmem:[%s3 + $0xb8] sm:$0xff]
  %v234 = vld [vmem:[%s3 + $0xc0] sm:$0xff]
  %v235 = vld [vmem:[%s3 + $0xc8] sm:$0xff]
  %v236 = vld [vmem:[%s3 + $0xd0] sm:$0xff]
  %v237 = vld [vmem:[%s3 + $0xd8] sm:$0xff]
  %v238 = vld [vmem:[%s3 + $0xe0] sm:$0xff]
  %v239 = vld [vmem:[%s3 + $0xe8] sm:$0xff]
  %v240 = vld [vmem:[%s3 + $0xf0] sm:$0xff]
  %v241 = vld [vmem:[%s3 + $0xf8] sm:$0xff]
  %v242 = vld [vmem:[%s3 + $0x100] sm:$0xff]
  %v243 = vld [vmem:[%s3 + $0x108] sm:$0xff]
  %v244 = vld [vmem:[%s3 + $0x110] sm:$0xff]
  %v245 = vld [vmem:[%s3 + $0x118] sm:$0xff]
  %v246 = vld [vmem:[%s3 + $0x120] sm:$0xff]
  %v247 = vld [vmem:[%s3 + $0x128] sm:$0xff]
  %v248 = vld [vmem:[%s3 + $0x130] sm:$0xff]
  %v249 = vld [vmem:[%s3 + $0x138] sm:$0xff]
  %v250 = vld [vmem:[%s3 + $0x140] sm:$0xff]
  %v251 = vld [vmem:[%s3 + $0x148] sm:$0xff]
  %v252 = vld [vmem:[%s3 + $0x150] sm:$0xff]
  %v253 = vld [vmem:[%s3 + $0x158] sm:$0xff]
  %v254 = vld [vmem:[%s3 + $0x160] sm:$0xff]
  %v255 = vld [vmem:[%s3 + $0x168] sm:$0xff]
  %v256 = vld [vmem:[%s3 + $0x170] sm:$0xff]
  %v257 = vld [vmem:[%s3 + $0x178] sm:$0xff]
  %v258 = vld [vmem:[%s3 + $0x180] sm:$0xff]
  %v259 = vld [vmem:[%s3 + $0x188] sm:$0xff]
  %v260 = vld [vmem:[%s3 + $0x190] sm:$0xff]
  %v261 = vld [vmem:[%s3 + $0x198] sm:$0xff]
  %v262 = vld [vmem:[%s3 + $0x1a0] sm:$0xff]
  %v263 = vld [vmem:[%s3 + $0x1a8] sm:$0xff]
  %v264 = vld [vmem:[%s3 + $0x1b0] sm:$0xff]
  %v265 = vld [vmem:[%s3 + $0x1b8] sm:$0xff]
  %v266 = vld [vmem:[%s3 + $0x1c0] sm:$0xff]
  %v267 = vld [vmem:[%s3 + $0x1c8] sm:$0xff]
  %v268 = vld [vmem:[%s3 + $0x1d0] sm:$0xff]
  %v269 = vld [vmem:[%s3 + $0x1d8] sm:$0xff]
  %v270 = vld [vmem:[%s3 + $0x1e0] sm:$0xff]
  %v271 = vld [vmem:[%s3 + $0x1e8] sm:$0xff]
  %v272 = vld [vmem:[%s3 + $0x1f0] sm:$0xff]
  %v273 = vld [vmem:[%s3 + $0x1f8] sm:$0xff]
  %v274 = vld [vmem:[%s4] sm:$0xf]
  %v276 = vlaneseq
  %v277 = vshrl.u32 %v276, 7
  %v278 = vsub.s32 0, %v277
  %v279 = vrot.slane %v274, %v278
  %v280 = vlaneseq
  %v281 = vshrl.u32 %v280, 7
  %v282 = vsub.s32 1, %v281
  %v283 = vrot.slane %v274, %v282
  %v284 = vlaneseq
  %v285 = vshrl.u32 %v284, 7
  %v286 = vsub.s32 2, %v285
  %v287 = vrot.slane %v274, %v286
  %v288 = vlaneseq
  %v289 = vshrl.u32 %v288, 7
  %v290 = vsub.s32 3, %v289
  %v291 = vrot.slane %v274, %v290
  %v360 = vunpack.c.l.b16 %v210
  %v361 = vunpack.c.h.b16 %v210
  %v362 = vunpack.c.l.b16 %v211
  %v363 = vunpack.c.h.b16 %v211
  %v364 = vunpack.c.l.b16 %v212
  %v365 = vunpack.c.h.b16 %v212
  %v366 = vunpack.c.l.b16 %v213
  %v367 = vunpack.c.h.b16 %v213
  %v368 = vunpack.c.l.b16 %v214
  %v369 = vunpack.c.h.b16 %v214
  %v370 = vunpack.c.l.b16 %v215
  %v371 = vunpack.c.h.b16 %v215
  %v372 = vunpack.c.l.b16 %v216
  %v373 = vunpack.c.h.b16 %v216
  %v374 = vunpack.c.l.b16 %v217
  %v375 = vunpack.c.h.b16 %v217
  %v376 = vunpack.c.l.b16 %v218
  %v377 = vunpack.c.h.b16 %v218
  %v378 = vunpack.c.l.b16 %v219
  %v379 = vunpack.c.h.b16 %v219
  %v380 = vunpack.c.l.b16 %v220
  %v381 = vunpack.c.h.b16 %v220
  %v382 = vunpack.c.l.b16 %v221
  %v383 = vunpack.c.h.b16 %v221
  %v384 = vunpack.c.l.b16 %v222
  %v385 = vunpack.c.h.b16 %v222
  %v386 = vunpack.c.l.b16 %v223
  %v387 = vunpack.c.h.b16 %v223
  %v388 = vunpack.c.l.b16 %v224
  %v389 = vunpack.c.h.b16 %v224
  %v390 = vunpack.c.l.b16 %v225
  %v391 = vunpack.c.h.b16 %v225
  %v392 = vunpack.c.l.b16 %v226
  %v393 = vunpack.c.h.b16 %v226
  %v394 = vunpack.c.l.b16 %v227
  %v395 = vunpack.c.h.b16 %v227
  %v396 = vunpack.c.l.b16 %v228
  %v397 = vunpack.c.h.b16 %v228
  %v398 = vunpack.c.l.b16 %v229
  %v399 = vunpack.c.h.b16 %v229
  %v400 = vunpack.c.l.b16 %v230
  %v401 = vunpack.c.h.b16 %v230
  %v402 = vunpack.c.l.b16 %v231
  %v403 = vunpack.c.h.b16 %v231
  %v404 = vunpack.c.l.b16 %v232
  %v405 = vunpack.c.h.b16 %v232
  %v406 = vunpack.c.l.b16 %v233
  %v407 = vunpack.c.h.b16 %v233
  %v408 = vunpack.c.l.b16 %v234
  %v409 = vunpack.c.h.b16 %v234
  %v410 = vunpack.c.l.b16 %v235
  %v411 = vunpack.c.h.b16 %v235
  %v412 = vunpack.c.l.b16 %v236
  %v413 = vunpack.c.h.b16 %v236
  %v414 = vunpack.c.l.b16 %v237
  %v415 = vunpack.c.h.b16 %v237
  %v416 = vunpack.c.l.b16 %v238
  %v417 = vunpack.c.h.b16 %v238
  %v418 = vunpack.c.l.b16 %v239
  %v419 = vunpack.c.h.b16 %v239
  %v420 = vunpack.c.l.b16 %v240
  %v421 = vunpack.c.h.b16 %v240
  %v422 = vunpack.c.l.b16 %v241
  %v423 = vunpack.c.h.b16 %v241
  %v424 = vunpack.c.l.b16 %v242
  %v425 = vunpack.c.h.b16 %v242
  %v426 = vunpack.c.l.b16 %v243
  %v427 = vunpack.c.h.b16 %v243
  %v428 = vunpack.c.l.b16 %v244
  %v429 = vunpack.c.h.b16 %v244
  %v430 = vunpack.c.l.b16 %v245
  %v431 = vunpack.c.h.b16 %v245
  %v432 = vunpack.c.l.b16 %v246
  %v433 = vunpack.c.h.b16 %v246
  %v434 = vunpack.c.l.b16 %v247
  %v435 = vunpack.c.h.b16 %v247
  %v436 = vunpack.c.l.b16 %v248
  %v437 = vunpack.c.h.b16 %v248
  %v438 = vunpack.c.l.b16 %v249
  %v439 = vunpack.c.h.b16 %v249
  %v440 = vunpack.c.l.b16 %v250
  %v441 = vunpack.c.h.b16 %v250
  %v442 = vunpack.c.l.b16 %v251
  %v443 = vunpack.c.h.b16 %v251
  %v444 = vunpack.c.l.b16 %v252
  %v445 = vunpack.c.h.b16 %v252
  %v446 = vunpack.c.l.b16 %v253
  %v447 = vunpack.c.h.b16 %v253
  %v448 = vunpack.c.l.b16 %v254
  %v449 = vunpack.c.h.b16 %v254
  %v450 = vunpack.c.l.b16 %v255
  %v451 = vunpack.c.h.b16 %v255
  %v452 = vunpack.c.l.b16 %v256
  %v453 = vunpack.c.h.b16 %v256
  %v454 = vunpack.c.l.b16 %v257
  %v455 = vunpack.c.h.b16 %v257
  %v456 = vunpack.c.l.b16 %v258
  %v457 = vunpack.c.h.b16 %v258
  %v458 = vunpack.c.l.b16 %v259
  %v459 = vunpack.c.h.b16 %v259
  %v460 = vunpack.c.l.b16 %v260
  %v461 = vunpack.c.h.b16 %v260
  %v462 = vunpack.c.l.b16 %v261
  %v463 = vunpack.c.h.b16 %v261
  %v464 = vunpack.c.l.b16 %v262
  %v465 = vunpack.c.h.b16 %v262
  %v466 = vunpack.c.l.b16 %v263
  %v467 = vunpack.c.h.b16 %v263
  %v468 = vunpack.c.l.b16 %v264
  %v469 = vunpack.c.h.b16 %v264
  %v470 = vunpack.c.l.b16 %v265
  %v471 = vunpack.c.h.b16 %v265
  %v472 = vunpack.c.l.b16 %v266
  %v473 = vunpack.c.h.b16 %v266
  %v474 = vunpack.c.l.b16 %v267
  %v475 = vunpack.c.h.b16 %v267
  %v476 = vunpack.c.l.b16 %v268
  %v477 = vunpack.c.h.b16 %v268
  %v478 = vunpack.c.l.b16 %v269
  %v479 = vunpack.c.h.b16 %v269
  %v480 = vunpack.c.l.b16 %v270
  %v481 = vunpack.c.h.b16 %v270
  %v482 = vunpack.c.l.b16 %v271
  %v483 = vunpack.c.h.b16 %v271
  %v484 = vunpack.c.l.b16 %v272
  %v485 = vunpack.c.h.b16 %v272
  %v486 = vunpack.c.l.b16 %v273
  %v487 = vunpack.c.h.b16 %v273
  %v488 = vpack.c.b16 %v364, %v360
  %v489 = vpack.c.b16 %v365, %v361
  %v490 = vpack.c.b16 %v366, %v362
  %v491 = vpack.c.b16 %v367, %v363
  %v492 = vpack.c.b16 %v372, %v368
  %v493 = vpack.c.b16 %v373, %v369
  %v494 = vpack.c.b16 %v374, %v370
  %v495 = vpack.c.b16 %v375, %v371
  %v496 = vpack.c.b16 %v380, %v376
  %v497 = vpack.c.b16 %v381, %v377
  %v498 = vpack.c.b16 %v382, %v378
  %v499 = vpack.c.b16 %v383, %v379
  %v500 = vpack.c.b16 %v388, %v384
  %v501 = vpack.c.b16 %v389, %v385
  %v502 = vpack.c.b16 %v390, %v386
  %v503 = vpack.c.b16 %v391, %v387
  %v504 = vpack.c.b16 %v396, %v392
  %v505 = vpack.c.b16 %v397, %v393
  %v506 = vpack.c.b16 %v398, %v394
  %v507 = vpack.c.b16 %v399, %v395
  %v508 = vpack.c.b16 %v404, %v400
  %v509 = vpack.c.b16 %v405, %v401
  %v510 = vpack.c.b16 %v406, %v402
  %v511 = vpack.c.b16 %v407, %v403
  %v512 = vpack.c.b16 %v412, %v408
  %v513 = vpack.c.b16 %v413, %v409
  %v514 = vpack.c.b16 %v414, %v410
  %v515 = vpack.c.b16 %v415, %v411
  %v516 = vpack.c.b16 %v420, %v416
  %v517 = vpack.c.b16 %v421, %v417
  %v518 = vpack.c.b16 %v422, %v418
  %v519 = vpack.c.b16 %v423, %v419
  %v520 = vpack.c.b16 %v428, %v424
  %v521 = vpack.c.b16 %v429, %v425
  %v522 = vpack.c.b16 %v430, %v426
  %v523 = vpack.c.b16 %v431, %v427
  %v524 = vpack.c.b16 %v436, %v432
  %v525 = vpack.c.b16 %v437, %v433
  %v526 = vpack.c.b16 %v438, %v434
  %v527 = vpack.c.b16 %v439, %v435
  %v528 = vpack.c.b16 %v444, %v440
  %v529 = vpack.c.b16 %v445, %v441
  %v530 = vpack.c.b16 %v446, %v442
  %v531 = vpack.c.b16 %v447, %v443
  %v532 = vpack.c.b16 %v452, %v448
  %v533 = vpack.c.b16 %v453, %v449
  %v534 = vpack.c.b16 %v454, %v450
  %v535 = vpack.c.b16 %v455, %v451
  %v536 = vpack.c.b16 %v460, %v456
  %v537 = vpack.c.b16 %v461, %v457
  %v538 = vpack.c.b16 %v462, %v458
  %v539 = vpack.c.b16 %v463, %v459
  %v540 = vpack.c.b16 %v468, %v464
  %v541 = vpack.c.b16 %v469, %v465
  %v542 = vpack.c.b16 %v470, %v466
  %v543 = vpack.c.b16 %v471, %v467
  %v544 = vpack.c.b16 %v476, %v472
  %v545 = vpack.c.b16 %v477, %v473
  %v546 = vpack.c.b16 %v478, %v474
  %v547 = vpack.c.b16 %v479, %v475
  %v548 = vpack.c.b16 %v484, %v480
  %v549 = vpack.c.b16 %v485, %v481
  %v550 = vpack.c.b16 %v486, %v482
  %v551 = vpack.c.b16 %v487, %v483
  %616 = vmatprep.subr.bf16.mxu0 %v489
  %617 = vmatpush1.bf16.msra.mxu0 %v488
  %618 = vmatprep.subr.bf16.mxu0 %v493
  %619 = vmatpush1.bf16.msra.mxu0 %v492
  %620 = vmatprep.subr.bf16.mxu0 %v497
  %621 = vmatpush1.bf16.msra.mxu0 %v496
  %622 = vmatprep.subr.bf16.mxu0 %v501
  %623 = vmatpush1.bf16.msra.mxu0 %v500
  %624 = vmatprep.subr.bf16.mxu0 %v505
  %625 = vmatpush1.bf16.msra.mxu0 %v504
  %626 = vmatprep.subr.bf16.mxu0 %v509
  %627 = vmatpush1.bf16.msra.mxu0 %v508
  %628 = vmatprep.subr.bf16.mxu0 %v513
  %629 = vmatpush1.bf16.msra.mxu0 %v512
  %630 = vmatprep.subr.bf16.mxu0 %v517
  %631 = vmatpush1.bf16.msra.mxu0 %v516
  %632 = vmatprep.subr.bf16.mxu0 %v521
  %633 = vmatpush1.bf16.msra.mxu0 %v520
  %634 = vmatprep.subr.bf16.mxu0 %v525
  %635 = vmatpush1.bf16.msra.mxu0 %v524
  %636 = vmatprep.subr.bf16.mxu0 %v529
  %637 = vmatpush1.bf16.msra.mxu0 %v528
  %638 = vmatprep.subr.bf16.mxu0 %v533
  %639 = vmatpush1.bf16.msra.mxu0 %v532
  %640 = vmatprep.subr.bf16.mxu0 %v537
  %641 = vmatpush1.bf16.msra.mxu0 %v536
  %642 = vmatprep.subr.bf16.mxu0 %v541
  %643 = vmatpush1.bf16.msra.mxu0 %v540
  %644 = vmatprep.subr.bf16.mxu0 %v545
  %645 = vmatpush1.bf16.msra.mxu0 %v544
  %646 = vmatprep.subr.bf16.mxu0 %v549
  %647 = vmatpush1.bf16.msra.mxu0 %v548
  %648 = vmatprep.mubr.bf16.mxu0 %v208
  %649 = vmatmul.mubr.bf16.gmra.mrb[0].mxu0 %v206
  %v650 = vpop.f32.mrb[0].mxu0
  %v651 = vadd.f32 %v279, %v650
  %v652 = vpop.f32.mrb[0].mxu0
  %v653 = vadd.f32 %v283, %v652
  %v654 = vpop.f32.mrb[0].mxu0
  %v655 = vadd.f32 %v279, %v654
  %v656 = vpop.f32.mrb[0].mxu0
  %v657 = vadd.f32 %v283, %v656
  %658 = vmatprep.mubr.bf16.mxu0 %v209
  %659 = vmatmul.mubr.bf16.gmra.mrb[0].mxu0 %v207
  %v660 = vpop.f32.mrb[0].mxu0
  %v661 = vadd.f32 %v279, %v660
  %v662 = vpop.f32.mrb[0].mxu0
  %v663 = vadd.f32 %v283, %v662
  %v664 = vpop.f32.mrb[0].mxu0
  %v665 = vadd.f32 %v279, %v664
  %v666 = vpop.f32.mrb[0].mxu0
  %v667 = vadd.f32 %v283, %v666
  %668 = vdwg.mxu0
  %669 = vmatprep.subr.bf16.mxu0 %v491
  %670 = vmatpush1.bf16.msra.mxu0 %v490
  %671 = vmatprep.subr.bf16.mxu0 %v495
  %672 = vmatpush1.bf16.msra.mxu0 %v494
  %673 = vmatprep.subr.bf16.mxu0 %v499
  %674 = vmatpush1.bf16.msra.mxu0 %v498
  %675 = vmatprep.subr.bf16.mxu0 %v503
  %676 = vmatpush1.bf16.msra.mxu0 %v502
  %677 = vmatprep.subr.bf16.mxu0 %v507
  %678 = vmatpush1.bf16.msra.mxu0 %v506
  %679 = vmatprep.subr.bf16.mxu0 %v511
  %680 = vmatpush1.bf16.msra.mxu0 %v510
  %681 = vmatprep.subr.bf16.mxu0 %v515
  %682 = vmatpush1.bf16.msra.mxu0 %v514
  %683 = vmatprep.subr.bf16.mxu0 %v519
  %684 = vmatpush1.bf16.msra.mxu0 %v518
  %685 = vmatprep.subr.bf16.mxu0 %v523
  %686 = vmatpush1.bf16.msra.mxu0 %v522
  %687 = vmatprep.subr.bf16.mxu0 %v527
  %688 = vmatpush1.bf16.msra.mxu0 %v526
  %689 = vmatprep.subr.bf16.mxu0 %v531
  %690 = vmatpush1.bf16.msra.mxu0 %v530
  %691 = vmatprep.subr.bf16.mxu0 %v535
  %692 = vmatpush1.bf16.msra.mxu0 %v534
  %693 = vmatprep.subr.bf16.mxu0 %v539
  %694 = vmatpush1.bf16.msra.mxu0 %v538
  %695 = vmatprep.subr.bf16.mxu0 %v543
  %696 = vmatpush1.bf16.msra.mxu0 %v542
  %697 = vmatprep.subr.bf16.mxu0 %v547
  %698 = vmatpush1.bf16.msra.mxu0 %v546
  %699 = vmatprep.subr.bf16.mxu0 %v551
  %700 = vmatpush1.bf16.msra.mxu0 %v550
  %701 = vmatprep.mubr.bf16.mxu0 %v208
  %702 = vmatmul.mubr.bf16.gmra.mrb[0].mxu0 %v206
  %v703 = vpop.f32.mrb[0].mxu0
  %v704 = vadd.f32 %v287, %v703
  %v705 = vpop.f32.mrb[0].mxu0
  %v706 = vadd.f32 %v291, %v705
  %v707 = vpop.f32.mrb[0].mxu0
  %v708 = vadd.f32 %v287, %v707
  %v709 = vpop.f32.mrb[0].mxu0
  %v710 = vadd.f32 %v291, %v709
  %711 = vmatprep.mubr.bf16.mxu0 %v209
  %712 = vmatmul.mubr.bf16.gmra.mrb[0].mxu0 %v207
  %v713 = vpop.f32.mrb[0].mxu0
  %v714 = vadd.f32 %v287, %v713
  %v715 = vpop.f32.mrb[0].mxu0
  %v716 = vadd.f32 %v291, %v715
  %v717 = vpop.f32.mrb[0].mxu0
  %v718 = vadd.f32 %v287, %v717
  %v719 = vpop.f32.mrb[0].mxu0
  %v720 = vadd.f32 %v291, %v719
  %721 = vdwg.mxu0
  %v722 = vmax.f32 %v651, 0.0
  %v723 = vmax.f32 %v653, 0.0
  %v724 = vmax.f32 %v704, 0.0
  %v725 = vmax.f32 %v706, 0.0
  %v726 = vmax.f32 %v655, 0.0
  %v727 = vmax.f32 %v657, 0.0
  %v728 = vmax.f32 %v708, 0.0
  %v729 = vmax.f32 %v710, 0.0
  %v730 = vmax.f32 %v661, 0.0
  %v731 = vmax.f32 %v663, 0.0
  %v732 = vmax.f32 %v714, 0.0
  %v733 = vmax.f32 %v716, 0.0
  %v734 = vmax.f32 %v665, 0.0
  %v735 = vmax.f32 %v667, 0.0
  %v736 = vmax.f32 %v718, 0.0
  %v737 = vmax.f32 %v720, 0.0
  %v738 = vpack.c.bf16 %v726, %v722
  %v739 = vpack.c.bf16 %v727, %v723
  %v740 = vpack.c.bf16 %v728, %v724
  %v741 = vpack.c.bf16 %v729, %v725
  %v742 = vpack.c.bf16 %v734, %v730
  %v743 = vpack.c.bf16 %v735, %v731
  %v744 = vpack.c.bf16 %v736, %v732
  %v745 = vpack.c.bf16 %v737, %v733
  %v746 = vld [vmem:[%s5] sm:$0xff]
  %v747 = vld [vmem:[%s5 + $0x8] sm:$0xff]
  %v748 = vld [vmem:[%s5 + $0x10] sm:$0xff]
  %v749 = vld [vmem:[%s5 + $0x18] sm:$0xff]
  %v750 = vld [vmem:[%s5 + $0x20] sm:$0xff]
  %v751 = vld [vmem:[%s5 + $0x28] sm:$0xff]
  %v752 = vld [vmem:[%s5 + $0x30] sm:$0xff]
  %v753 = vld [vmem:[%s5 + $0x38] sm:$0xff]
  %v754 = vld [vmem:[%s5 + $0x40] sm:$0xff]
  %v755 = vld [vmem:[%s5 + $0x48] sm:$0xff]
  %v756 = vld [vmem:[%s5 + $0x50] sm:$0xff]
  %v757 = vld [vmem:[%s5 + $0x58] sm:$0xff]
  %v758 = vld [vmem:[%s5 + $0x60] sm:$0xff]
  %v759 = vld [vmem:[%s5 + $0x68] sm:$0xff]
  %v760 = vld [vmem:[%s5 + $0x70] sm:$0xff]
  %v761 = vld [vmem:[%s5 + $0x78] sm:$0xff]
  %v762 = vld [vmem:[%s5 + $0x80] sm:$0xff]
  %v763 = vld [vmem:[%s5 + $0x88] sm:$0xff]
  %v764 = vld [vmem:[%s5 + $0x90] sm:$0xff]
  %v765 = vld [vmem:[%s5 + $0x98] sm:$0xff]
  %v766 = vld [vmem:[%s5 + $0xa0] sm:$0xff]
  %v767 = vld [vmem:[%s5 + $0xa8] sm:$0xff]
  %v768 = vld [vmem:[%s5 + $0xb0] sm:$0xff]
  %v769 = vld [vmem:[%s5 + $0xb8] sm:$0xff]
  %v770 = vld [vmem:[%s5 + $0xc0] sm:$0xff]
  %v771 = vld [vmem:[%s5 + $0xc8] sm:$0xff]
  %v772 = vld [vmem:[%s5 + $0xd0] sm:$0xff]
  %v773 = vld [vmem:[%s5 + $0xd8] sm:$0xff]
  %v774 = vld [vmem:[%s5 + $0xe0] sm:$0xff]
  %v775 = vld [vmem:[%s5 + $0xe8] sm:$0xff]
  %v776 = vld [vmem:[%s5 + $0xf0] sm:$0xff]
  %v777 = vld [vmem:[%s5 + $0xf8] sm:$0xff]
  %v778 = vld [vmem:[%s5 + $0x100] sm:$0xff]
  %v779 = vld [vmem:[%s5 + $0x108] sm:$0xff]
  %v780 = vld [vmem:[%s5 + $0x110] sm:$0xff]
  %v781 = vld [vmem:[%s5 + $0x118] sm:$0xff]
  %v782 = vld [vmem:[%s5 + $0x120] sm:$0xff]
  %v783 = vld [vmem:[%s5 + $0x128] sm:$0xff]
  %v784 = vld [vmem:[%s5 + $0x130] sm:$0xff]
  %v785 = vld [vmem:[%s5 + $0x138] sm:$0xff]
  %v786 = vld [vmem:[%s5 + $0x140] sm:$0xff]
  %v787 = vld [vmem:[%s5 + $0x148] sm:$0xff]
  %v788 = vld [vmem:[%s5 + $0x150] sm:$0xff]
  %v789 = vld [vmem:[%s5 + $0x158] sm:$0xff]
  %v790 = vld [vmem:[%s5 + $0x160] sm:$0xff]
  %v791 = vld [vmem:[%s5 + $0x168] sm:$0xff]
  %v792 = vld [vmem:[%s5 + $0x170] sm:$0xff]
  %v793 = vld [vmem:[%s5 + $0x178] sm:$0xff]
  %v794 = vld [vmem:[%s5 + $0x180] sm:$0xff]
  %v795 = vld [vmem:[%s5 + $0x188] sm:$0xff]
  %v796 = vld [vmem:[%s5 + $0x190] sm:$0xff]
  %v797 = vld [vmem:[%s5 + $0x198] sm:$0xff]
  %v798 = vld [vmem:[%s5 + $0x1a0] sm:$0xff]
  %v799 = vld [vmem:[%s5 + $0x1a8] sm:$0xff]
  %v800 = vld [vmem:[%s5 + $0x1b0] sm:$0xff]
  %v801 = vld [vmem:[%s5 + $0x1b8] sm:$0xff]
  %v802 = vld [vmem:[%s5 + $0x1c0] sm:$0xff]
  %v803 = vld [vmem:[%s5 + $0x1c8] sm:$0xff]
  %v804 = vld [vmem:[%s5 + $0x1d0] sm:$0xff]
  %v805 = vld [vmem:[%s5 + $0x1d8] sm:$0xff]
  %v806 = vld [vmem:[%s5 + $0x1e0] sm:$0xff]
  %v807 = vld [vmem:[%s5 + $0x1e8] sm:$0xff]
  %v808 = vld [vmem:[%s5 + $0x1f0] sm:$0xff]
  %v809 = vld [vmem:[%s5 + $0x1f8] sm:$0xff]
  %v810 = vld [vmem:[%s6] sm:$0x3]
  %v812 = vlaneseq
  %v813 = vshrl.u32 %v812, 7
  %v814 = vsub.s32 0, %v813
  %v815 = vrot.slane %v810, %v814
  %v816 = vlaneseq
  %v817 = vshrl.u32 %v816, 7
  %v818 = vsub.s32 1, %v817
  %v819 = vrot.slane %v810, %v818
  %v886 = vunpack.c.l.b16 %v746
  %v887 = vunpack.c.h.b16 %v746
  %v888 = vunpack.c.l.b16 %v747
  %v889 = vunpack.c.h.b16 %v747
  %v890 = vunpack.c.l.b16 %v748
  %v891 = vunpack.c.h.b16 %v748
  %v892 = vunpack.c.l.b16 %v749
  %v893 = vunpack.c.h.b16 %v749
  %v894 = vunpack.c.l.b16 %v750
  %v895 = vunpack.c.h.b16 %v750
  %v896 = vunpack.c.l.b16 %v751
  %v897 = vunpack.c.h.b16 %v751
  %v898 = vunpack.c.l.b16 %v752
  %v899 = vunpack.c.h.b16 %v752
  %v900 = vunpack.c.l.b16 %v753
  %v901 = vunpack.c.h.b16 %v753
  %v902 = vunpack.c.l.b16 %v754
  %v903 = vunpack.c.h.b16 %v754
  %v904 = vunpack.c.l.b16 %v755
  %v905 = vunpack.c.h.b16 %v755
  %v906 = vunpack.c.l.b16 %v756
  %v907 = vunpack.c.h.b16 %v756
  %v908 = vunpack.c.l.b16 %v757
  %v909 = vunpack.c.h.b16 %v757
  %v910 = vunpack.c.l.b16 %v758
  %v911 = vunpack.c.h.b16 %v758
  %v912 = vunpack.c.l.b16 %v759
  %v913 = vunpack.c.h.b16 %v759
  %v914 = vunpack.c.l.b16 %v760
  %v915 = vunpack.c.h.b16 %v760
  %v916 = vunpack.c.l.b16 %v761
  %v917 = vunpack.c.h.b16 %v761
  %v918 = vunpack.c.l.b16 %v762
  %v919 = vunpack.c.h.b16 %v762
  %v920 = vunpack.c.l.b16 %v763
  %v921 = vunpack.c.h.b16 %v763
  %v922 = vunpack.c.l.b16 %v764
  %v923 = vunpack.c.h.b16 %v764
  %v924 = vunpack.c.l.b16 %v765
  %v925 = vunpack.c.h.b16 %v765
  %v926 = vunpack.c.l.b16 %v766
  %v927 = vunpack.c.h.b16 %v766
  %v928 = vunpack.c.l.b16 %v767
  %v929 = vunpack.c.h.b16 %v767
  %v930 = vunpack.c.l.b16 %v768
  %v931 = vunpack.c.h.b16 %v768
  %v932 = vunpack.c.l.b16 %v769
  %v933 = vunpack.c.h.b16 %v769
  %v934 = vunpack.c.l.b16 %v770
  %v935 = vunpack.c.h.b16 %v770
  %v936 = vunpack.c.l.b16 %v771
  %v937 = vunpack.c.h.b16 %v771
  %v938 = vunpack.c.l.b16 %v772
  %v939 = vunpack.c.h.b16 %v772
  %v940 = vunpack.c.l.b16 %v773
  %v941 = vunpack.c.h.b16 %v773
  %v942 = vunpack.c.l.b16 %v774
  %v943 = vunpack.c.h.b16 %v774
  %v944 = vunpack.c.l.b16 %v775
  %v945 = vunpack.c.h.b16 %v775
  %v946 = vunpack.c.l.b16 %v776
  %v947 = vunpack.c.h.b16 %v776
  %v948 = vunpack.c.l.b16 %v777
  %v949 = vunpack.c.h.b16 %v777
  %v950 = vunpack.c.l.b16 %v778
  %v951 = vunpack.c.h.b16 %v778
  %v952 = vunpack.c.l.b16 %v779
  %v953 = vunpack.c.h.b16 %v779
  %v954 = vunpack.c.l.b16 %v780
  %v955 = vunpack.c.h.b16 %v780
  %v956 = vunpack.c.l.b16 %v781
  %v957 = vunpack.c.h.b16 %v781
  %v958 = vunpack.c.l.b16 %v782
  %v959 = vunpack.c.h.b16 %v782
  %v960 = vunpack.c.l.b16 %v783
  %v961 = vunpack.c.h.b16 %v783
  %v962 = vunpack.c.l.b16 %v784
  %v963 = vunpack.c.h.b16 %v784
  %v964 = vunpack.c.l.b16 %v785
  %v965 = vunpack.c.h.b16 %v785
  %v966 = vunpack.c.l.b16 %v786
  %v967 = vunpack.c.h.b16 %v786
  %v968 = vunpack.c.l.b16 %v787
  %v969 = vunpack.c.h.b16 %v787
  %v970 = vunpack.c.l.b16 %v788
  %v971 = vunpack.c.h.b16 %v788
  %v972 = vunpack.c.l.b16 %v789
  %v973 = vunpack.c.h.b16 %v789
  %v974 = vunpack.c.l.b16 %v790
  %v975 = vunpack.c.h.b16 %v790
  %v976 = vunpack.c.l.b16 %v791
  %v977 = vunpack.c.h.b16 %v791
  %v978 = vunpack.c.l.b16 %v792
  %v979 = vunpack.c.h.b16 %v792
  %v980 = vunpack.c.l.b16 %v793
  %v981 = vunpack.c.h.b16 %v793
  %v982 = vunpack.c.l.b16 %v794
  %v983 = vunpack.c.h.b16 %v794
  %v984 = vunpack.c.l.b16 %v795
  %v985 = vunpack.c.h.b16 %v795
  %v986 = vunpack.c.l.b16 %v796
  %v987 = vunpack.c.h.b16 %v796
  %v988 = vunpack.c.l.b16 %v797
  %v989 = vunpack.c.h.b16 %v797
  %v990 = vunpack.c.l.b16 %v798
  %v991 = vunpack.c.h.b16 %v798
  %v992 = vunpack.c.l.b16 %v799
  %v993 = vunpack.c.h.b16 %v799
  %v994 = vunpack.c.l.b16 %v800
  %v995 = vunpack.c.h.b16 %v800
  %v996 = vunpack.c.l.b16 %v801
  %v997 = vunpack.c.h.b16 %v801
  %v998 = vunpack.c.l.b16 %v802
  %v999 = vunpack.c.h.b16 %v802
  %v1000 = vunpack.c.l.b16 %v803
  %v1001 = vunpack.c.h.b16 %v803
  %v1002 = vunpack.c.l.b16 %v804
  %v1003 = vunpack.c.h.b16 %v804
  %v1004 = vunpack.c.l.b16 %v805
  %v1005 = vunpack.c.h.b16 %v805
  %v1006 = vunpack.c.l.b16 %v806
  %v1007 = vunpack.c.h.b16 %v806
  %v1008 = vunpack.c.l.b16 %v807
  %v1009 = vunpack.c.h.b16 %v807
  %v1010 = vunpack.c.l.b16 %v808
  %v1011 = vunpack.c.h.b16 %v808
  %v1012 = vunpack.c.l.b16 %v809
  %v1013 = vunpack.c.h.b16 %v809
  %v1014 = vpack.c.b16 %v888, %v886
  %v1015 = vpack.c.b16 %v889, %v887
  %v1016 = vpack.c.b16 %v892, %v890
  %v1017 = vpack.c.b16 %v893, %v891
  %v1018 = vpack.c.b16 %v896, %v894
  %v1019 = vpack.c.b16 %v897, %v895
  %v1020 = vpack.c.b16 %v900, %v898
  %v1021 = vpack.c.b16 %v901, %v899
  %v1022 = vpack.c.b16 %v904, %v902
  %v1023 = vpack.c.b16 %v905, %v903
  %v1024 = vpack.c.b16 %v908, %v906
  %v1025 = vpack.c.b16 %v909, %v907
  %v1026 = vpack.c.b16 %v912, %v910
  %v1027 = vpack.c.b16 %v913, %v911
  %v1028 = vpack.c.b16 %v916, %v914
  %v1029 = vpack.c.b16 %v917, %v915
  %v1030 = vpack.c.b16 %v920, %v918
  %v1031 = vpack.c.b16 %v921, %v919
  %v1032 = vpack.c.b16 %v924, %v922
  %v1033 = vpack.c.b16 %v925, %v923
  %v1034 = vpack.c.b16 %v928, %v926
  %v1035 = vpack.c.b16 %v929, %v927
  %v1036 = vpack.c.b16 %v932, %v930
  %v1037 = vpack.c.b16 %v933, %v931
  %v1038 = vpack.c.b16 %v936, %v934
  %v1039 = vpack.c.b16 %v937, %v935
  %v1040 = vpack.c.b16 %v940, %v938
  %v1041 = vpack.c.b16 %v941, %v939
  %v1042 = vpack.c.b16 %v944, %v942
  %v1043 = vpack.c.b16 %v945, %v943
  %v1044 = vpack.c.b16 %v948, %v946
  %v1045 = vpack.c.b16 %v949, %v947
  %v1046 = vpack.c.b16 %v952, %v950
  %v1047 = vpack.c.b16 %v953, %v951
  %v1048 = vpack.c.b16 %v956, %v954
  %v1049 = vpack.c.b16 %v957, %v955
  %v1050 = vpack.c.b16 %v960, %v958
  %v1051 = vpack.c.b16 %v961, %v959
  %v1052 = vpack.c.b16 %v964, %v962
  %v1053 = vpack.c.b16 %v965, %v963
  %v1054 = vpack.c.b16 %v968, %v966
  %v1055 = vpack.c.b16 %v969, %v967
  %v1056 = vpack.c.b16 %v972, %v970
  %v1057 = vpack.c.b16 %v973, %v971
  %v1058 = vpack.c.b16 %v976, %v974
  %v1059 = vpack.c.b16 %v977, %v975
  %v1060 = vpack.c.b16 %v980, %v978
  %v1061 = vpack.c.b16 %v981, %v979
  %v1062 = vpack.c.b16 %v984, %v982
  %v1063 = vpack.c.b16 %v985, %v983
  %v1064 = vpack.c.b16 %v988, %v986
  %v1065 = vpack.c.b16 %v989, %v987
  %v1066 = vpack.c.b16 %v992, %v990
  %v1067 = vpack.c.b16 %v993, %v991
  %v1068 = vpack.c.b16 %v996, %v994
  %v1069 = vpack.c.b16 %v997, %v995
  %v1070 = vpack.c.b16 %v1000, %v998
  %v1071 = vpack.c.b16 %v1001, %v999
  %v1072 = vpack.c.b16 %v1004, %v1002
  %v1073 = vpack.c.b16 %v1005, %v1003
  %v1074 = vpack.c.b16 %v1008, %v1006
  %v1075 = vpack.c.b16 %v1009, %v1007
  %v1076 = vpack.c.b16 %v1012, %v1010
  %v1077 = vpack.c.b16 %v1013, %v1011
  %1142 = vmatprep.subr.bf16.mxu0 %v1015
  %1143 = vmatpush1.bf16.msra.mxu0 %v1014
  %1144 = vmatprep.subr.bf16.mxu0 %v1017
  %1145 = vmatpush1.bf16.msra.mxu0 %v1016
  %1146 = vmatprep.subr.bf16.mxu0 %v1019
  %1147 = vmatpush1.bf16.msra.mxu0 %v1018
  %1148 = vmatprep.subr.bf16.mxu0 %v1021
  %1149 = vmatpush1.bf16.msra.mxu0 %v1020
  %1150 = vmatprep.subr.bf16.mxu0 %v1023
  %1151 = vmatpush1.bf16.msra.mxu0 %v1022
  %1152 = vmatprep.subr.bf16.mxu0 %v1025
  %1153 = vmatpush1.bf16.msra.mxu0 %v1024
  %1154 = vmatprep.subr.bf16.mxu0 %v1027
  %1155 = vmatpush1.bf16.msra.mxu0 %v1026
  %1156 = vmatprep.subr.bf16.mxu0 %v1029
  %1157 = vmatpush1.bf16.msra.mxu0 %v1028
  %1158 = vmatprep.subr.bf16.mxu0 %v1031
  %1159 = vmatpush1.bf16.msra.mxu0 %v1030
  %1160 = vmatprep.subr.bf16.mxu0 %v1033
  %1161 = vmatpush1.bf16.msra.mxu0 %v1032
  %1162 = vmatprep.subr.bf16.mxu0 %v1035
  %1163 = vmatpush1.bf16.msra.mxu0 %v1034
  %1164 = vmatprep.subr.bf16.mxu0 %v1037
  %1165 = vmatpush1.bf16.msra.mxu0 %v1036
  %1166 = vmatprep.subr.bf16.mxu0 %v1039
  %1167 = vmatpush1.bf16.msra.mxu0 %v1038
  %1168 = vmatprep.subr.bf16.mxu0 %v1041
  %1169 = vmatpush1.bf16.msra.mxu0 %v1040
  %1170 = vmatprep.subr.bf16.mxu0 %v1043
  %1171 = vmatpush1.bf16.msra.mxu0 %v1042
  %1172 = vmatprep.subr.bf16.mxu0 %v1045
  %1173 = vmatpush1.bf16.msra.mxu0 %v1044
  %1174 = vmatprep.mubr.bf16.mxu0 %v739
  %1175 = vmatmul.mubr.bf16.gmra.mrb[0].mxu0 %v738
  %v1176 = vpop.f32.mrb[0].mxu0
  %v1177 = vadd.f32 %v815, %v1176
  %v1178 = vpop.f32.mrb[0].mxu0
  %v1179 = vadd.f32 %v819, %v1178
  %v1180 = vpop.f32.mrb[0].mxu0
  %v1181 = vadd.f32 %v815, %v1180
  %v1182 = vpop.f32.mrb[0].mxu0
  %v1183 = vadd.f32 %v819, %v1182
  %1184 = vmatprep.mubr.bf16.mxu0 %v743
  %1185 = vmatmul.mubr.bf16.gmra.mrb[0].mxu0 %v742
  %v1186 = vpop.f32.mrb[0].mxu0
  %v1187 = vadd.f32 %v815, %v1186
  %v1188 = vpop.f32.mrb[0].mxu0
  %v1189 = vadd.f32 %v819, %v1188
  %v1190 = vpop.f32.mrb[0].mxu0
  %v1191 = vadd.f32 %v815, %v1190
  %v1192 = vpop.f32.mrb[0].mxu0
  %v1193 = vadd.f32 %v819, %v1192
  %1194 = vdwg.mxu0
  %1195 = vmatprep.subr.bf16.mxu0 %v1047
  %1196 = vmatpush1.bf16.msra.mxu0 %v1046
  %1197 = vmatprep.subr.bf16.mxu0 %v1049
  %1198 = vmatpush1.bf16.msra.mxu0 %v1048
  %1199 = vmatprep.subr.bf16.mxu0 %v1051
  %1200 = vmatpush1.bf16.msra.mxu0 %v1050
  %1201 = vmatprep.subr.bf16.mxu0 %v1053
  %1202 = vmatpush1.bf16.msra.mxu0 %v1052
  %1203 = vmatprep.subr.bf16.mxu0 %v1055
  %1204 = vmatpush1.bf16.msra.mxu0 %v1054
  %1205 = vmatprep.subr.bf16.mxu0 %v1057
  %1206 = vmatpush1.bf16.msra.mxu0 %v1056
  %1207 = vmatprep.subr.bf16.mxu0 %v1059
  %1208 = vmatpush1.bf16.msra.mxu0 %v1058
  %1209 = vmatprep.subr.bf16.mxu0 %v1061
  %1210 = vmatpush1.bf16.msra.mxu0 %v1060
  %1211 = vmatprep.subr.bf16.mxu0 %v1063
  %1212 = vmatpush1.bf16.msra.mxu0 %v1062
  %1213 = vmatprep.subr.bf16.mxu0 %v1065
  %1214 = vmatpush1.bf16.msra.mxu0 %v1064
  %1215 = vmatprep.subr.bf16.mxu0 %v1067
  %1216 = vmatpush1.bf16.msra.mxu0 %v1066
  %1217 = vmatprep.subr.bf16.mxu0 %v1069
  %1218 = vmatpush1.bf16.msra.mxu0 %v1068
  %1219 = vmatprep.subr.bf16.mxu0 %v1071
  %1220 = vmatpush1.bf16.msra.mxu0 %v1070
  %1221 = vmatprep.subr.bf16.mxu0 %v1073
  %1222 = vmatpush1.bf16.msra.mxu0 %v1072
  %1223 = vmatprep.subr.bf16.mxu0 %v1075
  %1224 = vmatpush1.bf16.msra.mxu0 %v1074
  %1225 = vmatprep.subr.bf16.mxu0 %v1077
  %1226 = vmatpush1.bf16.msra.mxu0 %v1076
  %1227 = vmatprep.mubr.bf16.mxu0 %v741
  %1228 = vmatmul.mubr.bf16.gmra.mrb[0].mxu0 %v740
  %v1229 = vpop.f32.mrb[0].mxu0
  %v1230 = vadd.f32 %v1177, %v1229
  %v1231 = vpop.f32.mrb[0].mxu0
  %v1232 = vadd.f32 %v1179, %v1231
  %v1233 = vpop.f32.mrb[0].mxu0
  %v1234 = vadd.f32 %v1181, %v1233
  %v1235 = vpop.f32.mrb[0].mxu0
  %v1236 = vadd.f32 %v1183, %v1235
  %1237 = vmatprep.mubr.bf16.mxu0 %v745
  %1238 = vmatmul.mubr.bf16.gmra.mrb[0].mxu0 %v744
  %v1239 = vpop.f32.mrb[0].mxu0
  %v1240 = vadd.f32 %v1187, %v1239
  %v1241 = vpop.f32.mrb[0].mxu0
  %v1242 = vadd.f32 %v1189, %v1241
  %v1243 = vpop.f32.mrb[0].mxu0
  %v1244 = vadd.f32 %v1191, %v1243
  %v1245 = vpop.f32.mrb[0].mxu0
  %v1246 = vadd.f32 %v1193, %v1245
  %1247 = vdwg.mxu0
  %v1248 = vpack.c.bf16 %v1234, %v1230
  %v1249 = vpack.c.bf16 %v1236, %v1232
  %v1250 = vpack.c.bf16 %v1244, %v1240
  %v1251 = vpack.c.bf16 %v1246, %v1242
  %v1256 = vunpack.c.l.b16 %v1248
  %v1257 = vunpack.c.l.b16 %v1249
  %v1258 = vunpack.c.h.b16 %v1248
  %v1259 = vunpack.c.h.b16 %v1249
  %v1260 = vunpack.c.l.b16 %v1250
  %v1261 = vunpack.c.l.b16 %v1251
  %v1262 = vunpack.c.h.b16 %v1250
  %v1263 = vunpack.c.h.b16 %v1251
  %v1264 = vpack.c.b16 %v1257, %v1256
  %v1265 = vpack.c.b16 %v1259, %v1258
  %v1266 = vpack.c.b16 %v1261, %v1260
  %v1267 = vpack.c.b16 %v1263, %v1262
  %1272 = vst [vmem:[%s7] sm:$0xff] %v1264
  %1273 = vst [vmem:[%s7 + $0x8] sm:$0xff] %v1265
  %1274 = vst [vmem:[%s7 + $0x10] sm:$0xff] %v1266
  %1275 = vst [vmem:[%s7 + $0x18] sm:$0xff] %v1267
  // Predicated region
  $region30: #{forward.13} parent=0 // pred_check
    _
  $region31: #{forward.13} parent=0 // pred_check_branch
    %1277 = sbr.rel (0) target = $region33
  $region32: #{forward.13} parent=0 // pred_region
    _
  $region33: #{forward.13} parent=0 // pred_fallthru
    _
  // Predicated region
  $region34: #{forward.13} parent=0 // pred_check
    _
  $region35: #{forward.13} parent=0 // pred_check_branch
    %1279 = sbr.rel (0) target = $region37
  $region36: #{forward.13} parent=0 // pred_region
    _
  $region37: #{forward.13} parent=0 // pred_fallthru
    _

// kernel: forward.14
$region0: #{forward.14}
  #allocation0 [shape = 'u32[]', space=smem, size = 0x4, offset = 0x4, fixed_abs, tag = 'smem constant byte address 0x4 - core index']
  #allocation1 [shape = 'u32[144,128]{1,0:T(1,128)}', space=vmem, size = 0x12000, scoped, tag = 'internal scratch']
  %s0 = inlined_call_operand.vmem [shape: f32[8,256], index: 0, kind: input, shape index: {}]
  %s1 = inlined_call_operand.vmem [shape: f32[8,1], index: 1, kind: input, shape index: {}]
  %s2 = inlined_call_operand.vmem [shape: f32[1,256], index: 2, kind: input, shape index: {}]
  %s3 = inlined_call_operand.vmem [shape: f32[1,256], index: 3, kind: input, shape index: {}]
  %s4 = inlined_call_operand.vmem [shape: f32[8,256], index: 4, kind: output, shape index: {}]
  %s5 = sld [smem:[#allocation0]]
  $region26: #{forward.14} parent=0
    _
  %s7 = ssub.s32 1, %s5
  %s8 = scalar_select 0, %s7, %s5
  // Predicated region
  $region2: #{forward.14} parent=0 // pred_check
    _
  $region3: #{forward.14} parent=0 // pred_check_branch
    %10 = sbr.rel (0) target = $region5
  $region4: #{forward.14} parent=0 // pred_region
    _
  $region5: #{forward.14} parent=0 // pred_fallthru
    _
  // Predicated region
  $region6: #{forward.14} parent=0 // pred_check
    _
  $region7: #{forward.14} parent=0 // pred_check_branch
    %12 = sbr.rel (0) target = $region9
  $region8: #{forward.14} parent=0 // pred_region
    _
  $region9: #{forward.14} parent=0 // pred_fallthru
    _
  // Predicated region
  $region10: #{forward.14} parent=0 // pred_check
    _
  $region11: #{forward.14} parent=0 // pred_check_branch
    %14 = sbr.rel (0) target = $region13
  $region12: #{forward.14} parent=0 // pred_region
    _
  $region13: #{forward.14} parent=0 // pred_fallthru
    _
  // Predicated region
  $region14: #{forward.14} parent=0 // pred_check
    _
  $region15: #{forward.14} parent=0 // pred_check_branch
    %16 = sbr.rel (0) target = $region17
  $region16: #{forward.14} parent=0 // pred_region
    _
  $region17: #{forward.14} parent=0 // pred_fallthru
    _
  %v17 = vld [vmem:[%s0] sm:$0xff]
  %v18 = vld [vmem:[%s0 + $0x8] sm:$0xff]
  %v19 = vld [vmem:[%s1] sm:$0xff]
  %21 = vset.pattern.permute.xlu0 0
  %22 = vperm.xlu0 %21, %v19
  %v23 = vpop.permute.xlu0 %22
  %v25 = vmul.f32 %v17, %v23
  %v26 = vmul.f32 %v18, %v23
  %v27 = vld [vmem:[%s2] sm:$0x3]
  %v29 = vlaneseq
  %v30 = vshrl.u32 %v29, 7
  %v31 = vsub.s32 0, %v30
  %v32 = vrot.slane %v27, %v31
  %v33 = vlaneseq
  %v34 = vshrl.u32 %v33, 7
  %v35 = vsub.s32 1, %v34
  %v36 = vrot.slane %v27, %v35
  %v39 = vmul.f32 %v25, %v32
  %v40 = vmul.f32 %v26, %v36
  %v41 = vld [vmem:[%s3] sm:$0x3]
  %v43 = vlaneseq
  %v44 = vshrl.u32 %v43, 7
  %v45 = vsub.s32 0, %v44
  %v46 = vrot.slane %v41, %v45
  %v47 = vlaneseq
  %v48 = vshrl.u32 %v47, 7
  %v49 = vsub.s32 1, %v48
  %v50 = vrot.slane %v41, %v49
  %v53 = vadd.f32 %v39, %v46
  %v54 = vadd.f32 %v40, %v50
  %v55 = vmax.f32 %v53, 0.0
  %v56 = vmax.f32 %v54, 0.0
  %57 = vst [vmem:[%s4] sm:$0xff] %v55
  %58 = vst [vmem:[%s4 + $0x8] sm:$0xff] %v56
  // Predicated region
  $region18: #{forward.14} parent=0 // pred_check
    _
  $region19: #{forward.14} parent=0 // pred_check_branch
    %60 = sbr.rel (0) target = $region21
  $region20: #{forward.14} parent=0 // pred_region
    _
  $region21: #{forward.14} parent=0 // pred_fallthru
    _
  // Predicated region
  $region22: #{forward.14} parent=0 // pred_check
    _
  $region23: #{forward.14} parent=0 // pred_check_branch
    %62 = sbr.rel (0) target = $region25
  $region24: #{forward.14} parent=0 // pred_region
    _
  $region25: #{forward.14} parent=0 // pred_fallthru
    _

// kernel: forward.15
$region0: #{forward.15}
  #allocation0 [shape = 'u32[]', space=smem, size = 0x4, offset = 0x4, fixed_abs, tag = 'smem constant byte address 0x4 - core index']
  #allocation1 [shape = 'u32[144,128]{1,0:T(1,128)}', space=vmem, size = 0x12000, scoped, tag = 'internal scratch']
  %s0 = inlined_call_operand.vmem [shape: s32[32,1], index: 0, kind: input, shape index: {}]
  %s1 = inlined_call_operand.vmem [shape: s32[32,1], index: 1, kind: input, shape index: {}]
  %s2 = inlined_call_operand.vmem [shape: f32[8,256], index: 2, kind: input, shape index: {}]
  %s3 = inlined_call_operand.vmem [shape: bf16[512,512], index: 3, kind: input, shape index: {}]
  %s4 = inlined_call_operand.vmem [shape: f32[1,512], index: 4, kind: input, shape index: {}]
  %s5 = inlined_call_operand.vmem [shape: bf16[512,256], index: 5, kind: input, shape index: {}]
  %s6 = inlined_call_operand.vmem [shape: f32[1,256], index: 6, kind: input, shape index: {}]
  %s7 = inlined_call_operand.vmem [shape: bf16[32,256], index: 7, kind: output, shape index: {}]
  %s8 = sld [smem:[#allocation0]]
  $region38: #{forward.15} parent=0
    _
  %s10 = ssub.s32 1, %s8
  %s11 = scalar_select 0, %s10, %s8
  // Predicated region
  $region2: #{forward.15} parent=0 // pred_check
    _
  $region3: #{forward.15} parent=0 // pred_check_branch
    %13 = sbr.rel (0) target = $region5
  $region4: #{forward.15} parent=0 // pred_region
    _
  $region5: #{forward.15} parent=0 // pred_fallthru
    _
  // Predicated region
  $region6: #{forward.15} parent=0 // pred_check
    _
  $region7: #{forward.15} parent=0 // pred_check_branch
    %15 = sbr.rel (0) target = $region9
  $region8: #{forward.15} parent=0 // pred_region
    _
  $region9: #{forward.15} parent=0 // pred_fallthru
    _
  // Predicated region
  $region10: #{forward.15} parent=0 // pred_check
    _
  $region11: #{forward.15} parent=0 // pred_check_branch
    %17 = sbr.rel (0) target = $region13
  $region12: #{forward.15} parent=0 // pred_region
    _
  $region13: #{forward.15} parent=0 // pred_fallthru
    _
  // Predicated region
  $region14: #{forward.15} parent=0 // pred_check
    _
  $region15: #{forward.15} parent=0 // pred_check_branch
    %19 = sbr.rel (0) target = $region17
  $region16: #{forward.15} parent=0 // pred_region
    _
  $region17: #{forward.15} parent=0 // pred_fallthru
    _
  // Predicated region
  $region18: #{forward.15} parent=0 // pred_check
    _
  $region19: #{forward.15} parent=0 // pred_check_branch
    %21 = sbr.rel (0) target = $region21
  $region20: #{forward.15} parent=0 // pred_region
    _
  $region21: #{forward.15} parent=0 // pred_fallthru
    _
  // Predicated region
  $region22: #{forward.15} parent=0 // pred_check
    _
  $region23: #{forward.15} parent=0 // pred_check_branch
    %23 = sbr.rel (0) target = $region25
  $region24: #{forward.15} parent=0 // pred_region
    _
  $region25: #{forward.15} parent=0 // pred_fallthru
    _
  // Predicated region
  $region26: #{forward.15} parent=0 // pred_check
    _
  $region27: #{forward.15} parent=0 // pred_check_branch
    %25 = sbr.rel (0) target = $region29
  $region28: #{forward.15} parent=0 // pred_region
    _
  $region29: #{forward.15} parent=0 // pred_fallthru
    _
  %v27 = vld [vmem:[%s2] sm:$0xff]
  %v28 = vld [vmem:[%s2 + $0x8] sm:$0xff]
  %v29 = vld [vmem:[%s0] sm:$0xff]
  %v30 = vld [vmem:[%s0 + $0x8] sm:$0xff]
  %v31 = vld [vmem:[%s0 + $0x10] sm:$0xff]
  %v32 = vld [vmem:[%s0 + $0x18] sm:$0xff]
  %v33 = vld [vmem:[%s1] sm:$0xff]
  %v34 = vld [vmem:[%s1 + $0x8] sm:$0xff]
  %v35 = vld [vmem:[%s1 + $0x10] sm:$0xff]
  %v36 = vld [vmem:[%s1 + $0x18] sm:$0xff]
  %v37 = vpack.c.bf16 %v27, %v27
  %v38 = vpack.c.bf16 %v28, %v28
  %v39 = vlaneseq
  %v40 = vand.u32 %v39, 127
  %41 = vset.pattern.permute.xlu0 0
  %42 = vperm.xlu0 %41, %v29
  %v43 = vpop.permute.xlu0 %42
  %44 = vset.pattern.permute.xlu0 0
  %45 = vperm.xlu0 %44, %v30
  %v46 = vpop.permute.xlu0 %45
  %47 = vset.pattern.permute.xlu0 0
  %48 = vperm.xlu0 %47, %v31
  %v49 = vpop.permute.xlu0 %48
  %50 = vset.pattern.permute.xlu0 0
  %51 = vperm.xlu0 %50, %v32
  %v52 = vpop.permute.xlu0 %51
  %vm53 = vcmp.eq.s32.totalorder %v43, %v40
  %vm54 = vcmp.eq.s32.totalorder %v46, %v40
  %vm55 = vcmp.eq.s32.totalorder %v49, %v40
  %vm56 = vcmp.eq.s32.totalorder %v52, %v40
  %v57 = vsel %vm53, 1, 0
  %v58 = vsel %vm54, 1, 0
  %v59 = vsel %vm55, 1, 0
  %v60 = vsel %vm56, 1, 0
  %v61 = vcvt.s32.f32 %v57
  %v62 = vcvt.s32.f32 %v58
  %v63 = vcvt.s32.f32 %v59
  %v64 = vcvt.s32.f32 %v60
  %v65 = vpack.c.bf16 %v62, %v61
  %v66 = vpack.c.bf16 %v64, %v63
  %67 = vset.pattern.permute.xlu0 0
  %68 = vperm.xlu0 %67, %v33
  %v69 = vpop.permute.xlu0 %68
  %70 = vset.pattern.permute.xlu0 0
  %71 = vperm.xlu0 %70, %v34
  %v72 = vpop.permute.xlu0 %71
  %73 = vset.pattern.permute.xlu0 0
  %74 = vperm.xlu0 %73, %v35
  %v75 = vpop.permute.xlu0 %74
  %76 = vset.pattern.permute.xlu0 0
  %77 = vperm.xlu0 %76, %v36
  %v78 = vpop.permute.xlu0 %77
  %vm79 = vcmp.eq.s32.totalorder %v69, %v40
  %vm80 = vcmp.eq.s32.totalorder %v72, %v40
  %vm81 = vcmp.eq.s32.totalorder %v75, %v40
  %vm82 = vcmp.eq.s32.totalorder %v78, %v40
  %v83 = vsel %vm79, 1, 0
  %v84 = vsel %vm80, 1, 0
  %v85 = vsel %vm81, 1, 0
  %v86 = vsel %vm82, 1, 0
  %v87 = vcvt.s32.f32 %v83
  %v88 = vcvt.s32.f32 %v84
  %v89 = vcvt.s32.f32 %v85
  %v90 = vcvt.s32.f32 %v86
  %v91 = vpack.c.bf16 %v88, %v87
  %v92 = vpack.c.bf16 %v90, %v89
  %vm93 = vcmask 64512
  %v95 = vsel %vm93, %v65, 0
  %v98 = vsel %vm93, %v66, 0
  %vm100 = vcmask 1043456
  %v102 = vsel %vm100, %v37, 0
  %v105 = vsel %vm100, %v38, 0
  %107 = vmatprep.subr.bf16.mxu0 %v105
  %108 = vmatpush1.bf16.msra.mxu0 %v102
  %109 = vmatprep.subr.bf16.mxu0 0
  %110 = vmatpush1.bf16.msra.mxu0 0
  %111 = vmatprep.subr.bf16.mxu0 0
  %112 = vmatpush1.bf16.msra.mxu0 0
  %113 = vmatprep.subr.bf16.mxu0 0
  %114 = vmatpush1.bf16.msra.mxu0 0
  %115 = vmatprep.subr.bf16.mxu0 0
  %116 = vmatpush1.bf16.msra.mxu0 0
  %117 = vmatprep.subr.bf16.mxu0 0
  %118 = vmatpush1.bf16.msra.mxu0 0
  %119 = vmatprep.subr.bf16.mxu0 0
  %120 = vmatpush1.bf16.msra.mxu0 0
  %121 = vmatprep.subr.bf16.mxu0 0
  %122 = vmatpush1.bf16.msra.mxu0 0
  %123 = vmatprep.subr.bf16.mxu0 0
  %124 = vmatpush1.bf16.msra.mxu0 0
  %125 = vmatprep.subr.bf16.mxu0 0
  %126 = vmatpush1.bf16.msra.mxu0 0
  %127 = vmatprep.subr.bf16.mxu0 0
  %128 = vmatpush1.bf16.msra.mxu0 0
  %129 = vmatprep.subr.bf16.mxu0 0
  %130 = vmatpush1.bf16.msra.mxu0 0
  %131 = vmatprep.subr.bf16.mxu0 0
  %132 = vmatpush1.bf16.msra.mxu0 0
  %133 = vmatprep.subr.bf16.mxu0 0
  %134 = vmatpush1.bf16.msra.mxu0 0
  %135 = vmatprep.subr.bf16.mxu0 0
  %136 = vmatpush1.bf16.msra.mxu0 0
  %137 = vmatprep.subr.bf16.mxu0 0
  %138 = vmatpush1.bf16.msra.mxu0 0
  %139 = vmatprep.mubr.bf16.mxu0 0
  %140 = vmatmul.mubr.bf16.gmra.mrb[0].mxu0 %v95
  %v141 = vpop.f32.mrb[0].mxu0
  %v142 = vadd.f32 0.0, %v141
  %v143 = vpop.f32.mrb[0].mxu0
  %v144 = vadd.f32 0.0, %v143
  %v145 = vpop.f32.mrb[0].mxu0
  %v146 = vadd.f32 0.0, %v145
  %v147 = vpop.f32.mrb[0].mxu0
  %v148 = vadd.f32 0.0, %v147
  %149 = vmatprep.mubr.bf16.mxu0 0
  %150 = vmatmul.mubr.bf16.gmra.mrb[0].mxu0 %v98
  %v151 = vpop.f32.mrb[0].mxu0
  %v152 = vadd.f32 0.0, %v151
  %v153 = vpop.f32.mrb[0].mxu0
  %v154 = vadd.f32 0.0, %v153
  %v155 = vpop.f32.mrb[0].mxu0
  %v156 = vadd.f32 0.0, %v155
  %v157 = vpop.f32.mrb[0].mxu0
  %v158 = vadd.f32 0.0, %v157
  %159 = vdwg.mxu0
  %v161 = vsel %vm93, %v91, 0
  %v164 = vsel %vm93, %v92, 0
  %166 = vmatprep.subr.bf16.mxu0 %v105
  %167 = vmatpush1.bf16.msra.mxu0 %v102
  %168 = vmatprep.subr.bf16.mxu0 0
  %169 = vmatpush1.bf16.msra.mxu0 0
  %170 = vmatprep.subr.bf16.mxu0 0
  %171 = vmatpush1.bf16.msra.mxu0 0
  %172 = vmatprep.subr.bf16.mxu0 0
  %173 = vmatpush1.bf16.msra.mxu0 0
  %174 = vmatprep.subr.bf16.mxu0 0
  %175 = vmatpush1.bf16.msra.mxu0 0
  %176 = vmatprep.subr.bf16.mxu0 0
  %177 = vmatpush1.bf16.msra.mxu0 0
  %178 = vmatprep.subr.bf16.mxu0 0
  %179 = vmatpush1.bf16.msra.mxu0 0
  %180 = vmatprep.subr.bf16.mxu0 0
  %181 = vmatpush1.bf16.msra.mxu0 0
  %182 = vmatprep.subr.bf16.mxu0 0
  %183 = vmatpush1.bf16.msra.mxu0 0
  %184 = vmatprep.subr.bf16.mxu0 0
  %185 = vmatpush1.bf16.msra.mxu0 0
  %186 = vmatprep.subr.bf16.mxu0 0
  %187 = vmatpush1.bf16.msra.mxu0 0
  %188 = vmatprep.subr.bf16.mxu0 0
  %189 = vmatpush1.bf16.msra.mxu0 0
  %190 = vmatprep.subr.bf16.mxu0 0
  %191 = vmatpush1.bf16.msra.mxu0 0
  %192 = vmatprep.subr.bf16.mxu0 0
  %193 = vmatpush1.bf16.msra.mxu0 0
  %194 = vmatprep.subr.bf16.mxu0 0
  %195 = vmatpush1.bf16.msra.mxu0 0
  %196 = vmatprep.subr.bf16.mxu0 0
  %197 = vmatpush1.bf16.msra.mxu0 0
  %198 = vmatprep.mubr.bf16.mxu0 0
  %199 = vmatmul.mubr.bf16.gmra.mrb[0].mxu0 %v161
  %v200 = vpop.f32.mrb[0].mxu0
  %v201 = vadd.f32 0.0, %v200
  %v202 = vpop.f32.mrb[0].mxu0
  %v203 = vadd.f32 0.0, %v202
  %v204 = vpop.f32.mrb[0].mxu0
  %v205 = vadd.f32 0.0, %v204
  %v206 = vpop.f32.mrb[0].mxu0
  %v207 = vadd.f32 0.0, %v206
  %208 = vmatprep.mubr.bf16.mxu0 0
  %209 = vmatmul.mubr.bf16.gmra.mrb[0].mxu0 %v164
  %v210 = vpop.f32.mrb[0].mxu0
  %v211 = vadd.f32 0.0, %v210
  %v212 = vpop.f32.mrb[0].mxu0
  %v213 = vadd.f32 0.0, %v212
  %v214 = vpop.f32.mrb[0].mxu0
  %v215 = vadd.f32 0.0, %v214
  %v216 = vpop.f32.mrb[0].mxu0
  %v217 = vadd.f32 0.0, %v216
  %218 = vdwg.mxu0
  %v219 = vpack.c.bf16 %v146, %v142
  %v220 = vpack.c.bf16 %v148, %v144
  %v221 = vpack.c.bf16 %v156, %v152
  %v222 = vpack.c.bf16 %v158, %v154
  %v223 = vpack.c.bf16 %v205, %v201
  %v224 = vpack.c.bf16 %v207, %v203
  %v225 = vpack.c.bf16 %v215, %v211
  %v226 = vpack.c.bf16 %v217, %v213
  %v227 = vld [vmem:[%s3] sm:$0xff]
  %v228 = vld [vmem:[%s3 + $0x8] sm:$0xff]
  %v229 = vld [vmem:[%s3 + $0x10] sm:$0xff]
  %v230 = vld [vmem:[%s3 + $0x18] sm:$0xff]
  %v231 = vld [vmem:[%s3 + $0x20] sm:$0xff]
  %v232 = vld [vmem:[%s3 + $0x28] sm:$0xff]
  %v233 = vld [vmem:[%s3 + $0x30] sm:$0xff]
  %v234 = vld [vmem:[%s3 + $0x38] sm:$0xff]
  %v235 = vld [vmem:[%s3 + $0x40] sm:$0xff]
  %v236 = vld [vmem:[%s3 + $0x48] sm:$0xff]
  %v237 = vld [vmem:[%s3 + $0x50] sm:$0xff]
  %v238 = vld [vmem:[%s3 + $0x58] sm:$0xff]
  %v239 = vld [vmem:[%s3 + $0x60] sm:$0xff]
  %v240 = vld [vmem:[%s3 + $0x68] sm:$0xff]
  %v241 = vld [vmem:[%s3 + $0x70] sm:$0xff]
  %v242 = vld [vmem:[%s3 + $0x78] sm:$0xff]
  %v243 = vld [vmem:[%s3 + $0x80] sm:$0xff]
  %v244 = vld [vmem:[%s3 + $0x88] sm:$0xff]
  %v245 = vld [vmem:[%s3 + $0x90] sm:$0xff]
  %v246 = vld [vmem:[%s3 + $0x98] sm:$0xff]
  %v247 = vld [vmem:[%s3 + $0xa0] sm:$0xff]
  %v248 = vld [vmem:[%s3 + $0xa8] sm:$0xff]
  %v249 = vld [vmem:[%s3 + $0xb0] sm:$0xff]
  %v250 = vld [vmem:[%s3 + $0xb8] sm:$0xff]
  %v251 = vld [vmem:[%s3 + $0xc0] sm:$0xff]
  %v252 = vld [vmem:[%s3 + $0xc8] sm:$0xff]
  %v253 = vld [vmem:[%s3 + $0xd0] sm:$0xff]
  %v254 = vld [vmem:[%s3 + $0xd8] sm:$0xff]
  %v255 = vld [vmem:[%s3 + $0xe0] sm:$0xff]
  %v256 = vld [vmem:[%s3 + $0xe8] sm:$0xff]
  %v257 = vld [vmem:[%s3 + $0xf0] sm:$0xff]
  %v258 = vld [vmem:[%s3 + $0xf8] sm:$0xff]
  %v259 = vld [vmem:[%s3 + $0x100] sm:$0xff]
  %v260 = vld [vmem:[%s3 + $0x108] sm:$0xff]
  %v261 = vld [vmem:[%s3 + $0x110] sm:$0xff]
  %v262 = vld [vmem:[%s3 + $0x118] sm:$0xff]
  %v263 = vld [vmem:[%s3 + $0x120] sm:$0xff]
  %v264 = vld [vmem:[%s3 + $0x128] sm:$0xff]
  %v265 = vld [vmem:[%s3 + $0x130] sm:$0xff]
  %v266 = vld [vmem:[%s3 + $0x138] sm:$0xff]
  %v267 = vld [vmem:[%s3 + $0x140] sm:$0xff]
  %v268 = vld [vmem:[%s3 + $0x148] sm:$0xff]
  %v269 = vld [vmem:[%s3 + $0x150] sm:$0xff]
  %v270 = vld [vmem:[%s3 + $0x158] sm:$0xff]
  %v271 = vld [vmem:[%s3 + $0x160] sm:$0xff]
  %v272 = vld [vmem:[%s3 + $0x168] sm:$0xff]
  %v273 = vld [vmem:[%s3 + $0x170] sm:$0xff]
  %v274 = vld [vmem:[%s3 + $0x178] sm:$0xff]
  %v275 = vld [vmem:[%s3 + $0x180] sm:$0xff]
  %v276 = vld [vmem:[%s3 + $0x188] sm:$0xff]
  %v277 = vld [vmem:[%s3 + $0x190] sm:$0xff]
  %v278 = vld [vmem:[%s3 + $0x198] sm:$0xff]
  %v279 = vld [vmem:[%s3 + $0x1a0] sm:$0xff]
  %v280 = vld [vmem:[%s3 + $0x1a8] sm:$0xff]
  %v281 = vld [vmem:[%s3 + $0x1b0] sm:$0xff]
  %v282 = vld [vmem:[%s3 + $0x1b8] sm:$0xff]
  %v283 = vld [vmem:[%s3 + $0x1c0] sm:$0xff]
  %v284 = vld [vmem:[%s3 + $0x1c8] sm:$0xff]
  %v285 = vld [vmem:[%s3 + $0x1d0] sm:$0xff]
  %v286 = vld [vmem:[%s3 + $0x1d8] sm:$0xff]
  %v287 = vld [vmem:[%s3 + $0x1e0] sm:$0xff]
  %v288 = vld [vmem:[%s3 + $0x1e8] sm:$0xff]
  %v289 = vld [vmem:[%s3 + $0x1f0] sm:$0xff]
  %v290 = vld [vmem:[%s3 + $0x1f8] sm:$0xff]
  %v291 = vld [vmem:[%s3 + $0x200] sm:$0xff]
  %v292 = vld [vmem:[%s3 + $0x208] sm:$0xff]
  %v293 = vld [vmem:[%s3 + $0x210] sm:$0xff]
  %v294 = vld [vmem:[%s3 + $0x218] sm:$0xff]
  %v295 = vld [vmem:[%s3 + $0x220] sm:$0xff]
  %v296 = vld [vmem:[%s3 + $0x228] sm:$0xff]
  %v297 = vld [vmem:[%s3 + $0x230] sm:$0xff]
  %v298 = vld [vmem:[%s3 + $0x238] sm:$0xff]
  %v299 = vld [vmem:[%s3 + $0x240] sm:$0xff]
  %v300 = vld [vmem:[%s3 + $0x248] sm:$0xff]
  %v301 = vld [vmem:[%s3 + $0x250] sm:$0xff]
  %v302 = vld [vmem:[%s3 + $0x258] sm:$0xff]
  %v303 = vld [vmem:[%s3 + $0x260] sm:$0xff]
  %v304 = vld [vmem:[%s3 + $0x268] sm:$0xff]
  %v305 = vld [vmem:[%s3 + $0x270] sm:$0xff]
  %v306 = vld [vmem:[%s3 + $0x278] sm:$0xff]
  %v307 = vld [vmem:[%s3 + $0x280] sm:$0xff]
  %v308 = vld [vmem:[%s3 + $0x288] sm:$0xff]
  %v309 = vld [vmem:[%s3 + $0x290] sm:$0xff]
  %v310 = vld [vmem:[%s3 + $0x298] sm:$0xff]
  %v311 = vld [vmem:[%s3 + $0x2a0] sm:$0xff]
  %v312 = vld [vmem:[%s3 + $0x2a8] sm:$0xff]
  %v313 = vld [vmem:[%s3 + $0x2b0] sm:$0xff]
  %v314 = vld [vmem:[%s3 + $0x2b8] sm:$0xff]
  %v315 = vld [vmem:[%s3 + $0x2c0] sm:$0xff]
  %v316 = vld [vmem:[%s3 + $0x2c8] sm:$0xff]
  %v317 = vld [vmem:[%s3 + $0x2d0] sm:$0xff]
  %v318 = vld [vmem:[%s3 + $0x2d8] sm:$0xff]
  %v319 = vld [vmem:[%s3 + $0x2e0] sm:$0xff]
  %v320 = vld [vmem:[%s3 + $0x2e8] sm:$0xff]
  %v321 = vld [vmem:[%s3 + $0x2f0] sm:$0xff]
  %v322 = vld [vmem:[%s3 + $0x2f8] sm:$0xff]
  %v323 = vld [vmem:[%s3 + $0x300] sm:$0xff]
  %v324 = vld [vmem:[%s3 + $0x308] sm:$0xff]
  %v325 = vld [vmem:[%s3 + $0x310] sm:$0xff]
  %v326 = vld [vmem:[%s3 + $0x318] sm:$0xff]
  %v327 = vld [vmem:[%s3 + $0x320] sm:$0xff]
  %v328 = vld [vmem:[%s3 + $0x328] sm:$0xff]
  %v329 = vld [vmem:[%s3 + $0x330] sm:$0xff]
  %v330 = vld [vmem:[%s3 + $0x338] sm:$0xff]
  %v331 = vld [vmem:[%s3 + $0x340] sm:$0xff]
  %v332 = vld [vmem:[%s3 + $0x348] sm:$0xff]
  %v333 = vld [vmem:[%s3 + $0x350] sm:$0xff]
  %v334 = vld [vmem:[%s3 + $0x358] sm:$0xff]
  %v335 = vld [vmem:[%s3 + $0x360] sm:$0xff]
  %v336 = vld [vmem:[%s3 + $0x368] sm:$0xff]
  %v337 = vld [vmem:[%s3 + $0x370] sm:$0xff]
  %v338 = vld [vmem:[%s3 + $0x378] sm:$0xff]
  %v339 = vld [vmem:[%s3 + $0x380] sm:$0xff]
  %v340 = vld [vmem:[%s3 + $0x388] sm:$0xff]
  %v341 = vld [vmem:[%s3 + $0x390] sm:$0xff]
  %v342 = vld [vmem:[%s3 + $0x398] sm:$0xff]
  %v343 = vld [vmem:[%s3 + $0x3a0] sm:$0xff]
  %v344 = vld [vmem:[%s3 + $0x3a8] sm:$0xff]
  %v345 = vld [vmem:[%s3 + $0x3b0] sm:$0xff]
  %v346 = vld [vmem:[%s3 + $0x3b8] sm:$0xff]
  %v347 = vld [vmem:[%s3 + $0x3c0] sm:$0xff]
  %v348 = vld [vmem:[%s3 + $0x3c8] sm:$0xff]
  %v349 = vld [vmem:[%s3 + $0x3d0] sm:$0xff]
  %v350 = vld [vmem:[%s3 + $0x3d8] sm:$0xff]
  %v351 = vld [vmem:[%s3 + $0x3e0] sm:$0xff]
  %v352 = vld [vmem:[%s3 + $0x3e8] sm:$0xff]
  %v353 = vld [vmem:[%s3 + $0x3f0] sm:$0xff]
  %v354 = vld [vmem:[%s3 + $0x3f8] sm:$0xff]
  %v355 = vld [vmem:[%s4] sm:$0xf]
  %v357 = vlaneseq
  %v358 = vshrl.u32 %v357, 7
  %v359 = vsub.s32 0, %v358
  %v360 = vrot.slane %v355, %v359
  %v361 = vlaneseq
  %v362 = vshrl.u32 %v361, 7
  %v363 = vsub.s32 1, %v362
  %v364 = vrot.slane %v355, %v363
  %v365 = vlaneseq
  %v366 = vshrl.u32 %v365, 7
  %v367 = vsub.s32 2, %v366
  %v368 = vrot.slane %v355, %v367
  %v369 = vlaneseq
  %v370 = vshrl.u32 %v369, 7
  %v371 = vsub.s32 3, %v370
  %v372 = vrot.slane %v355, %v371
  %v505 = vunpack.c.l.b16 %v227
  %v506 = vunpack.c.h.b16 %v227
  %v507 = vunpack.c.l.b16 %v228
  %v508 = vunpack.c.h.b16 %v228
  %v509 = vunpack.c.l.b16 %v229
  %v510 = vunpack.c.h.b16 %v229
  %v511 = vunpack.c.l.b16 %v230
  %v512 = vunpack.c.h.b16 %v230
  %v513 = vunpack.c.l.b16 %v231
  %v514 = vunpack.c.h.b16 %v231
  %v515 = vunpack.c.l.b16 %v232
  %v516 = vunpack.c.h.b16 %v232
  %v517 = vunpack.c.l.b16 %v233
  %v518 = vunpack.c.h.b16 %v233
  %v519 = vunpack.c.l.b16 %v234
  %v520 = vunpack.c.h.b16 %v234
  %v521 = vunpack.c.l.b16 %v235
  %v522 = vunpack.c.h.b16 %v235
  %v523 = vunpack.c.l.b16 %v236
  %v524 = vunpack.c.h.b16 %v236
  %v525 = vunpack.c.l.b16 %v237
  %v526 = vunpack.c.h.b16 %v237
  %v527 = vunpack.c.l.b16 %v238
  %v528 = vunpack.c.h.b16 %v238
  %v529 = vunpack.c.l.b16 %v239
  %v530 = vunpack.c.h.b16 %v239
  %v531 = vunpack.c.l.b16 %v240
  %v532 = vunpack.c.h.b16 %v240
  %v533 = vunpack.c.l.b16 %v241
  %v534 = vunpack.c.h.b16 %v241
  %v535 = vunpack.c.l.b16 %v242
  %v536 = vunpack.c.h.b16 %v242
  %v537 = vunpack.c.l.b16 %v243
  %v538 = vunpack.c.h.b16 %v243
  %v539 = vunpack.c.l.b16 %v244
  %v540 = vunpack.c.h.b16 %v244
  %v541 = vunpack.c.l.b16 %v245
  %v542 = vunpack.c.h.b16 %v245
  %v543 = vunpack.c.l.b16 %v246
  %v544 = vunpack.c.h.b16 %v246
  %v545 = vunpack.c.l.b16 %v247
  %v546 = vunpack.c.h.b16 %v247
  %v547 = vunpack.c.l.b16 %v248
  %v548 = vunpack.c.h.b16 %v248
  %v549 = vunpack.c.l.b16 %v249
  %v550 = vunpack.c.h.b16 %v249
  %v551 = vunpack.c.l.b16 %v250
  %v552 = vunpack.c.h.b16 %v250
  %v553 = vunpack.c.l.b16 %v251
  %v554 = vunpack.c.h.b16 %v251
  %v555 = vunpack.c.l.b16 %v252
  %v556 = vunpack.c.h.b16 %v252
  %v557 = vunpack.c.l.b16 %v253
  %v558 = vunpack.c.h.b16 %v253
  %v559 = vunpack.c.l.b16 %v254
  %v560 = vunpack.c.h.b16 %v254
  %v561 = vunpack.c.l.b16 %v255
  %v562 = vunpack.c.h.b16 %v255
  %v563 = vunpack.c.l.b16 %v256
  %v564 = vunpack.c.h.b16 %v256
  %v565 = vunpack.c.l.b16 %v257
  %v566 = vunpack.c.h.b16 %v257
  %v567 = vunpack.c.l.b16 %v258
  %v568 = vunpack.c.h.b16 %v258
  %v569 = vunpack.c.l.b16 %v259
  %v570 = vunpack.c.h.b16 %v259
  %v571 = vunpack.c.l.b16 %v260
  %v572 = vunpack.c.h.b16 %v260
  %v573 = vunpack.c.l.b16 %v261
  %v574 = vunpack.c.h.b16 %v261
  %v575 = vunpack.c.l.b16 %v262
  %v576 = vunpack.c.h.b16 %v262
  %v577 = vunpack.c.l.b16 %v263
  %v578 = vunpack.c.h.b16 %v263
  %v579 = vunpack.c.l.b16 %v264
  %v580 = vunpack.c.h.b16 %v264
  %v581 = vunpack.c.l.b16 %v265
  %v582 = vunpack.c.h.b16 %v265
  %v583 = vunpack.c.l.b16 %v266
  %v584 = vunpack.c.h.b16 %v266
  %v585 = vunpack.c.l.b16 %v267
  %v586 = vunpack.c.h.b16 %v267
  %v587 = vunpack.c.l.b16 %v268
  %v588 = vunpack.c.h.b16 %v268
  %v589 = vunpack.c.l.b16 %v269
  %v590 = vunpack.c.h.b16 %v269
  %v591 = vunpack.c.l.b16 %v270
  %v592 = vunpack.c.h.b16 %v270
  %v593 = vunpack.c.l.b16 %v271
  %v594 = vunpack.c.h.b16 %v271
  %v595 = vunpack.c.l.b16 %v272
  %v596 = vunpack.c.h.b16 %v272
  %v597 = vunpack.c.l.b16 %v273
  %v598 = vunpack.c.h.b16 %v273
  %v599 = vunpack.c.l.b16 %v274
  %v600 = vunpack.c.h.b16 %v274
  %v601 = vunpack.c.l.b16 %v275
  %v602 = vunpack.c.h.b16 %v275
  %v603 = vunpack.c.l.b16 %v276
  %v604 = vunpack.c.h.b16 %v276
  %v605 = vunpack.c.l.b16 %v277
  %v606 = vunpack.c.h.b16 %v277
  %v607 = vunpack.c.l.b16 %v278
  %v608 = vunpack.c.h.b16 %v278
  %v609 = vunpack.c.l.b16 %v279
  %v610 = vunpack.c.h.b16 %v279
  %v611 = vunpack.c.l.b16 %v280
  %v612 = vunpack.c.h.b16 %v280
  %v613 = vunpack.c.l.b16 %v281
  %v614 = vunpack.c.h.b16 %v281
  %v615 = vunpack.c.l.b16 %v282
  %v616 = vunpack.c.h.b16 %v282
  %v617 = vunpack.c.l.b16 %v283
  %v618 = vunpack.c.h.b16 %v283
  %v619 = vunpack.c.l.b16 %v284
  %v620 = vunpack.c.h.b16 %v284
  %v621 = vunpack.c.l.b16 %v285
  %v622 = vunpack.c.h.b16 %v285
  %v623 = vunpack.c.l.b16 %v286
  %v624 = vunpack.c.h.b16 %v286
  %v625 = vunpack.c.l.b16 %v287
  %v626 = vunpack.c.h.b16 %v287
  %v627 = vunpack.c.l.b16 %v288
  %v628 = vunpack.c.h.b16 %v288
  %v629 = vunpack.c.l.b16 %v289
  %v630 = vunpack.c.h.b16 %v289
  %v631 = vunpack.c.l.b16 %v290
  %v632 = vunpack.c.h.b16 %v290
  %v633 = vunpack.c.l.b16 %v291
  %v634 = vunpack.c.h.b16 %v291
  %v635 = vunpack.c.l.b16 %v292
  %v636 = vunpack.c.h.b16 %v292
  %v637 = vunpack.c.l.b16 %v293
  %v638 = vunpack.c.h.b16 %v293
  %v639 = vunpack.c.l.b16 %v294
  %v640 = vunpack.c.h.b16 %v294
  %v641 = vunpack.c.l.b16 %v295
  %v642 = vunpack.c.h.b16 %v295
  %v643 = vunpack.c.l.b16 %v296
  %v644 = vunpack.c.h.b16 %v296
  %v645 = vunpack.c.l.b16 %v297
  %v646 = vunpack.c.h.b16 %v297
  %v647 = vunpack.c.l.b16 %v298
  %v648 = vunpack.c.h.b16 %v298
  %v649 = vunpack.c.l.b16 %v299
  %v650 = vunpack.c.h.b16 %v299
  %v651 = vunpack.c.l.b16 %v300
  %v652 = vunpack.c.h.b16 %v300
  %v653 = vunpack.c.l.b16 %v301
  %v654 = vunpack.c.h.b16 %v301
  %v655 = vunpack.c.l.b16 %v302
  %v656 = vunpack.c.h.b16 %v302
  %v657 = vunpack.c.l.b16 %v303
  %v658 = vunpack.c.h.b16 %v303
  %v659 = vunpack.c.l.b16 %v304
  %v660 = vunpack.c.h.b16 %v304
  %v661 = vunpack.c.l.b16 %v305
  %v662 = vunpack.c.h.b16 %v305
  %v663 = vunpack.c.l.b16 %v306
  %v664 = vunpack.c.h.b16 %v306
  %v665 = vunpack.c.l.b16 %v307
  %v666 = vunpack.c.h.b16 %v307
  %v667 = vunpack.c.l.b16 %v308
  %v668 = vunpack.c.h.b16 %v308
  %v669 = vunpack.c.l.b16 %v309
  %v670 = vunpack.c.h.b16 %v309
  %v671 = vunpack.c.l.b16 %v310
  %v672 = vunpack.c.h.b16 %v310
  %v673 = vunpack.c.l.b16 %v311
  %v674 = vunpack.c.h.b16 %v311
  %v675 = vunpack.c.l.b16 %v312
  %v676 = vunpack.c.h.b16 %v312
  %v677 = vunpack.c.l.b16 %v313
  %v678 = vunpack.c.h.b16 %v313
  %v679 = vunpack.c.l.b16 %v314
  %v680 = vunpack.c.h.b16 %v314
  %v681 = vunpack.c.l.b16 %v315
  %v682 = vunpack.c.h.b16 %v315
  %v683 = vunpack.c.l.b16 %v316
  %v684 = vunpack.c.h.b16 %v316
  %v685 = vunpack.c.l.b16 %v317
  %v686 = vunpack.c.h.b16 %v317
  %v687 = vunpack.c.l.b16 %v318
  %v688 = vunpack.c.h.b16 %v318
  %v689 = vunpack.c.l.b16 %v319
  %v690 = vunpack.c.h.b16 %v319
  %v691 = vunpack.c.l.b16 %v320
  %v692 = vunpack.c.h.b16 %v320
  %v693 = vunpack.c.l.b16 %v321
  %v694 = vunpack.c.h.b16 %v321
  %v695 = vunpack.c.l.b16 %v322
  %v696 = vunpack.c.h.b16 %v322
  %v697 = vunpack.c.l.b16 %v323
  %v698 = vunpack.c.h.b16 %v323
  %v699 = vunpack.c.l.b16 %v324
  %v700 = vunpack.c.h.b16 %v324
  %v701 = vunpack.c.l.b16 %v325
  %v702 = vunpack.c.h.b16 %v325
  %v703 = vunpack.c.l.b16 %v326
  %v704 = vunpack.c.h.b16 %v326
  %v705 = vunpack.c.l.b16 %v327
  %v706 = vunpack.c.h.b16 %v327
  %v707 = vunpack.c.l.b16 %v328
  %v708 = vunpack.c.h.b16 %v328
  %v709 = vunpack.c.l.b16 %v329
  %v710 = vunpack.c.h.b16 %v329
  %v711 = vunpack.c.l.b16 %v330
  %v712 = vunpack.c.h.b16 %v330
  %v713 = vunpack.c.l.b16 %v331
  %v714 = vunpack.c.h.b16 %v331
  %v715 = vunpack.c.l.b16 %v332
  %v716 = vunpack.c.h.b16 %v332
  %v717 = vunpack.c.l.b16 %v333
  %v718 = vunpack.c.h.b16 %v333
  %v719 = vunpack.c.l.b16 %v334
  %v720 = vunpack.c.h.b16 %v334
  %v721 = vunpack.c.l.b16 %v335
  %v722 = vunpack.c.h.b16 %v335
  %v723 = vunpack.c.l.b16 %v336
  %v724 = vunpack.c.h.b16 %v336
  %v725 = vunpack.c.l.b16 %v337
  %v726 = vunpack.c.h.b16 %v337
  %v727 = vunpack.c.l.b16 %v338
  %v728 = vunpack.c.h.b16 %v338
  %v729 = vunpack.c.l.b16 %v339
  %v730 = vunpack.c.h.b16 %v339
  %v731 = vunpack.c.l.b16 %v340
  %v732 = vunpack.c.h.b16 %v340
  %v733 = vunpack.c.l.b16 %v341
  %v734 = vunpack.c.h.b16 %v341
  %v735 = vunpack.c.l.b16 %v342
  %v736 = vunpack.c.h.b16 %v342
  %v737 = vunpack.c.l.b16 %v343
  %v738 = vunpack.c.h.b16 %v343
  %v739 = vunpack.c.l.b16 %v344
  %v740 = vunpack.c.h.b16 %v344
  %v741 = vunpack.c.l.b16 %v345
  %v742 = vunpack.c.h.b16 %v345
  %v743 = vunpack.c.l.b16 %v346
  %v744 = vunpack.c.h.b16 %v346
  %v745 = vunpack.c.l.b16 %v347
  %v746 = vunpack.c.h.b16 %v347
  %v747 = vunpack.c.l.b16 %v348
  %v748 = vunpack.c.h.b16 %v348
  %v749 = vunpack.c.l.b16 %v349
  %v750 = vunpack.c.h.b16 %v349
  %v751 = vunpack.c.l.b16 %v350
  %v752 = vunpack.c.h.b16 %v350
  %v753 = vunpack.c.l.b16 %v351
  %v754 = vunpack.c.h.b16 %v351
  %v755 = vunpack.c.l.b16 %v352
  %v756 = vunpack.c.h.b16 %v352
  %v757 = vunpack.c.l.b16 %v353
  %v758 = vunpack.c.h.b16 %v353
  %v759 = vunpack.c.l.b16 %v354
  %v760 = vunpack.c.h.b16 %v354
  %v761 = vpack.c.b16 %v509, %v505
  %v762 = vpack.c.b16 %v510, %v506
  %v763 = vpack.c.b16 %v511, %v507
  %v764 = vpack.c.b16 %v512, %v508
  %v765 = vpack.c.b16 %v517, %v513
  %v766 = vpack.c.b16 %v518, %v514
  %v767 = vpack.c.b16 %v519, %v515
  %v768 = vpack.c.b16 %v520, %v516
  %v769 = vpack.c.b16 %v525, %v521
  %v770 = vpack.c.b16 %v526, %v522
  %v771 = vpack.c.b16 %v527, %v523
  %v772 = vpack.c.b16 %v528, %v524
  %v773 = vpack.c.b16 %v533, %v529
  %v774 = vpack.c.b16 %v534, %v530
  %v775 = vpack.c.b16 %v535, %v531
  %v776 = vpack.c.b16 %v536, %v532
  %v777 = vpack.c.b16 %v541, %v537
  %v778 = vpack.c.b16 %v542, %v538
  %v779 = vpack.c.b16 %v543, %v539
  %v780 = vpack.c.b16 %v544, %v540
  %v781 = vpack.c.b16 %v549, %v545
  %v782 = vpack.c.b16 %v550, %v546
  %v783 = vpack.c.b16 %v551, %v547
  %v784 = vpack.c.b16 %v552, %v548
  %v785 = vpack.c.b16 %v557, %v553
  %v786 = vpack.c.b16 %v558, %v554
  %v787 = vpack.c.b16 %v559, %v555
  %v788 = vpack.c.b16 %v560, %v556
  %v789 = vpack.c.b16 %v565, %v561
  %v790 = vpack.c.b16 %v566, %v562
  %v791 = vpack.c.b16 %v567, %v563
  %v792 = vpack.c.b16 %v568, %v564
  %v793 = vpack.c.b16 %v573, %v569
  %v794 = vpack.c.b16 %v574, %v570
  %v795 = vpack.c.b16 %v575, %v571
  %v796 = vpack.c.b16 %v576, %v572
  %v797 = vpack.c.b16 %v581, %v577
  %v798 = vpack.c.b16 %v582, %v578
  %v799 = vpack.c.b16 %v583, %v579
  %v800 = vpack.c.b16 %v584, %v580
  %v801 = vpack.c.b16 %v589, %v585
  %v802 = vpack.c.b16 %v590, %v586
  %v803 = vpack.c.b16 %v591, %v587
  %v804 = vpack.c.b16 %v592, %v588
  %v805 = vpack.c.b16 %v597, %v593
  %v806 = vpack.c.b16 %v598, %v594
  %v807 = vpack.c.b16 %v599, %v595
  %v808 = vpack.c.b16 %v600, %v596
  %v809 = vpack.c.b16 %v605, %v601
  %v810 = vpack.c.b16 %v606, %v602
  %v811 = vpack.c.b16 %v607, %v603
  %v812 = vpack.c.b16 %v608, %v604
  %v813 = vpack.c.b16 %v613, %v609
  %v814 = vpack.c.b16 %v614, %v610
  %v815 = vpack.c.b16 %v615, %v611
  %v816 = vpack.c.b16 %v616, %v612
  %v817 = vpack.c.b16 %v621, %v617
  %v818 = vpack.c.b16 %v622, %v618
  %v819 = vpack.c.b16 %v623, %v619
  %v820 = vpack.c.b16 %v624, %v620
  %v821 = vpack.c.b16 %v629, %v625
  %v822 = vpack.c.b16 %v630, %v626
  %v823 = vpack.c.b16 %v631, %v627
  %v824 = vpack.c.b16 %v632, %v628
  %v825 = vpack.c.b16 %v637, %v633
  %v826 = vpack.c.b16 %v638, %v634
  %v827 = vpack.c.b16 %v639, %v635
  %v828 = vpack.c.b16 %v640, %v636
  %v829 = vpack.c.b16 %v645, %v641
  %v830 = vpack.c.b16 %v646, %v642
  %v831 = vpack.c.b16 %v647, %v643
  %v832 = vpack.c.b16 %v648, %v644
  %v833 = vpack.c.b16 %v653, %v649
  %v834 = vpack.c.b16 %v654, %v650
  %v835 = vpack.c.b16 %v655, %v651
  %v836 = vpack.c.b16 %v656, %v652
  %v837 = vpack.c.b16 %v661, %v657
  %v838 = vpack.c.b16 %v662, %v658
  %v839 = vpack.c.b16 %v663, %v659
  %v840 = vpack.c.b16 %v664, %v660
  %v841 = vpack.c.b16 %v669, %v665
  %v842 = vpack.c.b16 %v670, %v666
  %v843 = vpack.c.b16 %v671, %v667
  %v844 = vpack.c.b16 %v672, %v668
  %v845 = vpack.c.b16 %v677, %v673
  %v846 = vpack.c.b16 %v678, %v674
  %v847 = vpack.c.b16 %v679, %v675
  %v848 = vpack.c.b16 %v680, %v676
  %v849 = vpack.c.b16 %v685, %v681
  %v850 = vpack.c.b16 %v686, %v682
  %v851 = vpack.c.b16 %v687, %v683
  %v852 = vpack.c.b16 %v688, %v684
  %v853 = vpack.c.b16 %v693, %v689
  %v854 = vpack.c.b16 %v694, %v690
  %v855 = vpack.c.b16 %v695, %v691
  %v856 = vpack.c.b16 %v696, %v692
  %v857 = vpack.c.b16 %v701, %v697
  %v858 = vpack.c.b16 %v702, %v698
  %v859 = vpack.c.b16 %v703, %v699
  %v860 = vpack.c.b16 %v704, %v700
  %v861 = vpack.c.b16 %v709, %v705
  %v862 = vpack.c.b16 %v710, %v706
  %v863 = vpack.c.b16 %v711, %v707
  %v864 = vpack.c.b16 %v712, %v708
  %v865 = vpack.c.b16 %v717, %v713
  %v866 = vpack.c.b16 %v718, %v714
  %v867 = vpack.c.b16 %v719, %v715
  %v868 = vpack.c.b16 %v720, %v716
  %v869 = vpack.c.b16 %v725, %v721
  %v870 = vpack.c.b16 %v726, %v722
  %v871 = vpack.c.b16 %v727, %v723
  %v872 = vpack.c.b16 %v728, %v724
  %v873 = vpack.c.b16 %v733, %v729
  %v874 = vpack.c.b16 %v734, %v730
  %v875 = vpack.c.b16 %v735, %v731
  %v876 = vpack.c.b16 %v736, %v732
  %v877 = vpack.c.b16 %v741, %v737
  %v878 = vpack.c.b16 %v742, %v738
  %v879 = vpack.c.b16 %v743, %v739
  %v880 = vpack.c.b16 %v744, %v740
  %v881 = vpack.c.b16 %v749, %v745
  %v882 = vpack.c.b16 %v750, %v746
  %v883 = vpack.c.b16 %v751, %v747
  %v884 = vpack.c.b16 %v752, %v748
  %v885 = vpack.c.b16 %v757, %v753
  %v886 = vpack.c.b16 %v758, %v754
  %v887 = vpack.c.b16 %v759, %v755
  %v888 = vpack.c.b16 %v760, %v756
  %1017 = vmatprep.subr.bf16.mxu0 %v762
  %1018 = vmatpush1.bf16.msra.mxu0 %v761
  %1019 = vmatprep.subr.bf16.mxu0 %v766
  %1020 = vmatpush1.bf16.msra.mxu0 %v765
  %1021 = vmatprep.subr.bf16.mxu0 %v770
  %1022 = vmatpush1.bf16.msra.mxu0 %v769
  %1023 = vmatprep.subr.bf16.mxu0 %v774
  %1024 = vmatpush1.bf16.msra.mxu0 %v773
  %1025 = vmatprep.subr.bf16.mxu0 %v778
  %1026 = vmatpush1.bf16.msra.mxu0 %v777
  %1027 = vmatprep.subr.bf16.mxu0 %v782
  %1028 = vmatpush1.bf16.msra.mxu0 %v781
  %1029 = vmatprep.subr.bf16.mxu0 %v786
  %1030 = vmatpush1.bf16.msra.mxu0 %v785
  %1031 = vmatprep.subr.bf16.mxu0 %v790
  %1032 = vmatpush1.bf16.msra.mxu0 %v789
  %1033 = vmatprep.subr.bf16.mxu0 %v794
  %1034 = vmatpush1.bf16.msra.mxu0 %v793
  %1035 = vmatprep.subr.bf16.mxu0 %v798
  %1036 = vmatpush1.bf16.msra.mxu0 %v797
  %1037 = vmatprep.subr.bf16.mxu0 %v802
  %1038 = vmatpush1.bf16.msra.mxu0 %v801
  %1039 = vmatprep.subr.bf16.mxu0 %v806
  %1040 = vmatpush1.bf16.msra.mxu0 %v805
  %1041 = vmatprep.subr.bf16.mxu0 %v810
  %1042 = vmatpush1.bf16.msra.mxu0 %v809
  %1043 = vmatprep.subr.bf16.mxu0 %v814
  %1044 = vmatpush1.bf16.msra.mxu0 %v813
  %1045 = vmatprep.subr.bf16.mxu0 %v818
  %1046 = vmatpush1.bf16.msra.mxu0 %v817
  %1047 = vmatprep.subr.bf16.mxu0 %v822
  %1048 = vmatpush1.bf16.msra.mxu0 %v821
  %1049 = vmatprep.mubr.bf16.mxu0 %v220
  %1050 = vmatmul.mubr.bf16.gmra.mrb[0].mxu0 %v219
  %v1051 = vpop.f32.mrb[0].mxu0
  %v1052 = vadd.f32 %v360, %v1051
  %v1053 = vpop.f32.mrb[0].mxu0
  %v1054 = vadd.f32 %v364, %v1053
  %v1055 = vpop.f32.mrb[0].mxu0
  %v1056 = vadd.f32 %v360, %v1055
  %v1057 = vpop.f32.mrb[0].mxu0
  %v1058 = vadd.f32 %v364, %v1057
  %1059 = vmatprep.mubr.bf16.mxu0 %v222
  %1060 = vmatmul.mubr.bf16.gmra.mrb[0].mxu0 %v221
  %v1061 = vpop.f32.mrb[0].mxu0
  %v1062 = vadd.f32 %v360, %v1061
  %v1063 = vpop.f32.mrb[0].mxu0
  %v1064 = vadd.f32 %v364, %v1063
  %v1065 = vpop.f32.mrb[0].mxu0
  %v1066 = vadd.f32 %v360, %v1065
  %v1067 = vpop.f32.mrb[0].mxu0
  %v1068 = vadd.f32 %v364, %v1067
  %1069 = vdwg.mxu0
  %1070 = vmatprep.subr.bf16.mxu0 %v826
  %1071 = vmatpush1.bf16.msra.mxu0 %v825
  %1072 = vmatprep.subr.bf16.mxu0 %v830
  %1073 = vmatpush1.bf16.msra.mxu0 %v829
  %1074 = vmatprep.subr.bf16.mxu0 %v834
  %1075 = vmatpush1.bf16.msra.mxu0 %v833
  %1076 = vmatprep.subr.bf16.mxu0 %v838
  %1077 = vmatpush1.bf16.msra.mxu0 %v837
  %1078 = vmatprep.subr.bf16.mxu0 %v842
  %1079 = vmatpush1.bf16.msra.mxu0 %v841
  %1080 = vmatprep.subr.bf16.mxu0 %v846
  %1081 = vmatpush1.bf16.msra.mxu0 %v845
  %1082 = vmatprep.subr.bf16.mxu0 %v850
  %1083 = vmatpush1.bf16.msra.mxu0 %v849
  %1084 = vmatprep.subr.bf16.mxu0 %v854
  %1085 = vmatpush1.bf16.msra.mxu0 %v853
  %1086 = vmatprep.subr.bf16.mxu0 %v858
  %1087 = vmatpush1.bf16.msra.mxu0 %v857
  %1088 = vmatprep.subr.bf16.mxu0 %v862
  %1089 = vmatpush1.bf16.msra.mxu0 %v861
  %1090 = vmatprep.subr.bf16.mxu0 %v866
  %1091 = vmatpush1.bf16.msra.mxu0 %v865
  %1092 = vmatprep.subr.bf16.mxu0 %v870
  %1093 = vmatpush1.bf16.msra.mxu0 %v869
  %1094 = vmatprep.subr.bf16.mxu0 %v874
  %1095 = vmatpush1.bf16.msra.mxu0 %v873
  %1096 = vmatprep.subr.bf16.mxu0 %v878
  %1097 = vmatpush1.bf16.msra.mxu0 %v877
  %1098 = vmatprep.subr.bf16.mxu0 %v882
  %1099 = vmatpush1.bf16.msra.mxu0 %v881
  %1100 = vmatprep.subr.bf16.mxu0 %v886
  %1101 = vmatpush1.bf16.msra.mxu0 %v885
  %1102 = vmatprep.mubr.bf16.mxu0 %v224
  %1103 = vmatmul.mubr.bf16.gmra.mrb[0].mxu0 %v223
  %v1104 = vpop.f32.mrb[0].mxu0
  %v1105 = vadd.f32 %v1052, %v1104
  %v1106 = vpop.f32.mrb[0].mxu0
  %v1107 = vadd.f32 %v1054, %v1106
  %v1108 = vpop.f32.mrb[0].mxu0
  %v1109 = vadd.f32 %v1056, %v1108
  %v1110 = vpop.f32.mrb[0].mxu0
  %v1111 = vadd.f32 %v1058, %v1110
  %1112 = vmatprep.mubr.bf16.mxu0 %v226
  %1113 = vmatmul.mubr.bf16.gmra.mrb[0].mxu0 %v225
  %v1114 = vpop.f32.mrb[0].mxu0
  %v1115 = vadd.f32 %v1062, %v1114
  %v1116 = vpop.f32.mrb[0].mxu0
  %v1117 = vadd.f32 %v1064, %v1116
  %v1118 = vpop.f32.mrb[0].mxu0
  %v1119 = vadd.f32 %v1066, %v1118
  %v1120 = vpop.f32.mrb[0].mxu0
  %v1121 = vadd.f32 %v1068, %v1120
  %1122 = vdwg.mxu0
  %1123 = vmatprep.subr.bf16.mxu0 %v764
  %1124 = vmatpush1.bf16.msra.mxu0 %v763
  %1125 = vmatprep.subr.bf16.mxu0 %v768
  %1126 = vmatpush1.bf16.msra.mxu0 %v767
  %1127 = vmatprep.subr.bf16.mxu0 %v772
  %1128 = vmatpush1.bf16.msra.mxu0 %v771
  %1129 = vmatprep.subr.bf16.mxu0 %v776
  %1130 = vmatpush1.bf16.msra.mxu0 %v775
  %1131 = vmatprep.subr.bf16.mxu0 %v780
  %1132 = vmatpush1.bf16.msra.mxu0 %v779
  %1133 = vmatprep.subr.bf16.mxu0 %v784
  %1134 = vmatpush1.bf16.msra.mxu0 %v783
  %1135 = vmatprep.subr.bf16.mxu0 %v788
  %1136 = vmatpush1.bf16.msra.mxu0 %v787
  %1137 = vmatprep.subr.bf16.mxu0 %v792
  %1138 = vmatpush1.bf16.msra.mxu0 %v791
  %1139 = vmatprep.subr.bf16.mxu0 %v796
  %1140 = vmatpush1.bf16.msra.mxu0 %v795
  %1141 = vmatprep.subr.bf16.mxu0 %v800
  %1142 = vmatpush1.bf16.msra.mxu0 %v799
  %1143 = vmatprep.subr.bf16.mxu0 %v804
  %1144 = vmatpush1.bf16.msra.mxu0 %v803
  %1145 = vmatprep.subr.bf16.mxu0 %v808
  %1146 = vmatpush1.bf16.msra.mxu0 %v807
  %1147 = vmatprep.subr.bf16.mxu0 %v812
  %1148 = vmatpush1.bf16.msra.mxu0 %v811
  %1149 = vmatprep.subr.bf16.mxu0 %v816
  %1150 = vmatpush1.bf16.msra.mxu0 %v815
  %1151 = vmatprep.subr.bf16.mxu0 %v820
  %1152 = vmatpush1.bf16.msra.mxu0 %v819
  %1153 = vmatprep.subr.bf16.mxu0 %v824
  %1154 = vmatpush1.bf16.msra.mxu0 %v823
  %1155 = vmatprep.mubr.bf16.mxu0 %v220
  %1156 = vmatmul.mubr.bf16.gmra.mrb[0].mxu0 %v219
  %v1157 = vpop.f32.mrb[0].mxu0
  %v1158 = vadd.f32 %v368, %v1157
  %v1159 = vpop.f32.mrb[0].mxu0
  %v1160 = vadd.f32 %v372, %v1159
  %v1161 = vpop.f32.mrb[0].mxu0
  %v1162 = vadd.f32 %v368, %v1161
  %v1163 = vpop.f32.mrb[0].mxu0
  %v1164 = vadd.f32 %v372, %v1163
  %1165 = vmatprep.mubr.bf16.mxu0 %v222
  %1166 = vmatmul.mubr.bf16.gmra.mrb[0].mxu0 %v221
  %v1167 = vpop.f32.mrb[0].mxu0
  %v1168 = vadd.f32 %v368, %v1167
  %v1169 = vpop.f32.mrb[0].mxu0
  %v1170 = vadd.f32 %v372, %v1169
  %v1171 = vpop.f32.mrb[0].mxu0
  %v1172 = vadd.f32 %v368, %v1171
  %v1173 = vpop.f32.mrb[0].mxu0
  %v1174 = vadd.f32 %v372, %v1173
  %1175 = vdwg.mxu0
  %1176 = vmatprep.subr.bf16.mxu0 %v828
  %1177 = vmatpush1.bf16.msra.mxu0 %v827
  %1178 = vmatprep.subr.bf16.mxu0 %v832
  %1179 = vmatpush1.bf16.msra.mxu0 %v831
  %1180 = vmatprep.subr.bf16.mxu0 %v836
  %1181 = vmatpush1.bf16.msra.mxu0 %v835
  %1182 = vmatprep.subr.bf16.mxu0 %v840
  %1183 = vmatpush1.bf16.msra.mxu0 %v839
  %1184 = vmatprep.subr.bf16.mxu0 %v844
  %1185 = vmatpush1.bf16.msra.mxu0 %v843
  %1186 = vmatprep.subr.bf16.mxu0 %v848
  %1187 = vmatpush1.bf16.msra.mxu0 %v847
  %1188 = vmatprep.subr.bf16.mxu0 %v852
  %1189 = vmatpush1.bf16.msra.mxu0 %v851
  %1190 = vmatprep.subr.bf16.mxu0 %v856
  %1191 = vmatpush1.bf16.msra.mxu0 %v855
  %1192 = vmatprep.subr.bf16.mxu0 %v860
  %1193 = vmatpush1.bf16.msra.mxu0 %v859
  %1194 = vmatprep.subr.bf16.mxu0 %v864
  %1195 = vmatpush1.bf16.msra.mxu0 %v863
  %1196 = vmatprep.subr.bf16.mxu0 %v868
  %1197 = vmatpush1.bf16.msra.mxu0 %v867
  %1198 = vmatprep.subr.bf16.mxu0 %v872
  %1199 = vmatpush1.bf16.msra.mxu0 %v871
  %1200 = vmatprep.subr.bf16.mxu0 %v876
  %1201 = vmatpush1.bf16.msra.mxu0 %v875
  %1202 = vmatprep.subr.bf16.mxu0 %v880
  %1203 = vmatpush1.bf16.msra.mxu0 %v879
  %1204 = vmatprep.subr.bf16.mxu0 %v884
  %1205 = vmatpush1.bf16.msra.mxu0 %v883
  %1206 = vmatprep.subr.bf16.mxu0 %v888
  %1207 = vmatpush1.bf16.msra.mxu0 %v887
  %1208 = vmatprep.mubr.bf16.mxu0 %v224
  %1209 = vmatmul.mubr.bf16.gmra.mrb[0].mxu0 %v223
  %v1210 = vpop.f32.mrb[0].mxu0
  %v1211 = vadd.f32 %v1158, %v1210
  %v1212 = vpop.f32.mrb[0].mxu0
  %v1213 = vadd.f32 %v1160, %v1212
  %v1214 = vpop.f32.mrb[0].mxu0
  %v1215 = vadd.f32 %v1162, %v1214
  %v1216 = vpop.f32.mrb[0].mxu0
  %v1217 = vadd.f32 %v1164, %v1216
  %1218 = vmatprep.mubr.bf16.mxu0 %v226
  %1219 = vmatmul.mubr.bf16.gmra.mrb[0].mxu0 %v225
  %v1220 = vpop.f32.mrb[0].mxu0
  %v1221 = vadd.f32 %v1168, %v1220
  %v1222 = vpop.f32.mrb[0].mxu0
  %v1223 = vadd.f32 %v1170, %v1222
  %v1224 = vpop.f32.mrb[0].mxu0
  %v1225 = vadd.f32 %v1172, %v1224
  %v1226 = vpop.f32.mrb[0].mxu0
  %v1227 = vadd.f32 %v1174, %v1226
  %1228 = vdwg.mxu0
  %v1229 = vmax.f32 %v1105, 0.0
  %v1230 = vmax.f32 %v1107, 0.0
  %v1231 = vmax.f32 %v1211, 0.0
  %v1232 = vmax.f32 %v1213, 0.0
  %v1233 = vmax.f32 %v1109, 0.0
  %v1234 = vmax.f32 %v1111, 0.0
  %v1235 = vmax.f32 %v1215, 0.0
  %v1236 = vmax.f32 %v1217, 0.0
  %v1237 = vmax.f32 %v1115, 0.0
  %v1238 = vmax.f32 %v1117, 0.0
  %v1239 = vmax.f32 %v1221, 0.0
  %v1240 = vmax.f32 %v1223, 0.0
  %v1241 = vmax.f32 %v1119, 0.0
  %v1242 = vmax.f32 %v1121, 0.0
  %v1243 = vmax.f32 %v1225, 0.0
  %v1244 = vmax.f32 %v1227, 0.0
  %v1245 = vpack.c.bf16 %v1233, %v1229
  %v1246 = vpack.c.bf16 %v1234, %v1230
  %v1247 = vpack.c.bf16 %v1235, %v1231
  %v1248 = vpack.c.bf16 %v1236, %v1232
  %v1249 = vpack.c.bf16 %v1241, %v1237
  %v1250 = vpack.c.bf16 %v1242, %v1238
  %v1251 = vpack.c.bf16 %v1243, %v1239
  %v1252 = vpack.c.bf16 %v1244, %v1240
  %v1253 = vld [vmem:[%s5] sm:$0xff]
  %v1254 = vld [vmem:[%s5 + $0x8] sm:$0xff]
  %v1255 = vld [vmem:[%s5 + $0x10] sm:$0xff]
  %v1256 = vld [vmem:[%s5 + $0x18] sm:$0xff]
  %v1257 = vld [vmem:[%s5 + $0x20] sm:$0xff]
  %v1258 = vld [vmem:[%s5 + $0x28] sm:$0xff]
  %v1259 = vld [vmem:[%s5 + $0x30] sm:$0xff]
  %v1260 = vld [vmem:[%s5 + $0x38] sm:$0xff]
  %v1261 = vld [vmem:[%s5 + $0x40] sm:$0xff]
  %v1262 = vld [vmem:[%s5 + $0x48] sm:$0xff]
  %v1263 = vld [vmem:[%s5 + $0x50] sm:$0xff]
  %v1264 = vld [vmem:[%s5 + $0x58] sm:$0xff]
  %v1265 = vld [vmem:[%s5 + $0x60] sm:$0xff]
  %v1266 = vld [vmem:[%s5 + $0x68] sm:$0xff]
  %v1267 = vld [vmem:[%s5 + $0x70] sm:$0xff]
  %v1268 = vld [vmem:[%s5 + $0x78] sm:$0xff]
  %v1269 = vld [vmem:[%s5 + $0x80] sm:$0xff]
  %v1270 = vld [vmem:[%s5 + $0x88] sm:$0xff]
  %v1271 = vld [vmem:[%s5 + $0x90] sm:$0xff]
  %v1272 = vld [vmem:[%s5 + $0x98] sm:$0xff]
  %v1273 = vld [vmem:[%s5 + $0xa0] sm:$0xff]
  %v1274 = vld [vmem:[%s5 + $0xa8] sm:$0xff]
  %v1275 = vld [vmem:[%s5 + $0xb0] sm:$0xff]
  %v1276 = vld [vmem:[%s5 + $0xb8] sm:$0xff]
  %v1277 = vld [vmem:[%s5 + $0xc0] sm:$0xff]
  %v1278 = vld [vmem:[%s5 + $0xc8] sm:$0xff]
  %v1279 = vld [vmem:[%s5 + $0xd0] sm:$0xff]
  %v1280 = vld [vmem:[%s5 + $0xd8] sm:$0xff]
  %v1281 = vld [vmem:[%s5 + $0xe0] sm:$0xff]
  %v1282 = vld [vmem:[%s5 + $0xe8] sm:$0xff]
  %v1283 = vld [vmem:[%s5 + $0xf0] sm:$0xff]
  %v1284 = vld [vmem:[%s5 + $0xf8] sm:$0xff]
  %v1285 = vld [vmem:[%s5 + $0x100] sm:$0xff]
  %v1286 = vld [vmem:[%s5 + $0x108] sm:$0xff]
  %v1287 = vld [vmem:[%s5 + $0x110] sm:$0xff]
  %v1288 = vld [vmem:[%s5 + $0x118] sm:$0xff]
  %v1289 = vld [vmem:[%s5 + $0x120] sm:$0xff]
  %v1290 = vld [vmem:[%s5 + $0x128] sm:$0xff]
  %v1291 = vld [vmem:[%s5 + $0x130] sm:$0xff]
  %v1292 = vld [vmem:[%s5 + $0x138] sm:$0xff]
  %v1293 = vld [vmem:[%s5 + $0x140] sm:$0xff]
  %v1294 = vld [vmem:[%s5 + $0x148] sm:$0xff]
  %v1295 = vld [vmem:[%s5 + $0x150] sm:$0xff]
  %v1296 = vld [vmem:[%s5 + $0x158] sm:$0xff]
  %v1297 = vld [vmem:[%s5 + $0x160] sm:$0xff]
  %v1298 = vld [vmem:[%s5 + $0x168] sm:$0xff]
  %v1299 = vld [vmem:[%s5 + $0x170] sm:$0xff]
  %v1300 = vld [vmem:[%s5 + $0x178] sm:$0xff]
  %v1301 = vld [vmem:[%s5 + $0x180] sm:$0xff]
  %v1302 = vld [vmem:[%s5 + $0x188] sm:$0xff]
  %v1303 = vld [vmem:[%s5 + $0x190] sm:$0xff]
  %v1304 = vld [vmem:[%s5 + $0x198] sm:$0xff]
  %v1305 = vld [vmem:[%s5 + $0x1a0] sm:$0xff]
  %v1306 = vld [vmem:[%s5 + $0x1a8] sm:$0xff]
  %v1307 = vld [vmem:[%s5 + $0x1b0] sm:$0xff]
  %v1308 = vld [vmem:[%s5 + $0x1b8] sm:$0xff]
  %v1309 = vld [vmem:[%s5 + $0x1c0] sm:$0xff]
  %v1310 = vld [vmem:[%s5 + $0x1c8] sm:$0xff]
  %v1311 = vld [vmem:[%s5 + $0x1d0] sm:$0xff]
  %v1312 = vld [vmem:[%s5 + $0x1d8] sm:$0xff]
  %v1313 = vld [vmem:[%s5 + $0x1e0] sm:$0xff]
  %v1314 = vld [vmem:[%s5 + $0x1e8] sm:$0xff]
  %v1315 = vld [vmem:[%s5 + $0x1f0] sm:$0xff]
  %v1316 = vld [vmem:[%s5 + $0x1f8] sm:$0xff]
  %v1317 = vld [vmem:[%s6] sm:$0x3]
  %v1319 = vlaneseq
  %v1320 = vshrl.u32 %v1319, 7
  %v1321 = vsub.s32 0, %v1320
  %v1322 = vrot.slane %v1317, %v1321
  %v1323 = vlaneseq
  %v1324 = vshrl.u32 %v1323, 7
  %v1325 = vsub.s32 1, %v1324
  %v1326 = vrot.slane %v1317, %v1325
  %v1393 = vunpack.c.l.b16 %v1253
  %v1394 = vunpack.c.h.b16 %v1253
  %v1395 = vunpack.c.l.b16 %v1254
  %v1396 = vunpack.c.h.b16 %v1254
  %v1397 = vunpack.c.l.b16 %v1255
  %v1398 = vunpack.c.h.b16 %v1255
  %v1399 = vunpack.c.l.b16 %v1256
  %v1400 = vunpack.c.h.b16 %v1256
  %v1401 = vunpack.c.l.b16 %v1257
  %v1402 = vunpack.c.h.b16 %v1257
  %v1403 = vunpack.c.l.b16 %v1258
  %v1404 = vunpack.c.h.b16 %v1258
  %v1405 = vunpack.c.l.b16 %v1259
  %v1406 = vunpack.c.h.b16 %v1259
  %v1407 = vunpack.c.l.b16 %v1260
  %v1408 = vunpack.c.h.b16 %v1260
  %v1409 = vunpack.c.l.b16 %v1261
  %v1410 = vunpack.c.h.b16 %v1261
  %v1411 = vunpack.c.l.b16 %v1262
  %v1412 = vunpack.c.h.b16 %v1262
  %v1413 = vunpack.c.l.b16 %v1263
  %v1414 = vunpack.c.h.b16 %v1263
  %v1415 = vunpack.c.l.b16 %v1264
  %v1416 = vunpack.c.h.b16 %v1264
  %v1417 = vunpack.c.l.b16 %v1265
  %v1418 = vunpack.c.h.b16 %v1265
  %v1419 = vunpack.c.l.b16 %v1266
  %v1420 = vunpack.c.h.b16 %v1266
  %v1421 = vunpack.c.l.b16 %v1267
  %v1422 = vunpack.c.h.b16 %v1267
  %v1423 = vunpack.c.l.b16 %v1268
  %v1424 = vunpack.c.h.b16 %v1268
  %v1425 = vunpack.c.l.b16 %v1269
  %v1426 = vunpack.c.h.b16 %v1269
  %v1427 = vunpack.c.l.b16 %v1270
  %v1428 = vunpack.c.h.b16 %v1270
  %v1429 = vunpack.c.l.b16 %v1271
  %v1430 = vunpack.c.h.b16 %v1271
  %v1431 = vunpack.c.l.b16 %v1272
  %v1432 = vunpack.c.h.b16 %v1272
  %v1433 = vunpack.c.l.b16 %v1273
  %v1434 = vunpack.c.h.b16 %v1273
  %v1435 = vunpack.c.l.b16 %v1274
  %v1436 = vunpack.c.h.b16 %v1274
  %v1437 = vunpack.c.l.b16 %v1275
  %v1438 = vunpack.c.h.b16 %v1275
  %v1439 = vunpack.c.l.b16 %v1276
  %v1440 = vunpack.c.h.b16 %v1276
  %v1441 = vunpack.c.l.b16 %v1277
  %v1442 = vunpack.c.h.b16 %v1277
  %v1443 = vunpack.c.l.b16 %v1278
  %v1444 = vunpack.c.h.b16 %v1278
  %v1445 = vunpack.c.l.b16 %v1279
  %v1446 = vunpack.c.h.b16 %v1279
  %v1447 = vunpack.c.l.b16 %v1280
  %v1448 = vunpack.c.h.b16 %v1280
  %v1449 = vunpack.c.l.b16 %v1281
  %v1450 = vunpack.c.h.b16 %v1281
  %v1451 = vunpack.c.l.b16 %v1282
  %v1452 = vunpack.c.h.b16 %v1282
  %v1453 = vunpack.c.l.b16 %v1283
  %v1454 = vunpack.c.h.b16 %v1283
  %v1455 = vunpack.c.l.b16 %v1284
  %v1456 = vunpack.c.h.b16 %v1284
  %v1457 = vunpack.c.l.b16 %v1285
  %v1458 = vunpack.c.h.b16 %v1285
  %v1459 = vunpack.c.l.b16 %v1286
  %v1460 = vunpack.c.h.b16 %v1286
  %v1461 = vunpack.c.l.b16 %v1287
  %v1462 = vunpack.c.h.b16 %v1287
  %v1463 = vunpack.c.l.b16 %v1288
  %v1464 = vunpack.c.h.b16 %v1288
  %v1465 = vunpack.c.l.b16 %v1289
  %v1466 = vunpack.c.h.b16 %v1289
  %v1467 = vunpack.c.l.b16 %v1290
  %v1468 = vunpack.c.h.b16 %v1290
  %v1469 = vunpack.c.l.b16 %v1291
  %v1470 = vunpack.c.h.b16 %v1291
  %v1471 = vunpack.c.l.b16 %v1292
  %v1472 = vunpack.c.h.b16 %v1292
  %v1473 = vunpack.c.l.b16 %v1293
  %v1474 = vunpack.c.h.b16 %v1293
  %v1475 = vunpack.c.l.b16 %v1294
  %v1476 = vunpack.c.h.b16 %v1294
  %v1477 = vunpack.c.l.b16 %v1295
  %v1478 = vunpack.c.h.b16 %v1295
  %v1479 = vunpack.c.l.b16 %v1296
  %v1480 = vunpack.c.h.b16 %v1296
  %v1481 = vunpack.c.l.b16 %v1297
  %v1482 = vunpack.c.h.b16 %v1297
  %v1483 = vunpack.c.l.b16 %v1298
  %v1484 = vunpack.c.h.b16 %v1298
  %v1485 = vunpack.c.l.b16 %v1299
  %v1486 = vunpack.c.h.b16 %v1299
  %v1487 = vunpack.c.l.b16 %v1300
  %v1488 = vunpack.c.h.b16 %v1300
  %v1489 = vunpack.c.l.b16 %v1301
  %v1490 = vunpack.c.h.b16 %v1301
  %v1491 = vunpack.c.l.b16 %v1302
  %v1492 = vunpack.c.h.b16 %v1302
  %v1493 = vunpack.c.l.b16 %v1303
  %v1494 = vunpack.c.h.b16 %v1303
  %v1495 = vunpack.c.l.b16 %v1304
  %v1496 = vunpack.c.h.b16 %v1304
  %v1497 = vunpack.c.l.b16 %v1305
  %v1498 = vunpack.c.h.b16 %v1305
  %v1499 = vunpack.c.l.b16 %v1306
  %v1500 = vunpack.c.h.b16 %v1306
  %v1501 = vunpack.c.l.b16 %v1307
  %v1502 = vunpack.c.h.b16 %v1307
  %v1503 = vunpack.c.l.b16 %v1308
  %v1504 = vunpack.c.h.b16 %v1308
  %v1505 = vunpack.c.l.b16 %v1309
  %v1506 = vunpack.c.h.b16 %v1309
  %v1507 = vunpack.c.l.b16 %v1310
  %v1508 = vunpack.c.h.b16 %v1310
  %v1509 = vunpack.c.l.b16 %v1311
  %v1510 = vunpack.c.h.b16 %v1311
  %v1511 = vunpack.c.l.b16 %v1312
  %v1512 = vunpack.c.h.b16 %v1312
  %v1513 = vunpack.c.l.b16 %v1313
  %v1514 = vunpack.c.h.b16 %v1313
  %v1515 = vunpack.c.l.b16 %v1314
  %v1516 = vunpack.c.h.b16 %v1314
  %v1517 = vunpack.c.l.b16 %v1315
  %v1518 = vunpack.c.h.b16 %v1315
  %v1519 = vunpack.c.l.b16 %v1316
  %v1520 = vunpack.c.h.b16 %v1316
  %v1521 = vpack.c.b16 %v1395, %v1393
  %v1522 = vpack.c.b16 %v1396, %v1394
  %v1523 = vpack.c.b16 %v1399, %v1397
  %v1524 = vpack.c.b16 %v1400, %v1398
  %v1525 = vpack.c.b16 %v1403, %v1401
  %v1526 = vpack.c.b16 %v1404, %v1402
  %v1527 = vpack.c.b16 %v1407, %v1405
  %v1528 = vpack.c.b16 %v1408, %v1406
  %v1529 = vpack.c.b16 %v1411, %v1409
  %v1530 = vpack.c.b16 %v1412, %v1410
  %v1531 = vpack.c.b16 %v1415, %v1413
  %v1532 = vpack.c.b16 %v1416, %v1414
  %v1533 = vpack.c.b16 %v1419, %v1417
  %v1534 = vpack.c.b16 %v1420, %v1418
  %v1535 = vpack.c.b16 %v1423, %v1421
  %v1536 = vpack.c.b16 %v1424, %v1422
  %v1537 = vpack.c.b16 %v1427, %v1425
  %v1538 = vpack.c.b16 %v1428, %v1426
  %v1539 = vpack.c.b16 %v1431, %v1429
  %v1540 = vpack.c.b16 %v1432, %v1430
  %v1541 = vpack.c.b16 %v1435, %v1433
  %v1542 = vpack.c.b16 %v1436, %v1434
  %v1543 = vpack.c.b16 %v1439, %v1437
  %v1544 = vpack.c.b16 %v1440, %v1438
  %v1545 = vpack.c.b16 %v1443, %v1441
  %v1546 = vpack.c.b16 %v1444, %v1442
  %v1547 = vpack.c.b16 %v1447, %v1445
  %v1548 = vpack.c.b16 %v1448, %v1446
  %v1549 = vpack.c.b16 %v1451, %v1449
  %v1550 = vpack.c.b16 %v1452, %v1450
  %v1551 = vpack.c.b16 %v1455, %v1453
  %v1552 = vpack.c.b16 %v1456, %v1454
  %v1553 = vpack.c.b16 %v1459, %v1457
  %v1554 = vpack.c.b16 %v1460, %v1458
  %v1555 = vpack.c.b16 %v1463, %v1461
  %v1556 = vpack.c.b16 %v1464, %v1462
  %v1557 = vpack.c.b16 %v1467, %v1465
  %v1558 = vpack.c.b16 %v1468, %v1466
  %v1559 = vpack.c.b16 %v1471, %v1469
  %v1560 = vpack.c.b16 %v1472, %v1470
  %v1561 = vpack.c.b16 %v1475, %v1473
  %v1562 = vpack.c.b16 %v1476, %v1474
  %v1563 = vpack.c.b16 %v1479, %v1477
  %v1564 = vpack.c.b16 %v1480, %v1478
  %v1565 = vpack.c.b16 %v1483, %v1481
  %v1566 = vpack.c.b16 %v1484, %v1482
  %v1567 = vpack.c.b16 %v1487, %v1485
  %v1568 = vpack.c.b16 %v1488, %v1486
  %v1569 = vpack.c.b16 %v1491, %v1489
  %v1570 = vpack.c.b16 %v1492, %v1490
  %v1571 = vpack.c.b16 %v1495, %v1493
  %v1572 = vpack.c.b16 %v1496, %v1494
  %v1573 = vpack.c.b16 %v1499, %v1497
  %v1574 = vpack.c.b16 %v1500, %v1498
  %v1575 = vpack.c.b16 %v1503, %v1501
  %v1576 = vpack.c.b16 %v1504, %v1502
  %v1577 = vpack.c.b16 %v1507, %v1505
  %v1578 = vpack.c.b16 %v1508, %v1506
  %v1579 = vpack.c.b16 %v1511, %v1509
  %v1580 = vpack.c.b16 %v1512, %v1510
  %v1581 = vpack.c.b16 %v1515, %v1513
  %v1582 = vpack.c.b16 %v1516, %v1514
  %v1583 = vpack.c.b16 %v1519, %v1517
  %v1584 = vpack.c.b16 %v1520, %v1518
  %1649 = vmatprep.subr.bf16.mxu0 %v1522
  %1650 = vmatpush1.bf16.msra.mxu0 %v1521
  %1651 = vmatprep.subr.bf16.mxu0 %v1524
  %1652 = vmatpush1.bf16.msra.mxu0 %v1523
  %1653 = vmatprep.subr.bf16.mxu0 %v1526
  %1654 = vmatpush1.bf16.msra.mxu0 %v1525
  %1655 = vmatprep.subr.bf16.mxu0 %v1528
  %1656 = vmatpush1.bf16.msra.mxu0 %v1527
  %1657 = vmatprep.subr.bf16.mxu0 %v1530
  %1658 = vmatpush1.bf16.msra.mxu0 %v1529
  %1659 = vmatprep.subr.bf16.mxu0 %v1532
  %1660 = vmatpush1.bf16.msra.mxu0 %v1531
  %1661 = vmatprep.subr.bf16.mxu0 %v1534
  %1662 = vmatpush1.bf16.msra.mxu0 %v1533
  %1663 = vmatprep.subr.bf16.mxu0 %v1536
  %1664 = vmatpush1.bf16.msra.mxu0 %v1535
  %1665 = vmatprep.subr.bf16.mxu0 %v1538
  %1666 = vmatpush1.bf16.msra.mxu0 %v1537
  %1667 = vmatprep.subr.bf16.mxu0 %v1540
  %1668 = vmatpush1.bf16.msra.mxu0 %v1539
  %1669 = vmatprep.subr.bf16.mxu0 %v1542
  %1670 = vmatpush1.bf16.msra.mxu0 %v1541
  %1671 = vmatprep.subr.bf16.mxu0 %v1544
  %1672 = vmatpush1.bf16.msra.mxu0 %v1543
  %1673 = vmatprep.subr.bf16.mxu0 %v1546
  %1674 = vmatpush1.bf16.msra.mxu0 %v1545
  %1675 = vmatprep.subr.bf16.mxu0 %v1548
  %1676 = vmatpush1.bf16.msra.mxu0 %v1547
  %1677 = vmatprep.subr.bf16.mxu0 %v1550
  %1678 = vmatpush1.bf16.msra.mxu0 %v1549
  %1679 = vmatprep.subr.bf16.mxu0 %v1552
  %1680 = vmatpush1.bf16.msra.mxu0 %v1551
  %1681 = vmatprep.mubr.bf16.mxu0 %v1246
  %1682 = vmatmul.mubr.bf16.gmra.mrb[0].mxu0 %v1245
  %v1683 = vpop.f32.mrb[0].mxu0
  %v1684 = vadd.f32 %v1322, %v1683
  %v1685 = vpop.f32.mrb[0].mxu0
  %v1686 = vadd.f32 %v1326, %v1685
  %v1687 = vpop.f32.mrb[0].mxu0
  %v1688 = vadd.f32 %v1322, %v1687
  %v1689 = vpop.f32.mrb[0].mxu0
  %v1690 = vadd.f32 %v1326, %v1689
  %1691 = vmatprep.mubr.bf16.mxu0 %v1250
  %1692 = vmatmul.mubr.bf16.gmra.mrb[0].mxu0 %v1249
  %v1693 = vpop.f32.mrb[0].mxu0
  %v1694 = vadd.f32 %v1322, %v1693
  %v1695 = vpop.f32.mrb[0].mxu0
  %v1696 = vadd.f32 %v1326, %v1695
  %v1697 = vpop.f32.mrb[0].mxu0
  %v1698 = vadd.f32 %v1322, %v1697
  %v1699 = vpop.f32.mrb[0].mxu0
  %v1700 = vadd.f32 %v1326, %v1699
  %1701 = vdwg.mxu0
  %1702 = vmatprep.subr.bf16.mxu0 %v1554
  %1703 = vmatpush1.bf16.msra.mxu0 %v1553
  %1704 = vmatprep.subr.bf16.mxu0 %v1556
  %1705 = vmatpush1.bf16.msra.mxu0 %v1555
  %1706 = vmatprep.subr.bf16.mxu0 %v1558
  %1707 = vmatpush1.bf16.msra.mxu0 %v1557
  %1708 = vmatprep.subr.bf16.mxu0 %v1560
  %1709 = vmatpush1.bf16.msra.mxu0 %v1559
  %1710 = vmatprep.subr.bf16.mxu0 %v1562
  %1711 = vmatpush1.bf16.msra.mxu0 %v1561
  %1712 = vmatprep.subr.bf16.mxu0 %v1564
  %1713 = vmatpush1.bf16.msra.mxu0 %v1563
  %1714 = vmatprep.subr.bf16.mxu0 %v1566
  %1715 = vmatpush1.bf16.msra.mxu0 %v1565
  %1716 = vmatprep.subr.bf16.mxu0 %v1568
  %1717 = vmatpush1.bf16.msra.mxu0 %v1567
  %1718 = vmatprep.subr.bf16.mxu0 %v1570
  %1719 = vmatpush1.bf16.msra.mxu0 %v1569
  %1720 = vmatprep.subr.bf16.mxu0 %v1572
  %1721 = vmatpush1.bf16.msra.mxu0 %v1571
  %1722 = vmatprep.subr.bf16.mxu0 %v1574
  %1723 = vmatpush1.bf16.msra.mxu0 %v1573
  %1724 = vmatprep.subr.bf16.mxu0 %v1576
  %1725 = vmatpush1.bf16.msra.mxu0 %v1575
  %1726 = vmatprep.subr.bf16.mxu0 %v1578
  %1727 = vmatpush1.bf16.msra.mxu0 %v1577
  %1728 = vmatprep.subr.bf16.mxu0 %v1580
  %1729 = vmatpush1.bf16.msra.mxu0 %v1579
  %1730 = vmatprep.subr.bf16.mxu0 %v1582
  %1731 = vmatpush1.bf16.msra.mxu0 %v1581
  %1732 = vmatprep.subr.bf16.mxu0 %v1584
  %1733 = vmatpush1.bf16.msra.mxu0 %v1583
  %1734 = vmatprep.mubr.bf16.mxu0 %v1248
  %1735 = vmatmul.mubr.bf16.gmra.mrb[0].mxu0 %v1247
  %v1736 = vpop.f32.mrb[0].mxu0
  %v1737 = vadd.f32 %v1684, %v1736
  %v1738 = vpop.f32.mrb[0].mxu0
  %v1739 = vadd.f32 %v1686, %v1738
  %v1740 = vpop.f32.mrb[0].mxu0
  %v1741 = vadd.f32 %v1688, %v1740
  %v1742 = vpop.f32.mrb[0].mxu0
  %v1743 = vadd.f32 %v1690, %v1742
  %1744 = vmatprep.mubr.bf16.mxu0 %v1252
  %1745 = vmatmul.mubr.bf16.gmra.mrb[0].mxu0 %v1251
  %v1746 = vpop.f32.mrb[0].mxu0
  %v1747 = vadd.f32 %v1694, %v1746
  %v1748 = vpop.f32.mrb[0].mxu0
  %v1749 = vadd.f32 %v1696, %v1748
  %v1750 = vpop.f32.mrb[0].mxu0
  %v1751 = vadd.f32 %v1698, %v1750
  %v1752 = vpop.f32.mrb[0].mxu0
  %v1753 = vadd.f32 %v1700, %v1752
  %1754 = vdwg.mxu0
  %v1755 = vpack.c.bf16 %v1741, %v1737
  %v1756 = vpack.c.bf16 %v1743, %v1739
  %v1757 = vpack.c.bf16 %v1751, %v1747
  %v1758 = vpack.c.bf16 %v1753, %v1749
  %v1763 = vunpack.c.l.b16 %v1755
  %v1764 = vunpack.c.l.b16 %v1756
  %v1765 = vunpack.c.h.b16 %v1755
  %v1766 = vunpack.c.h.b16 %v1756
  %v1767 = vunpack.c.l.b16 %v1757
  %v1768 = vunpack.c.l.b16 %v1758
  %v1769 = vunpack.c.h.b16 %v1757
  %v1770 = vunpack.c.h.b16 %v1758
  %v1771 = vpack.c.b16 %v1764, %v1763
  %v1772 = vpack.c.b16 %v1766, %v1765
  %v1773 = vpack.c.b16 %v1768, %v1767
  %v1774 = vpack.c.b16 %v1770, %v1769
  %1779 = vst [vmem:[%s7] sm:$0xff] %v1771
  %1780 = vst [vmem:[%s7 + $0x8] sm:$0xff] %v1772
  %1781 = vst [vmem:[%s7 + $0x10] sm:$0xff] %v1773
  %1782 = vst [vmem:[%s7 + $0x18] sm:$0xff] %v1774
  // Predicated region
  $region30: #{forward.15} parent=0 // pred_check
    _
  $region31: #{forward.15} parent=0 // pred_check_branch
    %1784 = sbr.rel (0) target = $region33
  $region32: #{forward.15} parent=0 // pred_region
    _
  $region33: #{forward.15} parent=0 // pred_fallthru
    _
  // Predicated region
  $region34: #{forward.15} parent=0 // pred_check
    _
  $region35: #{forward.15} parent=0 // pred_check_branch
    %1786 = sbr.rel (0) target = $region37
  $region36: #{forward.15} parent=0 // pred_region
    _
  $region37: #{forward.15} parent=0 // pred_fallthru
    _

// kernel: forward.17
$region0: #{forward.17}
  #allocation0 [shape = 'u32[]', space=smem, size = 0x4, offset = 0x4, fixed_abs, tag = 'smem constant byte address 0x4 - core index']
  #allocation1 [shape = 'u32[144,128]{1,0:T(1,128)}', space=vmem, size = 0x12000, scoped, tag = 'internal scratch']
  %s0 = inlined_call_operand.vmem [shape: s32[32,1], index: 0, kind: input, shape index: {}]
  %s1 = inlined_call_operand.vmem [shape: s32[32,1], index: 1, kind: input, shape index: {}]
  %s2 = inlined_call_operand.vmem [shape: f32[8,256], index: 2, kind: input, shape index: {}]
  %s3 = inlined_call_operand.vmem [shape: bf16[512,1024], index: 3, kind: input, shape index: {}]
  %s4 = inlined_call_operand.vmem [shape: f32[1,1024], index: 4, kind: input, shape index: {}]
  %s5 = inlined_call_operand.vmem [shape: bf16[1024,512], index: 5, kind: input, shape index: {}]
  %s6 = inlined_call_operand.vmem [shape: f32[1,512], index: 6, kind: input, shape index: {}]
  %s7 = inlined_call_operand.vmem [shape: bf16[32,512], index: 7, kind: output, shape index: {}]
  %s8 = sld [smem:[#allocation0]]
  $region38: #{forward.17} parent=0
    _
  %s10 = ssub.s32 1, %s8
  %s11 = scalar_select 0, %s10, %s8
  // Predicated region
  $region2: #{forward.17} parent=0 // pred_check
    _
  $region3: #{forward.17} parent=0 // pred_check_branch
    %13 = sbr.rel (0) target = $region5
  $region4: #{forward.17} parent=0 // pred_region
    _
  $region5: #{forward.17} parent=0 // pred_fallthru
    _
  // Predicated region
  $region6: #{forward.17} parent=0 // pred_check
    _
  $region7: #{forward.17} parent=0 // pred_check_branch
    %15 = sbr.rel (0) target = $region9
  $region8: #{forward.17} parent=0 // pred_region
    _
  $region9: #{forward.17} parent=0 // pred_fallthru
    _
  // Predicated region
  $region10: #{forward.17} parent=0 // pred_check
    _
  $region11: #{forward.17} parent=0 // pred_check_branch
    %17 = sbr.rel (0) target = $region13
  $region12: #{forward.17} parent=0 // pred_region
    _
  $region13: #{forward.17} parent=0 // pred_fallthru
    _
  // Predicated region
  $region14: #{forward.17} parent=0 // pred_check
    _
  $region15: #{forward.17} parent=0 // pred_check_branch
    %19 = sbr.rel (0) target = $region17
  $region16: #{forward.17} parent=0 // pred_region
    _
  $region17: #{forward.17} parent=0 // pred_fallthru
    _
  // Predicated region
  $region18: #{forward.17} parent=0 // pred_check
    _
  $region19: #{forward.17} parent=0 // pred_check_branch
    %21 = sbr.rel (0) target = $region21
  $region20: #{forward.17} parent=0 // pred_region
    _
  $region21: #{forward.17} parent=0 // pred_fallthru
    _
  // Predicated region
  $region22: #{forward.17} parent=0 // pred_check
    _
  $region23: #{forward.17} parent=0 // pred_check_branch
    %23 = sbr.rel (0) target = $region25
  $region24: #{forward.17} parent=0 // pred_region
    _
  $region25: #{forward.17} parent=0 // pred_fallthru
    _
  // Predicated region
  $region26: #{forward.17} parent=0 // pred_check
    _
  $region27: #{forward.17} parent=0 // pred_check_branch
    %25 = sbr.rel (0) target = $region29
  $region28: #{forward.17} parent=0 // pred_region
    _
  $region29: #{forward.17} parent=0 // pred_fallthru
    _
  %v27 = vld [vmem:[%s2] sm:$0xff]
  %v28 = vld [vmem:[%s2 + $0x8] sm:$0xff]
  %v29 = vld [vmem:[%s0] sm:$0xff]
  %v30 = vld [vmem:[%s0 + $0x8] sm:$0xff]
  %v31 = vld [vmem:[%s0 + $0x10] sm:$0xff]
  %v32 = vld [vmem:[%s0 + $0x18] sm:$0xff]
  %v33 = vld [vmem:[%s1] sm:$0xff]
  %v34 = vld [vmem:[%s1 + $0x8] sm:$0xff]
  %v35 = vld [vmem:[%s1 + $0x10] sm:$0xff]
  %v36 = vld [vmem:[%s1 + $0x18] sm:$0xff]
  %v37 = vpack.c.bf16 %v27, %v27
  %v38 = vpack.c.bf16 %v28, %v28
  %v39 = vlaneseq
  %v40 = vand.u32 %v39, 127
  %41 = vset.pattern.permute.xlu0 0
  %42 = vperm.xlu0 %41, %v29
  %v43 = vpop.permute.xlu0 %42
  %44 = vset.pattern.permute.xlu0 0
  %45 = vperm.xlu0 %44, %v30
  %v46 = vpop.permute.xlu0 %45
  %47 = vset.pattern.permute.xlu0 0
  %48 = vperm.xlu0 %47, %v31
  %v49 = vpop.permute.xlu0 %48
  %50 = vset.pattern.permute.xlu0 0
  %51 = vperm.xlu0 %50, %v32
  %v52 = vpop.permute.xlu0 %51
  %vm53 = vcmp.eq.s32.totalorder %v43, %v40
  %vm54 = vcmp.eq.s32.totalorder %v46, %v40
  %vm55 = vcmp.eq.s32.totalorder %v49, %v40
  %vm56 = vcmp.eq.s32.totalorder %v52, %v40
  %v57 = vsel %vm53, 1, 0
  %v58 = vsel %vm54, 1, 0
  %v59 = vsel %vm55, 1, 0
  %v60 = vsel %vm56, 1, 0
  %v61 = vcvt.s32.f32 %v57
  %v62 = vcvt.s32.f32 %v58
  %v63 = vcvt.s32.f32 %v59
  %v64 = vcvt.s32.f32 %v60
  %v65 = vpack.c.bf16 %v62, %v61
  %v66 = vpack.c.bf16 %v64, %v63
  %67 = vset.pattern.permute.xlu0 0
  %68 = vperm.xlu0 %67, %v33
  %v69 = vpop.permute.xlu0 %68
  %70 = vset.pattern.permute.xlu0 0
  %71 = vperm.xlu0 %70, %v34
  %v72 = vpop.permute.xlu0 %71
  %73 = vset.pattern.permute.xlu0 0
  %74 = vperm.xlu0 %73, %v35
  %v75 = vpop.permute.xlu0 %74
  %76 = vset.pattern.permute.xlu0 0
  %77 = vperm.xlu0 %76, %v36
  %v78 = vpop.permute.xlu0 %77
  %vm79 = vcmp.eq.s32.totalorder %v69, %v40
  %vm80 = vcmp.eq.s32.totalorder %v72, %v40
  %vm81 = vcmp.eq.s32.totalorder %v75, %v40
  %vm82 = vcmp.eq.s32.totalorder %v78, %v40
  %v83 = vsel %vm79, 1, 0
  %v84 = vsel %vm80, 1, 0
  %v85 = vsel %vm81, 1, 0
  %v86 = vsel %vm82, 1, 0
  %v87 = vcvt.s32.f32 %v83
  %v88 = vcvt.s32.f32 %v84
  %v89 = vcvt.s32.f32 %v85
  %v90 = vcvt.s32.f32 %v86
  %v91 = vpack.c.bf16 %v88, %v87
  %v92 = vpack.c.bf16 %v90, %v89
  %vm93 = vcmask 64512
  %v95 = vsel %vm93, %v65, 0
  %v98 = vsel %vm93, %v66, 0
  %vm100 = vcmask 1043456
  %v102 = vsel %vm100, %v37, 0
  %v105 = vsel %vm100, %v38, 0
  %107 = vmatprep.subr.bf16.mxu0 %v105
  %108 = vmatpush1.bf16.msra.mxu0 %v102
  %109 = vmatprep.subr.bf16.mxu0 0
  %110 = vmatpush1.bf16.msra.mxu0 0
  %111 = vmatprep.subr.bf16.mxu0 0
  %112 = vmatpush1.bf16.msra.mxu0 0
  %113 = vmatprep.subr.bf16.mxu0 0
  %114 = vmatpush1.bf16.msra.mxu0 0
  %115 = vmatprep.subr.bf16.mxu0 0
  %116 = vmatpush1.bf16.msra.mxu0 0
  %117 = vmatprep.subr.bf16.mxu0 0
  %118 = vmatpush1.bf16.msra.mxu0 0
  %119 = vmatprep.subr.bf16.mxu0 0
  %120 = vmatpush1.bf16.msra.mxu0 0
  %121 = vmatprep.subr.bf16.mxu0 0
  %122 = vmatpush1.bf16.msra.mxu0 0
  %123 = vmatprep.subr.bf16.mxu0 0
  %124 = vmatpush1.bf16.msra.mxu0 0
  %125 = vmatprep.subr.bf16.mxu0 0
  %126 = vmatpush1.bf16.msra.mxu0 0
  %127 = vmatprep.subr.bf16.mxu0 0
  %128 = vmatpush1.bf16.msra.mxu0 0
  %129 = vmatprep.subr.bf16.mxu0 0
  %130 = vmatpush1.bf16.msra.mxu0 0
  %131 = vmatprep.subr.bf16.mxu0 0
  %132 = vmatpush1.bf16.msra.mxu0 0
  %133 = vmatprep.subr.bf16.mxu0 0
  %134 = vmatpush1.bf16.msra.mxu0 0
  %135 = vmatprep.subr.bf16.mxu0 0
  %136 = vmatpush1.bf16.msra.mxu0 0
  %137 = vmatprep.subr.bf16.mxu0 0
  %138 = vmatpush1.bf16.msra.mxu0 0
  %139 = vmatprep.mubr.bf16.mxu0 0
  %140 = vmatmul.mubr.bf16.gmra.mrb[0].mxu0 %v95
  %v141 = vpop.f32.mrb[0].mxu0
  %v142 = vadd.f32 0.0, %v141
  %v143 = vpop.f32.mrb[0].mxu0
  %v144 = vadd.f32 0.0, %v143
  %v145 = vpop.f32.mrb[0].mxu0
  %v146 = vadd.f32 0.0, %v145
  %v147 = vpop.f32.mrb[0].mxu0
  %v148 = vadd.f32 0.0, %v147
  %149 = vmatprep.mubr.bf16.mxu0 0
  %150 = vmatmul.mubr.bf16.gmra.mrb[0].mxu0 %v98
  %v151 = vpop.f32.mrb[0].mxu0
  %v152 = vadd.f32 0.0, %v151
  %v153 = vpop.f32.mrb[0].mxu0
  %v154 = vadd.f32 0.0, %v153
  %v155 = vpop.f32.mrb[0].mxu0
  %v156 = vadd.f32 0.0, %v155
  %v157 = vpop.f32.mrb[0].mxu0
  %v158 = vadd.f32 0.0, %v157
  %159 = vdwg.mxu0
  %v161 = vsel %vm93, %v91, 0
  %v164 = vsel %vm93, %v92, 0
  %166 = vmatprep.subr.bf16.mxu0 %v105
  %167 = vmatpush1.bf16.msra.mxu0 %v102
  %168 = vmatprep.subr.bf16.mxu0 0
  %169 = vmatpush1.bf16.msra.mxu0 0
  %170 = vmatprep.subr.bf16.mxu0 0
  %171 = vmatpush1.bf16.msra.mxu0 0
  %172 = vmatprep.subr.bf16.mxu0 0
  %173 = vmatpush1.bf16.msra.mxu0 0
  %174 = vmatprep.subr.bf16.mxu0 0
  %175 = vmatpush1.bf16.msra.mxu0 0
  %176 = vmatprep.subr.bf16.mxu0 0
  %177 = vmatpush1.bf16.msra.mxu0 0
  %178 = vmatprep.subr.bf16.mxu0 0
  %179 = vmatpush1.bf16.msra.mxu0 0
  %180 = vmatprep.subr.bf16.mxu0 0
  %181 = vmatpush1.bf16.msra.mxu0 0
  %182 = vmatprep.subr.bf16.mxu0 0
  %183 = vmatpush1.bf16.msra.mxu0 0
  %184 = vmatprep.subr.bf16.mxu0 0
  %185 = vmatpush1.bf16.msra.mxu0 0
  %186 = vmatprep.subr.bf16.mxu0 0
  %187 = vmatpush1.bf16.msra.mxu0 0
  %188 = vmatprep.subr.bf16.mxu0 0
  %189 = vmatpush1.bf16.msra.mxu0 0
  %190 = vmatprep.subr.bf16.mxu0 0
  %191 = vmatpush1.bf16.msra.mxu0 0
  %192 = vmatprep.subr.bf16.mxu0 0
  %193 = vmatpush1.bf16.msra.mxu0 0
  %194 = vmatprep.subr.bf16.mxu0 0
  %195 = vmatpush1.bf16.msra.mxu0 0
  %196 = vmatprep.subr.bf16.mxu0 0
  %197 = vmatpush1.bf16.msra.mxu0 0
  %198 = vmatprep.mubr.bf16.mxu0 0
  %199 = vmatmul.mubr.bf16.gmra.mrb[0].mxu0 %v161
  %v200 = vpop.f32.mrb[0].mxu0
  %v201 = vadd.f32 0.0, %v200
  %v202 = vpop.f32.mrb[0].mxu0
  %v203 = vadd.f32 0.0, %v202
  %v204 = vpop.f32.mrb[0].mxu0
  %v205 = vadd.f32 0.0, %v204
  %v206 = vpop.f32.mrb[0].mxu0
  %v207 = vadd.f32 0.0, %v206
  %208 = vmatprep.mubr.bf16.mxu0 0
  %209 = vmatmul.mubr.bf16.gmra.mrb[0].mxu0 %v164
  %v210 = vpop.f32.mrb[0].mxu0
  %v211 = vadd.f32 0.0, %v210
  %v212 = vpop.f32.mrb[0].mxu0
  %v213 = vadd.f32 0.0, %v212
  %v214 = vpop.f32.mrb[0].mxu0
  %v215 = vadd.f32 0.0, %v214
  %v216 = vpop.f32.mrb[0].mxu0
  %v217 = vadd.f32 0.0, %v216
  %218 = vdwg.mxu0
  %v219 = vpack.c.bf16 %v146, %v142
  %v220 = vpack.c.bf16 %v148, %v144
  %v221 = vpack.c.bf16 %v156, %v152
  %v222 = vpack.c.bf16 %v158, %v154
  %v223 = vpack.c.bf16 %v205, %v201
  %v224 = vpack.c.bf16 %v207, %v203
  %v225 = vpack.c.bf16 %v215, %v211
  %v226 = vpack.c.bf16 %v217, %v213
  %v227 = vld [vmem:[%s3] sm:$0xff]
  %v228 = vld [vmem:[%s3 + $0x8] sm:$0xff]
  %v229 = vld [vmem:[%s3 + $0x10] sm:$0xff]
  %v230 = vld [vmem:[%s3 + $0x18] sm:$0xff]
  %v231 = vld [vmem:[%s3 + $0x20] sm:$0xff]
  %v232 = vld [vmem:[%s3 + $0x28] sm:$0xff]
  %v233 = vld [vmem:[%s3 + $0x30] sm:$0xff]
  %v234 = vld [vmem:[%s3 + $0x38] sm:$0xff]
  %v235 = vld [vmem:[%s3 + $0x40] sm:$0xff]
  %v236 = vld [vmem:[%s3 + $0x48] sm:$0xff]
  %v237 = vld [vmem:[%s3 + $0x50] sm:$0xff]
  %v238 = vld [vmem:[%s3 + $0x58] sm:$0xff]
  %v239 = vld [vmem:[%s3 + $0x60] sm:$0xff]
  %v240 = vld [vmem:[%s3 + $0x68] sm:$0xff]
  %v241 = vld [vmem:[%s3 + $0x70] sm:$0xff]
  %v242 = vld [vmem:[%s3 + $0x78] sm:$0xff]
  %v243 = vld [vmem:[%s3 + $0x80] sm:$0xff]
  %v244 = vld [vmem:[%s3 + $0x88] sm:$0xff]
  %v245 = vld [vmem:[%s3 + $0x90] sm:$0xff]
  %v246 = vld [vmem:[%s3 + $0x98] sm:$0xff]
  %v247 = vld [vmem:[%s3 + $0xa0] sm:$0xff]
  %v248 = vld [vmem:[%s3 + $0xa8] sm:$0xff]
  %v249 = vld [vmem:[%s3 + $0xb0] sm:$0xff]
  %v250 = vld [vmem:[%s3 + $0xb8] sm:$0xff]
  %v251 = vld [vmem:[%s3 + $0xc0] sm:$0xff]
  %v252 = vld [vmem:[%s3 + $0xc8] sm:$0xff]
  %v253 = vld [vmem:[%s3 + $0xd0] sm:$0xff]
  %v254 = vld [vmem:[%s3 + $0xd8] sm:$0xff]
  %v255 = vld [vmem:[%s3 + $0xe0] sm:$0xff]
  %v256 = vld [vmem:[%s3 + $0xe8] sm:$0xff]
  %v257 = vld [vmem:[%s3 + $0xf0] sm:$0xff]
  %v258 = vld [vmem:[%s3 + $0xf8] sm:$0xff]
  %v259 = vld [vmem:[%s3 + $0x100] sm:$0xff]
  %v260 = vld [vmem:[%s3 + $0x108] sm:$0xff]
  %v261 = vld [vmem:[%s3 + $0x110] sm:$0xff]
  %v262 = vld [vmem:[%s3 + $0x118] sm:$0xff]
  %v263 = vld [vmem:[%s3 + $0x120] sm:$0xff]
  %v264 = vld [vmem:[%s3 + $0x128] sm:$0xff]
  %v265 = vld [vmem:[%s3 + $0x130] sm:$0xff]
  %v266 = vld [vmem:[%s3 + $0x138] sm:$0xff]
  %v267 = vld [vmem:[%s3 + $0x140] sm:$0xff]
  %v268 = vld [vmem:[%s3 + $0x148] sm:$0xff]
  %v269 = vld [vmem:[%s3 + $0x150] sm:$0xff]
  %v270 = vld [vmem:[%s3 + $0x158] sm:$0xff]
  %v271 = vld [vmem:[%s3 + $0x160] sm:$0xff]
  %v272 = vld [vmem:[%s3 + $0x168] sm:$0xff]
  %v273 = vld [vmem:[%s3 + $0x170] sm:$0xff]
  %v274 = vld [vmem:[%s3 + $0x178] sm:$0xff]
  %v275 = vld [vmem:[%s3 + $0x180] sm:$0xff]
  %v276 = vld [vmem:[%s3 + $0x188] sm:$0xff]
  %v277 = vld [vmem:[%s3 + $0x190] sm:$0xff]
  %v278 = vld [vmem:[%s3 + $0x198] sm:$0xff]
  %v279 = vld [vmem:[%s3 + $0x1a0] sm:$0xff]
  %v280 = vld [vmem:[%s3 + $0x1a8] sm:$0xff]
  %v281 = vld [vmem:[%s3 + $0x1b0] sm:$0xff]
  %v282 = vld [vmem:[%s3 + $0x1b8] sm:$0xff]
  %v283 = vld [vmem:[%s3 + $0x1c0] sm:$0xff]
  %v284 = vld [vmem:[%s3 + $0x1c8] sm:$0xff]
  %v285 = vld [vmem:[%s3 + $0x1d0] sm:$0xff]
  %v286 = vld [vmem:[%s3 + $0x1d8] sm:$0xff]
  %v287 = vld [vmem:[%s3 + $0x1e0] sm:$0xff]
  %v288 = vld [vmem:[%s3 + $0x1e8] sm:$0xff]
  %v289 = vld [vmem:[%s3 + $0x1f0] sm:$0xff]
  %v290 = vld [vmem:[%s3 + $0x1f8] sm:$0xff]
  %v291 = vld [vmem:[%s3 + $0x200] sm:$0xff]
  %v292 = vld [vmem:[%s3 + $0x208] sm:$0xff]
  %v293 = vld [vmem:[%s3 + $0x210] sm:$0xff]
  %v294 = vld [vmem:[%s3 + $0x218] sm:$0xff]
  %v295 = vld [vmem:[%s3 + $0x220] sm:$0xff]
  %v296 = vld [vmem:[%s3 + $0x228] sm:$0xff]
  %v297 = vld [vmem:[%s3 + $0x230] sm:$0xff]
  %v298 = vld [vmem:[%s3 + $0x238] sm:$0xff]
  %v299 = vld [vmem:[%s3 + $0x240] sm:$0xff]
  %v300 = vld [vmem:[%s3 + $0x248] sm:$0xff]
  %v301 = vld [vmem:[%s3 + $0x250] sm:$0xff]
  %v302 = vld [vmem:[%s3 + $0x258] sm:$0xff]
  %v303 = vld [vmem:[%s3 + $0x260] sm:$0xff]
  %v304 = vld [vmem:[%s3 + $0x268] sm:$0xff]
  %v305 = vld [vmem:[%s3 + $0x270] sm:$0xff]
  %v306 = vld [vmem:[%s3 + $0x278] sm:$0xff]
  %v307 = vld [vmem:[%s3 + $0x280] sm:$0xff]
  %v308 = vld [vmem:[%s3 + $0x288] sm:$0xff]
  %v309 = vld [vmem:[%s3 + $0x290] sm:$0xff]
  %v310 = vld [vmem:[%s3 + $0x298] sm:$0xff]
  %v311 = vld [vmem:[%s3 + $0x2a0] sm:$0xff]
  %v312 = vld [vmem:[%s3 + $0x2a8] sm:$0xff]
  %v313 = vld [vmem:[%s3 + $0x2b0] sm:$0xff]
  %v314 = vld [vmem:[%s3 + $0x2b8] sm:$0xff]
  %v315 = vld [vmem:[%s3 + $0x2c0] sm:$0xff]
  %v316 = vld [vmem:[%s3 + $0x2c8] sm:$0xff]
  %v317 = vld [vmem:[%s3 + $0x2d0] sm:$0xff]
  %v318 = vld [vmem:[%s3 + $0x2d8] sm:$0xff]
  %v319 = vld [vmem:[%s3 + $0x2e0] sm:$0xff]
  %v320 = vld [vmem:[%s3 + $0x2e8] sm:$0xff]
  %v321 = vld [vmem:[%s3 + $0x2f0] sm:$0xff]
  %v322 = vld [vmem:[%s3 + $0x2f8] sm:$0xff]
  %v323 = vld [vmem:[%s3 + $0x300] sm:$0xff]
  %v324 = vld [vmem:[%s3 + $0x308] sm:$0xff]
  %v325 = vld [vmem:[%s3 + $0x310] sm:$0xff]
  %v326 = vld [vmem:[%s3 + $0x318] sm:$0xff]
  %v327 = vld [vmem:[%s3 + $0x320] sm:$0xff]
  %v328 = vld [vmem:[%s3 + $0x328] sm:$0xff]
  %v329 = vld [vmem:[%s3 + $0x330] sm:$0xff]
  %v330 = vld [vmem:[%s3 + $0x338] sm:$0xff]
  %v331 = vld [vmem:[%s3 + $0x340] sm:$0xff]
  %v332 = vld [vmem:[%s3 + $0x348] sm:$0xff]
  %v333 = vld [vmem:[%s3 + $0x350] sm:$0xff]
  %v334 = vld [vmem:[%s3 + $0x358] sm:$0xff]
  %v335 = vld [vmem:[%s3 + $0x360] sm:$0xff]
  %v336 = vld [vmem:[%s3 + $0x368] sm:$0xff]
  %v337 = vld [vmem:[%s3 + $0x370] sm:$0xff]
  %v338 = vld [vmem:[%s3 + $0x378] sm:$0xff]
  %v339 = vld [vmem:[%s3 + $0x380] sm:$0xff]
  %v340 = vld [vmem:[%s3 + $0x388] sm:$0xff]
  %v341 = vld [vmem:[%s3 + $0x390] sm:$0xff]
  %v342 = vld [vmem:[%s3 + $0x398] sm:$0xff]
  %v343 = vld [vmem:[%s3 + $0x3a0] sm:$0xff]
  %v344 = vld [vmem:[%s3 + $0x3a8] sm:$0xff]
  %v345 = vld [vmem:[%s3 + $0x3b0] sm:$0xff]
  %v346 = vld [vmem:[%s3 + $0x3b8] sm:$0xff]
  %v347 = vld [vmem:[%s3 + $0x3c0] sm:$0xff]
  %v348 = vld [vmem:[%s3 + $0x3c8] sm:$0xff]
  %v349 = vld [vmem:[%s3 + $0x3d0] sm:$0xff]
  %v350 = vld [vmem:[%s3 + $0x3d8] sm:$0xff]
  %v351 = vld [vmem:[%s3 + $0x3e0] sm:$0xff]
  %v352 = vld [vmem:[%s3 + $0x3e8] sm:$0xff]
  %v353 = vld [vmem:[%s3 + $0x3f0] sm:$0xff]
  %v354 = vld [vmem:[%s3 + $0x3f8] sm:$0xff]
  %v355 = vld [vmem:[%s3 + $0x400] sm:$0xff]
  %v356 = vld [vmem:[%s3 + $0x408] sm:$0xff]
  %v357 = vld [vmem:[%s3 + $0x410] sm:$0xff]
  %v358 = vld [vmem:[%s3 + $0x418] sm:$0xff]
  %v359 = vld [vmem:[%s3 + $0x420] sm:$0xff]
  %v360 = vld [vmem:[%s3 + $0x428] sm:$0xff]
  %v361 = vld [vmem:[%s3 + $0x430] sm:$0xff]
  %v362 = vld [vmem:[%s3 + $0x438] sm:$0xff]
  %v363 = vld [vmem:[%s3 + $0x440] sm:$0xff]
  %v364 = vld [vmem:[%s3 + $0x448] sm:$0xff]
  %v365 = vld [vmem:[%s3 + $0x450] sm:$0xff]
  %v366 = vld [vmem:[%s3 + $0x458] sm:$0xff]
  %v367 = vld [vmem:[%s3 + $0x460] sm:$0xff]
  %v368 = vld [vmem:[%s3 + $0x468] sm:$0xff]
  %v369 = vld [vmem:[%s3 + $0x470] sm:$0xff]
  %v370 = vld [vmem:[%s3 + $0x478] sm:$0xff]
  %v371 = vld [vmem:[%s3 + $0x480] sm:$0xff]
  %v372 = vld [vmem:[%s3 + $0x488] sm:$0xff]
  %v373 = vld [vmem:[%s3 + $0x490] sm:$0xff]
  %v374 = vld [vmem:[%s3 + $0x498] sm:$0xff]
  %v375 = vld [vmem:[%s3 + $0x4a0] sm:$0xff]
  %v376 = vld [vmem:[%s3 + $0x4a8] sm:$0xff]
  %v377 = vld [vmem:[%s3 + $0x4b0] sm:$0xff]
  %v378 = vld [vmem:[%s3 + $0x4b8] sm:$0xff]
  %v379 = vld [vmem:[%s3 + $0x4c0] sm:$0xff]
  %v380 = vld [vmem:[%s3 + $0x4c8] sm:$0xff]
  %v381 = vld [vmem:[%s3 + $0x4d0] sm:$0xff]
  %v382 = vld [vmem:[%s3 + $0x4d8] sm:$0xff]
  %v383 = vld [vmem:[%s3 + $0x4e0] sm:$0xff]
  %v384 = vld [vmem:[%s3 + $0x4e8] sm:$0xff]
  %v385 = vld [vmem:[%s3 + $0x4f0] sm:$0xff]
  %v386 = vld [vmem:[%s3 + $0x4f8] sm:$0xff]
  %v387 = vld [vmem:[%s3 + $0x500] sm:$0xff]
  %v388 = vld [vmem:[%s3 + $0x508] sm:$0xff]
  %v389 = vld [vmem:[%s3 + $0x510] sm:$0xff]
  %v390 = vld [vmem:[%s3 + $0x518] sm:$0xff]
  %v391 = vld [vmem:[%s3 + $0x520] sm:$0xff]
  %v392 = vld [vmem:[%s3 + $0x528] sm:$0xff]
  %v393 = vld [vmem:[%s3 + $0x530] sm:$0xff]
  %v394 = vld [vmem:[%s3 + $0x538] sm:$0xff]
  %v395 = vld [vmem:[%s3 + $0x540] sm:$0xff]
  %v396 = vld [vmem:[%s3 + $0x548] sm:$0xff]
  %v397 = vld [vmem:[%s3 + $0x550] sm:$0xff]
  %v398 = vld [vmem:[%s3 + $0x558] sm:$0xff]
  %v399 = vld [vmem:[%s3 + $0x560] sm:$0xff]
  %v400 = vld [vmem:[%s3 + $0x568] sm:$0xff]
  %v401 = vld [vmem:[%s3 + $0x570] sm:$0xff]
  %v402 = vld [vmem:[%s3 + $0x578] sm:$0xff]
  %v403 = vld [vmem:[%s3 + $0x580] sm:$0xff]
  %v404 = vld [vmem:[%s3 + $0x588] sm:$0xff]
  %v405 = vld [vmem:[%s3 + $0x590] sm:$0xff]
  %v406 = vld [vmem:[%s3 + $0x598] sm:$0xff]
  %v407 = vld [vmem:[%s3 + $0x5a0] sm:$0xff]
  %v408 = vld [vmem:[%s3 + $0x5a8] sm:$0xff]
  %v409 = vld [vmem:[%s3 + $0x5b0] sm:$0xff]
  %v410 = vld [vmem:[%s3 + $0x5b8] sm:$0xff]
  %v411 = vld [vmem:[%s3 + $0x5c0] sm:$0xff]
  %v412 = vld [vmem:[%s3 + $0x5c8] sm:$0xff]
  %v413 = vld [vmem:[%s3 + $0x5d0] sm:$0xff]
  %v414 = vld [vmem:[%s3 + $0x5d8] sm:$0xff]
  %v415 = vld [vmem:[%s3 + $0x5e0] sm:$0xff]
  %v416 = vld [vmem:[%s3 + $0x5e8] sm:$0xff]
  %v417 = vld [vmem:[%s3 + $0x5f0] sm:$0xff]
  %v418 = vld [vmem:[%s3 + $0x5f8] sm:$0xff]
  %v419 = vld [vmem:[%s3 + $0x600] sm:$0xff]
  %v420 = vld [vmem:[%s3 + $0x608] sm:$0xff]
  %v421 = vld [vmem:[%s3 + $0x610] sm:$0xff]
  %v422 = vld [vmem:[%s3 + $0x618] sm:$0xff]
  %v423 = vld [vmem:[%s3 + $0x620] sm:$0xff]
  %v424 = vld [vmem:[%s3 + $0x628] sm:$0xff]
  %v425 = vld [vmem:[%s3 + $0x630] sm:$0xff]
  %v426 = vld [vmem:[%s3 + $0x638] sm:$0xff]
  %v427 = vld [vmem:[%s3 + $0x640] sm:$0xff]
  %v428 = vld [vmem:[%s3 + $0x648] sm:$0xff]
  %v429 = vld [vmem:[%s3 + $0x650] sm:$0xff]
  %v430 = vld [vmem:[%s3 + $0x658] sm:$0xff]
  %v431 = vld [vmem:[%s3 + $0x660] sm:$0xff]
  %v432 = vld [vmem:[%s3 + $0x668] sm:$0xff]
  %v433 = vld [vmem:[%s3 + $0x670] sm:$0xff]
  %v434 = vld [vmem:[%s3 + $0x678] sm:$0xff]
  %v435 = vld [vmem:[%s3 + $0x680] sm:$0xff]
  %v436 = vld [vmem:[%s3 + $0x688] sm:$0xff]
  %v437 = vld [vmem:[%s3 + $0x690] sm:$0xff]
  %v438 = vld [vmem:[%s3 + $0x698] sm:$0xff]
  %v439 = vld [vmem:[%s3 + $0x6a0] sm:$0xff]
  %v440 = vld [vmem:[%s3 + $0x6a8] sm:$0xff]
  %v441 = vld [vmem:[%s3 + $0x6b0] sm:$0xff]
  %v442 = vld [vmem:[%s3 + $0x6b8] sm:$0xff]
  %v443 = vld [vmem:[%s3 + $0x6c0] sm:$0xff]
  %v444 = vld [vmem:[%s3 + $0x6c8] sm:$0xff]
  %v445 = vld [vmem:[%s3 + $0x6d0] sm:$0xff]
  %v446 = vld [vmem:[%s3 + $0x6d8] sm:$0xff]
  %v447 = vld [vmem:[%s3 + $0x6e0] sm:$0xff]
  %v448 = vld [vmem:[%s3 + $0x6e8] sm:$0xff]
  %v449 = vld [vmem:[%s3 + $0x6f0] sm:$0xff]
  %v450 = vld [vmem:[%s3 + $0x6f8] sm:$0xff]
  %v451 = vld [vmem:[%s3 + $0x700] sm:$0xff]
  %v452 = vld [vmem:[%s3 + $0x708] sm:$0xff]
  %v453 = vld [vmem:[%s3 + $0x710] sm:$0xff]
  %v454 = vld [vmem:[%s3 + $0x718] sm:$0xff]
  %v455 = vld [vmem:[%s3 + $0x720] sm:$0xff]
  %v456 = vld [vmem:[%s3 + $0x728] sm:$0xff]
  %v457 = vld [vmem:[%s3 + $0x730] sm:$0xff]
  %v458 = vld [vmem:[%s3 + $0x738] sm:$0xff]
  %v459 = vld [vmem:[%s3 + $0x740] sm:$0xff]
  %v460 = vld [vmem:[%s3 + $0x748] sm:$0xff]
  %v461 = vld [vmem:[%s3 + $0x750] sm:$0xff]
  %v462 = vld [vmem:[%s3 + $0x758] sm:$0xff]
  %v463 = vld [vmem:[%s3 + $0x760] sm:$0xff]
  %v464 = vld [vmem:[%s3 + $0x768] sm:$0xff]
  %v465 = vld [vmem:[%s3 + $0x770] sm:$0xff]
  %v466 = vld [vmem:[%s3 + $0x778] sm:$0xff]
  %v467 = vld [vmem:[%s3 + $0x780] sm:$0xff]
  %v468 = vld [vmem:[%s3 + $0x788] sm:$0xff]
  %v469 = vld [vmem:[%s3 + $0x790] sm:$0xff]
  %v470 = vld [vmem:[%s3 + $0x798] sm:$0xff]
  %v471 = vld [vmem:[%s3 + $0x7a0] sm:$0xff]
  %v472 = vld [vmem:[%s3 + $0x7a8] sm:$0xff]
  %v473 = vld [vmem:[%s3 + $0x7b0] sm:$0xff]
  %v474 = vld [vmem:[%s3 + $0x7b8] sm:$0xff]
  %v475 = vld [vmem:[%s3 + $0x7c0] sm:$0xff]
  %v476 = vld [vmem:[%s3 + $0x7c8] sm:$0xff]
  %v477 = vld [vmem:[%s3 + $0x7d0] sm:$0xff]
  %v478 = vld [vmem:[%s3 + $0x7d8] sm:$0xff]
  %v479 = vld [vmem:[%s3 + $0x7e0] sm:$0xff]
  %v480 = vld [vmem:[%s3 + $0x7e8] sm:$0xff]
  %v481 = vld [vmem:[%s3 + $0x7f0] sm:$0xff]
  %v482 = vld [vmem:[%s3 + $0x7f8] sm:$0xff]
  %v483 = vld [vmem:[%s4] sm:$0xff]
  %v485 = vlaneseq
  %v486 = vshrl.u32 %v485, 7
  %v487 = vsub.s32 0, %v486
  %v488 = vrot.slane %v483, %v487
  %v489 = vlaneseq
  %v490 = vshrl.u32 %v489, 7
  %v491 = vsub.s32 1, %v490
  %v492 = vrot.slane %v483, %v491
  %v493 = vlaneseq
  %v494 = vshrl.u32 %v493, 7
  %v495 = vsub.s32 2, %v494
  %v496 = vrot.slane %v483, %v495
  %v497 = vlaneseq
  %v498 = vshrl.u32 %v497, 7
  %v499 = vsub.s32 3, %v498
  %v500 = vrot.slane %v483, %v499
  %v501 = vlaneseq
  %v502 = vshrl.u32 %v501, 7
  %v503 = vsub.s32 4, %v502
  %v504 = vrot.slane %v483, %v503
  %v505 = vlaneseq
  %v506 = vshrl.u32 %v505, 7
  %v507 = vsub.s32 5, %v506
  %v508 = vrot.slane %v483, %v507
  %v509 = vlaneseq
  %v510 = vshrl.u32 %v509, 7
  %v511 = vsub.s32 6, %v510
  %v512 = vrot.slane %v483, %v511
  %v513 = vlaneseq
  %v514 = vshrl.u32 %v513, 7
  %v515 = vsub.s32 7, %v514
  %v516 = vrot.slane %v483, %v515
  %v781 = vunpack.c.l.b16 %v227
  %v782 = vunpack.c.h.b16 %v227
  %v783 = vunpack.c.l.b16 %v228
  %v784 = vunpack.c.h.b16 %v228
  %v785 = vunpack.c.l.b16 %v229
  %v786 = vunpack.c.h.b16 %v229
  %v787 = vunpack.c.l.b16 %v230
  %v788 = vunpack.c.h.b16 %v230
  %v789 = vunpack.c.l.b16 %v231
  %v790 = vunpack.c.h.b16 %v231
  %v791 = vunpack.c.l.b16 %v232
  %v792 = vunpack.c.h.b16 %v232
  %v793 = vunpack.c.l.b16 %v233
  %v794 = vunpack.c.h.b16 %v233
  %v795 = vunpack.c.l.b16 %v234
  %v796 = vunpack.c.h.b16 %v234
  %v797 = vunpack.c.l.b16 %v235
  %v798 = vunpack.c.h.b16 %v235
  %v799 = vunpack.c.l.b16 %v236
  %v800 = vunpack.c.h.b16 %v236
  %v801 = vunpack.c.l.b16 %v237
  %v802 = vunpack.c.h.b16 %v237
  %v803 = vunpack.c.l.b16 %v238
  %v804 = vunpack.c.h.b16 %v238
  %v805 = vunpack.c.l.b16 %v239
  %v806 = vunpack.c.h.b16 %v239
  %v807 = vunpack.c.l.b16 %v240
  %v808 = vunpack.c.h.b16 %v240
  %v809 = vunpack.c.l.b16 %v241
  %v810 = vunpack.c.h.b16 %v241
  %v811 = vunpack.c.l.b16 %v242
  %v812 = vunpack.c.h.b16 %v242
  %v813 = vunpack.c.l.b16 %v243
  %v814 = vunpack.c.h.b16 %v243
  %v815 = vunpack.c.l.b16 %v244
  %v816 = vunpack.c.h.b16 %v244
  %v817 = vunpack.c.l.b16 %v245
  %v818 = vunpack.c.h.b16 %v245
  %v819 = vunpack.c.l.b16 %v246
  %v820 = vunpack.c.h.b16 %v246
  %v821 = vunpack.c.l.b16 %v247
  %v822 = vunpack.c.h.b16 %v247
  %v823 = vunpack.c.l.b16 %v248
  %v824 = vunpack.c.h.b16 %v248
  %v825 = vunpack.c.l.b16 %v249
  %v826 = vunpack.c.h.b16 %v249
  %v827 = vunpack.c.l.b16 %v250
  %v828 = vunpack.c.h.b16 %v250
  %v829 = vunpack.c.l.b16 %v251
  %v830 = vunpack.c.h.b16 %v251
  %v831 = vunpack.c.l.b16 %v252
  %v832 = vunpack.c.h.b16 %v252
  %v833 = vunpack.c.l.b16 %v253
  %v834 = vunpack.c.h.b16 %v253
  %v835 = vunpack.c.l.b16 %v254
  %v836 = vunpack.c.h.b16 %v254
  %v837 = vunpack.c.l.b16 %v255
  %v838 = vunpack.c.h.b16 %v255
  %v839 = vunpack.c.l.b16 %v256
  %v840 = vunpack.c.h.b16 %v256
  %v841 = vunpack.c.l.b16 %v257
  %v842 = vunpack.c.h.b16 %v257
  %v843 = vunpack.c.l.b16 %v258
  %v844 = vunpack.c.h.b16 %v258
  %v845 = vunpack.c.l.b16 %v259
  %v846 = vunpack.c.h.b16 %v259
  %v847 = vunpack.c.l.b16 %v260
  %v848 = vunpack.c.h.b16 %v260
  %v849 = vunpack.c.l.b16 %v261
  %v850 = vunpack.c.h.b16 %v261
  %v851 = vunpack.c.l.b16 %v262
  %v852 = vunpack.c.h.b16 %v262
  %v853 = vunpack.c.l.b16 %v263
  %v854 = vunpack.c.h.b16 %v263
  %v855 = vunpack.c.l.b16 %v264
  %v856 = vunpack.c.h.b16 %v264
  %v857 = vunpack.c.l.b16 %v265
  %v858 = vunpack.c.h.b16 %v265
  %v859 = vunpack.c.l.b16 %v266
  %v860 = vunpack.c.h.b16 %v266
  %v861 = vunpack.c.l.b16 %v267
  %v862 = vunpack.c.h.b16 %v267
  %v863 = vunpack.c.l.b16 %v268
  %v864 = vunpack.c.h.b16 %v268
  %v865 = vunpack.c.l.b16 %v269
  %v866 = vunpack.c.h.b16 %v269
  %v867 = vunpack.c.l.b16 %v270
  %v868 = vunpack.c.h.b16 %v270
  %v869 = vunpack.c.l.b16 %v271
  %v870 = vunpack.c.h.b16 %v271
  %v871 = vunpack.c.l.b16 %v272
  %v872 = vunpack.c.h.b16 %v272
  %v873 = vunpack.c.l.b16 %v273
  %v874 = vunpack.c.h.b16 %v273
  %v875 = vunpack.c.l.b16 %v274
  %v876 = vunpack.c.h.b16 %v274
  %v877 = vunpack.c.l.b16 %v275
  %v878 = vunpack.c.h.b16 %v275
  %v879 = vunpack.c.l.b16 %v276
  %v880 = vunpack.c.h.b16 %v276
  %v881 = vunpack.c.l.b16 %v277
  %v882 = vunpack.c.h.b16 %v277
  %v883 = vunpack.c.l.b16 %v278
  %v884 = vunpack.c.h.b16 %v278
  %v885 = vunpack.c.l.b16 %v279
  %v886 = vunpack.c.h.b16 %v279
  %v887 = vunpack.c.l.b16 %v280
  %v888 = vunpack.c.h.b16 %v280
  %v889 = vunpack.c.l.b16 %v281
  %v890 = vunpack.c.h.b16 %v281
  %v891 = vunpack.c.l.b16 %v282
  %v892 = vunpack.c.h.b16 %v282
  %v893 = vunpack.c.l.b16 %v283
  %v894 = vunpack.c.h.b16 %v283
  %v895 = vunpack.c.l.b16 %v284
  %v896 = vunpack.c.h.b16 %v284
  %v897 = vunpack.c.l.b16 %v285
  %v898 = vunpack.c.h.b16 %v285
  %v899 = vunpack.c.l.b16 %v286
  %v900 = vunpack.c.h.b16 %v286
  %v901 = vunpack.c.l.b16 %v287
  %v902 = vunpack.c.h.b16 %v287
  %v903 = vunpack.c.l.b16 %v288
  %v904 = vunpack.c.h.b16 %v288
  %v905 = vunpack.c.l.b16 %v289
  %v906 = vunpack.c.h.b16 %v289
  %v907 = vunpack.c.l.b16 %v290
  %v908 = vunpack.c.h.b16 %v290
  %v909 = vunpack.c.l.b16 %v291
  %v910 = vunpack.c.h.b16 %v291
  %v911 = vunpack.c.l.b16 %v292
  %v912 = vunpack.c.h.b16 %v292
  %v913 = vunpack.c.l.b16 %v293
  %v914 = vunpack.c.h.b16 %v293
  %v915 = vunpack.c.l.b16 %v294
  %v916 = vunpack.c.h.b16 %v294
  %v917 = vunpack.c.l.b16 %v295
  %v918 = vunpack.c.h.b16 %v295
  %v919 = vunpack.c.l.b16 %v296
  %v920 = vunpack.c.h.b16 %v296
  %v921 = vunpack.c.l.b16 %v297
  %v922 = vunpack.c.h.b16 %v297
  %v923 = vunpack.c.l.b16 %v298
  %v924 = vunpack.c.h.b16 %v298
  %v925 = vunpack.c.l.b16 %v299
  %v926 = vunpack.c.h.b16 %v299
  %v927 = vunpack.c.l.b16 %v300
  %v928 = vunpack.c.h.b16 %v300
  %v929 = vunpack.c.l.b16 %v301
  %v930 = vunpack.c.h.b16 %v301
  %v931 = vunpack.c.l.b16 %v302
  %v932 = vunpack.c.h.b16 %v302
  %v933 = vunpack.c.l.b16 %v303
  %v934 = vunpack.c.h.b16 %v303
  %v935 = vunpack.c.l.b16 %v304
  %v936 = vunpack.c.h.b16 %v304
  %v937 = vunpack.c.l.b16 %v305
  %v938 = vunpack.c.h.b16 %v305
  %v939 = vunpack.c.l.b16 %v306
  %v940 = vunpack.c.h.b16 %v306
  %v941 = vunpack.c.l.b16 %v307
  %v942 = vunpack.c.h.b16 %v307
  %v943 = vunpack.c.l.b16 %v308
  %v944 = vunpack.c.h.b16 %v308
  %v945 = vunpack.c.l.b16 %v309
  %v946 = vunpack.c.h.b16 %v309
  %v947 = vunpack.c.l.b16 %v310
  %v948 = vunpack.c.h.b16 %v310
  %v949 = vunpack.c.l.b16 %v311
  %v950 = vunpack.c.h.b16 %v311
  %v951 = vunpack.c.l.b16 %v312
  %v952 = vunpack.c.h.b16 %v312
  %v953 = vunpack.c.l.b16 %v313
  %v954 = vunpack.c.h.b16 %v313
  %v955 = vunpack.c.l.b16 %v314
  %v956 = vunpack.c.h.b16 %v314
  %v957 = vunpack.c.l.b16 %v315
  %v958 = vunpack.c.h.b16 %v315
  %v959 = vunpack.c.l.b16 %v316
  %v960 = vunpack.c.h.b16 %v316
  %v961 = vunpack.c.l.b16 %v317
  %v962 = vunpack.c.h.b16 %v317
  %v963 = vunpack.c.l.b16 %v318
  %v964 = vunpack.c.h.b16 %v318
  %v965 = vunpack.c.l.b16 %v319
  %v966 = vunpack.c.h.b16 %v319
  %v967 = vunpack.c.l.b16 %v320
  %v968 = vunpack.c.h.b16 %v320
  %v969 = vunpack.c.l.b16 %v321
  %v970 = vunpack.c.h.b16 %v321
  %v971 = vunpack.c.l.b16 %v322
  %v972 = vunpack.c.h.b16 %v322
  %v973 = vunpack.c.l.b16 %v323
  %v974 = vunpack.c.h.b16 %v323
  %v975 = vunpack.c.l.b16 %v324
  %v976 = vunpack.c.h.b16 %v324
  %v977 = vunpack.c.l.b16 %v325
  %v978 = vunpack.c.h.b16 %v325
  %v979 = vunpack.c.l.b16 %v326
  %v980 = vunpack.c.h.b16 %v326
  %v981 = vunpack.c.l.b16 %v327
  %v982 = vunpack.c.h.b16 %v327
  %v983 = vunpack.c.l.b16 %v328
  %v984 = vunpack.c.h.b16 %v328
  %v985 = vunpack.c.l.b16 %v329
  %v986 = vunpack.c.h.b16 %v329
  %v987 = vunpack.c.l.b16 %v330
  %v988 = vunpack.c.h.b16 %v330
  %v989 = vunpack.c.l.b16 %v331
  %v990 = vunpack.c.h.b16 %v331
  %v991 = vunpack.c.l.b16 %v332
  %v992 = vunpack.c.h.b16 %v332
  %v993 = vunpack.c.l.b16 %v333
  %v994 = vunpack.c.h.b16 %v333
  %v995 = vunpack.c.l.b16 %v334
  %v996 = vunpack.c.h.b16 %v334
  %v997 = vunpack.c.l.b16 %v335
  %v998 = vunpack.c.h.b16 %v335
  %v999 = vunpack.c.l.b16 %v336
  %v1000 = vunpack.c.h.b16 %v336
  %v1001 = vunpack.c.l.b16 %v337
  %v1002 = vunpack.c.h.b16 %v337
  %v1003 = vunpack.c.l.b16 %v338
  %v1004 = vunpack.c.h.b16 %v338
  %v1005 = vunpack.c.l.b16 %v339
  %v1006 = vunpack.c.h.b16 %v339
  %v1007 = vunpack.c.l.b16 %v340
  %v1008 = vunpack.c.h.b16 %v340
  %v1009 = vunpack.c.l.b16 %v341
  %v1010 = vunpack.c.h.b16 %v341
  %v1011 = vunpack.c.l.b16 %v342
  %v1012 = vunpack.c.h.b16 %v342
  %v1013 = vunpack.c.l.b16 %v343
  %v1014 = vunpack.c.h.b16 %v343
  %v1015 = vunpack.c.l.b16 %v344
  %v1016 = vunpack.c.h.b16 %v344
  %v1017 = vunpack.c.l.b16 %v345
  %v1018 = vunpack.c.h.b16 %v345
  %v1019 = vunpack.c.l.b16 %v346
  %v1020 = vunpack.c.h.b16 %v346
  %v1021 = vunpack.c.l.b16 %v347
  %v1022 = vunpack.c.h.b16 %v347
  %v1023 = vunpack.c.l.b16 %v348
  %v1024 = vunpack.c.h.b16 %v348
  %v1025 = vunpack.c.l.b16 %v349
  %v1026 = vunpack.c.h.b16 %v349
  %v1027 = vunpack.c.l.b16 %v350
  %v1028 = vunpack.c.h.b16 %v350
  %v1029 = vunpack.c.l.b16 %v351
  %v1030 = vunpack.c.h.b16 %v351
  %v1031 = vunpack.c.l.b16 %v352
  %v1032 = vunpack.c.h.b16 %v352
  %v1033 = vunpack.c.l.b16 %v353
  %v1034 = vunpack.c.h.b16 %v353
  %v1035 = vunpack.c.l.b16 %v354
  %v1036 = vunpack.c.h.b16 %v354
  %v1037 = vunpack.c.l.b16 %v355
  %v1038 = vunpack.c.h.b16 %v355
  %v1039 = vunpack.c.l.b16 %v356
  %v1040 = vunpack.c.h.b16 %v356
  %v1041 = vunpack.c.l.b16 %v357
  %v1042 = vunpack.c.h.b16 %v357
  %v1043 = vunpack.c.l.b16 %v358
  %v1044 = vunpack.c.h.b16 %v358
  %v1045 = vunpack.c.l.b16 %v359
  %v1046 = vunpack.c.h.b16 %v359
  %v1047 = vunpack.c.l.b16 %v360
  %v1048 = vunpack.c.h.b16 %v360
  %v1049 = vunpack.c.l.b16 %v361
  %v1050 = vunpack.c.h.b16 %v361
  %v1051 = vunpack.c.l.b16 %v362
  %v1052 = vunpack.c.h.b16 %v362
  %v1053 = vunpack.c.l.b16 %v363
  %v1054 = vunpack.c.h.b16 %v363
  %v1055 = vunpack.c.l.b16 %v364
  %v1056 = vunpack.c.h.b16 %v364
  %v1057 = vunpack.c.l.b16 %v365
  %v1058 = vunpack.c.h.b16 %v365
  %v1059 = vunpack.c.l.b16 %v366
  %v1060 = vunpack.c.h.b16 %v366
  %v1061 = vunpack.c.l.b16 %v367
  %v1062 = vunpack.c.h.b16 %v367
  %v1063 = vunpack.c.l.b16 %v368
  %v1064 = vunpack.c.h.b16 %v368
  %v1065 = vunpack.c.l.b16 %v369
  %v1066 = vunpack.c.h.b16 %v369
  %v1067 = vunpack.c.l.b16 %v370
  %v1068 = vunpack.c.h.b16 %v370
  %v1069 = vunpack.c.l.b16 %v371
  %v1070 = vunpack.c.h.b16 %v371
  %v1071 = vunpack.c.l.b16 %v372
  %v1072 = vunpack.c.h.b16 %v372
  %v1073 = vunpack.c.l.b16 %v373
  %v1074 = vunpack.c.h.b16 %v373
  %v1075 = vunpack.c.l.b16 %v374
  %v1076 = vunpack.c.h.b16 %v374
  %v1077 = vunpack.c.l.b16 %v375
  %v1078 = vunpack.c.h.b16 %v375
  %v1079 = vunpack.c.l.b16 %v376
  %v1080 = vunpack.c.h.b16 %v376
  %v1081 = vunpack.c.l.b16 %v377
  %v1082 = vunpack.c.h.b16 %v377
  %v1083 = vunpack.c.l.b16 %v378
  %v1084 = vunpack.c.h.b16 %v378
  %v1085 = vunpack.c.l.b16 %v379
  %v1086 = vunpack.c.h.b16 %v379
  %v1087 = vunpack.c.l.b16 %v380
  %v1088 = vunpack.c.h.b16 %v380
  %v1089 = vunpack.c.l.b16 %v381
  %v1090 = vunpack.c.h.b16 %v381
  %v1091 = vunpack.c.l.b16 %v382
  %v1092 = vunpack.c.h.b16 %v382
  %v1093 = vunpack.c.l.b16 %v383
  %v1094 = vunpack.c.h.b16 %v383
  %v1095 = vunpack.c.l.b16 %v384
  %v1096 = vunpack.c.h.b16 %v384
  %v1097 = vunpack.c.l.b16 %v385
  %v1098 = vunpack.c.h.b16 %v385
  %v1099 = vunpack.c.l.b16 %v386
  %v1100 = vunpack.c.h.b16 %v386
  %v1101 = vunpack.c.l.b16 %v387
  %v1102 = vunpack.c.h.b16 %v387
  %v1103 = vunpack.c.l.b16 %v388
  %v1104 = vunpack.c.h.b16 %v388
  %v1105 = vunpack.c.l.b16 %v389
  %v1106 = vunpack.c.h.b16 %v389
  %v1107 = vunpack.c.l.b16 %v390
  %v1108 = vunpack.c.h.b16 %v390
  %v1109 = vunpack.c.l.b16 %v391
  %v1110 = vunpack.c.h.b16 %v391
  %v1111 = vunpack.c.l.b16 %v392
  %v1112 = vunpack.c.h.b16 %v392
  %v1113 = vunpack.c.l.b16 %v393
  %v1114 = vunpack.c.h.b16 %v393
  %v1115 = vunpack.c.l.b16 %v394
  %v1116 = vunpack.c.h.b16 %v394
  %v1117 = vunpack.c.l.b16 %v395
  %v1118 = vunpack.c.h.b16 %v395
  %v1119 = vunpack.c.l.b16 %v396
  %v1120 = vunpack.c.h.b16 %v396
  %v1121 = vunpack.c.l.b16 %v397
  %v1122 = vunpack.c.h.b16 %v397
  %v1123 = vunpack.c.l.b16 %v398
  %v1124 = vunpack.c.h.b16 %v398
  %v1125 = vunpack.c.l.b16 %v399
  %v1126 = vunpack.c.h.b16 %v399
  %v1127 = vunpack.c.l.b16 %v400
  %v1128 = vunpack.c.h.b16 %v400
  %v1129 = vunpack.c.l.b16 %v401
  %v1130 = vunpack.c.h.b16 %v401
  %v1131 = vunpack.c.l.b16 %v402
  %v1132 = vunpack.c.h.b16 %v402
  %v1133 = vunpack.c.l.b16 %v403
  %v1134 = vunpack.c.h.b16 %v403
  %v1135 = vunpack.c.l.b16 %v404
  %v1136 = vunpack.c.h.b16 %v404
  %v1137 = vunpack.c.l.b16 %v405
  %v1138 = vunpack.c.h.b16 %v405
  %v1139 = vunpack.c.l.b16 %v406
  %v1140 = vunpack.c.h.b16 %v406
  %v1141 = vunpack.c.l.b16 %v407
  %v1142 = vunpack.c.h.b16 %v407
  %v1143 = vunpack.c.l.b16 %v408
  %v1144 = vunpack.c.h.b16 %v408
  %v1145 = vunpack.c.l.b16 %v409
  %v1146 = vunpack.c.h.b16 %v409
  %v1147 = vunpack.c.l.b16 %v410
  %v1148 = vunpack.c.h.b16 %v410
  %v1149 = vunpack.c.l.b16 %v411
  %v1150 = vunpack.c.h.b16 %v411
  %v1151 = vunpack.c.l.b16 %v412
  %v1152 = vunpack.c.h.b16 %v412
  %v1153 = vunpack.c.l.b16 %v413
  %v1154 = vunpack.c.h.b16 %v413
  %v1155 = vunpack.c.l.b16 %v414
  %v1156 = vunpack.c.h.b16 %v414
  %v1157 = vunpack.c.l.b16 %v415
  %v1158 = vunpack.c.h.b16 %v415
  %v1159 = vunpack.c.l.b16 %v416
  %v1160 = vunpack.c.h.b16 %v416
  %v1161 = vunpack.c.l.b16 %v417
  %v1162 = vunpack.c.h.b16 %v417
  %v1163 = vunpack.c.l.b16 %v418
  %v1164 = vunpack.c.h.b16 %v418
  %v1165 = vunpack.c.l.b16 %v419
  %v1166 = vunpack.c.h.b16 %v419
  %v1167 = vunpack.c.l.b16 %v420
  %v1168 = vunpack.c.h.b16 %v420
  %v1169 = vunpack.c.l.b16 %v421
  %v1170 = vunpack.c.h.b16 %v421
  %v1171 = vunpack.c.l.b16 %v422
  %v1172 = vunpack.c.h.b16 %v422
  %v1173 = vunpack.c.l.b16 %v423
  %v1174 = vunpack.c.h.b16 %v423
  %v1175 = vunpack.c.l.b16 %v424
  %v1176 = vunpack.c.h.b16 %v424
  %v1177 = vunpack.c.l.b16 %v425
  %v1178 = vunpack.c.h.b16 %v425
  %v1179 = vunpack.c.l.b16 %v426
  %v1180 = vunpack.c.h.b16 %v426
  %v1181 = vunpack.c.l.b16 %v427
  %v1182 = vunpack.c.h.b16 %v427
  %v1183 = vunpack.c.l.b16 %v428
  %v1184 = vunpack.c.h.b16 %v428
  %v1185 = vunpack.c.l.b16 %v429
  %v1186 = vunpack.c.h.b16 %v429
  %v1187 = vunpack.c.l.b16 %v430
  %v1188 = vunpack.c.h.b16 %v430
  %v1189 = vunpack.c.l.b16 %v431
  %v1190 = vunpack.c.h.b16 %v431
  %v1191 = vunpack.c.l.b16 %v432
  %v1192 = vunpack.c.h.b16 %v432
  %v1193 = vunpack.c.l.b16 %v433
  %v1194 = vunpack.c.h.b16 %v433
  %v1195 = vunpack.c.l.b16 %v434
  %v1196 = vunpack.c.h.b16 %v434
  %v1197 = vunpack.c.l.b16 %v435
  %v1198 = vunpack.c.h.b16 %v435
  %v1199 = vunpack.c.l.b16 %v436
  %v1200 = vunpack.c.h.b16 %v436
  %v1201 = vunpack.c.l.b16 %v437
  %v1202 = vunpack.c.h.b16 %v437
  %v1203 = vunpack.c.l.b16 %v438
  %v1204 = vunpack.c.h.b16 %v438
  %v1205 = vunpack.c.l.b16 %v439
  %v1206 = vunpack.c.h.b16 %v439
  %v1207 = vunpack.c.l.b16 %v440
  %v1208 = vunpack.c.h.b16 %v440
  %v1209 = vunpack.c.l.b16 %v441
  %v1210 = vunpack.c.h.b16 %v441
  %v1211 = vunpack.c.l.b16 %v442
  %v1212 = vunpack.c.h.b16 %v442
  %v1213 = vunpack.c.l.b16 %v443
  %v1214 = vunpack.c.h.b16 %v443
  %v1215 = vunpack.c.l.b16 %v444
  %v1216 = vunpack.c.h.b16 %v444
  %v1217 = vunpack.c.l.b16 %v445
  %v1218 = vunpack.c.h.b16 %v445
  %v1219 = vunpack.c.l.b16 %v446
  %v1220 = vunpack.c.h.b16 %v446
  %v1221 = vunpack.c.l.b16 %v447
  %v1222 = vunpack.c.h.b16 %v447
  %v1223 = vunpack.c.l.b16 %v448
  %v1224 = vunpack.c.h.b16 %v448
  %v1225 = vunpack.c.l.b16 %v449
  %v1226 = vunpack.c.h.b16 %v449
  %v1227 = vunpack.c.l.b16 %v450
  %v1228 = vunpack.c.h.b16 %v450
  %v1229 = vunpack.c.l.b16 %v451
  %v1230 = vunpack.c.h.b16 %v451
  %v1231 = vunpack.c.l.b16 %v452
  %v1232 = vunpack.c.h.b16 %v452
  %v1233 = vunpack.c.l.b16 %v453
  %v1234 = vunpack.c.h.b16 %v453
  %v1235 = vunpack.c.l.b16 %v454
  %v1236 = vunpack.c.h.b16 %v454
  %v1237 = vunpack.c.l.b16 %v455
  %v1238 = vunpack.c.h.b16 %v455
  %v1239 = vunpack.c.l.b16 %v456
  %v1240 = vunpack.c.h.b16 %v456
  %v1241 = vunpack.c.l.b16 %v457
  %v1242 = vunpack.c.h.b16 %v457
  %v1243 = vunpack.c.l.b16 %v458
  %v1244 = vunpack.c.h.b16 %v458
  %v1245 = vunpack.c.l.b16 %v459
  %v1246 = vunpack.c.h.b16 %v459
  %v1247 = vunpack.c.l.b16 %v460
  %v1248 = vunpack.c.h.b16 %v460
  %v1249 = vunpack.c.l.b16 %v461
  %v1250 = vunpack.c.h.b16 %v461
  %v1251 = vunpack.c.l.b16 %v462
  %v1252 = vunpack.c.h.b16 %v462
  %v1253 = vunpack.c.l.b16 %v463
  %v1254 = vunpack.c.h.b16 %v463
  %v1255 = vunpack.c.l.b16 %v464
  %v1256 = vunpack.c.h.b16 %v464
  %v1257 = vunpack.c.l.b16 %v465
  %v1258 = vunpack.c.h.b16 %v465
  %v1259 = vunpack.c.l.b16 %v466
  %v1260 = vunpack.c.h.b16 %v466
  %v1261 = vunpack.c.l.b16 %v467
  %v1262 = vunpack.c.h.b16 %v467
  %v1263 = vunpack.c.l.b16 %v468
  %v1264 = vunpack.c.h.b16 %v468
  %v1265 = vunpack.c.l.b16 %v469
  %v1266 = vunpack.c.h.b16 %v469
  %v1267 = vunpack.c.l.b16 %v470
  %v1268 = vunpack.c.h.b16 %v470
  %v1269 = vunpack.c.l.b16 %v471
  %v1270 = vunpack.c.h.b16 %v471
  %v1271 = vunpack.c.l.b16 %v472
  %v1272 = vunpack.c.h.b16 %v472
  %v1273 = vunpack.c.l.b16 %v473
  %v1274 = vunpack.c.h.b16 %v473
  %v1275 = vunpack.c.l.b16 %v474
  %v1276 = vunpack.c.h.b16 %v474
  %v1277 = vunpack.c.l.b16 %v475
  %v1278 = vunpack.c.h.b16 %v475
  %v1279 = vunpack.c.l.b16 %v476
  %v1280 = vunpack.c.h.b16 %v476
  %v1281 = vunpack.c.l.b16 %v477
  %v1282 = vunpack.c.h.b16 %v477
  %v1283 = vunpack.c.l.b16 %v478
  %v1284 = vunpack.c.h.b16 %v478
  %v1285 = vunpack.c.l.b16 %v479
  %v1286 = vunpack.c.h.b16 %v479
  %v1287 = vunpack.c.l.b16 %v480
  %v1288 = vunpack.c.h.b16 %v480
  %v1289 = vunpack.c.l.b16 %v481
  %v1290 = vunpack.c.h.b16 %v481
  %v1291 = vunpack.c.l.b16 %v482
  %v1292 = vunpack.c.h.b16 %v482
  %v1293 = vpack.c.b16 %v789, %v781
  %v1294 = vpack.c.b16 %v790, %v782
  %v1295 = vpack.c.b16 %v791, %v783
  %v1296 = vpack.c.b16 %v792, %v784
  %v1297 = vpack.c.b16 %v793, %v785
  %v1298 = vpack.c.b16 %v794, %v786
  %v1299 = vpack.c.b16 %v795, %v787
  %v1300 = vpack.c.b16 %v796, %v788
  %v1301 = vpack.c.b16 %v805, %v797
  %v1302 = vpack.c.b16 %v806, %v798
  %v1303 = vpack.c.b16 %v807, %v799
  %v1304 = vpack.c.b16 %v808, %v800
  %v1305 = vpack.c.b16 %v809, %v801
  %v1306 = vpack.c.b16 %v810, %v802
  %v1307 = vpack.c.b16 %v811, %v803
  %v1308 = vpack.c.b16 %v812, %v804
  %v1309 = vpack.c.b16 %v821, %v813
  %v1310 = vpack.c.b16 %v822, %v814
  %v1311 = vpack.c.b16 %v823, %v815
  %v1312 = vpack.c.b16 %v824, %v816
  %v1313 = vpack.c.b16 %v825, %v817
  %v1314 = vpack.c.b16 %v826, %v818
  %v1315 = vpack.c.b16 %v827, %v819
  %v1316 = vpack.c.b16 %v828, %v820
  %v1317 = vpack.c.b16 %v837, %v829
  %v1318 = vpack.c.b16 %v838, %v830
  %v1319 = vpack.c.b16 %v839, %v831
  %v1320 = vpack.c.b16 %v840, %v832
  %v1321 = vpack.c.b16 %v841, %v833
  %v1322 = vpack.c.b16 %v842, %v834
  %v1323 = vpack.c.b16 %v843, %v835
  %v1324 = vpack.c.b16 %v844, %v836
  %v1325 = vpack.c.b16 %v853, %v845
  %v1326 = vpack.c.b16 %v854, %v846
  %v1327 = vpack.c.b16 %v855, %v847
  %v1328 = vpack.c.b16 %v856, %v848
  %v1329 = vpack.c.b16 %v857, %v849
  %v1330 = vpack.c.b16 %v858, %v850
  %v1331 = vpack.c.b16 %v859, %v851
  %v1332 = vpack.c.b16 %v860, %v852
  %v1333 = vpack.c.b16 %v869, %v861
  %v1334 = vpack.c.b16 %v870, %v862
  %v1335 = vpack.c.b16 %v871, %v863
  %v1336 = vpack.c.b16 %v872, %v864
  %v1337 = vpack.c.b16 %v873, %v865
  %v1338 = vpack.c.b16 %v874, %v866
  %v1339 = vpack.c.b16 %v875, %v867
  %v1340 = vpack.c.b16 %v876, %v868
  %v1341 = vpack.c.b16 %v885, %v877
  %v1342 = vpack.c.b16 %v886, %v878
  %v1343 = vpack.c.b16 %v887, %v879
  %v1344 = vpack.c.b16 %v888, %v880
  %v1345 = vpack.c.b16 %v889, %v881
  %v1346 = vpack.c.b16 %v890, %v882
  %v1347 = vpack.c.b16 %v891, %v883
  %v1348 = vpack.c.b16 %v892, %v884
  %v1349 = vpack.c.b16 %v901, %v893
  %v1350 = vpack.c.b16 %v902, %v894
  %v1351 = vpack.c.b16 %v903, %v895
  %v1352 = vpack.c.b16 %v904, %v896
  %v1353 = vpack.c.b16 %v905, %v897
  %v1354 = vpack.c.b16 %v906, %v898
  %v1355 = vpack.c.b16 %v907, %v899
  %v1356 = vpack.c.b16 %v908, %v900
  %v1357 = vpack.c.b16 %v917, %v909
  %v1358 = vpack.c.b16 %v918, %v910
  %v1359 = vpack.c.b16 %v919, %v911
  %v1360 = vpack.c.b16 %v920, %v912
  %v1361 = vpack.c.b16 %v921, %v913
  %v1362 = vpack.c.b16 %v922, %v914
  %v1363 = vpack.c.b16 %v923, %v915
  %v1364 = vpack.c.b16 %v924, %v916
  %v1365 = vpack.c.b16 %v933, %v925
  %v1366 = vpack.c.b16 %v934, %v926
  %v1367 = vpack.c.b16 %v935, %v927
  %v1368 = vpack.c.b16 %v936, %v928
  %v1369 = vpack.c.b16 %v937, %v929
  %v1370 = vpack.c.b16 %v938, %v930
  %v1371 = vpack.c.b16 %v939, %v931
  %v1372 = vpack.c.b16 %v940, %v932
  %v1373 = vpack.c.b16 %v949, %v941
  %v1374 = vpack.c.b16 %v950, %v942
  %v1375 = vpack.c.b16 %v951, %v943
  %v1376 = vpack.c.b16 %v952, %v944
  %v1377 = vpack.c.b16 %v953, %v945
  %v1378 = vpack.c.b16 %v954, %v946
  %v1379 = vpack.c.b16 %v955, %v947
  %v1380 = vpack.c.b16 %v956, %v948
  %v1381 = vpack.c.b16 %v965, %v957
  %v1382 = vpack.c.b16 %v966, %v958
  %v1383 = vpack.c.b16 %v967, %v959
  %v1384 = vpack.c.b16 %v968, %v960
  %v1385 = vpack.c.b16 %v969, %v961
  %v1386 = vpack.c.b16 %v970, %v962
  %v1387 = vpack.c.b16 %v971, %v963
  %v1388 = vpack.c.b16 %v972, %v964
  %v1389 = vpack.c.b16 %v981, %v973
  %v1390 = vpack.c.b16 %v982, %v974
  %v1391 = vpack.c.b16 %v983, %v975
  %v1392 = vpack.c.b16 %v984, %v976
  %v1393 = vpack.c.b16 %v985, %v977
  %v1394 = vpack.c.b16 %v986, %v978
  %v1395 = vpack.c.b16 %v987, %v979
  %v1396 = vpack.c.b16 %v988, %v980
  %v1397 = vpack.c.b16 %v997, %v989
  %v1398 = vpack.c.b16 %v998, %v990
  %v1399 = vpack.c.b16 %v999, %v991
  %v1400 = vpack.c.b16 %v1000, %v992
  %v1401 = vpack.c.b16 %v1001, %v993
  %v1402 = vpack.c.b16 %v1002, %v994
  %v1403 = vpack.c.b16 %v1003, %v995
  %v1404 = vpack.c.b16 %v1004, %v996
  %v1405 = vpack.c.b16 %v1013, %v1005
  %v1406 = vpack.c.b16 %v1014, %v1006
  %v1407 = vpack.c.b16 %v1015, %v1007
  %v1408 = vpack.c.b16 %v1016, %v1008
  %v1409 = vpack.c.b16 %v1017, %v1009
  %v1410 = vpack.c.b16 %v1018, %v1010
  %v1411 = vpack.c.b16 %v1019, %v1011
  %v1412 = vpack.c.b16 %v1020, %v1012
  %v1413 = vpack.c.b16 %v1029, %v1021
  %v1414 = vpack.c.b16 %v1030, %v1022
  %v1415 = vpack.c.b16 %v1031, %v1023
  %v1416 = vpack.c.b16 %v1032, %v1024
  %v1417 = vpack.c.b16 %v1033, %v1025
  %v1418 = vpack.c.b16 %v1034, %v1026
  %v1419 = vpack.c.b16 %v1035, %v1027
  %v1420 = vpack.c.b16 %v1036, %v1028
  %v1421 = vpack.c.b16 %v1045, %v1037
  %v1422 = vpack.c.b16 %v1046, %v1038
  %v1423 = vpack.c.b16 %v1047, %v1039
  %v1424 = vpack.c.b16 %v1048, %v1040
  %v1425 = vpack.c.b16 %v1049, %v1041
  %v1426 = vpack.c.b16 %v1050, %v1042
  %v1427 = vpack.c.b16 %v1051, %v1043
  %v1428 = vpack.c.b16 %v1052, %v1044
  %v1429 = vpack.c.b16 %v1061, %v1053
  %v1430 = vpack.c.b16 %v1062, %v1054
  %v1431 = vpack.c.b16 %v1063, %v1055
  %v1432 = vpack.c.b16 %v1064, %v1056
  %v1433 = vpack.c.b16 %v1065, %v1057
  %v1434 = vpack.c.b16 %v1066, %v1058
  %v1435 = vpack.c.b16 %v1067, %v1059
  %v1436 = vpack.c.b16 %v1068, %v1060
  %v1437 = vpack.c.b16 %v1077, %v1069
  %v1438 = vpack.c.b16 %v1078, %v1070
  %v1439 = vpack.c.b16 %v1079, %v1071
  %v1440 = vpack.c.b16 %v1080, %v1072
  %v1441 = vpack.c.b16 %v1081, %v1073
  %v1442 = vpack.c.b16 %v1082, %v1074
  %v1443 = vpack.c.b16 %v1083, %v1075
  %v1444 = vpack.c.b16 %v1084, %v1076
  %v1445 = vpack.c.b16 %v1093, %v1085
  %v1446 = vpack.c.b16 %v1094, %v1086
  %v1447 = vpack.c.b16 %v1095, %v1087
  %v1448 = vpack.c.b16 %v1096, %v1088
  %v1449 = vpack.c.b16 %v1097, %v1089
  %v1450 = vpack.c.b16 %v1098, %v1090
  %v1451 = vpack.c.b16 %v1099, %v1091
  %v1452 = vpack.c.b16 %v1100, %v1092
  %v1453 = vpack.c.b16 %v1109, %v1101
  %v1454 = vpack.c.b16 %v1110, %v1102
  %v1455 = vpack.c.b16 %v1111, %v1103
  %v1456 = vpack.c.b16 %v1112, %v1104
  %v1457 = vpack.c.b16 %v1113, %v1105
  %v1458 = vpack.c.b16 %v1114, %v1106
  %v1459 = vpack.c.b16 %v1115, %v1107
  %v1460 = vpack.c.b16 %v1116, %v1108
  %v1461 = vpack.c.b16 %v1125, %v1117
  %v1462 = vpack.c.b16 %v1126, %v1118
  %v1463 = vpack.c.b16 %v1127, %v1119
  %v1464 = vpack.c.b16 %v1128, %v1120
  %v1465 = vpack.c.b16 %v1129, %v1121
  %v1466 = vpack.c.b16 %v1130, %v1122
  %v1467 = vpack.c.b16 %v1131, %v1123
  %v1468 = vpack.c.b16 %v1132, %v1124
  %v1469 = vpack.c.b16 %v1141, %v1133
  %v1470 = vpack.c.b16 %v1142, %v1134
  %v1471 = vpack.c.b16 %v1143, %v1135
  %v1472 = vpack.c.b16 %v1144, %v1136
  %v1473 = vpack.c.b16 %v1145, %v1137
  %v1474 = vpack.c.b16 %v1146, %v1138
  %v1475 = vpack.c.b16 %v1147, %v1139
  %v1476 = vpack.c.b16 %v1148, %v1140
  %v1477 = vpack.c.b16 %v1157, %v1149
  %v1478 = vpack.c.b16 %v1158, %v1150
  %v1479 = vpack.c.b16 %v1159, %v1151
  %v1480 = vpack.c.b16 %v1160, %v1152
  %v1481 = vpack.c.b16 %v1161, %v1153
  %v1482 = vpack.c.b16 %v1162, %v1154
  %v1483 = vpack.c.b16 %v1163, %v1155
  %v1484 = vpack.c.b16 %v1164, %v1156
  %v1485 = vpack.c.b16 %v1173, %v1165
  %v1486 = vpack.c.b16 %v1174, %v1166
  %v1487 = vpack.c.b16 %v1175, %v1167
  %v1488 = vpack.c.b16 %v1176, %v1168
  %v1489 = vpack.c.b16 %v1177, %v1169
  %v1490 = vpack.c.b16 %v1178, %v1170
  %v1491 = vpack.c.b16 %v1179, %v1171
  %v1492 = vpack.c.b16 %v1180, %v1172
  %v1493 = vpack.c.b16 %v1189, %v1181
  %v1494 = vpack.c.b16 %v1190, %v1182
  %v1495 = vpack.c.b16 %v1191, %v1183
  %v1496 = vpack.c.b16 %v1192, %v1184
  %v1497 = vpack.c.b16 %v1193, %v1185
  %v1498 = vpack.c.b16 %v1194, %v1186
  %v1499 = vpack.c.b16 %v1195, %v1187
  %v1500 = vpack.c.b16 %v1196, %v1188
  %v1501 = vpack.c.b16 %v1205, %v1197
  %v1502 = vpack.c.b16 %v1206, %v1198
  %v1503 = vpack.c.b16 %v1207, %v1199
  %v1504 = vpack.c.b16 %v1208, %v1200
  %v1505 = vpack.c.b16 %v1209, %v1201
  %v1506 = vpack.c.b16 %v1210, %v1202
  %v1507 = vpack.c.b16 %v1211, %v1203
  %v1508 = vpack.c.b16 %v1212, %v1204
  %v1509 = vpack.c.b16 %v1221, %v1213
  %v1510 = vpack.c.b16 %v1222, %v1214
  %v1511 = vpack.c.b16 %v1223, %v1215
  %v1512 = vpack.c.b16 %v1224, %v1216
  %v1513 = vpack.c.b16 %v1225, %v1217
  %v1514 = vpack.c.b16 %v1226, %v1218
  %v1515 = vpack.c.b16 %v1227, %v1219
  %v1516 = vpack.c.b16 %v1228, %v1220
  %v1517 = vpack.c.b16 %v1237, %v1229
  %v1518 = vpack.c.b16 %v1238, %v1230
  %v1519 = vpack.c.b16 %v1239, %v1231
  %v1520 = vpack.c.b16 %v1240, %v1232
  %v1521 = vpack.c.b16 %v1241, %v1233
  %v1522 = vpack.c.b16 %v1242, %v1234
  %v1523 = vpack.c.b16 %v1243, %v1235
  %v1524 = vpack.c.b16 %v1244, %v1236
  %v1525 = vpack.c.b16 %v1253, %v1245
  %v1526 = vpack.c.b16 %v1254, %v1246
  %v1527 = vpack.c.b16 %v1255, %v1247
  %v1528 = vpack.c.b16 %v1256, %v1248
  %v1529 = vpack.c.b16 %v1257, %v1249
  %v1530 = vpack.c.b16 %v1258, %v1250
  %v1531 = vpack.c.b16 %v1259, %v1251
  %v1532 = vpack.c.b16 %v1260, %v1252
  %v1533 = vpack.c.b16 %v1269, %v1261
  %v1534 = vpack.c.b16 %v1270, %v1262
  %v1535 = vpack.c.b16 %v1271, %v1263
  %v1536 = vpack.c.b16 %v1272, %v1264
  %v1537 = vpack.c.b16 %v1273, %v1265
  %v1538 = vpack.c.b16 %v1274, %v1266
  %v1539 = vpack.c.b16 %v1275, %v1267
  %v1540 = vpack.c.b16 %v1276, %v1268
  %v1541 = vpack.c.b16 %v1285, %v1277
  %v1542 = vpack.c.b16 %v1286, %v1278
  %v1543 = vpack.c.b16 %v1287, %v1279
  %v1544 = vpack.c.b16 %v1288, %v1280
  %v1545 = vpack.c.b16 %v1289, %v1281
  %v1546 = vpack.c.b16 %v1290, %v1282
  %v1547 = vpack.c.b16 %v1291, %v1283
  %v1548 = vpack.c.b16 %v1292, %v1284
  %1805 = vmatprep.subr.bf16.mxu0 %v1294
  %1806 = vmatpush1.bf16.msra.mxu0 %v1293
  %1807 = vmatprep.subr.bf16.mxu0 %v1302
  %1808 = vmatpush1.bf16.msra.mxu0 %v1301
  %1809 = vmatprep.subr.bf16.mxu0 %v1310
  %1810 = vmatpush1.bf16.msra.mxu0 %v1309
  %1811 = vmatprep.subr.bf16.mxu0 %v1318
  %1812 = vmatpush1.bf16.msra.mxu0 %v1317
  %1813 = vmatprep.subr.bf16.mxu0 %v1326
  %1814 = vmatpush1.bf16.msra.mxu0 %v1325
  %1815 = vmatprep.subr.bf16.mxu0 %v1334
  %1816 = vmatpush1.bf16.msra.mxu0 %v1333
  %1817 = vmatprep.subr.bf16.mxu0 %v1342
  %1818 = vmatpush1.bf16.msra.mxu0 %v1341
  %1819 = vmatprep.subr.bf16.mxu0 %v1350
  %1820 = vmatpush1.bf16.msra.mxu0 %v1349
  %1821 = vmatprep.subr.bf16.mxu0 %v1358
  %1822 = vmatpush1.bf16.msra.mxu0 %v1357
  %1823 = vmatprep.subr.bf16.mxu0 %v1366
  %1824 = vmatpush1.bf16.msra.mxu0 %v1365
  %1825 = vmatprep.subr.bf16.mxu0 %v1374
  %1826 = vmatpush1.bf16.msra.mxu0 %v1373
  %1827 = vmatprep.subr.bf16.mxu0 %v1382
  %1828 = vmatpush1.bf16.msra.mxu0 %v1381
  %1829 = vmatprep.subr.bf16.mxu0 %v1390
  %1830 = vmatpush1.bf16.msra.mxu0 %v1389
  %1831 = vmatprep.subr.bf16.mxu0 %v1398
  %1832 = vmatpush1.bf16.msra.mxu0 %v1397
  %1833 = vmatprep.subr.bf16.mxu0 %v1406
  %1834 = vmatpush1.bf16.msra.mxu0 %v1405
  %1835 = vmatprep.subr.bf16.mxu0 %v1414
  %1836 = vmatpush1.bf16.msra.mxu0 %v1413
  %1837 = vmatprep.mubr.bf16.mxu0 %v220
  %1838 = vmatmul.mubr.bf16.gmra.mrb[0].mxu0 %v219
  %v1839 = vpop.f32.mrb[0].mxu0
  %v1840 = vadd.f32 %v488, %v1839
  %v1841 = vpop.f32.mrb[0].mxu0
  %v1842 = vadd.f32 %v492, %v1841
  %v1843 = vpop.f32.mrb[0].mxu0
  %v1844 = vadd.f32 %v488, %v1843
  %v1845 = vpop.f32.mrb[0].mxu0
  %v1846 = vadd.f32 %v492, %v1845
  %1847 = vmatprep.mubr.bf16.mxu0 %v222
  %1848 = vmatmul.mubr.bf16.gmra.mrb[0].mxu0 %v221
  %v1849 = vpop.f32.mrb[0].mxu0
  %v1850 = vadd.f32 %v488, %v1849
  %v1851 = vpop.f32.mrb[0].mxu0
  %v1852 = vadd.f32 %v492, %v1851
  %v1853 = vpop.f32.mrb[0].mxu0
  %v1854 = vadd.f32 %v488, %v1853
  %v1855 = vpop.f32.mrb[0].mxu0
  %v1856 = vadd.f32 %v492, %v1855
  %1857 = vdwg.mxu0
  %1858 = vmatprep.subr.bf16.mxu0 %v1422
  %1859 = vmatpush1.bf16.msra.mxu0 %v1421
  %1860 = vmatprep.subr.bf16.mxu0 %v1430
  %1861 = vmatpush1.bf16.msra.mxu0 %v1429
  %1862 = vmatprep.subr.bf16.mxu0 %v1438
  %1863 = vmatpush1.bf16.msra.mxu0 %v1437
  %1864 = vmatprep.subr.bf16.mxu0 %v1446
  %1865 = vmatpush1.bf16.msra.mxu0 %v1445
  %1866 = vmatprep.subr.bf16.mxu0 %v1454
  %1867 = vmatpush1.bf16.msra.mxu0 %v1453
  %1868 = vmatprep.subr.bf16.mxu0 %v1462
  %1869 = vmatpush1.bf16.msra.mxu0 %v1461
  %1870 = vmatprep.subr.bf16.mxu0 %v1470
  %1871 = vmatpush1.bf16.msra.mxu0 %v1469
  %1872 = vmatprep.subr.bf16.mxu0 %v1478
  %1873 = vmatpush1.bf16.msra.mxu0 %v1477
  %1874 = vmatprep.subr.bf16.mxu0 %v1486
  %1875 = vmatpush1.bf16.msra.mxu0 %v1485
  %1876 = vmatprep.subr.bf16.mxu0 %v1494
  %1877 = vmatpush1.bf16.msra.mxu0 %v1493
  %1878 = vmatprep.subr.bf16.mxu0 %v1502
  %1879 = vmatpush1.bf16.msra.mxu0 %v1501
  %1880 = vmatprep.subr.bf16.mxu0 %v1510
  %1881 = vmatpush1.bf16.msra.mxu0 %v1509
  %1882 = vmatprep.subr.bf16.mxu0 %v1518
  %1883 = vmatpush1.bf16.msra.mxu0 %v1517
  %1884 = vmatprep.subr.bf16.mxu0 %v1526
  %1885 = vmatpush1.bf16.msra.mxu0 %v1525
  %1886 = vmatprep.subr.bf16.mxu0 %v1534
  %1887 = vmatpush1.bf16.msra.mxu0 %v1533
  %1888 = vmatprep.subr.bf16.mxu0 %v1542
  %1889 = vmatpush1.bf16.msra.mxu0 %v1541
  %1890 = vmatprep.mubr.bf16.mxu0 %v224
  %1891 = vmatmul.mubr.bf16.gmra.mrb[0].mxu0 %v223
  %v1892 = vpop.f32.mrb[0].mxu0
  %v1893 = vadd.f32 %v1840, %v1892
  %v1894 = vpop.f32.mrb[0].mxu0
  %v1895 = vadd.f32 %v1842, %v1894
  %v1896 = vpop.f32.mrb[0].mxu0
  %v1897 = vadd.f32 %v1844, %v1896
  %v1898 = vpop.f32.mrb[0].mxu0
  %v1899 = vadd.f32 %v1846, %v1898
  %1900 = vmatprep.mubr.bf16.mxu0 %v226
  %1901 = vmatmul.mubr.bf16.gmra.mrb[0].mxu0 %v225
  %v1902 = vpop.f32.mrb[0].mxu0
  %v1903 = vadd.f32 %v1850, %v1902
  %v1904 = vpop.f32.mrb[0].mxu0
  %v1905 = vadd.f32 %v1852, %v1904
  %v1906 = vpop.f32.mrb[0].mxu0
  %v1907 = vadd.f32 %v1854, %v1906
  %v1908 = vpop.f32.mrb[0].mxu0
  %v1909 = vadd.f32 %v1856, %v1908
  %1910 = vdwg.mxu0
  %1911 = vmatprep.subr.bf16.mxu0 %v1296
  %1912 = vmatpush1.bf16.msra.mxu0 %v1295
  %1913 = vmatprep.subr.bf16.mxu0 %v1304
  %1914 = vmatpush1.bf16.msra.mxu0 %v1303
  %1915 = vmatprep.subr.bf16.mxu0 %v1312
  %1916 = vmatpush1.bf16.msra.mxu0 %v1311
  %1917 = vmatprep.subr.bf16.mxu0 %v1320
  %1918 = vmatpush1.bf16.msra.mxu0 %v1319
  %1919 = vmatprep.subr.bf16.mxu0 %v1328
  %1920 = vmatpush1.bf16.msra.mxu0 %v1327
  %1921 = vmatprep.subr.bf16.mxu0 %v1336
  %1922 = vmatpush1.bf16.msra.mxu0 %v1335
  %1923 = vmatprep.subr.bf16.mxu0 %v1344
  %1924 = vmatpush1.bf16.msra.mxu0 %v1343
  %1925 = vmatprep.subr.bf16.mxu0 %v1352
  %1926 = vmatpush1.bf16.msra.mxu0 %v1351
  %1927 = vmatprep.subr.bf16.mxu0 %v1360
  %1928 = vmatpush1.bf16.msra.mxu0 %v1359
  %1929 = vmatprep.subr.bf16.mxu0 %v1368
  %1930 = vmatpush1.bf16.msra.mxu0 %v1367
  %1931 = vmatprep.subr.bf16.mxu0 %v1376
  %1932 = vmatpush1.bf16.msra.mxu0 %v1375
  %1933 = vmatprep.subr.bf16.mxu0 %v1384
  %1934 = vmatpush1.bf16.msra.mxu0 %v1383
  %1935 = vmatprep.subr.bf16.mxu0 %v1392
  %1936 = vmatpush1.bf16.msra.mxu0 %v1391
  %1937 = vmatprep.subr.bf16.mxu0 %v1400
  %1938 = vmatpush1.bf16.msra.mxu0 %v1399
  %1939 = vmatprep.subr.bf16.mxu0 %v1408
  %1940 = vmatpush1.bf16.msra.mxu0 %v1407
  %1941 = vmatprep.subr.bf16.mxu0 %v1416
  %1942 = vmatpush1.bf16.msra.mxu0 %v1415
  %1943 = vmatprep.mubr.bf16.mxu0 %v220
  %1944 = vmatmul.mubr.bf16.gmra.mrb[0].mxu0 %v219
  %v1945 = vpop.f32.mrb[0].mxu0
  %v1946 = vadd.f32 %v496, %v1945
  %v1947 = vpop.f32.mrb[0].mxu0
  %v1948 = vadd.f32 %v500, %v1947
  %v1949 = vpop.f32.mrb[0].mxu0
  %v1950 = vadd.f32 %v496, %v1949
  %v1951 = vpop.f32.mrb[0].mxu0
  %v1952 = vadd.f32 %v500, %v1951
  %1953 = vmatprep.mubr.bf16.mxu0 %v222
  %1954 = vmatmul.mubr.bf16.gmra.mrb[0].mxu0 %v221
  %v1955 = vpop.f32.mrb[0].mxu0
  %v1956 = vadd.f32 %v496, %v1955
  %v1957 = vpop.f32.mrb[0].mxu0
  %v1958 = vadd.f32 %v500, %v1957
  %v1959 = vpop.f32.mrb[0].mxu0
  %v1960 = vadd.f32 %v496, %v1959
  %v1961 = vpop.f32.mrb[0].mxu0
  %v1962 = vadd.f32 %v500, %v1961
  %1963 = vdwg.mxu0
  %1964 = vmatprep.subr.bf16.mxu0 %v1424
  %1965 = vmatpush1.bf16.msra.mxu0 %v1423
  %1966 = vmatprep.subr.bf16.mxu0 %v1432
  %1967 = vmatpush1.bf16.msra.mxu0 %v1431
  %1968 = vmatprep.subr.bf16.mxu0 %v1440
  %1969 = vmatpush1.bf16.msra.mxu0 %v1439
  %1970 = vmatprep.subr.bf16.mxu0 %v1448
  %1971 = vmatpush1.bf16.msra.mxu0 %v1447
  %1972 = vmatprep.subr.bf16.mxu0 %v1456
  %1973 = vmatpush1.bf16.msra.mxu0 %v1455
  %1974 = vmatprep.subr.bf16.mxu0 %v1464
  %1975 = vmatpush1.bf16.msra.mxu0 %v1463
  %1976 = vmatprep.subr.bf16.mxu0 %v1472
  %1977 = vmatpush1.bf16.msra.mxu0 %v1471
  %1978 = vmatprep.subr.bf16.mxu0 %v1480
  %1979 = vmatpush1.bf16.msra.mxu0 %v1479
  %1980 = vmatprep.subr.bf16.mxu0 %v1488
  %1981 = vmatpush1.bf16.msra.mxu0 %v1487
  %1982 = vmatprep.subr.bf16.mxu0 %v1496
  %1983 = vmatpush1.bf16.msra.mxu0 %v1495
  %1984 = vmatprep.subr.bf16.mxu0 %v1504
  %1985 = vmatpush1.bf16.msra.mxu0 %v1503
  %1986 = vmatprep.subr.bf16.mxu0 %v1512
  %1987 = vmatpush1.bf16.msra.mxu0 %v1511
  %1988 = vmatprep.subr.bf16.mxu0 %v1520
  %1989 = vmatpush1.bf16.msra.mxu0 %v1519
  %1990 = vmatprep.subr.bf16.mxu0 %v1528
  %1991 = vmatpush1.bf16.msra.mxu0 %v1527
  %1992 = vmatprep.subr.bf16.mxu0 %v1536
  %1993 = vmatpush1.bf16.msra.mxu0 %v1535
  %1994 = vmatprep.subr.bf16.mxu0 %v1544
  %1995 = vmatpush1.bf16.msra.mxu0 %v1543
  %1996 = vmatprep.mubr.bf16.mxu0 %v224
  %1997 = vmatmul.mubr.bf16.gmra.mrb[0].mxu0 %v223
  %v1998 = vpop.f32.mrb[0].mxu0
  %v1999 = vadd.f32 %v1946, %v1998
  %v2000 = vpop.f32.mrb[0].mxu0
  %v2001 = vadd.f32 %v1948, %v2000
  %v2002 = vpop.f32.mrb[0].mxu0
  %v2003 = vadd.f32 %v1950, %v2002
  %v2004 = vpop.f32.mrb[0].mxu0
  %v2005 = vadd.f32 %v1952, %v2004
  %2006 = vmatprep.mubr.bf16.mxu0 %v226
  %2007 = vmatmul.mubr.bf16.gmra.mrb[0].mxu0 %v225
  %v2008 = vpop.f32.mrb[0].mxu0
  %v2009 = vadd.f32 %v1956, %v2008
  %v2010 = vpop.f32.mrb[0].mxu0
  %v2011 = vadd.f32 %v1958, %v2010
  %v2012 = vpop.f32.mrb[0].mxu0
  %v2013 = vadd.f32 %v1960, %v2012
  %v2014 = vpop.f32.mrb[0].mxu0
  %v2015 = vadd.f32 %v1962, %v2014
  %2016 = vdwg.mxu0
  %2017 = vmatprep.subr.bf16.mxu0 %v1298
  %2018 = vmatpush1.bf16.msra.mxu0 %v1297
  %2019 = vmatprep.subr.bf16.mxu0 %v1306
  %2020 = vmatpush1.bf16.msra.mxu0 %v1305
  %2021 = vmatprep.subr.bf16.mxu0 %v1314
  %2022 = vmatpush1.bf16.msra.mxu0 %v1313
  %2023 = vmatprep.subr.bf16.mxu0 %v1322
  %2024 = vmatpush1.bf16.msra.mxu0 %v1321
  %2025 = vmatprep.subr.bf16.mxu0 %v1330
  %2026 = vmatpush1.bf16.msra.mxu0 %v1329
  %2027 = vmatprep.subr.bf16.mxu0 %v1338
  %2028 = vmatpush1.bf16.msra.mxu0 %v1337
  %2029 = vmatprep.subr.bf16.mxu0 %v1346
  %2030 = vmatpush1.bf16.msra.mxu0 %v1345
  %2031 = vmatprep.subr.bf16.mxu0 %v1354
  %2032 = vmatpush1.bf16.msra.mxu0 %v1353
  %2033 = vmatprep.subr.bf16.mxu0 %v1362
  %2034 = vmatpush1.bf16.msra.mxu0 %v1361
  %2035 = vmatprep.subr.bf16.mxu0 %v1370
  %2036 = vmatpush1.bf16.msra.mxu0 %v1369
  %2037 = vmatprep.subr.bf16.mxu0 %v1378
  %2038 = vmatpush1.bf16.msra.mxu0 %v1377
  %2039 = vmatprep.subr.bf16.mxu0 %v1386
  %2040 = vmatpush1.bf16.msra.mxu0 %v1385
  %2041 = vmatprep.subr.bf16.mxu0 %v1394
  %2042 = vmatpush1.bf16.msra.mxu0 %v1393
  %2043 = vmatprep.subr.bf16.mxu0 %v1402
  %2044 = vmatpush1.bf16.msra.mxu0 %v1401
  %2045 = vmatprep.subr.bf16.mxu0 %v1410
  %2046 = vmatpush1.bf16.msra.mxu0 %v1409
  %2047 = vmatprep.subr.bf16.mxu0 %v1418
  %2048 = vmatpush1.bf16.msra.mxu0 %v1417
  %2049 = vmatprep.mubr.bf16.mxu0 %v220
  %2050 = vmatmul.mubr.bf16.gmra.mrb[0].mxu0 %v219
  %v2051 = vpop.f32.mrb[0].mxu0
  %v2052 = vadd.f32 %v504, %v2051
  %v2053 = vpop.f32.mrb[0].mxu0
  %v2054 = vadd.f32 %v508, %v2053
  %v2055 = vpop.f32.mrb[0].mxu0
  %v2056 = vadd.f32 %v504, %v2055
  %v2057 = vpop.f32.mrb[0].mxu0
  %v2058 = vadd.f32 %v508, %v2057
  %2059 = vmatprep.mubr.bf16.mxu0 %v222
  %2060 = vmatmul.mubr.bf16.gmra.mrb[0].mxu0 %v221
  %v2061 = vpop.f32.mrb[0].mxu0
  %v2062 = vadd.f32 %v504, %v2061
  %v2063 = vpop.f32.mrb[0].mxu0
  %v2064 = vadd.f32 %v508, %v2063
  %v2065 = vpop.f32.mrb[0].mxu0
  %v2066 = vadd.f32 %v504, %v2065
  %v2067 = vpop.f32.mrb[0].mxu0
  %v2068 = vadd.f32 %v508, %v2067
  %2069 = vdwg.mxu0
  %2070 = vmatprep.subr.bf16.mxu0 %v1426
  %2071 = vmatpush1.bf16.msra.mxu0 %v1425
  %2072 = vmatprep.subr.bf16.mxu0 %v1434
  %2073 = vmatpush1.bf16.msra.mxu0 %v1433
  %2074 = vmatprep.subr.bf16.mxu0 %v1442
  %2075 = vmatpush1.bf16.msra.mxu0 %v1441
  %2076 = vmatprep.subr.bf16.mxu0 %v1450
  %2077 = vmatpush1.bf16.msra.mxu0 %v1449
  %2078 = vmatprep.subr.bf16.mxu0 %v1458
  %2079 = vmatpush1.bf16.msra.mxu0 %v1457
  %2080 = vmatprep.subr.bf16.mxu0 %v1466
  %2081 = vmatpush1.bf16.msra.mxu0 %v1465
  %2082 = vmatprep.subr.bf16.mxu0 %v1474
  %2083 = vmatpush1.bf16.msra.mxu0 %v1473
  %2084 = vmatprep.subr.bf16.mxu0 %v1482
  %2085 = vmatpush1.bf16.msra.mxu0 %v1481
  %2086 = vmatprep.subr.bf16.mxu0 %v1490
  %2087 = vmatpush1.bf16.msra.mxu0 %v1489
  %2088 = vmatprep.subr.bf16.mxu0 %v1498
  %2089 = vmatpush1.bf16.msra.mxu0 %v1497
  %2090 = vmatprep.subr.bf16.mxu0 %v1506
  %2091 = vmatpush1.bf16.msra.mxu0 %v1505
  %2092 = vmatprep.subr.bf16.mxu0 %v1514
  %2093 = vmatpush1.bf16.msra.mxu0 %v1513
  %2094 = vmatprep.subr.bf16.mxu0 %v1522
  %2095 = vmatpush1.bf16.msra.mxu0 %v1521
  %2096 = vmatprep.subr.bf16.mxu0 %v1530
  %2097 = vmatpush1.bf16.msra.mxu0 %v1529
  %2098 = vmatprep.subr.bf16.mxu0 %v1538
  %2099 = vmatpush1.bf16.msra.mxu0 %v1537
  %2100 = vmatprep.subr.bf16.mxu0 %v1546
  %2101 = vmatpush1.bf16.msra.mxu0 %v1545
  %2102 = vmatprep.mubr.bf16.mxu0 %v224
  %2103 = vmatmul.mubr.bf16.gmra.mrb[0].mxu0 %v223
  %v2104 = vpop.f32.mrb[0].mxu0
  %v2105 = vadd.f32 %v2052, %v2104
  %v2106 = vpop.f32.mrb[0].mxu0
  %v2107 = vadd.f32 %v2054, %v2106
  %v2108 = vpop.f32.mrb[0].mxu0
  %v2109 = vadd.f32 %v2056, %v2108
  %v2110 = vpop.f32.mrb[0].mxu0
  %v2111 = vadd.f32 %v2058, %v2110
  %2112 = vmatprep.mubr.bf16.mxu0 %v226
  %2113 = vmatmul.mubr.bf16.gmra.mrb[0].mxu0 %v225
  %v2114 = vpop.f32.mrb[0].mxu0
  %v2115 = vadd.f32 %v2062, %v2114
  %v2116 = vpop.f32.mrb[0].mxu0
  %v2117 = vadd.f32 %v2064, %v2116
  %v2118 = vpop.f32.mrb[0].mxu0
  %v2119 = vadd.f32 %v2066, %v2118
  %v2120 = vpop.f32.mrb[0].mxu0
  %v2121 = vadd.f32 %v2068, %v2120
  %2122 = vdwg.mxu0
  %2123 = vmatprep.subr.bf16.mxu0 %v1300
  %2124 = vmatpush1.bf16.msra.mxu0 %v1299
  %2125 = vmatprep.subr.bf16.mxu0 %v1308
  %2126 = vmatpush1.bf16.msra.mxu0 %v1307
  %2127 = vmatprep.subr.bf16.mxu0 %v1316
  %2128 = vmatpush1.bf16.msra.mxu0 %v1315
  %2129 = vmatprep.subr.bf16.mxu0 %v1324
  %2130 = vmatpush1.bf16.msra.mxu0 %v1323
  %2131 = vmatprep.subr.bf16.mxu0 %v1332
  %2132 = vmatpush1.bf16.msra.mxu0 %v1331
  %2133 = vmatprep.subr.bf16.mxu0 %v1340
  %2134 = vmatpush1.bf16.msra.mxu0 %v1339
  %2135 = vmatprep.subr.bf16.mxu0 %v1348
  %2136 = vmatpush1.bf16.msra.mxu0 %v1347
  %2137 = vmatprep.subr.bf16.mxu0 %v1356
  %2138 = vmatpush1.bf16.msra.mxu0 %v1355
  %2139 = vmatprep.subr.bf16.mxu0 %v1364
  %2140 = vmatpush1.bf16.msra.mxu0 %v1363
  %2141 = vmatprep.subr.bf16.mxu0 %v1372
  %2142 = vmatpush1.bf16.msra.mxu0 %v1371
  %2143 = vmatprep.subr.bf16.mxu0 %v1380
  %2144 = vmatpush1.bf16.msra.mxu0 %v1379
  %2145 = vmatprep.subr.bf16.mxu0 %v1388
  %2146 = vmatpush1.bf16.msra.mxu0 %v1387
  %2147 = vmatprep.subr.bf16.mxu0 %v1396
  %2148 = vmatpush1.bf16.msra.mxu0 %v1395
  %2149 = vmatprep.subr.bf16.mxu0 %v1404
  %2150 = vmatpush1.bf16.msra.mxu0 %v1403
  %2151 = vmatprep.subr.bf16.mxu0 %v1412
  %2152 = vmatpush1.bf16.msra.mxu0 %v1411
  %2153 = vmatprep.subr.bf16.mxu0 %v1420
  %2154 = vmatpush1.bf16.msra.mxu0 %v1419
  %2155 = vmatprep.mubr.bf16.mxu0 %v220
  %2156 = vmatmul.mubr.bf16.gmra.mrb[0].mxu0 %v219
  %v2157 = vpop.f32.mrb[0].mxu0
  %v2158 = vadd.f32 %v512, %v2157
  %v2159 = vpop.f32.mrb[0].mxu0
  %v2160 = vadd.f32 %v516, %v2159
  %v2161 = vpop.f32.mrb[0].mxu0
  %v2162 = vadd.f32 %v512, %v2161
  %v2163 = vpop.f32.mrb[0].mxu0
  %v2164 = vadd.f32 %v516, %v2163
  %2165 = vmatprep.mubr.bf16.mxu0 %v222
  %2166 = vmatmul.mubr.bf16.gmra.mrb[0].mxu0 %v221
  %v2167 = vpop.f32.mrb[0].mxu0
  %v2168 = vadd.f32 %v512, %v2167
  %v2169 = vpop.f32.mrb[0].mxu0
  %v2170 = vadd.f32 %v516, %v2169
  %v2171 = vpop.f32.mrb[0].mxu0
  %v2172 = vadd.f32 %v512, %v2171
  %v2173 = vpop.f32.mrb[0].mxu0
  %v2174 = vadd.f32 %v516, %v2173
  %2175 = vdwg.mxu0
  %2176 = vmatprep.subr.bf16.mxu0 %v1428
  %2177 = vmatpush1.bf16.msra.mxu0 %v1427
  %2178 = vmatprep.subr.bf16.mxu0 %v1436
  %2179 = vmatpush1.bf16.msra.mxu0 %v1435
  %2180 = vmatprep.subr.bf16.mxu0 %v1444
  %2181 = vmatpush1.bf16.msra.mxu0 %v1443
  %2182 = vmatprep.subr.bf16.mxu0 %v1452
  %2183 = vmatpush1.bf16.msra.mxu0 %v1451
  %2184 = vmatprep.subr.bf16.mxu0 %v1460
  %2185 = vmatpush1.bf16.msra.mxu0 %v1459
  %2186 = vmatprep.subr.bf16.mxu0 %v1468
  %2187 = vmatpush1.bf16.msra.mxu0 %v1467
  %2188 = vmatprep.subr.bf16.mxu0 %v1476
  %2189 = vmatpush1.bf16.msra.mxu0 %v1475
  %2190 = vmatprep.subr.bf16.mxu0 %v1484
  %2191 = vmatpush1.bf16.msra.mxu0 %v1483
  %2192 = vmatprep.subr.bf16.mxu0 %v1492
  %2193 = vmatpush1.bf16.msra.mxu0 %v1491
  %2194 = vmatprep.subr.bf16.mxu0 %v1500
  %2195 = vmatpush1.bf16.msra.mxu0 %v1499
  %2196 = vmatprep.subr.bf16.mxu0 %v1508
  %2197 = vmatpush1.bf16.msra.mxu0 %v1507
  %2198 = vmatprep.subr.bf16.mxu0 %v1516
  %2199 = vmatpush1.bf16.msra.mxu0 %v1515
  %2200 = vmatprep.subr.bf16.mxu0 %v1524
  %2201 = vmatpush1.bf16.msra.mxu0 %v1523
  %2202 = vmatprep.subr.bf16.mxu0 %v1532
  %2203 = vmatpush1.bf16.msra.mxu0 %v1531
  %2204 = vmatprep.subr.bf16.mxu0 %v1540
  %2205 = vmatpush1.bf16.msra.mxu0 %v1539
  %2206 = vmatprep.subr.bf16.mxu0 %v1548
  %2207 = vmatpush1.bf16.msra.mxu0 %v1547
  %2208 = vmatprep.mubr.bf16.mxu0 %v224
  %2209 = vmatmul.mubr.bf16.gmra.mrb[0].mxu0 %v223
  %v2210 = vpop.f32.mrb[0].mxu0
  %v2211 = vadd.f32 %v2158, %v2210
  %v2212 = vpop.f32.mrb[0].mxu0
  %v2213 = vadd.f32 %v2160, %v2212
  %v2214 = vpop.f32.mrb[0].mxu0
  %v2215 = vadd.f32 %v2162, %v2214
  %v2216 = vpop.f32.mrb[0].mxu0
  %v2217 = vadd.f32 %v2164, %v2216
  %2218 = vmatprep.mubr.bf16.mxu0 %v226
  %2219 = vmatmul.mubr.bf16.gmra.mrb[0].mxu0 %v225
  %v2220 = vpop.f32.mrb[0].mxu0
  %v2221 = vadd.f32 %v2168, %v2220
  %v2222 = vpop.f32.mrb[0].mxu0
  %v2223 = vadd.f32 %v2170, %v2222
  %v2224 = vpop.f32.mrb[0].mxu0
  %v2225 = vadd.f32 %v2172, %v2224
  %v2226 = vpop.f32.mrb[0].mxu0
  %v2227 = vadd.f32 %v2174, %v2226
  %2228 = vdwg.mxu0
  %v2229 = vmax.f32 %v1893, 0.0
  %v2230 = vmax.f32 %v1895, 0.0
  %v2231 = vmax.f32 %v1999, 0.0
  %v2232 = vmax.f32 %v2001, 0.0
  %v2233 = vmax.f32 %v2105, 0.0
  %v2234 = vmax.f32 %v2107, 0.0
  %v2235 = vmax.f32 %v2211, 0.0
  %v2236 = vmax.f32 %v2213, 0.0
  %v2237 = vmax.f32 %v1897, 0.0
  %v2238 = vmax.f32 %v1899, 0.0
  %v2239 = vmax.f32 %v2003, 0.0
  %v2240 = vmax.f32 %v2005, 0.0
  %v2241 = vmax.f32 %v2109, 0.0
  %v2242 = vmax.f32 %v2111, 0.0
  %v2243 = vmax.f32 %v2215, 0.0
  %v2244 = vmax.f32 %v2217, 0.0
  %v2245 = vmax.f32 %v1903, 0.0
  %v2246 = vmax.f32 %v1905, 0.0
  %v2247 = vmax.f32 %v2009, 0.0
  %v2248 = vmax.f32 %v2011, 0.0
  %v2249 = vmax.f32 %v2115, 0.0
  %v2250 = vmax.f32 %v2117, 0.0
  %v2251 = vmax.f32 %v2221, 0.0
  %v2252 = vmax.f32 %v2223, 0.0
  %v2253 = vmax.f32 %v1907, 0.0
  %v2254 = vmax.f32 %v1909, 0.0
  %v2255 = vmax.f32 %v2013, 0.0
  %v2256 = vmax.f32 %v2015, 0.0
  %v2257 = vmax.f32 %v2119, 0.0
  %v2258 = vmax.f32 %v2121, 0.0
  %v2259 = vmax.f32 %v2225, 0.0
  %v2260 = vmax.f32 %v2227, 0.0
  %v2261 = vpack.c.bf16 %v2237, %v2229
  %v2262 = vpack.c.bf16 %v2238, %v2230
  %v2263 = vpack.c.bf16 %v2239, %v2231
  %v2264 = vpack.c.bf16 %v2240, %v2232
  %v2265 = vpack.c.bf16 %v2241, %v2233
  %v2266 = vpack.c.bf16 %v2242, %v2234
  %v2267 = vpack.c.bf16 %v2243, %v2235
  %v2268 = vpack.c.bf16 %v2244, %v2236
  %v2269 = vpack.c.bf16 %v2253, %v2245
  %v2270 = vpack.c.bf16 %v2254, %v2246
  %v2271 = vpack.c.bf16 %v2255, %v2247
  %v2272 = vpack.c.bf16 %v2256, %v2248
  %v2273 = vpack.c.bf16 %v2257, %v2249
  %v2274 = vpack.c.bf16 %v2258, %v2250
  %v2275 = vpack.c.bf16 %v2259, %v2251
  %v2276 = vpack.c.bf16 %v2260, %v2252
  %v2277 = vld [vmem:[%s5] sm:$0xff]
  %v2278 = vld [vmem:[%s5 + $0x8] sm:$0xff]
  %v2279 = vld [vmem:[%s5 + $0x10] sm:$0xff]
  %v2280 = vld [vmem:[%s5 + $0x18] sm:$0xff]
  %v2281 = vld [vmem:[%s5 + $0x20] sm:$0xff]
  %v2282 = vld [vmem:[%s5 + $0x28] sm:$0xff]
  %v2283 = vld [vmem:[%s5 + $0x30] sm:$0xff]
  %v2284 = vld [vmem:[%s5 + $0x38] sm:$0xff]
  %v2285 = vld [vmem:[%s5 + $0x40] sm:$0xff]
  %v2286 = vld [vmem:[%s5 + $0x48] sm:$0xff]
  %v2287 = vld [vmem:[%s5 + $0x50] sm:$0xff]
  %v2288 = vld [vmem:[%s5 + $0x58] sm:$0xff]
  %v2289 = vld [vmem:[%s5 + $0x60] sm:$0xff]
  %v2290 = vld [vmem:[%s5 + $0x68] sm:$0xff]
  %v2291 = vld [vmem:[%s5 + $0x70] sm:$0xff]
  %v2292 = vld [vmem:[%s5 + $0x78] sm:$0xff]
  %v2293 = vld [vmem:[%s5 + $0x80] sm:$0xff]
  %v2294 = vld [vmem:[%s5 + $0x88] sm:$0xff]
  %v2295 = vld [vmem:[%s5 + $0x90] sm:$0xff]
  %v2296 = vld [vmem:[%s5 + $0x98] sm:$0xff]
  %v2297 = vld [vmem:[%s5 + $0xa0] sm:$0xff]
  %v2298 = vld [vmem:[%s5 + $0xa8] sm:$0xff]
  %v2299 = vld [vmem:[%s5 + $0xb0] sm:$0xff]
  %v2300 = vld [vmem:[%s5 + $0xb8] sm:$0xff]
  %v2301 = vld [vmem:[%s5 + $0xc0] sm:$0xff]
  %v2302 = vld [vmem:[%s5 + $0xc8] sm:$0xff]
  %v2303 = vld [vmem:[%s5 + $0xd0] sm:$0xff]
  %v2304 = vld [vmem:[%s5 + $0xd8] sm:$0xff]
  %v2305 = vld [vmem:[%s5 + $0xe0] sm:$0xff]
  %v2306 = vld [vmem:[%s5 + $0xe8] sm:$0xff]
  %v2307 = vld [vmem:[%s5 + $0xf0] sm:$0xff]
  %v2308 = vld [vmem:[%s5 + $0xf8] sm:$0xff]
  %v2309 = vld [vmem:[%s5 + $0x100] sm:$0xff]
  %v2310 = vld [vmem:[%s5 + $0x108] sm:$0xff]
  %v2311 = vld [vmem:[%s5 + $0x110] sm:$0xff]
  %v2312 = vld [vmem:[%s5 + $0x118] sm:$0xff]
  %v2313 = vld [vmem:[%s5 + $0x120] sm:$0xff]
  %v2314 = vld [vmem:[%s5 + $0x128] sm:$0xff]
  %v2315 = vld [vmem:[%s5 + $0x130] sm:$0xff]
  %v2316 = vld [vmem:[%s5 + $0x138] sm:$0xff]
  %v2317 = vld [vmem:[%s5 + $0x140] sm:$0xff]
  %v2318 = vld [vmem:[%s5 + $0x148] sm:$0xff]
  %v2319 = vld [vmem:[%s5 + $0x150] sm:$0xff]
  %v2320 = vld [vmem:[%s5 + $0x158] sm:$0xff]
  %v2321 = vld [vmem:[%s5 + $0x160] sm:$0xff]
  %v2322 = vld [vmem:[%s5 + $0x168] sm:$0xff]
  %v2323 = vld [vmem:[%s5 + $0x170] sm:$0xff]
  %v2324 = vld [vmem:[%s5 + $0x178] sm:$0xff]
  %v2325 = vld [vmem:[%s5 + $0x180] sm:$0xff]
  %v2326 = vld [vmem:[%s5 + $0x188] sm:$0xff]
  %v2327 = vld [vmem:[%s5 + $0x190] sm:$0xff]
  %v2328 = vld [vmem:[%s5 + $0x198] sm:$0xff]
  %v2329 = vld [vmem:[%s5 + $0x1a0] sm:$0xff]
  %v2330 = vld [vmem:[%s5 + $0x1a8] sm:$0xff]
  %v2331 = vld [vmem:[%s5 + $0x1b0] sm:$0xff]
  %v2332 = vld [vmem:[%s5 + $0x1b8] sm:$0xff]
  %v2333 = vld [vmem:[%s5 + $0x1c0] sm:$0xff]
  %v2334 = vld [vmem:[%s5 + $0x1c8] sm:$0xff]
  %v2335 = vld [vmem:[%s5 + $0x1d0] sm:$0xff]
  %v2336 = vld [vmem:[%s5 + $0x1d8] sm:$0xff]
  %v2337 = vld [vmem:[%s5 + $0x1e0] sm:$0xff]
  %v2338 = vld [vmem:[%s5 + $0x1e8] sm:$0xff]
  %v2339 = vld [vmem:[%s5 + $0x1f0] sm:$0xff]
  %v2340 = vld [vmem:[%s5 + $0x1f8] sm:$0xff]
  %v2341 = vld [vmem:[%s5 + $0x200] sm:$0xff]
  %v2342 = vld [vmem:[%s5 + $0x208] sm:$0xff]
  %v2343 = vld [vmem:[%s5 + $0x210] sm:$0xff]
  %v2344 = vld [vmem:[%s5 + $0x218] sm:$0xff]
  %v2345 = vld [vmem:[%s5 + $0x220] sm:$0xff]
  %v2346 = vld [vmem:[%s5 + $0x228] sm:$0xff]
  %v2347 = vld [vmem:[%s5 + $0x230] sm:$0xff]
  %v2348 = vld [vmem:[%s5 + $0x238] sm:$0xff]
  %v2349 = vld [vmem:[%s5 + $0x240] sm:$0xff]
  %v2350 = vld [vmem:[%s5 + $0x248] sm:$0xff]
  %v2351 = vld [vmem:[%s5 + $0x250] sm:$0xff]
  %v2352 = vld [vmem:[%s5 + $0x258] sm:$0xff]
  %v2353 = vld [vmem:[%s5 + $0x260] sm:$0xff]
  %v2354 = vld [vmem:[%s5 + $0x268] sm:$0xff]
  %v2355 = vld [vmem:[%s5 + $0x270] sm:$0xff]
  %v2356 = vld [vmem:[%s5 + $0x278] sm:$0xff]
  %v2357 = vld [vmem:[%s5 + $0x280] sm:$0xff]
  %v2358 = vld [vmem:[%s5 + $0x288] sm:$0xff]
  %v2359 = vld [vmem:[%s5 + $0x290] sm:$0xff]
  %v2360 = vld [vmem:[%s5 + $0x298] sm:$0xff]
  %v2361 = vld [vmem:[%s5 + $0x2a0] sm:$0xff]
  %v2362 = vld [vmem:[%s5 + $0x2a8] sm:$0xff]
  %v2363 = vld [vmem:[%s5 + $0x2b0] sm:$0xff]
  %v2364 = vld [vmem:[%s5 + $0x2b8] sm:$0xff]
  %v2365 = vld [vmem:[%s5 + $0x2c0] sm:$0xff]
  %v2366 = vld [vmem:[%s5 + $0x2c8] sm:$0xff]
  %v2367 = vld [vmem:[%s5 + $0x2d0] sm:$0xff]
  %v2368 = vld [vmem:[%s5 + $0x2d8] sm:$0xff]
  %v2369 = vld [vmem:[%s5 + $0x2e0] sm:$0xff]
  %v2370 = vld [vmem:[%s5 + $0x2e8] sm:$0xff]
  %v2371 = vld [vmem:[%s5 + $0x2f0] sm:$0xff]
  %v2372 = vld [vmem:[%s5 + $0x2f8] sm:$0xff]
  %v2373 = vld [vmem:[%s5 + $0x300] sm:$0xff]
  %v2374 = vld [vmem:[%s5 + $0x308] sm:$0xff]
  %v2375 = vld [vmem:[%s5 + $0x310] sm:$0xff]
  %v2376 = vld [vmem:[%s5 + $0x318] sm:$0xff]
  %v2377 = vld [vmem:[%s5 + $0x320] sm:$0xff]
  %v2378 = vld [vmem:[%s5 + $0x328] sm:$0xff]
  %v2379 = vld [vmem:[%s5 + $0x330] sm:$0xff]
  %v2380 = vld [vmem:[%s5 + $0x338] sm:$0xff]
  %v2381 = vld [vmem:[%s5 + $0x340] sm:$0xff]
  %v2382 = vld [vmem:[%s5 + $0x348] sm:$0xff]
  %v2383 = vld [vmem:[%s5 + $0x350] sm:$0xff]
  %v2384 = vld [vmem:[%s5 + $0x358] sm:$0xff]
  %v2385 = vld [vmem:[%s5 + $0x360] sm:$0xff]
  %v2386 = vld [vmem:[%s5 + $0x368] sm:$0xff]
  %v2387 = vld [vmem:[%s5 + $0x370] sm:$0xff]
  %v2388 = vld [vmem:[%s5 + $0x378] sm:$0xff]
  %v2389 = vld [vmem:[%s5 + $0x380] sm:$0xff]
  %v2390 = vld [vmem:[%s5 + $0x388] sm:$0xff]
  %v2391 = vld [vmem:[%s5 + $0x390] sm:$0xff]
  %v2392 = vld [vmem:[%s5 + $0x398] sm:$0xff]
  %v2393 = vld [vmem:[%s5 + $0x3a0] sm:$0xff]
  %v2394 = vld [vmem:[%s5 + $0x3a8] sm:$0xff]
  %v2395 = vld [vmem:[%s5 + $0x3b0] sm:$0xff]
  %v2396 = vld [vmem:[%s5 + $0x3b8] sm:$0xff]
  %v2397 = vld [vmem:[%s5 + $0x3c0] sm:$0xff]
  %v2398 = vld [vmem:[%s5 + $0x3c8] sm:$0xff]
  %v2399 = vld [vmem:[%s5 + $0x3d0] sm:$0xff]
  %v2400 = vld [vmem:[%s5 + $0x3d8] sm:$0xff]
  %v2401 = vld [vmem:[%s5 + $0x3e0] sm:$0xff]
  %v2402 = vld [vmem:[%s5 + $0x3e8] sm:$0xff]
  %v2403 = vld [vmem:[%s5 + $0x3f0] sm:$0xff]
  %v2404 = vld [vmem:[%s5 + $0x3f8] sm:$0xff]
  %v2405 = vld [vmem:[%s5 + $0x400] sm:$0xff]
  %v2406 = vld [vmem:[%s5 + $0x408] sm:$0xff]
  %v2407 = vld [vmem:[%s5 + $0x410] sm:$0xff]
  %v2408 = vld [vmem:[%s5 + $0x418] sm:$0xff]
  %v2409 = vld [vmem:[%s5 + $0x420] sm:$0xff]
  %v2410 = vld [vmem:[%s5 + $0x428] sm:$0xff]
  %v2411 = vld [vmem:[%s5 + $0x430] sm:$0xff]
  %v2412 = vld [vmem:[%s5 + $0x438] sm:$0xff]
  %v2413 = vld [vmem:[%s5 + $0x440] sm:$0xff]
  %v2414 = vld [vmem:[%s5 + $0x448] sm:$0xff]
  %v2415 = vld [vmem:[%s5 + $0x450] sm:$0xff]
  %v2416 = vld [vmem:[%s5 + $0x458] sm:$0xff]
  %v2417 = vld [vmem:[%s5 + $0x460] sm:$0xff]
  %v2418 = vld [vmem:[%s5 + $0x468] sm:$0xff]
  %v2419 = vld [vmem:[%s5 + $0x470] sm:$0xff]
  %v2420 = vld [vmem:[%s5 + $0x478] sm:$0xff]
  %v2421 = vld [vmem:[%s5 + $0x480] sm:$0xff]
  %v2422 = vld [vmem:[%s5 + $0x488] sm:$0xff]
  %v2423 = vld [vmem:[%s5 + $0x490] sm:$0xff]
  %v2424 = vld [vmem:[%s5 + $0x498] sm:$0xff]
  %v2425 = vld [vmem:[%s5 + $0x4a0] sm:$0xff]
  %v2426 = vld [vmem:[%s5 + $0x4a8] sm:$0xff]
  %v2427 = vld [vmem:[%s5 + $0x4b0] sm:$0xff]
  %v2428 = vld [vmem:[%s5 + $0x4b8] sm:$0xff]
  %v2429 = vld [vmem:[%s5 + $0x4c0] sm:$0xff]
  %v2430 = vld [vmem:[%s5 + $0x4c8] sm:$0xff]
  %v2431 = vld [vmem:[%s5 + $0x4d0] sm:$0xff]
  %v2432 = vld [vmem:[%s5 + $0x4d8] sm:$0xff]
  %v2433 = vld [vmem:[%s5 + $0x4e0] sm:$0xff]
  %v2434 = vld [vmem:[%s5 + $0x4e8] sm:$0xff]
  %v2435 = vld [vmem:[%s5 + $0x4f0] sm:$0xff]
  %v2436 = vld [vmem:[%s5 + $0x4f8] sm:$0xff]
  %v2437 = vld [vmem:[%s5 + $0x500] sm:$0xff]
  %v2438 = vld [vmem:[%s5 + $0x508] sm:$0xff]
  %v2439 = vld [vmem:[%s5 + $0x510] sm:$0xff]
  %v2440 = vld [vmem:[%s5 + $0x518] sm:$0xff]
  %v2441 = vld [vmem:[%s5 + $0x520] sm:$0xff]
  %v2442 = vld [vmem:[%s5 + $0x528] sm:$0xff]
  %v2443 = vld [vmem:[%s5 + $0x530] sm:$0xff]
  %v2444 = vld [vmem:[%s5 + $0x538] sm:$0xff]
  %v2445 = vld [vmem:[%s5 + $0x540] sm:$0xff]
  %v2446 = vld [vmem:[%s5 + $0x548] sm:$0xff]
  %v2447 = vld [vmem:[%s5 + $0x550] sm:$0xff]
  %v2448 = vld [vmem:[%s5 + $0x558] sm:$0xff]
  %v2449 = vld [vmem:[%s5 + $0x560] sm:$0xff]
  %v2450 = vld [vmem:[%s5 + $0x568] sm:$0xff]
  %v2451 = vld [vmem:[%s5 + $0x570] sm:$0xff]
  %v2452 = vld [vmem:[%s5 + $0x578] sm:$0xff]
  %v2453 = vld [vmem:[%s5 + $0x580] sm:$0xff]
  %v2454 = vld [vmem:[%s5 + $0x588] sm:$0xff]
  %v2455 = vld [vmem:[%s5 + $0x590] sm:$0xff]
  %v2456 = vld [vmem:[%s5 + $0x598] sm:$0xff]
  %v2457 = vld [vmem:[%s5 + $0x5a0] sm:$0xff]
  %v2458 = vld [vmem:[%s5 + $0x5a8] sm:$0xff]
  %v2459 = vld [vmem:[%s5 + $0x5b0] sm:$0xff]
  %v2460 = vld [vmem:[%s5 + $0x5b8] sm:$0xff]
  %v2461 = vld [vmem:[%s5 + $0x5c0] sm:$0xff]
  %v2462 = vld [vmem:[%s5 + $0x5c8] sm:$0xff]
  %v2463 = vld [vmem:[%s5 + $0x5d0] sm:$0xff]
  %v2464 = vld [vmem:[%s5 + $0x5d8] sm:$0xff]
  %v2465 = vld [vmem:[%s5 + $0x5e0] sm:$0xff]
  %v2466 = vld [vmem:[%s5 + $0x5e8] sm:$0xff]
  %v2467 = vld [vmem:[%s5 + $0x5f0] sm:$0xff]
  %v2468 = vld [vmem:[%s5 + $0x5f8] sm:$0xff]
  %v2469 = vld [vmem:[%s5 + $0x600] sm:$0xff]
  %v2470 = vld [vmem:[%s5 + $0x608] sm:$0xff]
  %v2471 = vld [vmem:[%s5 + $0x610] sm:$0xff]
  %v2472 = vld [vmem:[%s5 + $0x618] sm:$0xff]
  %v2473 = vld [vmem:[%s5 + $0x620] sm:$0xff]
  %v2474 = vld [vmem:[%s5 + $0x628] sm:$0xff]
  %v2475 = vld [vmem:[%s5 + $0x630] sm:$0xff]
  %v2476 = vld [vmem:[%s5 + $0x638] sm:$0xff]
  %v2477 = vld [vmem:[%s5 + $0x640] sm:$0xff]
  %v2478 = vld [vmem:[%s5 + $0x648] sm:$0xff]
  %v2479 = vld [vmem:[%s5 + $0x650] sm:$0xff]
  %v2480 = vld [vmem:[%s5 + $0x658] sm:$0xff]
  %v2481 = vld [vmem:[%s5 + $0x660] sm:$0xff]
  %v2482 = vld [vmem:[%s5 + $0x668] sm:$0xff]
  %v2483 = vld [vmem:[%s5 + $0x670] sm:$0xff]
  %v2484 = vld [vmem:[%s5 + $0x678] sm:$0xff]
  %v2485 = vld [vmem:[%s5 + $0x680] sm:$0xff]
  %v2486 = vld [vmem:[%s5 + $0x688] sm:$0xff]
  %v2487 = vld [vmem:[%s5 + $0x690] sm:$0xff]
  %v2488 = vld [vmem:[%s5 + $0x698] sm:$0xff]
  %v2489 = vld [vmem:[%s5 + $0x6a0] sm:$0xff]
  %v2490 = vld [vmem:[%s5 + $0x6a8] sm:$0xff]
  %v2491 = vld [vmem:[%s5 + $0x6b0] sm:$0xff]
  %v2492 = vld [vmem:[%s5 + $0x6b8] sm:$0xff]
  %v2493 = vld [vmem:[%s5 + $0x6c0] sm:$0xff]
  %v2494 = vld [vmem:[%s5 + $0x6c8] sm:$0xff]
  %v2495 = vld [vmem:[%s5 + $0x6d0] sm:$0xff]
  %v2496 = vld [vmem:[%s5 + $0x6d8] sm:$0xff]
  %v2497 = vld [vmem:[%s5 + $0x6e0] sm:$0xff]
  %v2498 = vld [vmem:[%s5 + $0x6e8] sm:$0xff]
  %v2499 = vld [vmem:[%s5 + $0x6f0] sm:$0xff]
  %v2500 = vld [vmem:[%s5 + $0x6f8] sm:$0xff]
  %v2501 = vld [vmem:[%s5 + $0x700] sm:$0xff]
  %v2502 = vld [vmem:[%s5 + $0x708] sm:$0xff]
  %v2503 = vld [vmem:[%s5 + $0x710] sm:$0xff]
  %v2504 = vld [vmem:[%s5 + $0x718] sm:$0xff]
  %v2505 = vld [vmem:[%s5 + $0x720] sm:$0xff]
  %v2506 = vld [vmem:[%s5 + $0x728] sm:$0xff]
  %v2507 = vld [vmem:[%s5 + $0x730] sm:$0xff]
  %v2508 = vld [vmem:[%s5 + $0x738] sm:$0xff]
  %v2509 = vld [vmem:[%s5 + $0x740] sm:$0xff]
  %v2510 = vld [vmem:[%s5 + $0x748] sm:$0xff]
  %v2511 = vld [vmem:[%s5 + $0x750] sm:$0xff]
  %v2512 = vld [vmem:[%s5 + $0x758] sm:$0xff]
  %v2513 = vld [vmem:[%s5 + $0x760] sm:$0xff]
  %v2514 = vld [vmem:[%s5 + $0x768] sm:$0xff]
  %v2515 = vld [vmem:[%s5 + $0x770] sm:$0xff]
  %v2516 = vld [vmem:[%s5 + $0x778] sm:$0xff]
  %v2517 = vld [vmem:[%s5 + $0x780] sm:$0xff]
  %v2518 = vld [vmem:[%s5 + $0x788] sm:$0xff]
  %v2519 = vld [vmem:[%s5 + $0x790] sm:$0xff]
  %v2520 = vld [vmem:[%s5 + $0x798] sm:$0xff]
  %v2521 = vld [vmem:[%s5 + $0x7a0] sm:$0xff]
  %v2522 = vld [vmem:[%s5 + $0x7a8] sm:$0xff]
  %v2523 = vld [vmem:[%s5 + $0x7b0] sm:$0xff]
  %v2524 = vld [vmem:[%s5 + $0x7b8] sm:$0xff]
  %v2525 = vld [vmem:[%s5 + $0x7c0] sm:$0xff]
  %v2526 = vld [vmem:[%s5 + $0x7c8] sm:$0xff]
  %v2527 = vld [vmem:[%s5 + $0x7d0] sm:$0xff]
  %v2528 = vld [vmem:[%s5 + $0x7d8] sm:$0xff]
  %v2529 = vld [vmem:[%s5 + $0x7e0] sm:$0xff]
  %v2530 = vld [vmem:[%s5 + $0x7e8] sm:$0xff]
  %v2531 = vld [vmem:[%s5 + $0x7f0] sm:$0xff]
  %v2532 = vld [vmem:[%s5 + $0x7f8] sm:$0xff]
  %v2533 = vld [vmem:[%s6] sm:$0xf]
  %v2535 = vlaneseq
  %v2536 = vshrl.u32 %v2535, 7
  %v2537 = vsub.s32 0, %v2536
  %v2538 = vrot.slane %v2533, %v2537
  %v2539 = vlaneseq
  %v2540 = vshrl.u32 %v2539, 7
  %v2541 = vsub.s32 1, %v2540
  %v2542 = vrot.slane %v2533, %v2541
  %v2543 = vlaneseq
  %v2544 = vshrl.u32 %v2543, 7
  %v2545 = vsub.s32 2, %v2544
  %v2546 = vrot.slane %v2533, %v2545
  %v2547 = vlaneseq
  %v2548 = vshrl.u32 %v2547, 7
  %v2549 = vsub.s32 3, %v2548
  %v2550 = vrot.slane %v2533, %v2549
  %v2811 = vunpack.c.l.b16 %v2277
  %v2812 = vunpack.c.h.b16 %v2277
  %v2813 = vunpack.c.l.b16 %v2278
  %v2814 = vunpack.c.h.b16 %v2278
  %v2815 = vunpack.c.l.b16 %v2279
  %v2816 = vunpack.c.h.b16 %v2279
  %v2817 = vunpack.c.l.b16 %v2280
  %v2818 = vunpack.c.h.b16 %v2280
  %v2819 = vunpack.c.l.b16 %v2281
  %v2820 = vunpack.c.h.b16 %v2281
  %v2821 = vunpack.c.l.b16 %v2282
  %v2822 = vunpack.c.h.b16 %v2282
  %v2823 = vunpack.c.l.b16 %v2283
  %v2824 = vunpack.c.h.b16 %v2283
  %v2825 = vunpack.c.l.b16 %v2284
  %v2826 = vunpack.c.h.b16 %v2284
  %v2827 = vunpack.c.l.b16 %v2285
  %v2828 = vunpack.c.h.b16 %v2285
  %v2829 = vunpack.c.l.b16 %v2286
  %v2830 = vunpack.c.h.b16 %v2286
  %v2831 = vunpack.c.l.b16 %v2287
  %v2832 = vunpack.c.h.b16 %v2287
  %v2833 = vunpack.c.l.b16 %v2288
  %v2834 = vunpack.c.h.b16 %v2288
  %v2835 = vunpack.c.l.b16 %v2289
  %v2836 = vunpack.c.h.b16 %v2289
  %v2837 = vunpack.c.l.b16 %v2290
  %v2838 = vunpack.c.h.b16 %v2290
  %v2839 = vunpack.c.l.b16 %v2291
  %v2840 = vunpack.c.h.b16 %v2291
  %v2841 = vunpack.c.l.b16 %v2292
  %v2842 = vunpack.c.h.b16 %v2292
  %v2843 = vunpack.c.l.b16 %v2293
  %v2844 = vunpack.c.h.b16 %v2293
  %v2845 = vunpack.c.l.b16 %v2294
  %v2846 = vunpack.c.h.b16 %v2294
  %v2847 = vunpack.c.l.b16 %v2295
  %v2848 = vunpack.c.h.b16 %v2295
  %v2849 = vunpack.c.l.b16 %v2296
  %v2850 = vunpack.c.h.b16 %v2296
  %v2851 = vunpack.c.l.b16 %v2297
  %v2852 = vunpack.c.h.b16 %v2297
  %v2853 = vunpack.c.l.b16 %v2298
  %v2854 = vunpack.c.h.b16 %v2298
  %v2855 = vunpack.c.l.b16 %v2299
  %v2856 = vunpack.c.h.b16 %v2299
  %v2857 = vunpack.c.l.b16 %v2300
  %v2858 = vunpack.c.h.b16 %v2300
  %v2859 = vunpack.c.l.b16 %v2301
  %v2860 = vunpack.c.h.b16 %v2301
  %v2861 = vunpack.c.l.b16 %v2302
  %v2862 = vunpack.c.h.b16 %v2302
  %v2863 = vunpack.c.l.b16 %v2303
  %v2864 = vunpack.c.h.b16 %v2303
  %v2865 = vunpack.c.l.b16 %v2304
  %v2866 = vunpack.c.h.b16 %v2304
  %v2867 = vunpack.c.l.b16 %v2305
  %v2868 = vunpack.c.h.b16 %v2305
  %v2869 = vunpack.c.l.b16 %v2306
  %v2870 = vunpack.c.h.b16 %v2306
  %v2871 = vunpack.c.l.b16 %v2307
  %v2872 = vunpack.c.h.b16 %v2307
  %v2873 = vunpack.c.l.b16 %v2308
  %v2874 = vunpack.c.h.b16 %v2308
  %v2875 = vunpack.c.l.b16 %v2309
  %v2876 = vunpack.c.h.b16 %v2309
  %v2877 = vunpack.c.l.b16 %v2310
  %v2878 = vunpack.c.h.b16 %v2310
  %v2879 = vunpack.c.l.b16 %v2311
  %v2880 = vunpack.c.h.b16 %v2311
  %v2881 = vunpack.c.l.b16 %v2312
  %v2882 = vunpack.c.h.b16 %v2312
  %v2883 = vunpack.c.l.b16 %v2313
  %v2884 = vunpack.c.h.b16 %v2313
  %v2885 = vunpack.c.l.b16 %v2314
  %v2886 = vunpack.c.h.b16 %v2314
  %v2887 = vunpack.c.l.b16 %v2315
  %v2888 = vunpack.c.h.b16 %v2315
  %v2889 = vunpack.c.l.b16 %v2316
  %v2890 = vunpack.c.h.b16 %v2316
  %v2891 = vunpack.c.l.b16 %v2317
  %v2892 = vunpack.c.h.b16 %v2317
  %v2893 = vunpack.c.l.b16 %v2318
  %v2894 = vunpack.c.h.b16 %v2318
  %v2895 = vunpack.c.l.b16 %v2319
  %v2896 = vunpack.c.h.b16 %v2319
  %v2897 = vunpack.c.l.b16 %v2320
  %v2898 = vunpack.c.h.b16 %v2320
  %v2899 = vunpack.c.l.b16 %v2321
  %v2900 = vunpack.c.h.b16 %v2321
  %v2901 = vunpack.c.l.b16 %v2322
  %v2902 = vunpack.c.h.b16 %v2322
  %v2903 = vunpack.c.l.b16 %v2323
  %v2904 = vunpack.c.h.b16 %v2323
  %v2905 = vunpack.c.l.b16 %v2324
  %v2906 = vunpack.c.h.b16 %v2324
  %v2907 = vunpack.c.l.b16 %v2325
  %v2908 = vunpack.c.h.b16 %v2325
  %v2909 = vunpack.c.l.b16 %v2326
  %v2910 = vunpack.c.h.b16 %v2326
  %v2911 = vunpack.c.l.b16 %v2327
  %v2912 = vunpack.c.h.b16 %v2327
  %v2913 = vunpack.c.l.b16 %v2328
  %v2914 = vunpack.c.h.b16 %v2328
  %v2915 = vunpack.c.l.b16 %v2329
  %v2916 = vunpack.c.h.b16 %v2329
  %v2917 = vunpack.c.l.b16 %v2330
  %v2918 = vunpack.c.h.b16 %v2330
  %v2919 = vunpack.c.l.b16 %v2331
  %v2920 = vunpack.c.h.b16 %v2331
  %v2921 = vunpack.c.l.b16 %v2332
  %v2922 = vunpack.c.h.b16 %v2332
  %v2923 = vunpack.c.l.b16 %v2333
  %v2924 = vunpack.c.h.b16 %v2333
  %v2925 = vunpack.c.l.b16 %v2334
  %v2926 = vunpack.c.h.b16 %v2334
  %v2927 = vunpack.c.l.b16 %v2335
  %v2928 = vunpack.c.h.b16 %v2335
  %v2929 = vunpack.c.l.b16 %v2336
  %v2930 = vunpack.c.h.b16 %v2336
  %v2931 = vunpack.c.l.b16 %v2337
  %v2932 = vunpack.c.h.b16 %v2337
  %v2933 = vunpack.c.l.b16 %v2338
  %v2934 = vunpack.c.h.b16 %v2338
  %v2935 = vunpack.c.l.b16 %v2339
  %v2936 = vunpack.c.h.b16 %v2339
  %v2937 = vunpack.c.l.b16 %v2340
  %v2938 = vunpack.c.h.b16 %v2340
  %v2939 = vunpack.c.l.b16 %v2341
  %v2940 = vunpack.c.h.b16 %v2341
  %v2941 = vunpack.c.l.b16 %v2342
  %v2942 = vunpack.c.h.b16 %v2342
  %v2943 = vunpack.c.l.b16 %v2343
  %v2944 = vunpack.c.h.b16 %v2343
  %v2945 = vunpack.c.l.b16 %v2344
  %v2946 = vunpack.c.h.b16 %v2344
  %v2947 = vunpack.c.l.b16 %v2345
  %v2948 = vunpack.c.h.b16 %v2345
  %v2949 = vunpack.c.l.b16 %v2346
  %v2950 = vunpack.c.h.b16 %v2346
  %v2951 = vunpack.c.l.b16 %v2347
  %v2952 = vunpack.c.h.b16 %v2347
  %v2953 = vunpack.c.l.b16 %v2348
  %v2954 = vunpack.c.h.b16 %v2348
  %v2955 = vunpack.c.l.b16 %v2349
  %v2956 = vunpack.c.h.b16 %v2349
  %v2957 = vunpack.c.l.b16 %v2350
  %v2958 = vunpack.c.h.b16 %v2350
  %v2959 = vunpack.c.l.b16 %v2351
  %v2960 = vunpack.c.h.b16 %v2351
  %v2961 = vunpack.c.l.b16 %v2352
  %v2962 = vunpack.c.h.b16 %v2352
  %v2963 = vunpack.c.l.b16 %v2353
  %v2964 = vunpack.c.h.b16 %v2353
  %v2965 = vunpack.c.l.b16 %v2354
  %v2966 = vunpack.c.h.b16 %v2354
  %v2967 = vunpack.c.l.b16 %v2355
  %v2968 = vunpack.c.h.b16 %v2355
  %v2969 = vunpack.c.l.b16 %v2356
  %v2970 = vunpack.c.h.b16 %v2356
  %v2971 = vunpack.c.l.b16 %v2357
  %v2972 = vunpack.c.h.b16 %v2357
  %v2973 = vunpack.c.l.b16 %v2358
  %v2974 = vunpack.c.h.b16 %v2358
  %v2975 = vunpack.c.l.b16 %v2359
  %v2976 = vunpack.c.h.b16 %v2359
  %v2977 = vunpack.c.l.b16 %v2360
  %v2978 = vunpack.c.h.b16 %v2360
  %v2979 = vunpack.c.l.b16 %v2361
  %v2980 = vunpack.c.h.b16 %v2361
  %v2981 = vunpack.c.l.b16 %v2362
  %v2982 = vunpack.c.h.b16 %v2362
  %v2983 = vunpack.c.l.b16 %v2363
  %v2984 = vunpack.c.h.b16 %v2363
  %v2985 = vunpack.c.l.b16 %v2364
  %v2986 = vunpack.c.h.b16 %v2364
  %v2987 = vunpack.c.l.b16 %v2365
  %v2988 = vunpack.c.h.b16 %v2365
  %v2989 = vunpack.c.l.b16 %v2366
  %v2990 = vunpack.c.h.b16 %v2366
  %v2991 = vunpack.c.l.b16 %v2367
  %v2992 = vunpack.c.h.b16 %v2367
  %v2993 = vunpack.c.l.b16 %v2368
  %v2994 = vunpack.c.h.b16 %v2368
  %v2995 = vunpack.c.l.b16 %v2369
  %v2996 = vunpack.c.h.b16 %v2369
  %v2997 = vunpack.c.l.b16 %v2370
  %v2998 = vunpack.c.h.b16 %v2370
  %v2999 = vunpack.c.l.b16 %v2371
  %v3000 = vunpack.c.h.b16 %v2371
  %v3001 = vunpack.c.l.b16 %v2372
  %v3002 = vunpack.c.h.b16 %v2372
  %v3003 = vunpack.c.l.b16 %v2373
  %v3004 = vunpack.c.h.b16 %v2373
  %v3005 = vunpack.c.l.b16 %v2374
  %v3006 = vunpack.c.h.b16 %v2374
  %v3007 = vunpack.c.l.b16 %v2375
  %v3008 = vunpack.c.h.b16 %v2375
  %v3009 = vunpack.c.l.b16 %v2376
  %v3010 = vunpack.c.h.b16 %v2376
  %v3011 = vunpack.c.l.b16 %v2377
  %v3012 = vunpack.c.h.b16 %v2377
  %v3013 = vunpack.c.l.b16 %v2378
  %v3014 = vunpack.c.h.b16 %v2378
  %v3015 = vunpack.c.l.b16 %v2379
  %v3016 = vunpack.c.h.b16 %v2379
  %v3017 = vunpack.c.l.b16 %v2380
  %v3018 = vunpack.c.h.b16 %v2380
  %v3019 = vunpack.c.l.b16 %v2381
  %v3020 = vunpack.c.h.b16 %v2381
  %v3021 = vunpack.c.l.b16 %v2382
  %v3022 = vunpack.c.h.b16 %v2382
  %v3023 = vunpack.c.l.b16 %v2383
  %v3024 = vunpack.c.h.b16 %v2383
  %v3025 = vunpack.c.l.b16 %v2384
  %v3026 = vunpack.c.h.b16 %v2384
  %v3027 = vunpack.c.l.b16 %v2385
  %v3028 = vunpack.c.h.b16 %v2385
  %v3029 = vunpack.c.l.b16 %v2386
  %v3030 = vunpack.c.h.b16 %v2386
  %v3031 = vunpack.c.l.b16 %v2387
  %v3032 = vunpack.c.h.b16 %v2387
  %v3033 = vunpack.c.l.b16 %v2388
  %v3034 = vunpack.c.h.b16 %v2388
  %v3035 = vunpack.c.l.b16 %v2389
  %v3036 = vunpack.c.h.b16 %v2389
  %v3037 = vunpack.c.l.b16 %v2390
  %v3038 = vunpack.c.h.b16 %v2390
  %v3039 = vunpack.c.l.b16 %v2391
  %v3040 = vunpack.c.h.b16 %v2391
  %v3041 = vunpack.c.l.b16 %v2392
  %v3042 = vunpack.c.h.b16 %v2392
  %v3043 = vunpack.c.l.b16 %v2393
  %v3044 = vunpack.c.h.b16 %v2393
  %v3045 = vunpack.c.l.b16 %v2394
  %v3046 = vunpack.c.h.b16 %v2394
  %v3047 = vunpack.c.l.b16 %v2395
  %v3048 = vunpack.c.h.b16 %v2395
  %v3049 = vunpack.c.l.b16 %v2396
  %v3050 = vunpack.c.h.b16 %v2396
  %v3051 = vunpack.c.l.b16 %v2397
  %v3052 = vunpack.c.h.b16 %v2397
  %v3053 = vunpack.c.l.b16 %v2398
  %v3054 = vunpack.c.h.b16 %v2398
  %v3055 = vunpack.c.l.b16 %v2399
  %v3056 = vunpack.c.h.b16 %v2399
  %v3057 = vunpack.c.l.b16 %v2400
  %v3058 = vunpack.c.h.b16 %v2400
  %v3059 = vunpack.c.l.b16 %v2401
  %v3060 = vunpack.c.h.b16 %v2401
  %v3061 = vunpack.c.l.b16 %v2402
  %v3062 = vunpack.c.h.b16 %v2402
  %v3063 = vunpack.c.l.b16 %v2403
  %v3064 = vunpack.c.h.b16 %v2403
  %v3065 = vunpack.c.l.b16 %v2404
  %v3066 = vunpack.c.h.b16 %v2404
  %v3067 = vunpack.c.l.b16 %v2405
  %v3068 = vunpack.c.h.b16 %v2405
  %v3069 = vunpack.c.l.b16 %v2406
  %v3070 = vunpack.c.h.b16 %v2406
  %v3071 = vunpack.c.l.b16 %v2407
  %v3072 = vunpack.c.h.b16 %v2407
  %v3073 = vunpack.c.l.b16 %v2408
  %v3074 = vunpack.c.h.b16 %v2408
  %v3075 = vunpack.c.l.b16 %v2409
  %v3076 = vunpack.c.h.b16 %v2409
  %v3077 = vunpack.c.l.b16 %v2410
  %v3078 = vunpack.c.h.b16 %v2410
  %v3079 = vunpack.c.l.b16 %v2411
  %v3080 = vunpack.c.h.b16 %v2411
  %v3081 = vunpack.c.l.b16 %v2412
  %v3082 = vunpack.c.h.b16 %v2412
  %v3083 = vunpack.c.l.b16 %v2413
  %v3084 = vunpack.c.h.b16 %v2413
  %v3085 = vunpack.c.l.b16 %v2414
  %v3086 = vunpack.c.h.b16 %v2414
  %v3087 = vunpack.c.l.b16 %v2415
  %v3088 = vunpack.c.h.b16 %v2415
  %v3089 = vunpack.c.l.b16 %v2416
  %v3090 = vunpack.c.h.b16 %v2416
  %v3091 = vunpack.c.l.b16 %v2417
  %v3092 = vunpack.c.h.b16 %v2417
  %v3093 = vunpack.c.l.b16 %v2418
  %v3094 = vunpack.c.h.b16 %v2418
  %v3095 = vunpack.c.l.b16 %v2419
  %v3096 = vunpack.c.h.b16 %v2419
  %v3097 = vunpack.c.l.b16 %v2420
  %v3098 = vunpack.c.h.b16 %v2420
  %v3099 = vunpack.c.l.b16 %v2421
  %v3100 = vunpack.c.h.b16 %v2421
  %v3101 = vunpack.c.l.b16 %v2422
  %v3102 = vunpack.c.h.b16 %v2422
  %v3103 = vunpack.c.l.b16 %v2423
  %v3104 = vunpack.c.h.b16 %v2423
  %v3105 = vunpack.c.l.b16 %v2424
  %v3106 = vunpack.c.h.b16 %v2424
  %v3107 = vunpack.c.l.b16 %v2425
  %v3108 = vunpack.c.h.b16 %v2425
  %v3109 = vunpack.c.l.b16 %v2426
  %v3110 = vunpack.c.h.b16 %v2426
  %v3111 = vunpack.c.l.b16 %v2427
  %v3112 = vunpack.c.h.b16 %v2427
  %v3113 = vunpack.c.l.b16 %v2428
  %v3114 = vunpack.c.h.b16 %v2428
  %v3115 = vunpack.c.l.b16 %v2429
  %v3116 = vunpack.c.h.b16 %v2429
  %v3117 = vunpack.c.l.b16 %v2430
  %v3118 = vunpack.c.h.b16 %v2430
  %v3119 = vunpack.c.l.b16 %v2431
  %v3120 = vunpack.c.h.b16 %v2431
  %v3121 = vunpack.c.l.b16 %v2432
  %v3122 = vunpack.c.h.b16 %v2432
  %v3123 = vunpack.c.l.b16 %v2433
  %v3124 = vunpack.c.h.b16 %v2433
  %v3125 = vunpack.c.l.b16 %v2434
  %v3126 = vunpack.c.h.b16 %v2434
  %v3127 = vunpack.c.l.b16 %v2435
  %v3128 = vunpack.c.h.b16 %v2435
  %v3129 = vunpack.c.l.b16 %v2436
  %v3130 = vunpack.c.h.b16 %v2436
  %v3131 = vunpack.c.l.b16 %v2437
  %v3132 = vunpack.c.h.b16 %v2437
  %v3133 = vunpack.c.l.b16 %v2438
  %v3134 = vunpack.c.h.b16 %v2438
  %v3135 = vunpack.c.l.b16 %v2439
  %v3136 = vunpack.c.h.b16 %v2439
  %v3137 = vunpack.c.l.b16 %v2440
  %v3138 = vunpack.c.h.b16 %v2440
  %v3139 = vunpack.c.l.b16 %v2441
  %v3140 = vunpack.c.h.b16 %v2441
  %v3141 = vunpack.c.l.b16 %v2442
  %v3142 = vunpack.c.h.b16 %v2442
  %v3143 = vunpack.c.l.b16 %v2443
  %v3144 = vunpack.c.h.b16 %v2443
  %v3145 = vunpack.c.l.b16 %v2444
  %v3146 = vunpack.c.h.b16 %v2444
  %v3147 = vunpack.c.l.b16 %v2445
  %v3148 = vunpack.c.h.b16 %v2445
  %v3149 = vunpack.c.l.b16 %v2446
  %v3150 = vunpack.c.h.b16 %v2446
  %v3151 = vunpack.c.l.b16 %v2447
  %v3152 = vunpack.c.h.b16 %v2447
  %v3153 = vunpack.c.l.b16 %v2448
  %v3154 = vunpack.c.h.b16 %v2448
  %v3155 = vunpack.c.l.b16 %v2449
  %v3156 = vunpack.c.h.b16 %v2449
  %v3157 = vunpack.c.l.b16 %v2450
  %v3158 = vunpack.c.h.b16 %v2450
  %v3159 = vunpack.c.l.b16 %v2451
  %v3160 = vunpack.c.h.b16 %v2451
  %v3161 = vunpack.c.l.b16 %v2452
  %v3162 = vunpack.c.h.b16 %v2452
  %v3163 = vunpack.c.l.b16 %v2453
  %v3164 = vunpack.c.h.b16 %v2453
  %v3165 = vunpack.c.l.b16 %v2454
  %v3166 = vunpack.c.h.b16 %v2454
  %v3167 = vunpack.c.l.b16 %v2455
  %v3168 = vunpack.c.h.b16 %v2455
  %v3169 = vunpack.c.l.b16 %v2456
  %v3170 = vunpack.c.h.b16 %v2456
  %v3171 = vunpack.c.l.b16 %v2457
  %v3172 = vunpack.c.h.b16 %v2457
  %v3173 = vunpack.c.l.b16 %v2458
  %v3174 = vunpack.c.h.b16 %v2458
  %v3175 = vunpack.c.l.b16 %v2459
  %v3176 = vunpack.c.h.b16 %v2459
  %v3177 = vunpack.c.l.b16 %v2460
  %v3178 = vunpack.c.h.b16 %v2460
  %v3179 = vunpack.c.l.b16 %v2461
  %v3180 = vunpack.c.h.b16 %v2461
  %v3181 = vunpack.c.l.b16 %v2462
  %v3182 = vunpack.c.h.b16 %v2462
  %v3183 = vunpack.c.l.b16 %v2463
  %v3184 = vunpack.c.h.b16 %v2463
  %v3185 = vunpack.c.l.b16 %v2464
  %v3186 = vunpack.c.h.b16 %v2464
  %v3187 = vunpack.c.l.b16 %v2465
  %v3188 = vunpack.c.h.b16 %v2465
  %v3189 = vunpack.c.l.b16 %v2466
  %v3190 = vunpack.c.h.b16 %v2466
  %v3191 = vunpack.c.l.b16 %v2467
  %v3192 = vunpack.c.h.b16 %v2467
  %v3193 = vunpack.c.l.b16 %v2468
  %v3194 = vunpack.c.h.b16 %v2468
  %v3195 = vunpack.c.l.b16 %v2469
  %v3196 = vunpack.c.h.b16 %v2469
  %v3197 = vunpack.c.l.b16 %v2470
  %v3198 = vunpack.c.h.b16 %v2470
  %v3199 = vunpack.c.l.b16 %v2471
  %v3200 = vunpack.c.h.b16 %v2471
  %v3201 = vunpack.c.l.b16 %v2472
  %v3202 = vunpack.c.h.b16 %v2472
  %v3203 = vunpack.c.l.b16 %v2473
  %v3204 = vunpack.c.h.b16 %v2473
  %v3205 = vunpack.c.l.b16 %v2474
  %v3206 = vunpack.c.h.b16 %v2474
  %v3207 = vunpack.c.l.b16 %v2475
  %v3208 = vunpack.c.h.b16 %v2475
  %v3209 = vunpack.c.l.b16 %v2476
  %v3210 = vunpack.c.h.b16 %v2476
  %v3211 = vunpack.c.l.b16 %v2477
  %v3212 = vunpack.c.h.b16 %v2477
  %v3213 = vunpack.c.l.b16 %v2478
  %v3214 = vunpack.c.h.b16 %v2478
  %v3215 = vunpack.c.l.b16 %v2479
  %v3216 = vunpack.c.h.b16 %v2479
  %v3217 = vunpack.c.l.b16 %v2480
  %v3218 = vunpack.c.h.b16 %v2480
  %v3219 = vunpack.c.l.b16 %v2481
  %v3220 = vunpack.c.h.b16 %v2481
  %v3221 = vunpack.c.l.b16 %v2482
  %v3222 = vunpack.c.h.b16 %v2482
  %v3223 = vunpack.c.l.b16 %v2483
  %v3224 = vunpack.c.h.b16 %v2483
  %v3225 = vunpack.c.l.b16 %v2484
  %v3226 = vunpack.c.h.b16 %v2484
  %v3227 = vunpack.c.l.b16 %v2485
  %v3228 = vunpack.c.h.b16 %v2485
  %v3229 = vunpack.c.l.b16 %v2486
  %v3230 = vunpack.c.h.b16 %v2486
  %v3231 = vunpack.c.l.b16 %v2487
  %v3232 = vunpack.c.h.b16 %v2487
  %v3233 = vunpack.c.l.b16 %v2488
  %v3234 = vunpack.c.h.b16 %v2488
  %v3235 = vunpack.c.l.b16 %v2489
  %v3236 = vunpack.c.h.b16 %v2489
  %v3237 = vunpack.c.l.b16 %v2490
  %v3238 = vunpack.c.h.b16 %v2490
  %v3239 = vunpack.c.l.b16 %v2491
  %v3240 = vunpack.c.h.b16 %v2491
  %v3241 = vunpack.c.l.b16 %v2492
  %v3242 = vunpack.c.h.b16 %v2492
  %v3243 = vunpack.c.l.b16 %v2493
  %v3244 = vunpack.c.h.b16 %v2493
  %v3245 = vunpack.c.l.b16 %v2494
  %v3246 = vunpack.c.h.b16 %v2494
  %v3247 = vunpack.c.l.b16 %v2495
  %v3248 = vunpack.c.h.b16 %v2495
  %v3249 = vunpack.c.l.b16 %v2496
  %v3250 = vunpack.c.h.b16 %v2496
  %v3251 = vunpack.c.l.b16 %v2497
  %v3252 = vunpack.c.h.b16 %v2497
  %v3253 = vunpack.c.l.b16 %v2498
  %v3254 = vunpack.c.h.b16 %v2498
  %v3255 = vunpack.c.l.b16 %v2499
  %v3256 = vunpack.c.h.b16 %v2499
  %v3257 = vunpack.c.l.b16 %v2500
  %v3258 = vunpack.c.h.b16 %v2500
  %v3259 = vunpack.c.l.b16 %v2501
  %v3260 = vunpack.c.h.b16 %v2501
  %v3261 = vunpack.c.l.b16 %v2502
  %v3262 = vunpack.c.h.b16 %v2502
  %v3263 = vunpack.c.l.b16 %v2503
  %v3264 = vunpack.c.h.b16 %v2503
  %v3265 = vunpack.c.l.b16 %v2504
  %v3266 = vunpack.c.h.b16 %v2504
  %v3267 = vunpack.c.l.b16 %v2505
  %v3268 = vunpack.c.h.b16 %v2505
  %v3269 = vunpack.c.l.b16 %v2506
  %v3270 = vunpack.c.h.b16 %v2506
  %v3271 = vunpack.c.l.b16 %v2507
  %v3272 = vunpack.c.h.b16 %v2507
  %v3273 = vunpack.c.l.b16 %v2508
  %v3274 = vunpack.c.h.b16 %v2508
  %v3275 = vunpack.c.l.b16 %v2509
  %v3276 = vunpack.c.h.b16 %v2509
  %v3277 = vunpack.c.l.b16 %v2510
  %v3278 = vunpack.c.h.b16 %v2510
  %v3279 = vunpack.c.l.b16 %v2511
  %v3280 = vunpack.c.h.b16 %v2511
  %v3281 = vunpack.c.l.b16 %v2512
  %v3282 = vunpack.c.h.b16 %v2512
  %v3283 = vunpack.c.l.b16 %v2513
  %v3284 = vunpack.c.h.b16 %v2513
  %v3285 = vunpack.c.l.b16 %v2514
  %v3286 = vunpack.c.h.b16 %v2514
  %v3287 = vunpack.c.l.b16 %v2515
  %v3288 = vunpack.c.h.b16 %v2515
  %v3289 = vunpack.c.l.b16 %v2516
  %v3290 = vunpack.c.h.b16 %v2516
  %v3291 = vunpack.c.l.b16 %v2517
  %v3292 = vunpack.c.h.b16 %v2517
  %v3293 = vunpack.c.l.b16 %v2518
  %v3294 = vunpack.c.h.b16 %v2518
  %v3295 = vunpack.c.l.b16 %v2519
  %v3296 = vunpack.c.h.b16 %v2519
  %v3297 = vunpack.c.l.b16 %v2520
  %v3298 = vunpack.c.h.b16 %v2520
  %v3299 = vunpack.c.l.b16 %v2521
  %v3300 = vunpack.c.h.b16 %v2521
  %v3301 = vunpack.c.l.b16 %v2522
  %v3302 = vunpack.c.h.b16 %v2522
  %v3303 = vunpack.c.l.b16 %v2523
  %v3304 = vunpack.c.h.b16 %v2523
  %v3305 = vunpack.c.l.b16 %v2524
  %v3306 = vunpack.c.h.b16 %v2524
  %v3307 = vunpack.c.l.b16 %v2525
  %v3308 = vunpack.c.h.b16 %v2525
  %v3309 = vunpack.c.l.b16 %v2526
  %v3310 = vunpack.c.h.b16 %v2526
  %v3311 = vunpack.c.l.b16 %v2527
  %v3312 = vunpack.c.h.b16 %v2527
  %v3313 = vunpack.c.l.b16 %v2528
  %v3314 = vunpack.c.h.b16 %v2528
  %v3315 = vunpack.c.l.b16 %v2529
  %v3316 = vunpack.c.h.b16 %v2529
  %v3317 = vunpack.c.l.b16 %v2530
  %v3318 = vunpack.c.h.b16 %v2530
  %v3319 = vunpack.c.l.b16 %v2531
  %v3320 = vunpack.c.h.b16 %v2531
  %v3321 = vunpack.c.l.b16 %v2532
  %v3322 = vunpack.c.h.b16 %v2532
  %v3323 = vpack.c.b16 %v2815, %v2811
  %v3324 = vpack.c.b16 %v2816, %v2812
  %v3325 = vpack.c.b16 %v2817, %v2813
  %v3326 = vpack.c.b16 %v2818, %v2814
  %v3327 = vpack.c.b16 %v2823, %v2819
  %v3328 = vpack.c.b16 %v2824, %v2820
  %v3329 = vpack.c.b16 %v2825, %v2821
  %v3330 = vpack.c.b16 %v2826, %v2822
  %v3331 = vpack.c.b16 %v2831, %v2827
  %v3332 = vpack.c.b16 %v2832, %v2828
  %v3333 = vpack.c.b16 %v2833, %v2829
  %v3334 = vpack.c.b16 %v2834, %v2830
  %v3335 = vpack.c.b16 %v2839, %v2835
  %v3336 = vpack.c.b16 %v2840, %v2836
  %v3337 = vpack.c.b16 %v2841, %v2837
  %v3338 = vpack.c.b16 %v2842, %v2838
  %v3339 = vpack.c.b16 %v2847, %v2843
  %v3340 = vpack.c.b16 %v2848, %v2844
  %v3341 = vpack.c.b16 %v2849, %v2845
  %v3342 = vpack.c.b16 %v2850, %v2846
  %v3343 = vpack.c.b16 %v2855, %v2851
  %v3344 = vpack.c.b16 %v2856, %v2852
  %v3345 = vpack.c.b16 %v2857, %v2853
  %v3346 = vpack.c.b16 %v2858, %v2854
  %v3347 = vpack.c.b16 %v2863, %v2859
  %v3348 = vpack.c.b16 %v2864, %v2860
  %v3349 = vpack.c.b16 %v2865, %v2861
  %v3350 = vpack.c.b16 %v2866, %v2862
  %v3351 = vpack.c.b16 %v2871, %v2867
  %v3352 = vpack.c.b16 %v2872, %v2868
  %v3353 = vpack.c.b16 %v2873, %v2869
  %v3354 = vpack.c.b16 %v2874, %v2870
  %v3355 = vpack.c.b16 %v2879, %v2875
  %v3356 = vpack.c.b16 %v2880, %v2876
  %v3357 = vpack.c.b16 %v2881, %v2877
  %v3358 = vpack.c.b16 %v2882, %v2878
  %v3359 = vpack.c.b16 %v2887, %v2883
  %v3360 = vpack.c.b16 %v2888, %v2884
  %v3361 = vpack.c.b16 %v2889, %v2885
  %v3362 = vpack.c.b16 %v2890, %v2886
  %v3363 = vpack.c.b16 %v2895, %v2891
  %v3364 = vpack.c.b16 %v2896, %v2892
  %v3365 = vpack.c.b16 %v2897, %v2893
  %v3366 = vpack.c.b16 %v2898, %v2894
  %v3367 = vpack.c.b16 %v2903, %v2899
  %v3368 = vpack.c.b16 %v2904, %v2900
  %v3369 = vpack.c.b16 %v2905, %v2901
  %v3370 = vpack.c.b16 %v2906, %v2902
  %v3371 = vpack.c.b16 %v2911, %v2907
  %v3372 = vpack.c.b16 %v2912, %v2908
  %v3373 = vpack.c.b16 %v2913, %v2909
  %v3374 = vpack.c.b16 %v2914, %v2910
  %v3375 = vpack.c.b16 %v2919, %v2915
  %v3376 = vpack.c.b16 %v2920, %v2916
  %v3377 = vpack.c.b16 %v2921, %v2917
  %v3378 = vpack.c.b16 %v2922, %v2918
  %v3379 = vpack.c.b16 %v2927, %v2923
  %v3380 = vpack.c.b16 %v2928, %v2924
  %v3381 = vpack.c.b16 %v2929, %v2925
  %v3382 = vpack.c.b16 %v2930, %v2926
  %v3383 = vpack.c.b16 %v2935, %v2931
  %v3384 = vpack.c.b16 %v2936, %v2932
  %v3385 = vpack.c.b16 %v2937, %v2933
  %v3386 = vpack.c.b16 %v2938, %v2934
  %v3387 = vpack.c.b16 %v2943, %v2939
  %v3388 = vpack.c.b16 %v2944, %v2940
  %v3389 = vpack.c.b16 %v2945, %v2941
  %v3390 = vpack.c.b16 %v2946, %v2942
  %v3391 = vpack.c.b16 %v2951, %v2947
  %v3392 = vpack.c.b16 %v2952, %v2948
  %v3393 = vpack.c.b16 %v2953, %v2949
  %v3394 = vpack.c.b16 %v2954, %v2950
  %v3395 = vpack.c.b16 %v2959, %v2955
  %v3396 = vpack.c.b16 %v2960, %v2956
  %v3397 = vpack.c.b16 %v2961, %v2957
  %v3398 = vpack.c.b16 %v2962, %v2958
  %v3399 = vpack.c.b16 %v2967, %v2963
  %v3400 = vpack.c.b16 %v2968, %v2964
  %v3401 = vpack.c.b16 %v2969, %v2965
  %v3402 = vpack.c.b16 %v2970, %v2966
  %v3403 = vpack.c.b16 %v2975, %v2971
  %v3404 = vpack.c.b16 %v2976, %v2972
  %v3405 = vpack.c.b16 %v2977, %v2973
  %v3406 = vpack.c.b16 %v2978, %v2974
  %v3407 = vpack.c.b16 %v2983, %v2979
  %v3408 = vpack.c.b16 %v2984, %v2980
  %v3409 = vpack.c.b16 %v2985, %v2981
  %v3410 = vpack.c.b16 %v2986, %v2982
  %v3411 = vpack.c.b16 %v2991, %v2987
  %v3412 = vpack.c.b16 %v2992, %v2988
  %v3413 = vpack.c.b16 %v2993, %v2989
  %v3414 = vpack.c.b16 %v2994, %v2990
  %v3415 = vpack.c.b16 %v2999, %v2995
  %v3416 = vpack.c.b16 %v3000, %v2996
  %v3417 = vpack.c.b16 %v3001, %v2997
  %v3418 = vpack.c.b16 %v3002, %v2998
  %v3419 = vpack.c.b16 %v3007, %v3003
  %v3420 = vpack.c.b16 %v3008, %v3004
  %v3421 = vpack.c.b16 %v3009, %v3005
  %v3422 = vpack.c.b16 %v3010, %v3006
  %v3423 = vpack.c.b16 %v3015, %v3011
  %v3424 = vpack.c.b16 %v3016, %v3012
  %v3425 = vpack.c.b16 %v3017, %v3013
  %v3426 = vpack.c.b16 %v3018, %v3014
  %v3427 = vpack.c.b16 %v3023, %v3019
  %v3428 = vpack.c.b16 %v3024, %v3020
  %v3429 = vpack.c.b16 %v3025, %v3021
  %v3430 = vpack.c.b16 %v3026, %v3022
  %v3431 = vpack.c.b16 %v3031, %v3027
  %v3432 = vpack.c.b16 %v3032, %v3028
  %v3433 = vpack.c.b16 %v3033, %v3029
  %v3434 = vpack.c.b16 %v3034, %v3030
  %v3435 = vpack.c.b16 %v3039, %v3035
  %v3436 = vpack.c.b16 %v3040, %v3036
  %v3437 = vpack.c.b16 %v3041, %v3037
  %v3438 = vpack.c.b16 %v3042, %v3038
  %v3439 = vpack.c.b16 %v3047, %v3043
  %v3440 = vpack.c.b16 %v3048, %v3044
  %v3441 = vpack.c.b16 %v3049, %v3045
  %v3442 = vpack.c.b16 %v3050, %v3046
  %v3443 = vpack.c.b16 %v3055, %v3051
  %v3444 = vpack.c.b16 %v3056, %v3052
  %v3445 = vpack.c.b16 %v3057, %v3053
  %v3446 = vpack.c.b16 %v3058, %v3054
  %v3447 = vpack.c.b16 %v3063, %v3059
  %v3448 = vpack.c.b16 %v3064, %v3060
  %v3449 = vpack.c.b16 %v3065, %v3061
  %v3450 = vpack.c.b16 %v3066, %v3062
  %v3451 = vpack.c.b16 %v3071, %v3067
  %v3452 = vpack.c.b16 %v3072, %v3068
  %v3453 = vpack.c.b16 %v3073, %v3069
  %v3454 = vpack.c.b16 %v3074, %v3070
  %v3455 = vpack.c.b16 %v3079, %v3075
  %v3456 = vpack.c.b16 %v3080, %v3076
  %v3457 = vpack.c.b16 %v3081, %v3077
  %v3458 = vpack.c.b16 %v3082, %v3078
  %v3459 = vpack.c.b16 %v3087, %v3083
  %v3460 = vpack.c.b16 %v3088, %v3084
  %v3461 = vpack.c.b16 %v3089, %v3085
  %v3462 = vpack.c.b16 %v3090, %v3086
  %v3463 = vpack.c.b16 %v3095, %v3091
  %v3464 = vpack.c.b16 %v3096, %v3092
  %v3465 = vpack.c.b16 %v3097, %v3093
  %v3466 = vpack.c.b16 %v3098, %v3094
  %v3467 = vpack.c.b16 %v3103, %v3099
  %v3468 = vpack.c.b16 %v3104, %v3100
  %v3469 = vpack.c.b16 %v3105, %v3101
  %v3470 = vpack.c.b16 %v3106, %v3102
  %v3471 = vpack.c.b16 %v3111, %v3107
  %v3472 = vpack.c.b16 %v3112, %v3108
  %v3473 = vpack.c.b16 %v3113, %v3109
  %v3474 = vpack.c.b16 %v3114, %v3110
  %v3475 = vpack.c.b16 %v3119, %v3115
  %v3476 = vpack.c.b16 %v3120, %v3116
  %v3477 = vpack.c.b16 %v3121, %v3117
  %v3478 = vpack.c.b16 %v3122, %v3118
  %v3479 = vpack.c.b16 %v3127, %v3123
  %v3480 = vpack.c.b16 %v3128, %v3124
  %v3481 = vpack.c.b16 %v3129, %v3125
  %v3482 = vpack.c.b16 %v3130, %v3126
  %v3483 = vpack.c.b16 %v3135, %v3131
  %v3484 = vpack.c.b16 %v3136, %v3132
  %v3485 = vpack.c.b16 %v3137, %v3133
  %v3486 = vpack.c.b16 %v3138, %v3134
  %v3487 = vpack.c.b16 %v3143, %v3139
  %v3488 = vpack.c.b16 %v3144, %v3140
  %v3489 = vpack.c.b16 %v3145, %v3141
  %v3490 = vpack.c.b16 %v3146, %v3142
  %v3491 = vpack.c.b16 %v3151, %v3147
  %v3492 = vpack.c.b16 %v3152, %v3148
  %v3493 = vpack.c.b16 %v3153, %v3149
  %v3494 = vpack.c.b16 %v3154, %v3150
  %v3495 = vpack.c.b16 %v3159, %v3155
  %v3496 = vpack.c.b16 %v3160, %v3156
  %v3497 = vpack.c.b16 %v3161, %v3157
  %v3498 = vpack.c.b16 %v3162, %v3158
  %v3499 = vpack.c.b16 %v3167, %v3163
  %v3500 = vpack.c.b16 %v3168, %v3164
  %v3501 = vpack.c.b16 %v3169, %v3165
  %v3502 = vpack.c.b16 %v3170, %v3166
  %v3503 = vpack.c.b16 %v3175, %v3171
  %v3504 = vpack.c.b16 %v3176, %v3172
  %v3505 = vpack.c.b16 %v3177, %v3173
  %v3506 = vpack.c.b16 %v3178, %v3174
  %v3507 = vpack.c.b16 %v3183, %v3179
  %v3508 = vpack.c.b16 %v3184, %v3180
  %v3509 = vpack.c.b16 %v3185, %v3181
  %v3510 = vpack.c.b16 %v3186, %v3182
  %v3511 = vpack.c.b16 %v3191, %v3187
  %v3512 = vpack.c.b16 %v3192, %v3188
  %v3513 = vpack.c.b16 %v3193, %v3189
  %v3514 = vpack.c.b16 %v3194, %v3190
  %v3515 = vpack.c.b16 %v3199, %v3195
  %v3516 = vpack.c.b16 %v3200, %v3196
  %v3517 = vpack.c.b16 %v3201, %v3197
  %v3518 = vpack.c.b16 %v3202, %v3198
  %v3519 = vpack.c.b16 %v3207, %v3203
  %v3520 = vpack.c.b16 %v3208, %v3204
  %v3521 = vpack.c.b16 %v3209, %v3205
  %v3522 = vpack.c.b16 %v3210, %v3206
  %v3523 = vpack.c.b16 %v3215, %v3211
  %v3524 = vpack.c.b16 %v3216, %v3212
  %v3525 = vpack.c.b16 %v3217, %v3213
  %v3526 = vpack.c.b16 %v3218, %v3214
  %v3527 = vpack.c.b16 %v3223, %v3219
  %v3528 = vpack.c.b16 %v3224, %v3220
  %v3529 = vpack.c.b16 %v3225, %v3221
  %v3530 = vpack.c.b16 %v3226, %v3222
  %v3531 = vpack.c.b16 %v3231, %v3227
  %v3532 = vpack.c.b16 %v3232, %v3228
  %v3533 = vpack.c.b16 %v3233, %v3229
  %v3534 = vpack.c.b16 %v3234, %v3230
  %v3535 = vpack.c.b16 %v3239, %v3235
  %v3536 = vpack.c.b16 %v3240, %v3236
  %v3537 = vpack.c.b16 %v3241, %v3237
  %v3538 = vpack.c.b16 %v3242, %v3238
  %v3539 = vpack.c.b16 %v3247, %v3243
  %v3540 = vpack.c.b16 %v3248, %v3244
  %v3541 = vpack.c.b16 %v3249, %v3245
  %v3542 = vpack.c.b16 %v3250, %v3246
  %v3543 = vpack.c.b16 %v3255, %v3251
  %v3544 = vpack.c.b16 %v3256, %v3252
  %v3545 = vpack.c.b16 %v3257, %v3253
  %v3546 = vpack.c.b16 %v3258, %v3254
  %v3547 = vpack.c.b16 %v3263, %v3259
  %v3548 = vpack.c.b16 %v3264, %v3260
  %v3549 = vpack.c.b16 %v3265, %v3261
  %v3550 = vpack.c.b16 %v3266, %v3262
  %v3551 = vpack.c.b16 %v3271, %v3267
  %v3552 = vpack.c.b16 %v3272, %v3268
  %v3553 = vpack.c.b16 %v3273, %v3269
  %v3554 = vpack.c.b16 %v3274, %v3270
  %v3555 = vpack.c.b16 %v3279, %v3275
  %v3556 = vpack.c.b16 %v3280, %v3276
  %v3557 = vpack.c.b16 %v3281, %v3277
  %v3558 = vpack.c.b16 %v3282, %v3278
  %v3559 = vpack.c.b16 %v3287, %v3283
  %v3560 = vpack.c.b16 %v3288, %v3284
  %v3561 = vpack.c.b16 %v3289, %v3285
  %v3562 = vpack.c.b16 %v3290, %v3286
  %v3563 = vpack.c.b16 %v3295, %v3291
  %v3564 = vpack.c.b16 %v3296, %v3292
  %v3565 = vpack.c.b16 %v3297, %v3293
  %v3566 = vpack.c.b16 %v3298, %v3294
  %v3567 = vpack.c.b16 %v3303, %v3299
  %v3568 = vpack.c.b16 %v3304, %v3300
  %v3569 = vpack.c.b16 %v3305, %v3301
  %v3570 = vpack.c.b16 %v3306, %v3302
  %v3571 = vpack.c.b16 %v3311, %v3307
  %v3572 = vpack.c.b16 %v3312, %v3308
  %v3573 = vpack.c.b16 %v3313, %v3309
  %v3574 = vpack.c.b16 %v3314, %v3310
  %v3575 = vpack.c.b16 %v3319, %v3315
  %v3576 = vpack.c.b16 %v3320, %v3316
  %v3577 = vpack.c.b16 %v3321, %v3317
  %v3578 = vpack.c.b16 %v3322, %v3318
  %3835 = vmatprep.subr.bf16.mxu0 %v3324
  %3836 = vmatpush1.bf16.msra.mxu0 %v3323
  %3837 = vmatprep.subr.bf16.mxu0 %v3328
  %3838 = vmatpush1.bf16.msra.mxu0 %v3327
  %3839 = vmatprep.subr.bf16.mxu0 %v3332
  %3840 = vmatpush1.bf16.msra.mxu0 %v3331
  %3841 = vmatprep.subr.bf16.mxu0 %v3336
  %3842 = vmatpush1.bf16.msra.mxu0 %v3335
  %3843 = vmatprep.subr.bf16.mxu0 %v3340
  %3844 = vmatpush1.bf16.msra.mxu0 %v3339
  %3845 = vmatprep.subr.bf16.mxu0 %v3344
  %3846 = vmatpush1.bf16.msra.mxu0 %v3343
  %3847 = vmatprep.subr.bf16.mxu0 %v3348
  %3848 = vmatpush1.bf16.msra.mxu0 %v3347
  %3849 = vmatprep.subr.bf16.mxu0 %v3352
  %3850 = vmatpush1.bf16.msra.mxu0 %v3351
  %3851 = vmatprep.subr.bf16.mxu0 %v3356
  %3852 = vmatpush1.bf16.msra.mxu0 %v3355
  %3853 = vmatprep.subr.bf16.mxu0 %v3360
  %3854 = vmatpush1.bf16.msra.mxu0 %v3359
  %3855 = vmatprep.subr.bf16.mxu0 %v3364
  %3856 = vmatpush1.bf16.msra.mxu0 %v3363
  %3857 = vmatprep.subr.bf16.mxu0 %v3368
  %3858 = vmatpush1.bf16.msra.mxu0 %v3367
  %3859 = vmatprep.subr.bf16.mxu0 %v3372
  %3860 = vmatpush1.bf16.msra.mxu0 %v3371
  %3861 = vmatprep.subr.bf16.mxu0 %v3376
  %3862 = vmatpush1.bf16.msra.mxu0 %v3375
  %3863 = vmatprep.subr.bf16.mxu0 %v3380
  %3864 = vmatpush1.bf16.msra.mxu0 %v3379
  %3865 = vmatprep.subr.bf16.mxu0 %v3384
  %3866 = vmatpush1.bf16.msra.mxu0 %v3383
  %3867 = vmatprep.mubr.bf16.mxu0 %v2262
  %3868 = vmatmul.mubr.bf16.gmra.mrb[0].mxu0 %v2261
  %v3869 = vpop.f32.mrb[0].mxu0
  %v3870 = vadd.f32 %v2538, %v3869
  %v3871 = vpop.f32.mrb[0].mxu0
  %v3872 = vadd.f32 %v2542, %v3871
  %v3873 = vpop.f32.mrb[0].mxu0
  %v3874 = vadd.f32 %v2538, %v3873
  %v3875 = vpop.f32.mrb[0].mxu0
  %v3876 = vadd.f32 %v2542, %v3875
  %3877 = vmatprep.mubr.bf16.mxu0 %v2270
  %3878 = vmatmul.mubr.bf16.gmra.mrb[0].mxu0 %v2269
  %v3879 = vpop.f32.mrb[0].mxu0
  %v3880 = vadd.f32 %v2538, %v3879
  %v3881 = vpop.f32.mrb[0].mxu0
  %v3882 = vadd.f32 %v2542, %v3881
  %v3883 = vpop.f32.mrb[0].mxu0
  %v3884 = vadd.f32 %v2538, %v3883
  %v3885 = vpop.f32.mrb[0].mxu0
  %v3886 = vadd.f32 %v2542, %v3885
  %3887 = vdwg.mxu0
  %3888 = vmatprep.subr.bf16.mxu0 %v3388
  %3889 = vmatpush1.bf16.msra.mxu0 %v3387
  %3890 = vmatprep.subr.bf16.mxu0 %v3392
  %3891 = vmatpush1.bf16.msra.mxu0 %v3391
  %3892 = vmatprep.subr.bf16.mxu0 %v3396
  %3893 = vmatpush1.bf16.msra.mxu0 %v3395
  %3894 = vmatprep.subr.bf16.mxu0 %v3400
  %3895 = vmatpush1.bf16.msra.mxu0 %v3399
  %3896 = vmatprep.subr.bf16.mxu0 %v3404
  %3897 = vmatpush1.bf16.msra.mxu0 %v3403
  %3898 = vmatprep.subr.bf16.mxu0 %v3408
  %3899 = vmatpush1.bf16.msra.mxu0 %v3407
  %3900 = vmatprep.subr.bf16.mxu0 %v3412
  %3901 = vmatpush1.bf16.msra.mxu0 %v3411
  %3902 = vmatprep.subr.bf16.mxu0 %v3416
  %3903 = vmatpush1.bf16.msra.mxu0 %v3415
  %3904 = vmatprep.subr.bf16.mxu0 %v3420
  %3905 = vmatpush1.bf16.msra.mxu0 %v3419
  %3906 = vmatprep.subr.bf16.mxu0 %v3424
  %3907 = vmatpush1.bf16.msra.mxu0 %v3423
  %3908 = vmatprep.subr.bf16.mxu0 %v3428
  %3909 = vmatpush1.bf16.msra.mxu0 %v3427
  %3910 = vmatprep.subr.bf16.mxu0 %v3432
  %3911 = vmatpush1.bf16.msra.mxu0 %v3431
  %3912 = vmatprep.subr.bf16.mxu0 %v3436
  %3913 = vmatpush1.bf16.msra.mxu0 %v3435
  %3914 = vmatprep.subr.bf16.mxu0 %v3440
  %3915 = vmatpush1.bf16.msra.mxu0 %v3439
  %3916 = vmatprep.subr.bf16.mxu0 %v3444
  %3917 = vmatpush1.bf16.msra.mxu0 %v3443
  %3918 = vmatprep.subr.bf16.mxu0 %v3448
  %3919 = vmatpush1.bf16.msra.mxu0 %v3447
  %3920 = vmatprep.mubr.bf16.mxu0 %v2264
  %3921 = vmatmul.mubr.bf16.gmra.mrb[0].mxu0 %v2263
  %v3922 = vpop.f32.mrb[0].mxu0
  %v3923 = vadd.f32 %v3870, %v3922
  %v3924 = vpop.f32.mrb[0].mxu0
  %v3925 = vadd.f32 %v3872, %v3924
  %v3926 = vpop.f32.mrb[0].mxu0
  %v3927 = vadd.f32 %v3874, %v3926
  %v3928 = vpop.f32.mrb[0].mxu0
  %v3929 = vadd.f32 %v3876, %v3928
  %3930 = vmatprep.mubr.bf16.mxu0 %v2272
  %3931 = vmatmul.mubr.bf16.gmra.mrb[0].mxu0 %v2271
  %v3932 = vpop.f32.mrb[0].mxu0
  %v3933 = vadd.f32 %v3880, %v3932
  %v3934 = vpop.f32.mrb[0].mxu0
  %v3935 = vadd.f32 %v3882, %v3934
  %v3936 = vpop.f32.mrb[0].mxu0
  %v3937 = vadd.f32 %v3884, %v3936
  %v3938 = vpop.f32.mrb[0].mxu0
  %v3939 = vadd.f32 %v3886, %v3938
  %3940 = vdwg.mxu0
  %3941 = vmatprep.subr.bf16.mxu0 %v3452
  %3942 = vmatpush1.bf16.msra.mxu0 %v3451
  %3943 = vmatprep.subr.bf16.mxu0 %v3456
  %3944 = vmatpush1.bf16.msra.mxu0 %v3455
  %3945 = vmatprep.subr.bf16.mxu0 %v3460
  %3946 = vmatpush1.bf16.msra.mxu0 %v3459
  %3947 = vmatprep.subr.bf16.mxu0 %v3464
  %3948 = vmatpush1.bf16.msra.mxu0 %v3463
  %3949 = vmatprep.subr.bf16.mxu0 %v3468
  %3950 = vmatpush1.bf16.msra.mxu0 %v3467
  %3951 = vmatprep.subr.bf16.mxu0 %v3472
  %3952 = vmatpush1.bf16.msra.mxu0 %v3471
  %3953 = vmatprep.subr.bf16.mxu0 %v3476
  %3954 = vmatpush1.bf16.msra.mxu0 %v3475
  %3955 = vmatprep.subr.bf16.mxu0 %v3480
  %3956 = vmatpush1.bf16.msra.mxu0 %v3479
  %3957 = vmatprep.subr.bf16.mxu0 %v3484
  %3958 = vmatpush1.bf16.msra.mxu0 %v3483
  %3959 = vmatprep.subr.bf16.mxu0 %v3488
  %3960 = vmatpush1.bf16.msra.mxu0 %v3487
  %3961 = vmatprep.subr.bf16.mxu0 %v3492
  %3962 = vmatpush1.bf16.msra.mxu0 %v3491
  %3963 = vmatprep.subr.bf16.mxu0 %v3496
  %3964 = vmatpush1.bf16.msra.mxu0 %v3495
  %3965 = vmatprep.subr.bf16.mxu0 %v3500
  %3966 = vmatpush1.bf16.msra.mxu0 %v3499
  %3967 = vmatprep.subr.bf16.mxu0 %v3504
  %3968 = vmatpush1.bf16.msra.mxu0 %v3503
  %3969 = vmatprep.subr.bf16.mxu0 %v3508
  %3970 = vmatpush1.bf16.msra.mxu0 %v3507
  %3971 = vmatprep.subr.bf16.mxu0 %v3512
  %3972 = vmatpush1.bf16.msra.mxu0 %v3511
  %3973 = vmatprep.mubr.bf16.mxu0 %v2266
  %3974 = vmatmul.mubr.bf16.gmra.mrb[0].mxu0 %v2265
  %v3975 = vpop.f32.mrb[0].mxu0
  %v3976 = vadd.f32 %v3923, %v3975
  %v3977 = vpop.f32.mrb[0].mxu0
  %v3978 = vadd.f32 %v3925, %v3977
  %v3979 = vpop.f32.mrb[0].mxu0
  %v3980 = vadd.f32 %v3927, %v3979
  %v3981 = vpop.f32.mrb[0].mxu0
  %v3982 = vadd.f32 %v3929, %v3981
  %3983 = vmatprep.mubr.bf16.mxu0 %v2274
  %3984 = vmatmul.mubr.bf16.gmra.mrb[0].mxu0 %v2273
  %v3985 = vpop.f32.mrb[0].mxu0
  %v3986 = vadd.f32 %v3933, %v3985
  %v3987 = vpop.f32.mrb[0].mxu0
  %v3988 = vadd.f32 %v3935, %v3987
  %v3989 = vpop.f32.mrb[0].mxu0
  %v3990 = vadd.f32 %v3937, %v3989
  %v3991 = vpop.f32.mrb[0].mxu0
  %v3992 = vadd.f32 %v3939, %v3991
  %3993 = vdwg.mxu0
  %3994 = vmatprep.subr.bf16.mxu0 %v3516
  %3995 = vmatpush1.bf16.msra.mxu0 %v3515
  %3996 = vmatprep.subr.bf16.mxu0 %v3520
  %3997 = vmatpush1.bf16.msra.mxu0 %v3519
  %3998 = vmatprep.subr.bf16.mxu0 %v3524
  %3999 = vmatpush1.bf16.msra.mxu0 %v3523
  %4000 = vmatprep.subr.bf16.mxu0 %v3528
  %4001 = vmatpush1.bf16.msra.mxu0 %v3527
  %4002 = vmatprep.subr.bf16.mxu0 %v3532
  %4003 = vmatpush1.bf16.msra.mxu0 %v3531
  %4004 = vmatprep.subr.bf16.mxu0 %v3536
  %4005 = vmatpush1.bf16.msra.mxu0 %v3535
  %4006 = vmatprep.subr.bf16.mxu0 %v3540
  %4007 = vmatpush1.bf16.msra.mxu0 %v3539
  %4008 = vmatprep.subr.bf16.mxu0 %v3544
  %4009 = vmatpush1.bf16.msra.mxu0 %v3543
  %4010 = vmatprep.subr.bf16.mxu0 %v3548
  %4011 = vmatpush1.bf16.msra.mxu0 %v3547
  %4012 = vmatprep.subr.bf16.mxu0 %v3552
  %4013 = vmatpush1.bf16.msra.mxu0 %v3551
  %4014 = vmatprep.subr.bf16.mxu0 %v3556
  %4015 = vmatpush1.bf16.msra.mxu0 %v3555
  %4016 = vmatprep.subr.bf16.mxu0 %v3560
  %4017 = vmatpush1.bf16.msra.mxu0 %v3559
  %4018 = vmatprep.subr.bf16.mxu0 %v3564
  %4019 = vmatpush1.bf16.msra.mxu0 %v3563
  %4020 = vmatprep.subr.bf16.mxu0 %v3568
  %4021 = vmatpush1.bf16.msra.mxu0 %v3567
  %4022 = vmatprep.subr.bf16.mxu0 %v3572
  %4023 = vmatpush1.bf16.msra.mxu0 %v3571
  %4024 = vmatprep.subr.bf16.mxu0 %v3576
  %4025 = vmatpush1.bf16.msra.mxu0 %v3575
  %4026 = vmatprep.mubr.bf16.mxu0 %v2268
  %4027 = vmatmul.mubr.bf16.gmra.mrb[0].mxu0 %v2267
  %v4028 = vpop.f32.mrb[0].mxu0
  %v4029 = vadd.f32 %v3976, %v4028
  %v4030 = vpop.f32.mrb[0].mxu0
  %v4031 = vadd.f32 %v3978, %v4030
  %v4032 = vpop.f32.mrb[0].mxu0
  %v4033 = vadd.f32 %v3980, %v4032
  %v4034 = vpop.f32.mrb[0].mxu0
  %v4035 = vadd.f32 %v3982, %v4034
  %4036 = vmatprep.mubr.bf16.mxu0 %v2276
  %4037 = vmatmul.mubr.bf16.gmra.mrb[0].mxu0 %v2275
  %v4038 = vpop.f32.mrb[0].mxu0
  %v4039 = vadd.f32 %v3986, %v4038
  %v4040 = vpop.f32.mrb[0].mxu0
  %v4041 = vadd.f32 %v3988, %v4040
  %v4042 = vpop.f32.mrb[0].mxu0
  %v4043 = vadd.f32 %v3990, %v4042
  %v4044 = vpop.f32.mrb[0].mxu0
  %v4045 = vadd.f32 %v3992, %v4044
  %4046 = vdwg.mxu0
  %4047 = vmatprep.subr.bf16.mxu0 %v3326
  %4048 = vmatpush1.bf16.msra.mxu0 %v3325
  %4049 = vmatprep.subr.bf16.mxu0 %v3330
  %4050 = vmatpush1.bf16.msra.mxu0 %v3329
  %4051 = vmatprep.subr.bf16.mxu0 %v3334
  %4052 = vmatpush1.bf16.msra.mxu0 %v3333
  %4053 = vmatprep.subr.bf16.mxu0 %v3338
  %4054 = vmatpush1.bf16.msra.mxu0 %v3337
  %4055 = vmatprep.subr.bf16.mxu0 %v3342
  %4056 = vmatpush1.bf16.msra.mxu0 %v3341
  %4057 = vmatprep.subr.bf16.mxu0 %v3346
  %4058 = vmatpush1.bf16.msra.mxu0 %v3345
  %4059 = vmatprep.subr.bf16.mxu0 %v3350
  %4060 = vmatpush1.bf16.msra.mxu0 %v3349
  %4061 = vmatprep.subr.bf16.mxu0 %v3354
  %4062 = vmatpush1.bf16.msra.mxu0 %v3353
  %4063 = vmatprep.subr.bf16.mxu0 %v3358
  %4064 = vmatpush1.bf16.msra.mxu0 %v3357
  %4065 = vmatprep.subr.bf16.mxu0 %v3362
  %4066 = vmatpush1.bf16.msra.mxu0 %v3361
  %4067 = vmatprep.subr.bf16.mxu0 %v3366
  %4068 = vmatpush1.bf16.msra.mxu0 %v3365
  %4069 = vmatprep.subr.bf16.mxu0 %v3370
  %4070 = vmatpush1.bf16.msra.mxu0 %v3369
  %4071 = vmatprep.subr.bf16.mxu0 %v3374
  %4072 = vmatpush1.bf16.msra.mxu0 %v3373
  %4073 = vmatprep.subr.bf16.mxu0 %v3378
  %4074 = vmatpush1.bf16.msra.mxu0 %v3377
  %4075 = vmatprep.subr.bf16.mxu0 %v3382
  %4076 = vmatpush1.bf16.msra.mxu0 %v3381
  %4077 = vmatprep.subr.bf16.mxu0 %v3386
  %4078 = vmatpush1.bf16.msra.mxu0 %v3385
  %4079 = vmatprep.mubr.bf16.mxu0 %v2262
  %4080 = vmatmul.mubr.bf16.gmra.mrb[0].mxu0 %v2261
  %v4081 = vpop.f32.mrb[0].mxu0
  %v4082 = vadd.f32 %v2546, %v4081
  %v4083 = vpop.f32.mrb[0].mxu0
  %v4084 = vadd.f32 %v2550, %v4083
  %v4085 = vpop.f32.mrb[0].mxu0
  %v4086 = vadd.f32 %v2546, %v4085
  %v4087 = vpop.f32.mrb[0].mxu0
  %v4088 = vadd.f32 %v2550, %v4087
  %4089 = vmatprep.mubr.bf16.mxu0 %v2270
  %4090 = vmatmul.mubr.bf16.gmra.mrb[0].mxu0 %v2269
  %v4091 = vpop.f32.mrb[0].mxu0
  %v4092 = vadd.f32 %v2546, %v4091
  %v4093 = vpop.f32.mrb[0].mxu0
  %v4094 = vadd.f32 %v2550, %v4093
  %v4095 = vpop.f32.mrb[0].mxu0
  %v4096 = vadd.f32 %v2546, %v4095
  %v4097 = vpop.f32.mrb[0].mxu0
  %v4098 = vadd.f32 %v2550, %v4097
  %4099 = vdwg.mxu0
  %4100 = vmatprep.subr.bf16.mxu0 %v3390
  %4101 = vmatpush1.bf16.msra.mxu0 %v3389
  %4102 = vmatprep.subr.bf16.mxu0 %v3394
  %4103 = vmatpush1.bf16.msra.mxu0 %v3393
  %4104 = vmatprep.subr.bf16.mxu0 %v3398
  %4105 = vmatpush1.bf16.msra.mxu0 %v3397
  %4106 = vmatprep.subr.bf16.mxu0 %v3402
  %4107 = vmatpush1.bf16.msra.mxu0 %v3401
  %4108 = vmatprep.subr.bf16.mxu0 %v3406
  %4109 = vmatpush1.bf16.msra.mxu0 %v3405
  %4110 = vmatprep.subr.bf16.mxu0 %v3410
  %4111 = vmatpush1.bf16.msra.mxu0 %v3409
  %4112 = vmatprep.subr.bf16.mxu0 %v3414
  %4113 = vmatpush1.bf16.msra.mxu0 %v3413
  %4114 = vmatprep.subr.bf16.mxu0 %v3418
  %4115 = vmatpush1.bf16.msra.mxu0 %v3417
  %4116 = vmatprep.subr.bf16.mxu0 %v3422
  %4117 = vmatpush1.bf16.msra.mxu0 %v3421
  %4118 = vmatprep.subr.bf16.mxu0 %v3426
  %4119 = vmatpush1.bf16.msra.mxu0 %v3425
  %4120 = vmatprep.subr.bf16.mxu0 %v3430
  %4121 = vmatpush1.bf16.msra.mxu0 %v3429
  %4122 = vmatprep.subr.bf16.mxu0 %v3434
  %4123 = vmatpush1.bf16.msra.mxu0 %v3433
  %4124 = vmatprep.subr.bf16.mxu0 %v3438
  %4125 = vmatpush1.bf16.msra.mxu0 %v3437
  %4126 = vmatprep.subr.bf16.mxu0 %v3442
  %4127 = vmatpush1.bf16.msra.mxu0 %v3441
  %4128 = vmatprep.subr.bf16.mxu0 %v3446
  %4129 = vmatpush1.bf16.msra.mxu0 %v3445
  %4130 = vmatprep.subr.bf16.mxu0 %v3450
  %4131 = vmatpush1.bf16.msra.mxu0 %v3449
  %4132 = vmatprep.mubr.bf16.mxu0 %v2264
  %4133 = vmatmul.mubr.bf16.gmra.mrb[0].mxu0 %v2263
  %v4134 = vpop.f32.mrb[0].mxu0
  %v4135 = vadd.f32 %v4082, %v4134
  %v4136 = vpop.f32.mrb[0].mxu0
  %v4137 = vadd.f32 %v4084, %v4136
  %v4138 = vpop.f32.mrb[0].mxu0
  %v4139 = vadd.f32 %v4086, %v4138
  %v4140 = vpop.f32.mrb[0].mxu0
  %v4141 = vadd.f32 %v4088, %v4140
  %4142 = vmatprep.mubr.bf16.mxu0 %v2272
  %4143 = vmatmul.mubr.bf16.gmra.mrb[0].mxu0 %v2271
  %v4144 = vpop.f32.mrb[0].mxu0
  %v4145 = vadd.f32 %v4092, %v4144
  %v4146 = vpop.f32.mrb[0].mxu0
  %v4147 = vadd.f32 %v4094, %v4146
  %v4148 = vpop.f32.mrb[0].mxu0
  %v4149 = vadd.f32 %v4096, %v4148
  %v4150 = vpop.f32.mrb[0].mxu0
  %v4151 = vadd.f32 %v4098, %v4150
  %4152 = vdwg.mxu0
  %4153 = vmatprep.subr.bf16.mxu0 %v3454
  %4154 = vmatpush1.bf16.msra.mxu0 %v3453
  %4155 = vmatprep.subr.bf16.mxu0 %v3458
  %4156 = vmatpush1.bf16.msra.mxu0 %v3457
  %4157 = vmatprep.subr.bf16.mxu0 %v3462
  %4158 = vmatpush1.bf16.msra.mxu0 %v3461
  %4159 = vmatprep.subr.bf16.mxu0 %v3466
  %4160 = vmatpush1.bf16.msra.mxu0 %v3465
  %4161 = vmatprep.subr.bf16.mxu0 %v3470
  %4162 = vmatpush1.bf16.msra.mxu0 %v3469
  %4163 = vmatprep.subr.bf16.mxu0 %v3474
  %4164 = vmatpush1.bf16.msra.mxu0 %v3473
  %4165 = vmatprep.subr.bf16.mxu0 %v3478
  %4166 = vmatpush1.bf16.msra.mxu0 %v3477
  %4167 = vmatprep.subr.bf16.mxu0 %v3482
  %4168 = vmatpush1.bf16.msra.mxu0 %v3481
  %4169 = vmatprep.subr.bf16.mxu0 %v3486
  %4170 = vmatpush1.bf16.msra.mxu0 %v3485
  %4171 = vmatprep.subr.bf16.mxu0 %v3490
  %4172 = vmatpush1.bf16.msra.mxu0 %v3489
  %4173 = vmatprep.subr.bf16.mxu0 %v3494
  %4174 = vmatpush1.bf16.msra.mxu0 %v3493
  %4175 = vmatprep.subr.bf16.mxu0 %v3498
  %4176 = vmatpush1.bf16.msra.mxu0 %v3497
  %4177 = vmatprep.subr.bf16.mxu0 %v3502
  %4178 = vmatpush1.bf16.msra.mxu0 %v3501
  %4179 = vmatprep.subr.bf16.mxu0 %v3506
  %4180 = vmatpush1.bf16.msra.mxu0 %v3505
  %4181 = vmatprep.subr.bf16.mxu0 %v3510
  %4182 = vmatpush1.bf16.msra.mxu0 %v3509
  %4183 = vmatprep.subr.bf16.mxu0 %v3514
  %4184 = vmatpush1.bf16.msra.mxu0 %v3513
  %4185 = vmatprep.mubr.bf16.mxu0 %v2266
  %4186 = vmatmul.mubr.bf16.gmra.mrb[0].mxu0 %v2265
  %v4187 = vpop.f32.mrb[0].mxu0
  %v4188 = vadd.f32 %v4135, %v4187
  %v4189 = vpop.f32.mrb[0].mxu0
  %v4190 = vadd.f32 %v4137, %v4189
  %v4191 = vpop.f32.mrb[0].mxu0
  %v4192 = vadd.f32 %v4139, %v4191
  %v4193 = vpop.f32.mrb[0].mxu0
  %v4194 = vadd.f32 %v4141, %v4193
  %4195 = vmatprep.mubr.bf16.mxu0 %v2274
  %4196 = vmatmul.mubr.bf16.gmra.mrb[0].mxu0 %v2273
  %v4197 = vpop.f32.mrb[0].mxu0
  %v4198 = vadd.f32 %v4145, %v4197
  %v4199 = vpop.f32.mrb[0].mxu0
  %v4200 = vadd.f32 %v4147, %v4199
  %v4201 = vpop.f32.mrb[0].mxu0
  %v4202 = vadd.f32 %v4149, %v4201
  %v4203 = vpop.f32.mrb[0].mxu0
  %v4204 = vadd.f32 %v4151, %v4203
  %4205 = vdwg.mxu0
  %4206 = vmatprep.subr.bf16.mxu0 %v3518
  %4207 = vmatpush1.bf16.msra.mxu0 %v3517
  %4208 = vmatprep.subr.bf16.mxu0 %v3522
  %4209 = vmatpush1.bf16.msra.mxu0 %v3521
  %4210 = vmatprep.subr.bf16.mxu0 %v3526
  %4211 = vmatpush1.bf16.msra.mxu0 %v3525
  %4212 = vmatprep.subr.bf16.mxu0 %v3530
  %4213 = vmatpush1.bf16.msra.mxu0 %v3529
  %4214 = vmatprep.subr.bf16.mxu0 %v3534
  %4215 = vmatpush1.bf16.msra.mxu0 %v3533
  %4216 = vmatprep.subr.bf16.mxu0 %v3538
  %4217 = vmatpush1.bf16.msra.mxu0 %v3537
  %4218 = vmatprep.subr.bf16.mxu0 %v3542
  %4219 = vmatpush1.bf16.msra.mxu0 %v3541
  %4220 = vmatprep.subr.bf16.mxu0 %v3546
  %4221 = vmatpush1.bf16.msra.mxu0 %v3545
  %4222 = vmatprep.subr.bf16.mxu0 %v3550
  %4223 = vmatpush1.bf16.msra.mxu0 %v3549
  %4224 = vmatprep.subr.bf16.mxu0 %v3554
  %4225 = vmatpush1.bf16.msra.mxu0 %v3553
  %4226 = vmatprep.subr.bf16.mxu0 %v3558
  %4227 = vmatpush1.bf16.msra.mxu0 %v3557
  %4228 = vmatprep.subr.bf16.mxu0 %v3562
  %4229 = vmatpush1.bf16.msra.mxu0 %v3561
  %4230 = vmatprep.subr.bf16.mxu0 %v3566
  %4231 = vmatpush1.bf16.msra.mxu0 %v3565
  %4232 = vmatprep.subr.bf16.mxu0 %v3570
  %4233 = vmatpush1.bf16.msra.mxu0 %v3569
  %4234 = vmatprep.subr.bf16.mxu0 %v3574
  %4235 = vmatpush1.bf16.msra.mxu0 %v3573
  %4236 = vmatprep.subr.bf16.mxu0 %v3578
  %4237 = vmatpush1.bf16.msra.mxu0 %v3577
  %4238 = vmatprep.mubr.bf16.mxu0 %v2268
  %4239 = vmatmul.mubr.bf16.gmra.mrb[0].mxu0 %v2267
  %v4240 = vpop.f32.mrb[0].mxu0
  %v4241 = vadd.f32 %v4188, %v4240
  %v4242 = vpop.f32.mrb[0].mxu0
  %v4243 = vadd.f32 %v4190, %v4242
  %v4244 = vpop.f32.mrb[0].mxu0
  %v4245 = vadd.f32 %v4192, %v4244
  %v4246 = vpop.f32.mrb[0].mxu0
  %v4247 = vadd.f32 %v4194, %v4246
  %4248 = vmatprep.mubr.bf16.mxu0 %v2276
  %4249 = vmatmul.mubr.bf16.gmra.mrb[0].mxu0 %v2275
  %v4250 = vpop.f32.mrb[0].mxu0
  %v4251 = vadd.f32 %v4198, %v4250
  %v4252 = vpop.f32.mrb[0].mxu0
  %v4253 = vadd.f32 %v4200, %v4252
  %v4254 = vpop.f32.mrb[0].mxu0
  %v4255 = vadd.f32 %v4202, %v4254
  %v4256 = vpop.f32.mrb[0].mxu0
  %v4257 = vadd.f32 %v4204, %v4256
  %4258 = vdwg.mxu0
  %v4259 = vpack.c.bf16 %v4033, %v4029
  %v4260 = vpack.c.bf16 %v4035, %v4031
  %v4261 = vpack.c.bf16 %v4245, %v4241
  %v4262 = vpack.c.bf16 %v4247, %v4243
  %v4263 = vpack.c.bf16 %v4043, %v4039
  %v4264 = vpack.c.bf16 %v4045, %v4041
  %v4265 = vpack.c.bf16 %v4255, %v4251
  %v4266 = vpack.c.bf16 %v4257, %v4253
  %v4275 = vunpack.c.l.b16 %v4259
  %v4276 = vunpack.c.l.b16 %v4260
  %v4277 = vunpack.c.l.b16 %v4261
  %v4278 = vunpack.c.l.b16 %v4262
  %v4279 = vunpack.c.h.b16 %v4259
  %v4280 = vunpack.c.h.b16 %v4260
  %v4281 = vunpack.c.h.b16 %v4261
  %v4282 = vunpack.c.h.b16 %v4262
  %v4283 = vunpack.c.l.b16 %v4263
  %v4284 = vunpack.c.l.b16 %v4264
  %v4285 = vunpack.c.l.b16 %v4265
  %v4286 = vunpack.c.l.b16 %v4266
  %v4287 = vunpack.c.h.b16 %v4263
  %v4288 = vunpack.c.h.b16 %v4264
  %v4289 = vunpack.c.h.b16 %v4265
  %v4290 = vunpack.c.h.b16 %v4266
  %v4291 = vpack.c.b16 %v4276, %v4275
  %v4292 = vpack.c.b16 %v4278, %v4277
  %v4293 = vpack.c.b16 %v4280, %v4279
  %v4294 = vpack.c.b16 %v4282, %v4281
  %v4295 = vpack.c.b16 %v4284, %v4283
  %v4296 = vpack.c.b16 %v4286, %v4285
  %v4297 = vpack.c.b16 %v4288, %v4287
  %v4298 = vpack.c.b16 %v4290, %v4289
  %4307 = vst [vmem:[%s7] sm:$0xff] %v4291
  %4308 = vst [vmem:[%s7 + $0x8] sm:$0xff] %v4292
  %4309 = vst [vmem:[%s7 + $0x10] sm:$0xff] %v4293
  %4310 = vst [vmem:[%s7 + $0x18] sm:$0xff] %v4294
  %4311 = vst [vmem:[%s7 + $0x20] sm:$0xff] %v4295
  %4312 = vst [vmem:[%s7 + $0x28] sm:$0xff] %v4296
  %4313 = vst [vmem:[%s7 + $0x30] sm:$0xff] %v4297
  %4314 = vst [vmem:[%s7 + $0x38] sm:$0xff] %v4298
  // Predicated region
  $region30: #{forward.17} parent=0 // pred_check
    _
  $region31: #{forward.17} parent=0 // pred_check_branch
    %4316 = sbr.rel (0) target = $region33
  $region32: #{forward.17} parent=0 // pred_region
    _
  $region33: #{forward.17} parent=0 // pred_fallthru
    _
  // Predicated region
  $region34: #{forward.17} parent=0 // pred_check
    _
  $region35: #{forward.17} parent=0 // pred_check_branch
    %4318 = sbr.rel (0) target = $region37
  $region36: #{forward.17} parent=0 // pred_region
    _
  $region37: #{forward.17} parent=0 // pred_fallthru
    _

</llo_original>
